<compile_context>
chip_gen: v7x
topology: tpu7x:2x2x1
jax: 0.10.0
libtpu: 0.0.40
codegen_flags: <defaults>
</compile_context>

<pallas_src>
import jax
import jax.numpy as jnp
from jax.experimental import pallas as pl
from jax.experimental.pallas import tpu as pltpu

LANE = 128
_VMEM_LIMIT = 32 * 1024 * 1024   # safe scoped limit on v5e/v6e/v7x


def _round_up(x, m):
    return (x + m - 1) // m * m


def _apply_act(y, act):
    if act == "leaky":
        return jnp.where(y > 0, y, 0.2 * y)      # LeakyReLU(0.2)
    if act == "sigmoid":
        return jax.nn.sigmoid(y)
    return y


# ---------------------------------------------------------------------------
# Conv-as-matmul kernels (tiled over M = N*OH*OW)
# ---------------------------------------------------------------------------
def _make_conv_kernel(act):
    # Plain conv (no BN): per-tile output, M grid axis is "parallel".
    def kernel(x_ref, w_ref, o_ref):
        y = jnp.dot(x_ref[...].astype(jnp.float32),
                    w_ref[...].astype(jnp.float32),
                    preferred_element_type=jnp.float32)
        o_ref[...] = _apply_act(y, act).astype(o_ref.dtype)
    return kernel


def _make_fused_bn_conv_kernel(act, m_real, tm, eps=1e-5):
    # Fused conv + training-mode BatchNorm + activation in ONE pass:
    # raw y = x@w is kept resident in a VMEM f32 scratch across all M tiles,
    # per-channel sum / sum-of-squares accumulate in VMEM, and the finalize
    # step folds BN (biased variance over N*OH*OW) into
    #   scale = gamma * rsqrt(var + eps),  shift = beta - mean * scale
    # and writes the activated bf16 output once.
    def kernel(x_ref, w_ref, gamma_ref, beta_ref, o_ref, acc_ref, sum_ref, sq_ref):
        m = pl.program_id(0)

        @pl.when(m == 0)
        def _():
            sum_ref[...] = jnp.zeros_like(sum_ref)
            sq_ref[...] = jnp.zeros_like(sq_ref)

        y = jnp.dot(x_ref[...].astype(jnp.float32),
                    w_ref[...].astype(jnp.float32),
                    preferred_element_type=jnp.float32)
        # Zero-padded tail rows of x produce y == 0 exactly, so they add
        # nothing to sum / sumsq; the mean divides by the real row count.
        sum_ref[...] += jnp.sum(y, axis=0, keepdims=True)
        sq_ref[...] += jnp.sum(y * y, axis=0, keepdims=True)
        acc_ref[pl.ds(m * tm, tm), :] = y

        @pl.when(m == pl.num_programs(0) - 1)
        def _():
            inv_n = 1.0 / m_real
            mean = sum_ref[...] * inv_n
            var = jnp.maximum(sq_ref[...] * inv_n - mean * mean, 0.0)
            scale = gamma_ref[...] * jax.lax.rsqrt(var + eps)
            shift = beta_ref[...] - mean * scale
            o_ref[...] = _apply_act(acc_ref[...] * scale + shift,
                                    act).astype(o_ref.dtype)
    return kernel


def _conv_matmul(x_mat, wm, act, gamma=None, beta=None, out_dtype=jnp.bfloat16):
    """(M, K) x (K, Cp) matmul + optional fused train-mode BN + activation.

    x_mat: (M, K) bf16 im2col matrix; wm: (K, Cp) bf16 weights, Cp = 128-pad.
    """
    M, K = x_mat.shape
    cp = wm.shape[1]
    # >=2 tiles for larger M (v7x megacore on the parallel path); 16-row align.
    tm = 512 if M >= 1024 else _round_up(M, 16)
    mp = _round_up(M, tm)
    n_m = mp // tm

    x_in = x_mat if mp == M else jnp.pad(x_mat, ((0, mp - M), (0, 0)))

    x_spec = pl.BlockSpec((tm, K), lambda m: (m, 0))
    w_spec = pl.BlockSpec((K, cp), lambda m: (0, 0))
    vec_spec = pl.BlockSpec((1, cp), lambda m: (0, 0))

    if gamma is not None:
        # Single fused call; output (and f32 acc) resident in VMEM across M.
        # (mp*cp*4 bytes resident -- tiny here; stays well under v7x 64 MiB.)
        out = pl.pallas_call(
            _make_fused_bn_conv_kernel(act, M, tm),
            grid=(n_m,),
            in_specs=[x_spec, w_spec, vec_spec, vec_spec],
            out_specs=pl.BlockSpec((mp, cp), lambda m: (0, 0)),
            out_shape=jax.ShapeDtypeStruct((mp, cp), out_dtype),
            scratch_shapes=[pltpu.VMEM((mp, cp), jnp.float32),
                            pltpu.VMEM((1, cp), jnp.float32),
                            pltpu.VMEM((1, cp), jnp.float32)],
            compiler_params=pltpu.CompilerParams(
                dimension_semantics=("arbitrary",),
                vmem_limit_bytes=_VMEM_LIMIT),
        )(x_in, wm, gamma, beta)
    else:
        out = pl.pallas_call(
            _make_conv_kernel(act),
            grid=(n_m,),
            in_specs=[x_spec, w_spec],
            out_specs=pl.BlockSpec((tm, cp), lambda m: (m, 0)),
            out_shape=jax.ShapeDtypeStruct((mp, cp), out_dtype),
            compiler_params=pltpu.CompilerParams(
                dimension_semantics=("parallel",),
                vmem_limit_bytes=_VMEM_LIMIT),
        )(x_in, wm)
    return out[:M] if mp != M else out


# ---------------------------------------------------------------------------
# NHWC conv layer (im2col glue stays inside the same jit region, in bf16)
# ---------------------------------------------------------------------------
def _im2col_nhwc(x, kh, kw, stride, pad):
    # TODO(synk): fold the KH*KW window gather into the matmul grid (shifted
    # index_maps / strided in-kernel loads over the padded NHWC input) so the
    # duplicated im2col matrix is never materialized in HBM.
    n, h, w, c = x.shape
    if pad:
        x = jnp.pad(x, ((0, 0), (pad, pad), (pad, pad), (0, 0)))
    oh = (h + 2 * pad - kh) // stride + 1
    ow = (w + 2 * pad - kw) // stride + 1
    patches = []
    for i in range(kh):
        for j in range(kw):
            patches.append(x[:, i::stride, j::stride, :][:, :oh, :ow, :])
    p = jnp.stack(patches, axis=3)                     # (N, OH, OW, KH*KW, C)
    return p.reshape(n * oh * ow, kh * kw * c), oh, ow


def conv2d_nhwc(x, wp, stride, pad, act, gamma=None, beta=None,
                keep_padded=False, out_dtype=jnp.bfloat16):
    n = x.shape[0]
    xm, oh, ow = _im2col_nhwc(x, wp["kh"], wp["kw"], stride, pad)
    y = _conv_matmul(xm, wp["w"], act, gamma=gamma, beta=beta,
                     out_dtype=out_dtype)
    c = wp["w"].shape[1] if keep_padded else wp["cout"]
    return y[:, :c].reshape(n, oh, ow, c)              # stays NHWC


# ---------------------------------------------------------------------------
# SAGAN self-attention kernel (whole batch in one call, 128-lane padded)
# ---------------------------------------------------------------------------
def _attn_kernel(g_ref, x_ref, wq_ref, bq_ref, wk_ref, bk_ref, wv_ref, bv_ref,
                 o_ref):
    b, hw, cp = x_ref.shape
    x = x_ref[...].astype(jnp.float32)                 # (B, HW, CP)
    x2 = x.reshape(b * hw, cp)                         # fold batch into rows
    wq = wq_ref[...].astype(jnp.float32)
    wk = wk_ref[...].astype(jnp.float32)
    wv = wv_ref[...].astype(jnp.float32)
    q = (jnp.dot(x2, wq, preferred_element_type=jnp.float32)
         + bq_ref[...]).reshape(b, hw, cp)
    k = (jnp.dot(x2, wk, preferred_element_type=jnp.float32)
         + bk_ref[...]).reshape(b, hw, cp)
    v = (jnp.dot(x2, wv, preferred_element_type=jnp.float32)
         + bv_ref[...]).reshape(b, hw, cp)
    energy = jnp.einsum("bqc,bkc->bqk", q, k,
                        preferred_element_type=jnp.float32)     # (B, HW, HW)
    m = jnp.max(energy, axis=-1, keepdims=True)
    e = jnp.exp(energy - m)
    att = e / jnp.sum(e, axis=-1, keepdims=True)
    out = jnp.einsum("bqk,bkc->bqc", att, v,
                     preferred_element_type=jnp.float32)        # A @ V
    o_ref[...] = (g_ref[...] * out + x).astype(o_ref.dtype)     # gamma*out + x


def self_attention_nhwc(x, ap):
    # x: (N, H, W, CP) bf16 with CP = 128-lane-padded channels; the NHWC
    # flatten matches PyTorch's view(B, C, H*W) position ordering.
    n, h, w, cp = x.shape
    hw = h * w
    xf = x.reshape(n, hw, cp)
    mat_spec = pl.BlockSpec((cp, cp), lambda i: (0, 0))
    vec_spec = pl.BlockSpec((1, cp), lambda i: (0, 0))
    out = pl.pallas_call(
        _attn_kernel,
        grid=(1,),
        in_specs=[
            vec_spec,                                    # gamma (broadcast row)
            pl.BlockSpec((n, hw, cp), lambda i: (0, 0, 0)),
            mat_spec, vec_spec,                          # wq, bq
            mat_spec, vec_spec,                          # wk, bk
            mat_spec, vec_spec,                          # wv, bv
        ],
        out_specs=pl.BlockSpec((n, hw, cp), lambda i: (0, 0, 0)),
        out_shape=jax.ShapeDtypeStruct((n, hw, cp), jnp.bfloat16),
        compiler_params=pltpu.CompilerParams(
            dimension_semantics=("arbitrary",),
            vmem_limit_bytes=_VMEM_LIMIT),
    )(ap["gamma"], xf, ap["wq"], ap["bq"], ap["wk"], ap["bk"], ap["wv"],
      ap["bv"])
    # attention_score is discarded by the Discriminator forward, so it is
    # never materialized in HBM.
    return out.reshape(n, h, w, cp)


# ---------------------------------------------------------------------------
# Parameter preparation (one-time layout work, outside the per-call path)
# ---------------------------------------------------------------------------
def _prep_conv(w, cin_pad=None):
    cout, cin, kh, kw = w.shape
    cp = _round_up(cout, LANE)
    wt = jnp.transpose(w, (2, 3, 1, 0))                 # (kh, kw, cin, cout)
    if cin_pad is not None and cin_pad > cin:
        wt = jnp.pad(wt, ((0, 0), (0, 0), (0, cin_pad - cin), (0, 0)))
    wm = wt.reshape(kh * kw * wt.shape[2], cout)
    wm = jnp.pad(wm, ((0, 0), (0, cp - cout))).astype(jnp.bfloat16)
    return {"w": wm, "cout": cout, "kh": kh, "kw": kw}


def _prep_bn(g, b, cp):
    gp = jnp.pad(g, (0, cp - g.shape[0])).reshape(1, cp).astype(jnp.float32)
    bp = jnp.pad(b, (0, cp - b.shape[0])).reshape(1, cp).astype(jnp.float32)
    return gp, bp


def prepare_params(p):
    pp = {}
    for i in (1, 2, 3, 4):
        pp[f"w{i}"] = _prep_conv(p[f"w{i}"])
    # layer5 consumes the 128-lane padded attention output -> pad Cin too.
    pp["w5"] = _prep_conv(p["w5"], cin_pad=LANE)
    for i in (2, 3, 4):
        cp = pp[f"w{i}"]["w"].shape[1]
        pp[f"g{i}"], pp[f"b{i}"] = _prep_bn(p[f"g{i}"], p[f"b{i}"], cp)

    c8, c = p["wq"].shape[0], p["wq"].shape[1]
    cp = _round_up(c, LANE)

    def pad_w(w2d):                                   # (out, in) -> (cp, cp)
        wt = w2d.reshape(w2d.shape[0], w2d.shape[1]).T
        return jnp.pad(wt, ((0, cp - wt.shape[0]),
                            (0, cp - wt.shape[1]))).astype(jnp.bfloat16)

    def pad_b(b1d):
        return jnp.pad(b1d, (0, cp - b1d.shape[0])).reshape(1, cp).astype(
            jnp.float32)

    pp["attn"] = {
        "wq": pad_w(p["wq"]), "bq": pad_b(p["bq"]),
        "wk": pad_w(p["wk"]), "bk": pad_b(p["bk"]),
        "wv": pad_w(p["wv"]), "bv": pad_b(p["bv"]),
        "gamma": jnp.broadcast_to(
            p["gamma"].reshape(1, 1).astype(jnp.float32), (1, cp)),
    }
    return pp


# ---------------------------------------------------------------------------
# Discriminator forward
# ---------------------------------------------------------------------------
def discriminator_forward(x_nchw, pp):
    # Single NCHW -> NHWC layout change at the module boundary; activations
    # stay channel-last (lane-dense) and are carried in bf16 between layers.
    x = jnp.transpose(x_nchw, (0, 2, 3, 1)).astype(jnp.bfloat16)
    x = conv2d_nhwc(x, pp["w1"], 2, 1, "leaky")                           # layer1
    x = conv2d_nhwc(x, pp["w2"], 2, 1, "leaky", pp["g2"], pp["b2"])       # layer2
    x = conv2d_nhwc(x, pp["w3"], 2, 1, "leaky", pp["g3"], pp["b3"])       # layer3
    x = conv2d_nhwc(x, pp["w4"], 2, 1, "sigmoid", pp["g4"], pp["b4"],
                    keep_padded=True)                                     # layer4
    x = self_attention_nhwc(x, pp["attn"])                                # attn
    x = conv2d_nhwc(x, pp["w5"], 1, 0, "sigmoid",
                    out_dtype=jnp.float32)                                # layer5
    return x.reshape(-1)          # output.view(-1, 1).squeeze(1) -> (N,)


def init_params(key, channels, nf):
    ks = jax.random.split(key, 8)

    def w(k, shape, scale=0.05):
        return (scale * jax.random.normal(k, shape)).astype(jnp.float32)

    c4 = nf * 8
    return {
        # layer1: Conv(channels -> nf), no BN, no bias
        "w1": w(ks[0], (nf, channels, 4, 4)),
        # layer2: Conv(nf -> 2nf) + BN
        "w2": w(ks[1], (2 * nf, nf, 4, 4)),
        "g2": jnp.ones((2 * nf,), jnp.float32),
        "b2": jnp.zeros((2 * nf,), jnp.float32),
        # layer3: Conv(2nf -> 4nf) + BN
        "w3": w(ks[2], (4 * nf, 2 * nf, 4, 4)),
        "g3": jnp.ones((4 * nf,), jnp.float32),
        "b3": jnp.zeros((4 * nf,), jnp.float32),
        # layer4: Conv(4nf -> 8nf) + BN
        "w4": w(ks[3], (8 * nf, 4 * nf, 4, 4)),
        "g4": jnp.ones((8 * nf,), jnp.float32),
        "b4": jnp.zeros((8 * nf,), jnp.float32),
        # self-attention (1x1 convs with bias); gamma = 0 matching PyTorch init
        "wq": w(ks[4], (c4 // 8, c4, 1, 1)),
        "bq": jnp.zeros((c4 // 8,), jnp.float32),
        "wk": w(ks[5], (c4 // 8, c4, 1, 1)),
        "bk": jnp.zeros((c4 // 8,), jnp.float32),
        "wv": w(ks[6], (c4, c4, 1, 1)),
        "bv": jnp.zeros((c4,), jnp.float32),
        "gamma": jnp.zeros((1,), jnp.float32),
        # layer5: Conv(8nf -> 1), no BN, no bias
        "w5": w(ks[7], (1, 8 * nf, 4, 4)),
    }


if __name__ == "__main__":
    key = jax.random.PRNGKey(0)
    kx, kp = jax.random.split(key)
    # DCGAN-style spatial pipeline: 64 -> 32 -> 16 -> 8 -> 4 -> (4x4 valid) -> 1
    B, C, H, W = 2, 4, 64, 64
    nf = 8                       # noise_filter_discriminator

    x = jax.random.normal(kx, (B, C, H, W), dtype=jnp.float32)
    params = init_params(kp, C, nf)
    prepped = prepare_params(params)          # one-time weight layout prep

    fwd = jax.jit(lambda inp: discriminator_forward(inp, prepped))
    out = jax.block_until_ready(fwd(x))

    assert out.shape == (B,), out.shape
    assert bool(jnp.all(jnp.isfinite(out)))
    assert bool(jnp.all((out >= 0.0) & (out <= 1.0)))   # final Sigmoid range
    print("KERNEL_OK")
</pallas_src>

<mosaic_0001>
module attributes {stable_mosaic.version = 11 : i64} {
  func.func @kernel(%arg0: i32, %arg1: memref<512x64xbf16, #tpu.memory_space<vmem>>, %arg2: memref<64x128xbf16, #tpu.memory_space<vmem>>, %arg3: memref<512x128xbf16, #tpu.memory_space<vmem>>) attributes {dimension_semantics = [#tpu.dimension_semantics<parallel>], iteration_bounds = array<i64: 4>, scalar_prefetch = 0 : i64, scratch_operands = 0 : i64, tpu.core_type = #tpu.core_type<tc>, window_params = [{transform_indices = @transform_0, window_bounds = array<i64: 512, 64>}, {pipeline_mode = #tpu.pipeline_mode<synchronous>, transform_indices = @transform_1, window_bounds = array<i64: 64, 128>}, {transform_indices = @transform_2, window_bounds = array<i64: 512, 128>}]} {
    %c0 = arith.constant 0 : index
    %c0_0 = arith.constant 0 : index
    %0 = vector.load %arg1[%c0, %c0_0] : memref<512x64xbf16, #tpu.memory_space<vmem>>, vector<512x64xbf16>
    %1 = arith.extf %0 : vector<512x64xbf16> to vector<512x64xf32>
    %c0_1 = arith.constant 0 : index
    %c0_2 = arith.constant 0 : index
    %2 = vector.load %arg2[%c0_1, %c0_2] : memref<64x128xbf16, #tpu.memory_space<vmem>>, vector<64x128xbf16>
    %3 = arith.extf %2 : vector<64x128xbf16> to vector<64x128xf32>
    %cst = arith.constant dense<0.000000e+00> : vector<512x128xf32>
    %4 = tpu.matmul %1, %3, %cst {dimension_numbers = #tpu.dot_dimension_numbers<[1], [0], [0], [1], [0, 0, 1, 1], [], []>} : vector<512x64xf32>, vector<64x128xf32>, vector<512x128xf32> -> vector<512x128xf32>
    %cst_3 = arith.constant 0.000000e+00 : f32
    %5 = vector.broadcast %cst_3 : f32 to vector<512x128xf32>
    %6 = arith.cmpf ogt, %4, %5 : vector<512x128xf32>
    %cst_4 = arith.constant 2.000000e-01 : f32
    %7 = vector.broadcast %cst_4 : f32 to vector<512x128xf32>
    %8 = arith.mulf %7, %4 : vector<512x128xf32>
    %9 = arith.select %6, %4, %8 : vector<512x128xi1>, vector<512x128xf32>
    %10 = arith.truncf %9 : vector<512x128xf32> to vector<512x128xbf16>
    %c0_5 = arith.constant 0 : index
    %c0_6 = arith.constant 0 : index
    %11 = vector.load %arg3[%c0_5, %c0_6] : memref<512x128xbf16, #tpu.memory_space<vmem>>, vector<512x128xbf16>
    tpu.vector_store %arg3[%c0_5, %c0_6], %10 {strides = array<i32>} : memref<512x128xbf16, #tpu.memory_space<vmem>>, vector<512x128xbf16>,
    return
  }
  func.func @transform_0(%arg0: i32) -> (i32, i32) {
    %c0_i32 = arith.constant 0 : i32
    %c0_i32_0 = arith.constant 0 : i32
    return %arg0, %c0_i32 : i32, i32
  }
  func.func @transform_1(%arg0: i32) -> (i32, i32) {
    %c0_i32 = arith.constant 0 : i32
    %c0_i32_0 = arith.constant 0 : i32
    %c0_i32_1 = arith.constant 0 : i32
    return %c0_i32, %c0_i32_0 : i32, i32
  }
  func.func @transform_2(%arg0: i32) -> (i32, i32) {
    %c0_i32 = arith.constant 0 : i32
    %c0_i32_0 = arith.constant 0 : i32
    return %arg0, %c0_i32 : i32, i32
  }
}

module attributes {stable_mosaic.version = 11 : i64} {
  func.func @kernel(%arg0: i32, %arg1: memref<512x128xbf16, #tpu.memory_space<vmem>>, %arg2: memref<128x128xbf16, #tpu.memory_space<vmem>>, %arg3: memref<1x128xf32, #tpu.memory_space<vmem>>, %arg4: memref<1x128xf32, #tpu.memory_space<vmem>>, %arg5: memref<512x128xbf16, #tpu.memory_space<vmem>>, %arg6: memref<512x128xf32, #tpu.memory_space<vmem>>, %arg7: memref<1x128xf32, #tpu.memory_space<vmem>>, %arg8: memref<1x128xf32, #tpu.memory_space<vmem>>) attributes {dimension_semantics = [#tpu.dimension_semantics<arbitrary>], iteration_bounds = array<i64: 1>, scalar_prefetch = 0 : i64, scratch_operands = 3 : i64, tpu.core_type = #tpu.core_type<tc>, window_params = [{transform_indices = @transform_0, window_bounds = array<i64: 512, 128>}, {pipeline_mode = #tpu.pipeline_mode<synchronous>, transform_indices = @transform_1, window_bounds = array<i64: 128, 128>}, {pipeline_mode = #tpu.pipeline_mode<synchronous>, transform_indices = @transform_2, window_bounds = array<i64: 1, 128>}, {pipeline_mode = #tpu.pipeline_mode<synchronous>, transform_indices = @transform_3, window_bounds = array<i64: 1, 128>}, {pipeline_mode = #tpu.pipeline_mode<synchronous>, transform_indices = @transform_4, window_bounds = array<i64: 512, 128>}]} {
    %c0_i32 = arith.constant 0 : i32
    %0 = arith.cmpi eq, %arg0, %c0_i32 : i32
    %1 = arith.extui %0 : i1 to i32
    %c0_i32_0 = arith.constant 0 : i32
    %2 = arith.cmpi ne, %1, %c0_i32_0 : i32
    scf.if %2 {
      %cst_17 = arith.constant 0.000000e+00 : f32
      %25 = vector.broadcast %cst_17 : f32 to vector<1x128xf32>
      %c0_18 = arith.constant 0 : index
      %c0_19 = arith.constant 0 : index
      %26 = vector.load %arg7[%c0_18, %c0_19] : memref<1x128xf32, #tpu.memory_space<vmem>>, vector<1x128xf32>
      tpu.vector_store %arg7[%c0_18, %c0_19], %25 {strides = array<i32>} : memref<1x128xf32, #tpu.memory_space<vmem>>, vector<1x128xf32>,
      %cst_20 = arith.constant 0.000000e+00 : f32
      %27 = vector.broadcast %cst_20 : f32 to vector<1x128xf32>
      %c0_21 = arith.constant 0 : index
      %c0_22 = arith.constant 0 : index
      %28 = vector.load %arg8[%c0_21, %c0_22] : memref<1x128xf32, #tpu.memory_space<vmem>>, vector<1x128xf32>
      tpu.vector_store %arg8[%c0_21, %c0_22], %27 {strides = array<i32>} : memref<1x128xf32, #tpu.memory_space<vmem>>, vector<1x128xf32>,
    } else {
    }
    %c0 = arith.constant 0 : index
    %c0_1 = arith.constant 0 : index
    %3 = vector.load %arg1[%c0, %c0_1] : memref<512x128xbf16, #tpu.memory_space<vmem>>, vector<512x128xbf16>
    %4 = arith.extf %3 : vector<512x128xbf16> to vector<512x128xf32>
    %c0_2 = arith.constant 0 : index
    %c0_3 = arith.constant 0 : index
    %5 = vector.load %arg2[%c0_2, %c0_3] : memref<128x128xbf16, #tpu.memory_space<vmem>>, vector<128x128xbf16>
    %6 = arith.extf %5 : vector<128x128xbf16> to vector<128x128xf32>
    %cst = arith.constant dense<0.000000e+00> : vector<512x128xf32>
    %7 = tpu.matmul %4, %6, %cst {dimension_numbers = #tpu.dot_dimension_numbers<[1], [0], [0], [1], [0, 0, 1, 1], [], []>} : vector<512x128xf32>, vector<128x128xf32>, vector<512x128xf32> -> vector<512x128xf32>
    %c0_4 = arith.constant 0 : index
    %c0_5 = arith.constant 0 : index
    %8 = vector.load %arg7[%c0_4, %c0_5] : memref<1x128xf32, #tpu.memory_space<vmem>>, vector<1x128xf32>
    %cst_6 = arith.constant dense<0.000000e+00> : vector<128xf32>
    %9 = vector.multi_reduction <add>, %7, %cst_6 [0] : vector<512x128xf32> to vector<128xf32>
    %10 = vector.shape_cast %9 : vector<128xf32> to vector<1x128xf32>
    %11 = arith.addf %8, %10 : vector<1x128xf32>
    %c0_7 = arith.constant 0 : index
    %c0_8 = arith.constant 0 : index
    %12 = vector.load %arg7[%c0_7, %c0_8] : memref<1x128xf32, #tpu.memory_space<vmem>>, vector<1x128xf32>
    tpu.vector_store %arg7[%c0_7, %c0_8], %11 {strides = array<i32>} : memref<1x128xf32, #tpu.memory_space<vmem>>, vector<1x128xf32>,
    %c0_9 = arith.constant 0 : index
    %c0_10 = arith.constant 0 : index
    %13 = vector.load %arg8[%c0_9, %c0_10] : memref<1x128xf32, #tpu.memory_space<vmem>>, vector<1x128xf32>
    %14 = arith.mulf %7, %7 : vector<512x128xf32>
    %cst_11 = arith.constant dense<0.000000e+00> : vector<128xf32>
    %15 = vector.multi_reduction <add>, %14, %cst_11 [0] : vector<512x128xf32> to vector<128xf32>
    %16 = vector.shape_cast %15 : vector<128xf32> to vector<1x128xf32>
    %17 = arith.addf %13, %16 : vector<1x128xf32>
    %c0_12 = arith.constant 0 : index
    %c0_13 = arith.constant 0 : index
    %18 = vector.load %arg8[%c0_12, %c0_13] : memref<1x128xf32, #tpu.memory_space<vmem>>, vector<1x128xf32>
    tpu.vector_store %arg8[%c0_12, %c0_13], %17 {strides = array<i32>} : memref<1x128xf32, #tpu.memory_space<vmem>>, vector<1x128xf32>,
    %c512_i32 = arith.constant 512 : i32
    %19 = arith.muli %arg0, %c512_i32 : i32
    %20 = arith.index_cast %19 : i32 to index
    %c0_14 = arith.constant 0 : index
    %21 = vector.load %arg6[%20, %c0_14] : memref<512x128xf32, #tpu.memory_space<vmem>>, vector<512x128xf32>
    tpu.vector_store %arg6[%20, %c0_14], %7 {strides = array<i32>} : memref<512x128xf32, #tpu.memory_space<vmem>>, vector<512x128xf32>,
    %c0_i32_15 = arith.constant 0 : i32
    %22 = arith.cmpi eq, %arg0, %c0_i32_15 : i32
    %23 = arith.extui %22 : i1 to i32
    %c0_i32_16 = arith.constant 0 : i32
    %24 = arith.cmpi ne, %23, %c0_i32_16 : i32
    scf.if %24 {
      %c0_17 = arith.constant 0 : index
      %c0_18 = arith.constant 0 : index
      %25 = vector.load %arg7[%c0_17, %c0_18] : memref<1x128xf32, #tpu.memory_space<vmem>>, vector<1x128xf32>
      %cst_19 = arith.constant 0.001953125 : f32
      %26 = vector.broadcast %cst_19 : f32 to vector<1x128xf32>
      %27 = arith.mulf %25, %26 : vector<1x128xf32>
      %c0_20 = arith.constant 0 : index
      %c0_21 = arith.constant 0 : index
      %28 = vector.load %arg8[%c0_20, %c0_21] : memref<1x128xf32, #tpu.memory_space<vmem>>, vector<1x128xf32>
      %cst_22 = arith.constant 0.001953125 : f32
      %29 = vector.broadcast %cst_22 : f32 to vector<1x128xf32>
      %30 = arith.mulf %28, %29 : vector<1x128xf32>
      %31 = arith.mulf %27, %27 : vector<1x128xf32>
      %32 = arith.subf %30, %31 : vector<1x128xf32>
      %cst_23 = arith.constant 0.000000e+00 : f32
      %33 = vector.broadcast %cst_23 : f32 to vector<1x128xf32>
      %34 = arith.maximumf %32, %33 : vector<1x128xf32>
      %c0_24 = arith.constant 0 : index
      %c0_25 = arith.constant 0 : index
      %35 = vector.load %arg3[%c0_24, %c0_25] : memref<1x128xf32, #tpu.memory_space<vmem>>, vector<1x128xf32>
      %cst_26 = arith.constant 9.99999974E-6 : f32
      %36 = vector.broadcast %cst_26 : f32 to vector<1x128xf32>
      %37 = arith.addf %34, %36 : vector<1x128xf32>
      %38 = math.rsqrt %37 : vector<1x128xf32>
      %39 = arith.mulf %35, %38 : vector<1x128xf32>
      %c0_27 = arith.constant 0 : index
      %c0_28 = arith.constant 0 : index
      %40 = vector.load %arg4[%c0_27, %c0_28] : memref<1x128xf32, #tpu.memory_space<vmem>>, vector<1x128xf32>
      %41 = arith.mulf %27, %39 : vector<1x128xf32>
      %42 = arith.subf %40, %41 : vector<1x128xf32>
      %c0_29 = arith.constant 0 : index
      %c0_30 = arith.constant 0 : index
      %43 = vector.load %arg6[%c0_29, %c0_30] : memref<512x128xf32, #tpu.memory_space<vmem>>, vector<512x128xf32>
      %44 = vector.broadcast %39 : vector<1x128xf32> to vector<512x128xf32>
      %45 = arith.mulf %43, %44 : vector<512x128xf32>
      %46 = vector.broadcast %42 : vector<1x128xf32> to vector<512x128xf32>
      %47 = arith.addf %45, %46 : vector<512x128xf32>
      %cst_31 = arith.constant 0.000000e+00 : f32
      %48 = vector.broadcast %cst_31 : f32 to vector<512x128xf32>
      %49 = arith.cmpf ogt, %47, %48 : vector<512x128xf32>
      %cst_32 = arith.constant 2.000000e-01 : f32
      %50 = vector.broadcast %cst_32 : f32 to vector<512x128xf32>
      %51 = arith.mulf %50, %47 : vector<512x128xf32>
      %52 = arith.select %49, %47, %51 : vector<512x128xi1>, vector<512x128xf32>
      %53 = arith.truncf %52 : vector<512x128xf32> to vector<512x128xbf16>
      %c0_33 = arith.constant 0 : index
      %c0_34 = arith.constant 0 : index
      %54 = vector.load %arg5[%c0_33, %c0_34] : memref<512x128xbf16, #tpu.memory_space<vmem>>, vector<512x128xbf16>
      tpu.vector_store %arg5[%c0_33, %c0_34], %53 {strides = array<i32>} : memref<512x128xbf16, #tpu.memory_space<vmem>>, vector<512x128xbf16>,
    } else {
    }
    return
  }
  func.func @transform_0(%arg0: i32) -> (i32, i32) {
    %c0_i32 = arith.constant 0 : i32
    %c0_i32_0 = arith.constant 0 : i32
    return %arg0, %c0_i32 : i32, i32
  }
  func.func @transform_1(%arg0: i32) -> (i32, i32) {
    %c0_i32 = arith.constant 0 : i32
    %c0_i32_0 = arith.constant 0 : i32
    %c0_i32_1 = arith.constant 0 : i32
    return %c0_i32, %c0_i32_0 : i32, i32
  }
  func.func @transform_2(%arg0: i32) -> (i32, i32) {
    %c0_i32 = arith.constant 0 : i32
    %c0_i32_0 = arith.constant 0 : i32
    %c0_i32_1 = arith.constant 0 : i32
    return %c0_i32, %c0_i32_0 : i32, i32
  }
  func.func @transform_3(%arg0: i32) -> (i32, i32) {
    %c0_i32 = arith.constant 0 : i32
    %c0_i32_0 = arith.constant 0 : i32
    %c0_i32_1 = arith.constant 0 : i32
    return %c0_i32, %c0_i32_0 : i32, i32
  }
  func.func @transform_4(%arg0: i32) -> (i32, i32) {
    %c0_i32 = arith.constant 0 : i32
    %c0_i32_0 = arith.constant 0 : i32
    %c0_i32_1 = arith.constant 0 : i32
    return %c0_i32, %c0_i32_0 : i32, i32
  }
}

module attributes {stable_mosaic.version = 11 : i64} {
  func.func @kernel(%arg0: i32, %arg1: memref<128x256xbf16, #tpu.memory_space<vmem>>, %arg2: memref<256x128xbf16, #tpu.memory_space<vmem>>, %arg3: memref<1x128xf32, #tpu.memory_space<vmem>>, %arg4: memref<1x128xf32, #tpu.memory_space<vmem>>, %arg5: memref<128x128xbf16, #tpu.memory_space<vmem>>, %arg6: memref<128x128xf32, #tpu.memory_space<vmem>>, %arg7: memref<1x128xf32, #tpu.memory_space<vmem>>, %arg8: memref<1x128xf32, #tpu.memory_space<vmem>>) attributes {dimension_semantics = [#tpu.dimension_semantics<arbitrary>], iteration_bounds = array<i64: 1>, scalar_prefetch = 0 : i64, scratch_operands = 3 : i64, tpu.core_type = #tpu.core_type<tc>, window_params = [{transform_indices = @transform_0, window_bounds = array<i64: 128, 256>}, {pipeline_mode = #tpu.pipeline_mode<synchronous>, transform_indices = @transform_1, window_bounds = array<i64: 256, 128>}, {pipeline_mode = #tpu.pipeline_mode<synchronous>, transform_indices = @transform_2, window_bounds = array<i64: 1, 128>}, {pipeline_mode = #tpu.pipeline_mode<synchronous>, transform_indices = @transform_3, window_bounds = array<i64: 1, 128>}, {pipeline_mode = #tpu.pipeline_mode<synchronous>, transform_indices = @transform_4, window_bounds = array<i64: 128, 128>}]} {
    %c0_i32 = arith.constant 0 : i32
    %0 = arith.cmpi eq, %arg0, %c0_i32 : i32
    %1 = arith.extui %0 : i1 to i32
    %c0_i32_0 = arith.constant 0 : i32
    %2 = arith.cmpi ne, %1, %c0_i32_0 : i32
    scf.if %2 {
      %cst_17 = arith.constant 0.000000e+00 : f32
      %25 = vector.broadcast %cst_17 : f32 to vector<1x128xf32>
      %c0_18 = arith.constant 0 : index
      %c0_19 = arith.constant 0 : index
      %26 = vector.load %arg7[%c0_18, %c0_19] : memref<1x128xf32, #tpu.memory_space<vmem>>, vector<1x128xf32>
      tpu.vector_store %arg7[%c0_18, %c0_19], %25 {strides = array<i32>} : memref<1x128xf32, #tpu.memory_space<vmem>>, vector<1x128xf32>,
      %cst_20 = arith.constant 0.000000e+00 : f32
      %27 = vector.broadcast %cst_20 : f32 to vector<1x128xf32>
      %c0_21 = arith.constant 0 : index
      %c0_22 = arith.constant 0 : index
      %28 = vector.load %arg8[%c0_21, %c0_22] : memref<1x128xf32, #tpu.memory_space<vmem>>, vector<1x128xf32>
      tpu.vector_store %arg8[%c0_21, %c0_22], %27 {strides = array<i32>} : memref<1x128xf32, #tpu.memory_space<vmem>>, vector<1x128xf32>,
    } else {
    }
    %c0 = arith.constant 0 : index
    %c0_1 = arith.constant 0 : index
    %3 = vector.load %arg1[%c0, %c0_1] : memref<128x256xbf16, #tpu.memory_space<vmem>>, vector<128x256xbf16>
    %4 = arith.extf %3 : vector<128x256xbf16> to vector<128x256xf32>
    %c0_2 = arith.constant 0 : index
    %c0_3 = arith.constant 0 : index
    %5 = vector.load %arg2[%c0_2, %c0_3] : memref<256x128xbf16, #tpu.memory_space<vmem>>, vector<256x128xbf16>
    %6 = arith.extf %5 : vector<256x128xbf16> to vector<256x128xf32>
    %cst = arith.constant dense<0.000000e+00> : vector<128x128xf32>
    %7 = tpu.matmul %4, %6, %cst {dimension_numbers = #tpu.dot_dimension_numbers<[1], [0], [0], [1], [0, 0, 1, 1], [], []>} : vector<128x256xf32>, vector<256x128xf32>, vector<128x128xf32> -> vector<128x128xf32>
    %c0_4 = arith.constant 0 : index
    %c0_5 = arith.constant 0 : index
    %8 = vector.load %arg7[%c0_4, %c0_5] : memref<1x128xf32, #tpu.memory_space<vmem>>, vector<1x128xf32>
    %cst_6 = arith.constant dense<0.000000e+00> : vector<128xf32>
    %9 = vector.multi_reduction <add>, %7, %cst_6 [0] : vector<128x128xf32> to vector<128xf32>
    %10 = vector.shape_cast %9 : vector<128xf32> to vector<1x128xf32>
    %11 = arith.addf %8, %10 : vector<1x128xf32>
    %c0_7 = arith.constant 0 : index
    %c0_8 = arith.constant 0 : index
    %12 = vector.load %arg7[%c0_7, %c0_8] : memref<1x128xf32, #tpu.memory_space<vmem>>, vector<1x128xf32>
    tpu.vector_store %arg7[%c0_7, %c0_8], %11 {strides = array<i32>} : memref<1x128xf32, #tpu.memory_space<vmem>>, vector<1x128xf32>,
    %c0_9 = arith.constant 0 : index
    %c0_10 = arith.constant 0 : index
    %13 = vector.load %arg8[%c0_9, %c0_10] : memref<1x128xf32, #tpu.memory_space<vmem>>, vector<1x128xf32>
    %14 = arith.mulf %7, %7 : vector<128x128xf32>
    %cst_11 = arith.constant dense<0.000000e+00> : vector<128xf32>
    %15 = vector.multi_reduction <add>, %14, %cst_11 [0] : vector<128x128xf32> to vector<128xf32>
    %16 = vector.shape_cast %15 : vector<128xf32> to vector<1x128xf32>
    %17 = arith.addf %13, %16 : vector<1x128xf32>
    %c0_12 = arith.constant 0 : index
    %c0_13 = arith.constant 0 : index
    %18 = vector.load %arg8[%c0_12, %c0_13] : memref<1x128xf32, #tpu.memory_space<vmem>>, vector<1x128xf32>
    tpu.vector_store %arg8[%c0_12, %c0_13], %17 {strides = array<i32>} : memref<1x128xf32, #tpu.memory_space<vmem>>, vector<1x128xf32>,
    %c128_i32 = arith.constant 128 : i32
    %19 = arith.muli %arg0, %c128_i32 : i32
    %20 = arith.index_cast %19 : i32 to index
    %c0_14 = arith.constant 0 : index
    %21 = vector.load %arg6[%20, %c0_14] : memref<128x128xf32, #tpu.memory_space<vmem>>, vector<128x128xf32>
    tpu.vector_store %arg6[%20, %c0_14], %7 {strides = array<i32>} : memref<128x128xf32, #tpu.memory_space<vmem>>, vector<128x128xf32>,
    %c0_i32_15 = arith.constant 0 : i32
    %22 = arith.cmpi eq, %arg0, %c0_i32_15 : i32
    %23 = arith.extui %22 : i1 to i32
    %c0_i32_16 = arith.constant 0 : i32
    %24 = arith.cmpi ne, %23, %c0_i32_16 : i32
    scf.if %24 {
      %c0_17 = arith.constant 0 : index
      %c0_18 = arith.constant 0 : index
      %25 = vector.load %arg7[%c0_17, %c0_18] : memref<1x128xf32, #tpu.memory_space<vmem>>, vector<1x128xf32>
      %cst_19 = arith.constant 7.812500e-03 : f32
      %26 = vector.broadcast %cst_19 : f32 to vector<1x128xf32>
      %27 = arith.mulf %25, %26 : vector<1x128xf32>
      %c0_20 = arith.constant 0 : index
      %c0_21 = arith.constant 0 : index
      %28 = vector.load %arg8[%c0_20, %c0_21] : memref<1x128xf32, #tpu.memory_space<vmem>>, vector<1x128xf32>
      %cst_22 = arith.constant 7.812500e-03 : f32
      %29 = vector.broadcast %cst_22 : f32 to vector<1x128xf32>
      %30 = arith.mulf %28, %29 : vector<1x128xf32>
      %31 = arith.mulf %27, %27 : vector<1x128xf32>
      %32 = arith.subf %30, %31 : vector<1x128xf32>
      %cst_23 = arith.constant 0.000000e+00 : f32
      %33 = vector.broadcast %cst_23 : f32 to vector<1x128xf32>
      %34 = arith.maximumf %32, %33 : vector<1x128xf32>
      %c0_24 = arith.constant 0 : index
      %c0_25 = arith.constant 0 : index
      %35 = vector.load %arg3[%c0_24, %c0_25] : memref<1x128xf32, #tpu.memory_space<vmem>>, vector<1x128xf32>
      %cst_26 = arith.constant 9.99999974E-6 : f32
      %36 = vector.broadcast %cst_26 : f32 to vector<1x128xf32>
      %37 = arith.addf %34, %36 : vector<1x128xf32>
      %38 = math.rsqrt %37 : vector<1x128xf32>
      %39 = arith.mulf %35, %38 : vector<1x128xf32>
      %c0_27 = arith.constant 0 : index
      %c0_28 = arith.constant 0 : index
      %40 = vector.load %arg4[%c0_27, %c0_28] : memref<1x128xf32, #tpu.memory_space<vmem>>, vector<1x128xf32>
      %41 = arith.mulf %27, %39 : vector<1x128xf32>
      %42 = arith.subf %40, %41 : vector<1x128xf32>
      %c0_29 = arith.constant 0 : index
      %c0_30 = arith.constant 0 : index
      %43 = vector.load %arg6[%c0_29, %c0_30] : memref<128x128xf32, #tpu.memory_space<vmem>>, vector<128x128xf32>
      %44 = vector.broadcast %39 : vector<1x128xf32> to vector<128x128xf32>
      %45 = arith.mulf %43, %44 : vector<128x128xf32>
      %46 = vector.broadcast %42 : vector<1x128xf32> to vector<128x128xf32>
      %47 = arith.addf %45, %46 : vector<128x128xf32>
      %cst_31 = arith.constant 0.000000e+00 : f32
      %48 = vector.broadcast %cst_31 : f32 to vector<128x128xf32>
      %49 = arith.cmpf ogt, %47, %48 : vector<128x128xf32>
      %cst_32 = arith.constant 2.000000e-01 : f32
      %50 = vector.broadcast %cst_32 : f32 to vector<128x128xf32>
      %51 = arith.mulf %50, %47 : vector<128x128xf32>
      %52 = arith.select %49, %47, %51 : vector<128x128xi1>, vector<128x128xf32>
      %53 = arith.truncf %52 : vector<128x128xf32> to vector<128x128xbf16>
      %c0_33 = arith.constant 0 : index
      %c0_34 = arith.constant 0 : index
      %54 = vector.load %arg5[%c0_33, %c0_34] : memref<128x128xbf16, #tpu.memory_space<vmem>>, vector<128x128xbf16>
      tpu.vector_store %arg5[%c0_33, %c0_34], %53 {strides = array<i32>} : memref<128x128xbf16, #tpu.memory_space<vmem>>, vector<128x128xbf16>,
    } else {
    }
    return
  }
  func.func @transform_0(%arg0: i32) -> (i32, i32) {
    %c0_i32 = arith.constant 0 : i32
    %c0_i32_0 = arith.constant 0 : i32
    return %arg0, %c0_i32 : i32, i32
  }
  func.func @transform_1(%arg0: i32) -> (i32, i32) {
    %c0_i32 = arith.constant 0 : i32
    %c0_i32_0 = arith.constant 0 : i32
    %c0_i32_1 = arith.constant 0 : i32
    return %c0_i32, %c0_i32_0 : i32, i32
  }
  func.func @transform_2(%arg0: i32) -> (i32, i32) {
    %c0_i32 = arith.constant 0 : i32
    %c0_i32_0 = arith.constant 0 : i32
    %c0_i32_1 = arith.constant 0 : i32
    return %c0_i32, %c0_i32_0 : i32, i32
  }
  func.func @transform_3(%arg0: i32) -> (i32, i32) {
    %c0_i32 = arith.constant 0 : i32
    %c0_i32_0 = arith.constant 0 : i32
    %c0_i32_1 = arith.constant 0 : i32
    return %c0_i32, %c0_i32_0 : i32, i32
  }
  func.func @transform_4(%arg0: i32) -> (i32, i32) {
    %c0_i32 = arith.constant 0 : i32
    %c0_i32_0 = arith.constant 0 : i32
    %c0_i32_1 = arith.constant 0 : i32
    return %c0_i32, %c0_i32_0 : i32, i32
  }
}

module attributes {stable_mosaic.version = 11 : i64} {
  func.func @kernel(%arg0: i32, %arg1: memref<32x512xbf16, #tpu.memory_space<vmem>>, %arg2: memref<512x128xbf16, #tpu.memory_space<vmem>>, %arg3: memref<1x128xf32, #tpu.memory_space<vmem>>, %arg4: memref<1x128xf32, #tpu.memory_space<vmem>>, %arg5: memref<32x128xbf16, #tpu.memory_space<vmem>>, %arg6: memref<32x128xf32, #tpu.memory_space<vmem>>, %arg7: memref<1x128xf32, #tpu.memory_space<vmem>>, %arg8: memref<1x128xf32, #tpu.memory_space<vmem>>) attributes {dimension_semantics = [#tpu.dimension_semantics<arbitrary>], iteration_bounds = array<i64: 1>, scalar_prefetch = 0 : i64, scratch_operands = 3 : i64, tpu.core_type = #tpu.core_type<tc>, window_params = [{transform_indices = @transform_0, window_bounds = array<i64: 32, 512>}, {pipeline_mode = #tpu.pipeline_mode<synchronous>, transform_indices = @transform_1, window_bounds = array<i64: 512, 128>}, {pipeline_mode = #tpu.pipeline_mode<synchronous>, transform_indices = @transform_2, window_bounds = array<i64: 1, 128>}, {pipeline_mode = #tpu.pipeline_mode<synchronous>, transform_indices = @transform_3, window_bounds = array<i64: 1, 128>}, {pipeline_mode = #tpu.pipeline_mode<synchronous>, transform_indices = @transform_4, window_bounds = array<i64: 32, 128>}]} {
    %c0_i32 = arith.constant 0 : i32
    %0 = arith.cmpi eq, %arg0, %c0_i32 : i32
    %1 = arith.extui %0 : i1 to i32
    %c0_i32_0 = arith.constant 0 : i32
    %2 = arith.cmpi ne, %1, %c0_i32_0 : i32
    scf.if %2 {
      %cst_17 = arith.constant 0.000000e+00 : f32
      %25 = vector.broadcast %cst_17 : f32 to vector<1x128xf32>
      %c0_18 = arith.constant 0 : index
      %c0_19 = arith.constant 0 : index
      %26 = vector.load %arg7[%c0_18, %c0_19] : memref<1x128xf32, #tpu.memory_space<vmem>>, vector<1x128xf32>
      tpu.vector_store %arg7[%c0_18, %c0_19], %25 {strides = array<i32>} : memref<1x128xf32, #tpu.memory_space<vmem>>, vector<1x128xf32>,
      %cst_20 = arith.constant 0.000000e+00 : f32
      %27 = vector.broadcast %cst_20 : f32 to vector<1x128xf32>
      %c0_21 = arith.constant 0 : index
      %c0_22 = arith.constant 0 : index
      %28 = vector.load %arg8[%c0_21, %c0_22] : memref<1x128xf32, #tpu.memory_space<vmem>>, vector<1x128xf32>
      tpu.vector_store %arg8[%c0_21, %c0_22], %27 {strides = array<i32>} : memref<1x128xf32, #tpu.memory_space<vmem>>, vector<1x128xf32>,
    } else {
    }
    %c0 = arith.constant 0 : index
    %c0_1 = arith.constant 0 : index
    %3 = vector.load %arg1[%c0, %c0_1] : memref<32x512xbf16, #tpu.memory_space<vmem>>, vector<32x512xbf16>
    %4 = arith.extf %3 : vector<32x512xbf16> to vector<32x512xf32>
    %c0_2 = arith.constant 0 : index
    %c0_3 = arith.constant 0 : index
    %5 = vector.load %arg2[%c0_2, %c0_3] : memref<512x128xbf16, #tpu.memory_space<vmem>>, vector<512x128xbf16>
    %6 = arith.extf %5 : vector<512x128xbf16> to vector<512x128xf32>
    %cst = arith.constant dense<0.000000e+00> : vector<32x128xf32>
    %7 = tpu.matmul %4, %6, %cst {dimension_numbers = #tpu.dot_dimension_numbers<[1], [0], [0], [1], [0, 0, 1, 1], [], []>} : vector<32x512xf32>, vector<512x128xf32>, vector<32x128xf32> -> vector<32x128xf32>
    %c0_4 = arith.constant 0 : index
    %c0_5 = arith.constant 0 : index
    %8 = vector.load %arg7[%c0_4, %c0_5] : memref<1x128xf32, #tpu.memory_space<vmem>>, vector<1x128xf32>
    %cst_6 = arith.constant dense<0.000000e+00> : vector<128xf32>
    %9 = vector.multi_reduction <add>, %7, %cst_6 [0] : vector<32x128xf32> to vector<128xf32>
    %10 = vector.shape_cast %9 : vector<128xf32> to vector<1x128xf32>
    %11 = arith.addf %8, %10 : vector<1x128xf32>
    %c0_7 = arith.constant 0 : index
    %c0_8 = arith.constant 0 : index
    %12 = vector.load %arg7[%c0_7, %c0_8] : memref<1x128xf32, #tpu.memory_space<vmem>>, vector<1x128xf32>
    tpu.vector_store %arg7[%c0_7, %c0_8], %11 {strides = array<i32>} : memref<1x128xf32, #tpu.memory_space<vmem>>, vector<1x128xf32>,
    %c0_9 = arith.constant 0 : index
    %c0_10 = arith.constant 0 : index
    %13 = vector.load %arg8[%c0_9, %c0_10] : memref<1x128xf32, #tpu.memory_space<vmem>>, vector<1x128xf32>
    %14 = arith.mulf %7, %7 : vector<32x128xf32>
    %cst_11 = arith.constant dense<0.000000e+00> : vector<128xf32>
    %15 = vector.multi_reduction <add>, %14, %cst_11 [0] : vector<32x128xf32> to vector<128xf32>
    %16 = vector.shape_cast %15 : vector<128xf32> to vector<1x128xf32>
    %17 = arith.addf %13, %16 : vector<1x128xf32>
    %c0_12 = arith.constant 0 : index
    %c0_13 = arith.constant 0 : index
    %18 = vector.load %arg8[%c0_12, %c0_13] : memref<1x128xf32, #tpu.memory_space<vmem>>, vector<1x128xf32>
    tpu.vector_store %arg8[%c0_12, %c0_13], %17 {strides = array<i32>} : memref<1x128xf32, #tpu.memory_space<vmem>>, vector<1x128xf32>,
    %c32_i32 = arith.constant 32 : i32
    %19 = arith.muli %arg0, %c32_i32 : i32
    %20 = arith.index_cast %19 : i32 to index
    %c0_14 = arith.constant 0 : index
    %21 = vector.load %arg6[%20, %c0_14] : memref<32x128xf32, #tpu.memory_space<vmem>>, vector<32x128xf32>
    tpu.vector_store %arg6[%20, %c0_14], %7 {strides = array<i32>} : memref<32x128xf32, #tpu.memory_space<vmem>>, vector<32x128xf32>,
    %c0_i32_15 = arith.constant 0 : i32
    %22 = arith.cmpi eq, %arg0, %c0_i32_15 : i32
    %23 = arith.extui %22 : i1 to i32
    %c0_i32_16 = arith.constant 0 : i32
    %24 = arith.cmpi ne, %23, %c0_i32_16 : i32
    scf.if %24 {
      %c0_17 = arith.constant 0 : index
      %c0_18 = arith.constant 0 : index
      %25 = vector.load %arg7[%c0_17, %c0_18] : memref<1x128xf32, #tpu.memory_space<vmem>>, vector<1x128xf32>
      %cst_19 = arith.constant 3.125000e-02 : f32
      %26 = vector.broadcast %cst_19 : f32 to vector<1x128xf32>
      %27 = arith.mulf %25, %26 : vector<1x128xf32>
      %c0_20 = arith.constant 0 : index
      %c0_21 = arith.constant 0 : index
      %28 = vector.load %arg8[%c0_20, %c0_21] : memref<1x128xf32, #tpu.memory_space<vmem>>, vector<1x128xf32>
      %cst_22 = arith.constant 3.125000e-02 : f32
      %29 = vector.broadcast %cst_22 : f32 to vector<1x128xf32>
      %30 = arith.mulf %28, %29 : vector<1x128xf32>
      %31 = arith.mulf %27, %27 : vector<1x128xf32>
      %32 = arith.subf %30, %31 : vector<1x128xf32>
      %cst_23 = arith.constant 0.000000e+00 : f32
      %33 = vector.broadcast %cst_23 : f32 to vector<1x128xf32>
      %34 = arith.maximumf %32, %33 : vector<1x128xf32>
      %c0_24 = arith.constant 0 : index
      %c0_25 = arith.constant 0 : index
      %35 = vector.load %arg3[%c0_24, %c0_25] : memref<1x128xf32, #tpu.memory_space<vmem>>, vector<1x128xf32>
      %cst_26 = arith.constant 9.99999974E-6 : f32
      %36 = vector.broadcast %cst_26 : f32 to vector<1x128xf32>
      %37 = arith.addf %34, %36 : vector<1x128xf32>
      %38 = math.rsqrt %37 : vector<1x128xf32>
      %39 = arith.mulf %35, %38 : vector<1x128xf32>
      %c0_27 = arith.constant 0 : index
      %c0_28 = arith.constant 0 : index
      %40 = vector.load %arg4[%c0_27, %c0_28] : memref<1x128xf32, #tpu.memory_space<vmem>>, vector<1x128xf32>
      %41 = arith.mulf %27, %39 : vector<1x128xf32>
      %42 = arith.subf %40, %41 : vector<1x128xf32>
      %c0_29 = arith.constant 0 : index
      %c0_30 = arith.constant 0 : index
      %43 = vector.load %arg6[%c0_29, %c0_30] : memref<32x128xf32, #tpu.memory_space<vmem>>, vector<32x128xf32>
      %44 = vector.broadcast %39 : vector<1x128xf32> to vector<32x128xf32>
      %45 = arith.mulf %43, %44 : vector<32x128xf32>
      %46 = vector.broadcast %42 : vector<1x128xf32> to vector<32x128xf32>
      %47 = arith.addf %45, %46 : vector<32x128xf32>
      %48 = arith.negf %47 : vector<32x128xf32>
      %49 = math.exp %48 : vector<32x128xf32>
      %cst_31 = arith.constant 1.000000e+00 : f32
      %50 = vector.broadcast %cst_31 : f32 to vector<32x128xf32>
      %51 = arith.addf %50, %49 : vector<32x128xf32>
      %52 = arith.divf %50, %51 : vector<32x128xf32>
      %53 = arith.truncf %52 : vector<32x128xf32> to vector<32x128xbf16>
      %c0_32 = arith.constant 0 : index
      %c0_33 = arith.constant 0 : index
      %54 = vector.load %arg5[%c0_32, %c0_33] : memref<32x128xbf16, #tpu.memory_space<vmem>>, vector<32x128xbf16>
      tpu.vector_store %arg5[%c0_32, %c0_33], %53 {strides = array<i32>} : memref<32x128xbf16, #tpu.memory_space<vmem>>, vector<32x128xbf16>,
    } else {
    }
    return
  }
  func.func @transform_0(%arg0: i32) -> (i32, i32) {
    %c0_i32 = arith.constant 0 : i32
    %c0_i32_0 = arith.constant 0 : i32
    return %arg0, %c0_i32 : i32, i32
  }
  func.func @transform_1(%arg0: i32) -> (i32, i32) {
    %c0_i32 = arith.constant 0 : i32
    %c0_i32_0 = arith.constant 0 : i32
    %c0_i32_1 = arith.constant 0 : i32
    return %c0_i32, %c0_i32_0 : i32, i32
  }
  func.func @transform_2(%arg0: i32) -> (i32, i32) {
    %c0_i32 = arith.constant 0 : i32
    %c0_i32_0 = arith.constant 0 : i32
    %c0_i32_1 = arith.constant 0 : i32
    return %c0_i32, %c0_i32_0 : i32, i32
  }
  func.func @transform_3(%arg0: i32) -> (i32, i32) {
    %c0_i32 = arith.constant 0 : i32
    %c0_i32_0 = arith.constant 0 : i32
    %c0_i32_1 = arith.constant 0 : i32
    return %c0_i32, %c0_i32_0 : i32, i32
  }
  func.func @transform_4(%arg0: i32) -> (i32, i32) {
    %c0_i32 = arith.constant 0 : i32
    %c0_i32_0 = arith.constant 0 : i32
    %c0_i32_1 = arith.constant 0 : i32
    return %c0_i32, %c0_i32_0 : i32, i32
  }
}

module attributes {stable_mosaic.version = 11 : i64} {
  func.func @_attn_kernel(%arg0: i32, %arg1: memref<1x128xf32, #tpu.memory_space<vmem>>, %arg2: memref<2x16x128xbf16, #tpu.memory_space<vmem>>, %arg3: memref<128x128xbf16, #tpu.memory_space<vmem>>, %arg4: memref<1x128xf32, #tpu.memory_space<vmem>>, %arg5: memref<128x128xbf16, #tpu.memory_space<vmem>>, %arg6: memref<1x128xf32, #tpu.memory_space<vmem>>, %arg7: memref<128x128xbf16, #tpu.memory_space<vmem>>, %arg8: memref<1x128xf32, #tpu.memory_space<vmem>>, %arg9: memref<2x16x128xbf16, #tpu.memory_space<vmem>>) attributes {dimension_semantics = [#tpu.dimension_semantics<arbitrary>], iteration_bounds = array<i64: 1>, scalar_prefetch = 0 : i64, scratch_operands = 0 : i64, tpu.core_type = #tpu.core_type<tc>, window_params = [{pipeline_mode = #tpu.pipeline_mode<synchronous>, transform_indices = @transform_0, window_bounds = array<i64: 1, 128>}, {pipeline_mode = #tpu.pipeline_mode<synchronous>, transform_indices = @transform_1, window_bounds = array<i64: 2, 16, 128>}, {pipeline_mode = #tpu.pipeline_mode<synchronous>, transform_indices = @transform_2, window_bounds = array<i64: 128, 128>}, {pipeline_mode = #tpu.pipeline_mode<synchronous>, transform_indices = @transform_3, window_bounds = array<i64: 1, 128>}, {pipeline_mode = #tpu.pipeline_mode<synchronous>, transform_indices = @transform_4, window_bounds = array<i64: 128, 128>}, {pipeline_mode = #tpu.pipeline_mode<synchronous>, transform_indices = @transform_5, window_bounds = array<i64: 1, 128>}, {pipeline_mode = #tpu.pipeline_mode<synchronous>, transform_indices = @transform_6, window_bounds = array<i64: 128, 128>}, {pipeline_mode = #tpu.pipeline_mode<synchronous>, transform_indices = @transform_7, window_bounds = array<i64: 1, 128>}, {pipeline_mode = #tpu.pipeline_mode<synchronous>, transform_indices = @transform_8, window_bounds = array<i64: 2, 16, 128>}]} {
    %c0 = arith.constant 0 : index
    %c0_0 = arith.constant 0 : index
    %c0_1 = arith.constant 0 : index
    %0 = vector.load %arg2[%c0, %c0_0, %c0_1] : memref<2x16x128xbf16, #tpu.memory_space<vmem>>, vector<2x16x128xbf16>
    %1 = arith.extf %0 : vector<2x16x128xbf16> to vector<2x16x128xf32>
    %2 = vector.shape_cast %1 : vector<2x16x128xf32> to vector<32x128xf32>
    %c0_2 = arith.constant 0 : index
    %c0_3 = arith.constant 0 : index
    %3 = vector.load %arg3[%c0_2, %c0_3] : memref<128x128xbf16, #tpu.memory_space<vmem>>, vector<128x128xbf16>
    %4 = arith.extf %3 : vector<128x128xbf16> to vector<128x128xf32>
    %c0_4 = arith.constant 0 : index
    %c0_5 = arith.constant 0 : index
    %5 = vector.load %arg5[%c0_4, %c0_5] : memref<128x128xbf16, #tpu.memory_space<vmem>>, vector<128x128xbf16>
    %6 = arith.extf %5 : vector<128x128xbf16> to vector<128x128xf32>
    %c0_6 = arith.constant 0 : index
    %c0_7 = arith.constant 0 : index
    %7 = vector.load %arg7[%c0_6, %c0_7] : memref<128x128xbf16, #tpu.memory_space<vmem>>, vector<128x128xbf16>
    %8 = arith.extf %7 : vector<128x128xbf16> to vector<128x128xf32>
    %cst = arith.constant dense<0.000000e+00> : vector<32x128xf32>
    %9 = tpu.matmul %2, %4, %cst {dimension_numbers = #tpu.dot_dimension_numbers<[1], [0], [0], [1], [0, 0, 1, 1], [], []>} : vector<32x128xf32>, vector<128x128xf32>, vector<32x128xf32> -> vector<32x128xf32>
    %c0_8 = arith.constant 0 : index
    %c0_9 = arith.constant 0 : index
    %10 = vector.load %arg4[%c0_8, %c0_9] : memref<1x128xf32, #tpu.memory_space<vmem>>, vector<1x128xf32>
    %11 = vector.broadcast %10 : vector<1x128xf32> to vector<32x128xf32>
    %12 = arith.addf %9, %11 : vector<32x128xf32>
    %13 = vector.shape_cast %12 : vector<32x128xf32> to vector<2x16x128xf32>
    %cst_10 = arith.constant dense<0.000000e+00> : vector<32x128xf32>
    %14 = tpu.matmul %2, %6, %cst_10 {dimension_numbers = #tpu.dot_dimension_numbers<[1], [0], [0], [1], [0, 0, 1, 1], [], []>} : vector<32x128xf32>, vector<128x128xf32>, vector<32x128xf32> -> vector<32x128xf32>
    %c0_11 = arith.constant 0 : index
    %c0_12 = arith.constant 0 : index
    %15 = vector.load %arg6[%c0_11, %c0_12] : memref<1x128xf32, #tpu.memory_space<vmem>>, vector<1x128xf32>
    %16 = vector.broadcast %15 : vector<1x128xf32> to vector<32x128xf32>
    %17 = arith.addf %14, %16 : vector<32x128xf32>
    %18 = vector.shape_cast %17 : vector<32x128xf32> to vector<2x16x128xf32>
    %cst_13 = arith.constant dense<0.000000e+00> : vector<32x128xf32>
    %19 = tpu.matmul %2, %8, %cst_13 {dimension_numbers = #tpu.dot_dimension_numbers<[1], [0], [0], [1], [0, 0, 1, 1], [], []>} : vector<32x128xf32>, vector<128x128xf32>, vector<32x128xf32> -> vector<32x128xf32>
    %c0_14 = arith.constant 0 : index
    %c0_15 = arith.constant 0 : index
    %20 = vector.load %arg8[%c0_14, %c0_15] : memref<1x128xf32, #tpu.memory_space<vmem>>, vector<1x128xf32>
    %21 = vector.broadcast %20 : vector<1x128xf32> to vector<32x128xf32>
    %22 = arith.addf %19, %21 : vector<32x128xf32>
    %23 = vector.shape_cast %22 : vector<32x128xf32> to vector<2x16x128xf32>
    "tpu.trace_start"() <{level = 10 : i32, message = "bqc,bkc->bqk"}> : () -> ()
    %cst_16 = arith.constant dense<0.000000e+00> : vector<2x16x16xf32>
    %24 = tpu.matmul %13, %18, %cst_16 {dimension_numbers = #tpu.dot_dimension_numbers<[2], [2], [1], [1], [0, 0, 0, 1, 1, 1], [0], [0]>} : vector<2x16x128xf32>, vector<2x16x128xf32>, vector<2x16x16xf32> -> vector<2x16x16xf32>
    "tpu.trace_stop"() : () -> ()
    %cst_17 = arith.constant dense<0xFF800000> : vector<2x16xf32>
    %25 = vector.multi_reduction <maximumf>, %24, %cst_17 [2] : vector<2x16x16xf32> to vector<2x16xf32>
    %26 = vector.shape_cast %25 : vector<2x16xf32> to vector<2x16x1xf32>
    %27 = vector.broadcast %26 : vector<2x16x1xf32> to vector<2x16x16xf32>
    %28 = arith.subf %24, %27 : vector<2x16x16xf32>
    %29 = math.exp %28 : vector<2x16x16xf32>
    %cst_18 = arith.constant dense<0.000000e+00> : vector<2x16xf32>
    %30 = vector.multi_reduction <add>, %29, %cst_18 [2] : vector<2x16x16xf32> to vector<2x16xf32>
    %31 = vector.shape_cast %30 : vector<2x16xf32> to vector<2x16x1xf32>
    %32 = vector.broadcast %31 : vector<2x16x1xf32> to vector<2x16x16xf32>
    %33 = arith.divf %29, %32 : vector<2x16x16xf32>
    "tpu.trace_start"() <{level = 10 : i32, message = "bqk,bkc->bqc"}> : () -> ()
    %cst_19 = arith.constant dense<0.000000e+00> : vector<2x16x128xf32>
    %34 = tpu.matmul %33, %23, %cst_19 {dimension_numbers = #tpu.dot_dimension_numbers<[2], [1], [1], [2], [0, 0, 0, 1, 1, 2], [0], [0]>} : vector<2x16x16xf32>, vector<2x16x128xf32>, vector<2x16x128xf32> -> vector<2x16x128xf32>
    "tpu.trace_stop"() : () -> ()
    %c0_20 = arith.constant 0 : index
    %c0_21 = arith.constant 0 : index
    %35 = vector.load %arg1[%c0_20, %c0_21] : memref<1x128xf32, #tpu.memory_space<vmem>>, vector<1x128xf32>
    %36 = vector.shape_cast %35 : vector<1x128xf32> to vector<1x1x128xf32>
    %37 = vector.broadcast %36 : vector<1x1x128xf32> to vector<2x16x128xf32>
    %38 = arith.mulf %37, %34 : vector<2x16x128xf32>
    %39 = arith.addf %38, %1 : vector<2x16x128xf32>
    %40 = arith.truncf %39 : vector<2x16x128xf32> to vector<2x16x128xbf16>
    %c0_22 = arith.constant 0 : index
    %c0_23 = arith.constant 0 : index
    %c0_24 = arith.constant 0 : index
    %41 = vector.load %arg9[%c0_22, %c0_23, %c0_24] : memref<2x16x128xbf16, #tpu.memory_space<vmem>>, vector<2x16x128xbf16>
    tpu.vector_store %arg9[%c0_22, %c0_23, %c0_24], %40 {strides = array<i32>} : memref<2x16x128xbf16, #tpu.memory_space<vmem>>, vector<2x16x128xbf16>,
    return
  }
  func.func @transform_0(%arg0: i32) -> (i32, i32) {
    %c0_i32 = arith.constant 0 : i32
    %c0_i32_0 = arith.constant 0 : i32
    %c0_i32_1 = arith.constant 0 : i32
    return %c0_i32, %c0_i32_0 : i32, i32
  }
  func.func @transform_1(%arg0: i32) -> (i32, i32, i32) {
    %c0_i32 = arith.constant 0 : i32
    %c0_i32_0 = arith.constant 0 : i32
    %c0_i32_1 = arith.constant 0 : i32
    %c0_i32_2 = arith.constant 0 : i32
    return %c0_i32, %c0_i32_0, %c0_i32_1 : i32, i32, i32
  }
  func.func @transform_2(%arg0: i32) -> (i32, i32) {
    %c0_i32 = arith.constant 0 : i32
    %c0_i32_0 = arith.constant 0 : i32
    %c0_i32_1 = arith.constant 0 : i32
    return %c0_i32, %c0_i32_0 : i32, i32
  }
  func.func @transform_3(%arg0: i32) -> (i32, i32) {
    %c0_i32 = arith.constant 0 : i32
    %c0_i32_0 = arith.constant 0 : i32
    %c0_i32_1 = arith.constant 0 : i32
    return %c0_i32, %c0_i32_0 : i32, i32
  }
  func.func @transform_4(%arg0: i32) -> (i32, i32) {
    %c0_i32 = arith.constant 0 : i32
    %c0_i32_0 = arith.constant 0 : i32
    %c0_i32_1 = arith.constant 0 : i32
    return %c0_i32, %c0_i32_0 : i32, i32
  }
  func.func @transform_5(%arg0: i32) -> (i32, i32) {
    %c0_i32 = arith.constant 0 : i32
    %c0_i32_0 = arith.constant 0 : i32
    %c0_i32_1 = arith.constant 0 : i32
    return %c0_i32, %c0_i32_0 : i32, i32
  }
  func.func @transform_6(%arg0: i32) -> (i32, i32) {
    %c0_i32 = arith.constant 0 : i32
    %c0_i32_0 = arith.constant 0 : i32
    %c0_i32_1 = arith.constant 0 : i32
    return %c0_i32, %c0_i32_0 : i32, i32
  }
  func.func @transform_7(%arg0: i32) -> (i32, i32) {
    %c0_i32 = arith.constant 0 : i32
    %c0_i32_0 = arith.constant 0 : i32
    %c0_i32_1 = arith.constant 0 : i32
    return %c0_i32, %c0_i32_0 : i32, i32
  }
  func.func @transform_8(%arg0: i32) -> (i32, i32, i32) {
    %c0_i32 = arith.constant 0 : i32
    %c0_i32_0 = arith.constant 0 : i32
    %c0_i32_1 = arith.constant 0 : i32
    %c0_i32_2 = arith.constant 0 : i32
    return %c0_i32, %c0_i32_0, %c0_i32_1 : i32, i32, i32
  }
}

module attributes {stable_mosaic.version = 11 : i64} {
  func.func @kernel(%arg0: i32, %arg1: memref<16x2048xbf16, #tpu.memory_space<vmem>>, %arg2: memref<2048x128xbf16, #tpu.memory_space<vmem>>, %arg3: memref<16x128xf32, #tpu.memory_space<vmem>>) attributes {dimension_semantics = [#tpu.dimension_semantics<parallel>], iteration_bounds = array<i64: 1>, scalar_prefetch = 0 : i64, scratch_operands = 0 : i64, tpu.core_type = #tpu.core_type<tc>, window_params = [{transform_indices = @transform_0, window_bounds = array<i64: 16, 2048>}, {pipeline_mode = #tpu.pipeline_mode<synchronous>, transform_indices = @transform_1, window_bounds = array<i64: 2048, 128>}, {transform_indices = @transform_2, window_bounds = array<i64: 16, 128>}]} {
    %c0 = arith.constant 0 : index
    %c0_0 = arith.constant 0 : index
    %0 = vector.load %arg1[%c0, %c0_0] : memref<16x2048xbf16, #tpu.memory_space<vmem>>, vector<16x2048xbf16>
    %1 = arith.extf %0 : vector<16x2048xbf16> to vector<16x2048xf32>
    %c0_1 = arith.constant 0 : index
    %c0_2 = arith.constant 0 : index
    %2 = vector.load %arg2[%c0_1, %c0_2] : memref<2048x128xbf16, #tpu.memory_space<vmem>>, vector<2048x128xbf16>
    %3 = arith.extf %2 : vector<2048x128xbf16> to vector<2048x128xf32>
    %cst = arith.constant dense<0.000000e+00> : vector<16x128xf32>
    %4 = tpu.matmul %1, %3, %cst {dimension_numbers = #tpu.dot_dimension_numbers<[1], [0], [0], [1], [0, 0, 1, 1], [], []>} : vector<16x2048xf32>, vector<2048x128xf32>, vector<16x128xf32> -> vector<16x128xf32>
    %5 = arith.negf %4 : vector<16x128xf32>
    %6 = math.exp %5 : vector<16x128xf32>
    %cst_3 = arith.constant 1.000000e+00 : f32
    %7 = vector.broadcast %cst_3 : f32 to vector<16x128xf32>
    %8 = arith.addf %7, %6 : vector<16x128xf32>
    %9 = arith.divf %7, %8 : vector<16x128xf32>
    %c0_4 = arith.constant 0 : index
    %c0_5 = arith.constant 0 : index
    %10 = vector.load %arg3[%c0_4, %c0_5] : memref<16x128xf32, #tpu.memory_space<vmem>>, vector<16x128xf32>
    tpu.vector_store %arg3[%c0_4, %c0_5], %9 {strides = array<i32>} : memref<16x128xf32, #tpu.memory_space<vmem>>, vector<16x128xf32>,
    return
  }
  func.func @transform_0(%arg0: i32) -> (i32, i32) {
    %c0_i32 = arith.constant 0 : i32
    %c0_i32_0 = arith.constant 0 : i32
    return %arg0, %c0_i32 : i32, i32
  }
  func.func @transform_1(%arg0: i32) -> (i32, i32) {
    %c0_i32 = arith.constant 0 : i32
    %c0_i32_0 = arith.constant 0 : i32
    %c0_i32_1 = arith.constant 0 : i32
    return %c0_i32, %c0_i32_0 : i32, i32
  }
  func.func @transform_2(%arg0: i32) -> (i32, i32) {
    %c0_i32 = arith.constant 0 : i32
    %c0_i32_0 = arith.constant 0 : i32
    return %arg0, %c0_i32 : i32, i32
  }
}

</mosaic_0001>

<llo_original>
// kernel: _lambda_.6
$region0: #{_lambda_.6}
  #allocation0 [shape = 'u32[]', space=smem, size = 0x4, offset = 0x4, fixed_abs, tag = 'smem constant byte address 0x4 - core index']
  #allocation1 [shape = 'u32[144,128]{1,0:T(1,128)}', space=vmem, size = 0x12000, scoped, tag = 'internal scratch']
  %s0 = inlined_call_operand.vmem [shape: bf16[2048,64], index: 0, kind: input, shape index: {}]
  %s1 = inlined_call_operand.vmem [shape: bf16[64,128], index: 1, kind: input, shape index: {}]
  %s2 = inlined_call_operand.vmem [shape: bf16[2048,128], index: 2, kind: output, shape index: {}]
  %s3 = sld [smem:[#allocation0]]
  $region41: #{_lambda_.6} parent=0
    _
  %s5 = ssub.s32 1, %s3
  %s6 = scalar_select 0, %s5, %s3
  loop: start=0, step=1, limit=6
  $region2: #{_lambda_.6} parent=0 // loop_pre_header
    _
  $region3: #{_lambda_.6} parent=0 // loop_header
    %s8 = sphi 0, %s12
    %p9 = scmp.ge.s32.totalorder %s8, 6
    %s18 = sphi 0, %s20
    %s21 = sphi 0, %s18
    %s22 = sphi 0, %s21
    %s38 = sphi 0, %s22
    %s42 = sphi 0, %s42
    %s44 = sphi 0, %s42
    %s45 = sphi 0, %s44
    %s59 = sphi 0, %s45
    %s65 = sphi 0, %s67
    %s68 = sphi 0, %s65
    %s69 = sphi 0, %s68
    %s85 = sphi 0, %s69
  $region4: #{_lambda_.6} parent=0 // loop_header_branch
    %11 = sbr.rel (%p9) target = $region8
  $region5: #{_lambda_.6} parent=0 // loop_body
    %s13 = ssub.s32 %s8, 1
    %s14 = ssub.s32 %s8, 2
    %s15 = sadd.s32 %s8, 1
    %s16 = ssub.s32 %s8, %s15
    %p17 = scmp.eq.s32.totalorder %s16, 0
    %s19 = sadd.s32 %s18, 1
    %s20 = scalar_select %p17, %s18, %s19
    %p23 = pneg %p17
    %p24 = scmp.eq.s32.totalorder %s8, 3
    %p25 = por %p23, %p24
    %p26 = scmp.ne.s32.totalorder %s18, %s21
    %p27 = scmp.eq.s32.totalorder %s8, 0
    %p28 = por %p26, %p27
    %p29 = scmp.ne.s32.totalorder %s18, %s21
    %p30 = scmp.eq.s32.totalorder %s13, 3
    %p31 = por %p29, %p30
    %p32 = scmp.ne.s32.totalorder %s21, %s22
    %p33 = scmp.eq.s32.totalorder %s13, 0
    %p34 = por %p32, %p33
    %p35 = scmp.ne.s32.totalorder %s21, %s22
    %p36 = scmp.eq.s32.totalorder %s14, 3
    %p37 = por %p35, %p36
    %p39 = scmp.ne.s32.totalorder %s22, %s38
    %p40 = scmp.eq.s32.totalorder %s14, 0
    %p41 = por %p39, %p40
    %s43 = sadd.s32 %s42, 1
    %p46 = scmp.eq.s32.totalorder %s8, 3
    %p47 = scmp.ne.s32.totalorder %s42, %s44
    %p48 = scmp.eq.s32.totalorder %s8, 0
    %p49 = por %p47, %p48
    %p50 = scmp.ne.s32.totalorder %s42, %s44
    %p51 = scmp.eq.s32.totalorder %s13, 3
    %p52 = por %p50, %p51
    %p53 = scmp.ne.s32.totalorder %s44, %s45
    %p54 = scmp.eq.s32.totalorder %s13, 0
    %p55 = por %p53, %p54
    %p56 = scmp.ne.s32.totalorder %s44, %s45
    %p57 = scmp.eq.s32.totalorder %s14, 3
    %p58 = por %p56, %p57
    %p60 = scmp.ne.s32.totalorder %s45, %s59
    %p61 = scmp.eq.s32.totalorder %s14, 0
    %p62 = por %p60, %p61
    %s63 = ssub.s32 %s8, %s15
    %p64 = scmp.eq.s32.totalorder %s63, 0
    %s66 = sadd.s32 %s65, 1
    %s67 = scalar_select %p64, %s65, %s66
    %p70 = pneg %p64
    %p71 = scmp.eq.s32.totalorder %s8, 3
    %p72 = por %p70, %p71
    %p73 = scmp.ne.s32.totalorder %s65, %s68
    %p74 = scmp.eq.s32.totalorder %s8, 0
    %p75 = por %p73, %p74
    %p76 = scmp.ne.s32.totalorder %s65, %s68
    %p77 = scmp.eq.s32.totalorder %s13, 3
    %p78 = por %p76, %p77
    %p79 = scmp.ne.s32.totalorder %s68, %s69
    %p80 = scmp.eq.s32.totalorder %s13, 0
    %p81 = por %p79, %p80
    %p82 = scmp.ne.s32.totalorder %s68, %s69
    %p83 = scmp.eq.s32.totalorder %s14, 3
    %p84 = por %p82, %p83
    %p86 = scmp.ne.s32.totalorder %s69, %s85
    %p87 = scmp.eq.s32.totalorder %s14, 0
    %p88 = por %p86, %p87
    %p89 = scmp.le.s32.totalorder 1, %s8
    %p90 = scmp.lt.s32.totalorder %s8, 5
    %p91 = pnand %p89, %p90
    %p92 = pneg %p91
    // Predicated region
    $region9: #{_lambda_.6} parent=5 // pred_check
      _
    $region10: #{_lambda_.6} parent=5 // pred_check_branch
      %94 = sbr.rel (%p91) target = $region12
    $region11: #{_lambda_.6} parent=5 // pred_region
      %s95 = ssub.s32 %s8, 1
      // Predicated region
      $region13: #{_lambda_.6} parent=11 // pred_check
        %p96 = pneg %p55
      $region14: #{_lambda_.6} parent=11 // pred_check_branch
        %98 = sbr.rel (%p96) target = $region16
      $region15: #{_lambda_.6} parent=11 // pred_region
        _
      $region16: #{_lambda_.6} parent=11 // pred_fallthru
        _
    $region12: #{_lambda_.6} parent=5 // pred_fallthru
      _
    %p99 = scmp.lt.s32.totalorder %s8, 4
    // Predicated region
    $region17: #{_lambda_.6} parent=5 // pred_check
      %p100 = pneg %p99
    $region18: #{_lambda_.6} parent=5 // pred_check_branch
      %102 = sbr.rel (%p100) target = $region20
    $region19: #{_lambda_.6} parent=5 // pred_region
      // Predicated region
      $region21: #{_lambda_.6} parent=19 // pred_check
        %p103 = pneg %p28
      $region22: #{_lambda_.6} parent=19 // pred_check_branch
        %105 = sbr.rel (%p103) target = $region24
      $region23: #{_lambda_.6} parent=19 // pred_region
        %s106 = smul.u32 64, %s8
        %p107 = scmp.lt.s32.totalorder %s106, 255
        %s108 = scalar_select %p107, %s106, 255
        %s109 = smul.addr %s108, 4
        %s110 = scalar_lea.vmem %s0, %s109
        %s111 = smul.u32 64, %s8
      $region24: #{_lambda_.6} parent=19 // pred_fallthru
        _
    $region20: #{_lambda_.6} parent=5 // pred_fallthru
      _
    %p112 = scmp.le.s32.totalorder 1, %s8
    %p113 = scmp.lt.s32.totalorder %s8, 5
    %p114 = pnand %p112, %p113
    %p115 = pneg %p114
    // Predicated region
    $region25: #{_lambda_.6} parent=5 // pred_check
      _
    $region26: #{_lambda_.6} parent=5 // pred_check_branch
      %117 = sbr.rel (%p114) target = $region28
    $region27: #{_lambda_.6} parent=5 // pred_region
      %s118 = ssub.s32 %s8, 1
      %s119 = smul.u32 64, %s13
      %p120 = scmp.lt.s32.totalorder %s119, 255
      %s121 = scalar_select %p120, %s119, 255
      %s122 = smul.addr %s121, 4
      %s123 = scalar_lea.vmem %s0, %s122
      %p124 = pneg %p34
      %p125 = pneg %p31
      %p126 = pneg %p55
      %p127 = pneg %p52
      %p128 = pneg %p81
      %p129 = pneg %p78
      %s130 = smul.u32 64, %s13
      %p131 = scmp.lt.s32.totalorder %s130, 255
      %s132 = scalar_select %p131, %s130, 255
      %s133 = smul.addr %s132, 4
      %s134 = scalar_lea.vmem %s2, %s133
      %s135 = smul.u32 64, %s13
      %p136 = scmp.lt.s32.totalorder %s135, 255
      %s137 = scalar_select %p136, %s135, 255
      %s138 = smul.addr %s137, 4
      %s139 = scalar_lea.vmem %s0, %s138
      %s140 = smul.u32 64, %s13
      %s141 = smul.u32 64, %s13
      %p142 = scmp.lt.s32.totalorder %s141, 255
      %s143 = scalar_select %p142, %s141, 255
      %s144 = smul.addr %s143, 4
      %s145 = scalar_lea.vmem %s2, %s144
      %s146 = smul.u32 64, %s13
      %v147 = vld [vmem:[%s139] sm:$0xf]
      %v148 = vld [vmem:[%s139 + $0x4] sm:$0xf]
      %v149 = vld [vmem:[%s139 + $0x8] sm:$0xf]
      %v150 = vld [vmem:[%s139 + $0xc] sm:$0xf]
      %v151 = vld [vmem:[%s139 + $0x10] sm:$0xf]
      %v152 = vld [vmem:[%s139 + $0x14] sm:$0xf]
      %v153 = vld [vmem:[%s139 + $0x18] sm:$0xf]
      %v154 = vld [vmem:[%s139 + $0x1c] sm:$0xf]
      %v155 = vld [vmem:[%s139 + $0x20] sm:$0xf]
      %v156 = vld [vmem:[%s139 + $0x24] sm:$0xf]
      %v157 = vld [vmem:[%s139 + $0x28] sm:$0xf]
      %v158 = vld [vmem:[%s139 + $0x2c] sm:$0xf]
      %v159 = vld [vmem:[%s139 + $0x30] sm:$0xf]
      %v160 = vld [vmem:[%s139 + $0x34] sm:$0xf]
      %v161 = vld [vmem:[%s139 + $0x38] sm:$0xf]
      %v162 = vld [vmem:[%s139 + $0x3c] sm:$0xf]
      %v163 = vld [vmem:[%s139 + $0x40] sm:$0xf]
      %v164 = vld [vmem:[%s139 + $0x44] sm:$0xf]
      %v165 = vld [vmem:[%s139 + $0x48] sm:$0xf]
      %v166 = vld [vmem:[%s139 + $0x4c] sm:$0xf]
      %v167 = vld [vmem:[%s139 + $0x50] sm:$0xf]
      %v168 = vld [vmem:[%s139 + $0x54] sm:$0xf]
      %v169 = vld [vmem:[%s139 + $0x58] sm:$0xf]
      %v170 = vld [vmem:[%s139 + $0x5c] sm:$0xf]
      %v171 = vld [vmem:[%s139 + $0x60] sm:$0xf]
      %v172 = vld [vmem:[%s139 + $0x64] sm:$0xf]
      %v173 = vld [vmem:[%s139 + $0x68] sm:$0xf]
      %v174 = vld [vmem:[%s139 + $0x6c] sm:$0xf]
      %v175 = vld [vmem:[%s139 + $0x70] sm:$0xf]
      %v176 = vld [vmem:[%s139 + $0x74] sm:$0xf]
      %v177 = vld [vmem:[%s139 + $0x78] sm:$0xf]
      %v178 = vld [vmem:[%s139 + $0x7c] sm:$0xf]
      %v179 = vld [vmem:[%s139 + $0x80] sm:$0xf]
      %v180 = vld [vmem:[%s139 + $0x84] sm:$0xf]
      %v181 = vld [vmem:[%s139 + $0x88] sm:$0xf]
      %v182 = vld [vmem:[%s139 + $0x8c] sm:$0xf]
      %v183 = vld [vmem:[%s139 + $0x90] sm:$0xf]
      %v184 = vld [vmem:[%s139 + $0x94] sm:$0xf]
      %v185 = vld [vmem:[%s139 + $0x98] sm:$0xf]
      %v186 = vld [vmem:[%s139 + $0x9c] sm:$0xf]
      %v187 = vld [vmem:[%s139 + $0xa0] sm:$0xf]
      %v188 = vld [vmem:[%s139 + $0xa4] sm:$0xf]
      %v189 = vld [vmem:[%s139 + $0xa8] sm:$0xf]
      %v190 = vld [vmem:[%s139 + $0xac] sm:$0xf]
      %v191 = vld [vmem:[%s139 + $0xb0] sm:$0xf]
      %v192 = vld [vmem:[%s139 + $0xb4] sm:$0xf]
      %v193 = vld [vmem:[%s139 + $0xb8] sm:$0xf]
      %v194 = vld [vmem:[%s139 + $0xbc] sm:$0xf]
      %v195 = vld [vmem:[%s139 + $0xc0] sm:$0xf]
      %v196 = vld [vmem:[%s139 + $0xc4] sm:$0xf]
      %v197 = vld [vmem:[%s139 + $0xc8] sm:$0xf]
      %v198 = vld [vmem:[%s139 + $0xcc] sm:$0xf]
      %v199 = vld [vmem:[%s139 + $0xd0] sm:$0xf]
      %v200 = vld [vmem:[%s139 + $0xd4] sm:$0xf]
      %v201 = vld [vmem:[%s139 + $0xd8] sm:$0xf]
      %v202 = vld [vmem:[%s139 + $0xdc] sm:$0xf]
      %v203 = vld [vmem:[%s139 + $0xe0] sm:$0xf]
      %v204 = vld [vmem:[%s139 + $0xe4] sm:$0xf]
      %v205 = vld [vmem:[%s139 + $0xe8] sm:$0xf]
      %v206 = vld [vmem:[%s139 + $0xec] sm:$0xf]
      %v207 = vld [vmem:[%s139 + $0xf0] sm:$0xf]
      %v208 = vld [vmem:[%s139 + $0xf4] sm:$0xf]
      %v209 = vld [vmem:[%s139 + $0xf8] sm:$0xf]
      %v210 = vld [vmem:[%s139 + $0xfc] sm:$0xf]
      %v211 = vunpack.c.l.bf16 %v147
      %v212 = vunpack.c.l.bf16 %v148
      %v213 = vunpack.c.l.bf16 %v149
      %v214 = vunpack.c.l.bf16 %v150
      %v215 = vunpack.c.l.bf16 %v151
      %v216 = vunpack.c.l.bf16 %v152
      %v217 = vunpack.c.l.bf16 %v153
      %v218 = vunpack.c.l.bf16 %v154
      %v219 = vunpack.c.l.bf16 %v155
      %v220 = vunpack.c.l.bf16 %v156
      %v221 = vunpack.c.l.bf16 %v157
      %v222 = vunpack.c.l.bf16 %v158
      %v223 = vunpack.c.l.bf16 %v159
      %v224 = vunpack.c.l.bf16 %v160
      %v225 = vunpack.c.l.bf16 %v161
      %v226 = vunpack.c.l.bf16 %v162
      %v227 = vunpack.c.l.bf16 %v163
      %v228 = vunpack.c.l.bf16 %v164
      %v229 = vunpack.c.l.bf16 %v165
      %v230 = vunpack.c.l.bf16 %v166
      %v231 = vunpack.c.l.bf16 %v167
      %v232 = vunpack.c.l.bf16 %v168
      %v233 = vunpack.c.l.bf16 %v169
      %v234 = vunpack.c.l.bf16 %v170
      %v235 = vunpack.c.l.bf16 %v171
      %v236 = vunpack.c.l.bf16 %v172
      %v237 = vunpack.c.l.bf16 %v173
      %v238 = vunpack.c.l.bf16 %v174
      %v239 = vunpack.c.l.bf16 %v175
      %v240 = vunpack.c.l.bf16 %v176
      %v241 = vunpack.c.l.bf16 %v177
      %v242 = vunpack.c.l.bf16 %v178
      %v243 = vunpack.c.l.bf16 %v179
      %v244 = vunpack.c.l.bf16 %v180
      %v245 = vunpack.c.l.bf16 %v181
      %v246 = vunpack.c.l.bf16 %v182
      %v247 = vunpack.c.l.bf16 %v183
      %v248 = vunpack.c.l.bf16 %v184
      %v249 = vunpack.c.l.bf16 %v185
      %v250 = vunpack.c.l.bf16 %v186
      %v251 = vunpack.c.l.bf16 %v187
      %v252 = vunpack.c.l.bf16 %v188
      %v253 = vunpack.c.l.bf16 %v189
      %v254 = vunpack.c.l.bf16 %v190
      %v255 = vunpack.c.l.bf16 %v191
      %v256 = vunpack.c.l.bf16 %v192
      %v257 = vunpack.c.l.bf16 %v193
      %v258 = vunpack.c.l.bf16 %v194
      %v259 = vunpack.c.l.bf16 %v195
      %v260 = vunpack.c.l.bf16 %v196
      %v261 = vunpack.c.l.bf16 %v197
      %v262 = vunpack.c.l.bf16 %v198
      %v263 = vunpack.c.l.bf16 %v199
      %v264 = vunpack.c.l.bf16 %v200
      %v265 = vunpack.c.l.bf16 %v201
      %v266 = vunpack.c.l.bf16 %v202
      %v267 = vunpack.c.l.bf16 %v203
      %v268 = vunpack.c.l.bf16 %v204
      %v269 = vunpack.c.l.bf16 %v205
      %v270 = vunpack.c.l.bf16 %v206
      %v271 = vunpack.c.l.bf16 %v207
      %v272 = vunpack.c.l.bf16 %v208
      %v273 = vunpack.c.l.bf16 %v209
      %v274 = vunpack.c.l.bf16 %v210
      %v275 = vld [vmem:[%s1] sm:$0xf]
      %v276 = vld [vmem:[%s1 + $0x4] sm:$0xf]
      %v277 = vld [vmem:[%s1 + $0x8] sm:$0xf]
      %v278 = vld [vmem:[%s1 + $0xc] sm:$0xf]
      %v279 = vld [vmem:[%s1 + $0x10] sm:$0xf]
      %v280 = vld [vmem:[%s1 + $0x14] sm:$0xf]
      %v281 = vld [vmem:[%s1 + $0x18] sm:$0xf]
      %v282 = vld [vmem:[%s1 + $0x1c] sm:$0xf]
      %v283 = vunpack.c.l.bf16 %v275
      %v284 = vunpack.c.l.bf16 %v276
      %v285 = vunpack.c.l.bf16 %v277
      %v286 = vunpack.c.l.bf16 %v278
      %v287 = vunpack.c.l.bf16 %v279
      %v288 = vunpack.c.l.bf16 %v280
      %v289 = vunpack.c.l.bf16 %v281
      %v290 = vunpack.c.l.bf16 %v282
      %vm291 = vcmask 523264
      %v293 = vsel %vm291, %v211, 0
      %v296 = vsel %vm291, %v212, 0
      %v299 = vsel %vm291, %v213, 0
      %v302 = vsel %vm291, %v214, 0
      %v305 = vsel %vm291, %v215, 0
      %v308 = vsel %vm291, %v216, 0
      %v311 = vsel %vm291, %v217, 0
      %v314 = vsel %vm291, %v218, 0
      %v317 = vsel %vm291, %v219, 0
      %v320 = vsel %vm291, %v220, 0
      %v323 = vsel %vm291, %v221, 0
      %v326 = vsel %vm291, %v222, 0
      %v329 = vsel %vm291, %v223, 0
      %v332 = vsel %vm291, %v224, 0
      %v335 = vsel %vm291, %v225, 0
      %v338 = vsel %vm291, %v226, 0
      %v341 = vsel %vm291, %v227, 0
      %v344 = vsel %vm291, %v228, 0
      %v347 = vsel %vm291, %v229, 0
      %v350 = vsel %vm291, %v230, 0
      %v353 = vsel %vm291, %v231, 0
      %v356 = vsel %vm291, %v232, 0
      %v359 = vsel %vm291, %v233, 0
      %v362 = vsel %vm291, %v234, 0
      %v365 = vsel %vm291, %v235, 0
      %v368 = vsel %vm291, %v236, 0
      %v371 = vsel %vm291, %v237, 0
      %v374 = vsel %vm291, %v238, 0
      %v377 = vsel %vm291, %v239, 0
      %v380 = vsel %vm291, %v240, 0
      %v383 = vsel %vm291, %v241, 0
      %v386 = vsel %vm291, %v242, 0
      %v389 = vsel %vm291, %v243, 0
      %v392 = vsel %vm291, %v244, 0
      %v395 = vsel %vm291, %v245, 0
      %v398 = vsel %vm291, %v246, 0
      %v401 = vsel %vm291, %v247, 0
      %v404 = vsel %vm291, %v248, 0
      %v407 = vsel %vm291, %v249, 0
      %v410 = vsel %vm291, %v250, 0
      %v413 = vsel %vm291, %v251, 0
      %v416 = vsel %vm291, %v252, 0
      %v419 = vsel %vm291, %v253, 0
      %v422 = vsel %vm291, %v254, 0
      %v425 = vsel %vm291, %v255, 0
      %v428 = vsel %vm291, %v256, 0
      %v431 = vsel %vm291, %v257, 0
      %v434 = vsel %vm291, %v258, 0
      %v437 = vsel %vm291, %v259, 0
      %v440 = vsel %vm291, %v260, 0
      %v443 = vsel %vm291, %v261, 0
      %v446 = vsel %vm291, %v262, 0
      %v449 = vsel %vm291, %v263, 0
      %v452 = vsel %vm291, %v264, 0
      %v455 = vsel %vm291, %v265, 0
      %v458 = vsel %vm291, %v266, 0
      %v461 = vsel %vm291, %v267, 0
      %v464 = vsel %vm291, %v268, 0
      %v467 = vsel %vm291, %v269, 0
      %v470 = vsel %vm291, %v270, 0
      %v473 = vsel %vm291, %v271, 0
      %v476 = vsel %vm291, %v272, 0
      %v479 = vsel %vm291, %v273, 0
      %v482 = vsel %vm291, %v274, 0
      %484 = vmatprep.subr.mxu0 0.0
      %485 = vmatpush1.msra.mxu0 %v283
      %486 = vmatprep.subr.mxu0 0.0
      %487 = vmatpush1.msra.mxu0 %v284
      %488 = vmatprep.subr.mxu0 0.0
      %489 = vmatpush1.msra.mxu0 %v285
      %490 = vmatprep.subr.mxu0 0.0
      %491 = vmatpush1.msra.mxu0 %v286
      %492 = vmatprep.subr.mxu0 0.0
      %493 = vmatpush1.msra.mxu0 %v287
      %494 = vmatprep.subr.mxu0 0.0
      %495 = vmatpush1.msra.mxu0 %v288
      %496 = vmatprep.subr.mxu0 0.0
      %497 = vmatpush1.msra.mxu0 %v289
      %498 = vmatprep.subr.mxu0 0.0
      %499 = vmatpush1.msra.mxu0 %v290
      %500 = vmatprep.subr.mxu0 0.0
      %501 = vmatpush1.msra.mxu0 0.0
      %502 = vmatprep.subr.mxu0 0.0
      %503 = vmatpush1.msra.mxu0 0.0
      %504 = vmatprep.subr.mxu0 0.0
      %505 = vmatpush1.msra.mxu0 0.0
      %506 = vmatprep.subr.mxu0 0.0
      %507 = vmatpush1.msra.mxu0 0.0
      %508 = vmatprep.subr.mxu0 0.0
      %509 = vmatpush1.msra.mxu0 0.0
      %510 = vmatprep.subr.mxu0 0.0
      %511 = vmatpush1.msra.mxu0 0.0
      %512 = vmatprep.subr.mxu0 0.0
      %513 = vmatpush1.msra.mxu0 0.0
      %514 = vmatprep.subr.mxu0 0.0
      %515 = vmatpush1.msra.mxu0 0.0
      %516 = vmatprep.subr.mxu0 0.0
      %517 = vmatpush1.msra.mxu0 0.0
      %518 = vmatprep.subr.mxu0 0.0
      %519 = vmatpush1.msra.mxu0 0.0
      %520 = vmatprep.subr.mxu0 0.0
      %521 = vmatpush1.msra.mxu0 0.0
      %522 = vmatprep.subr.mxu0 0.0
      %523 = vmatpush1.msra.mxu0 0.0
      %524 = vmatprep.subr.mxu0 0.0
      %525 = vmatpush1.msra.mxu0 0.0
      %526 = vmatprep.subr.mxu0 0.0
      %527 = vmatpush1.msra.mxu0 0.0
      %528 = vmatprep.subr.mxu0 0.0
      %529 = vmatpush1.msra.mxu0 0.0
      %530 = vmatprep.subr.mxu0 0.0
      %531 = vmatpush1.msra.mxu0 0.0
      %532 = vmatprep.subr.mxu0 0.0
      %533 = vmatpush1.msra.mxu0 0.0
      %534 = vmatprep.subr.mxu0 0.0
      %535 = vmatpush1.msra.mxu0 0.0
      %536 = vmatprep.subr.mxu0 0.0
      %537 = vmatpush1.msra.mxu0 0.0
      %538 = vmatprep.subr.mxu0 0.0
      %539 = vmatpush1.msra.mxu0 0.0
      %540 = vmatprep.subr.mxu0 0.0
      %541 = vmatpush1.msra.mxu0 0.0
      %542 = vmatprep.subr.mxu0 0.0
      %543 = vmatpush1.msra.mxu0 0.0
      %544 = vmatprep.subr.mxu0 0.0
      %545 = vmatpush1.msra.mxu0 0.0
      %546 = vmatprep.subr.mxu0 0.0
      %547 = vmatpush1.msra.mxu0 0.0
      %548 = vmatprep.mubr.f32.mxu0 0.0
      %549 = vmatmul.mubr.f32.gmra.mrb[0].mxu0 %v293
      %v550 = vpop.f32.mrb[0].mxu0
      %v551 = vadd.f32 0.0, %v550
      %v552 = vpop.f32.mrb[0].mxu0
      %553 = vmatprep.mubr.f32.mxu0 0.0
      %554 = vmatmul.mubr.f32.gmra.mrb[0].mxu0 %v296
      %v555 = vpop.f32.mrb[0].mxu0
      %v556 = vadd.f32 0.0, %v555
      %v557 = vpop.f32.mrb[0].mxu0
      %558 = vmatprep.mubr.f32.mxu0 0.0
      %559 = vmatmul.mubr.f32.gmra.mrb[0].mxu0 %v299
      %v560 = vpop.f32.mrb[0].mxu0
      %v561 = vadd.f32 0.0, %v560
      %v562 = vpop.f32.mrb[0].mxu0
      %563 = vmatprep.mubr.f32.mxu0 0.0
      %564 = vmatmul.mubr.f32.gmra.mrb[0].mxu0 %v302
      %v565 = vpop.f32.mrb[0].mxu0
      %v566 = vadd.f32 0.0, %v565
      %v567 = vpop.f32.mrb[0].mxu0
      %568 = vmatprep.mubr.f32.mxu0 0.0
      %569 = vmatmul.mubr.f32.gmra.mrb[0].mxu0 %v305
      %v570 = vpop.f32.mrb[0].mxu0
      %v571 = vadd.f32 0.0, %v570
      %v572 = vpop.f32.mrb[0].mxu0
      %573 = vmatprep.mubr.f32.mxu0 0.0
      %574 = vmatmul.mubr.f32.gmra.mrb[0].mxu0 %v308
      %v575 = vpop.f32.mrb[0].mxu0
      %v576 = vadd.f32 0.0, %v575
      %v577 = vpop.f32.mrb[0].mxu0
      %578 = vmatprep.mubr.f32.mxu0 0.0
      %579 = vmatmul.mubr.f32.gmra.mrb[0].mxu0 %v311
      %v580 = vpop.f32.mrb[0].mxu0
      %v581 = vadd.f32 0.0, %v580
      %v582 = vpop.f32.mrb[0].mxu0
      %583 = vmatprep.mubr.f32.mxu0 0.0
      %584 = vmatmul.mubr.f32.gmra.mrb[0].mxu0 %v314
      %v585 = vpop.f32.mrb[0].mxu0
      %v586 = vadd.f32 0.0, %v585
      %v587 = vpop.f32.mrb[0].mxu0
      %588 = vmatprep.mubr.f32.mxu0 0.0
      %589 = vmatmul.mubr.f32.gmra.mrb[0].mxu0 %v317
      %v590 = vpop.f32.mrb[0].mxu0
      %v591 = vadd.f32 0.0, %v590
      %v592 = vpop.f32.mrb[0].mxu0
      %593 = vmatprep.mubr.f32.mxu0 0.0
      %594 = vmatmul.mubr.f32.gmra.mrb[0].mxu0 %v320
      %v595 = vpop.f32.mrb[0].mxu0
      %v596 = vadd.f32 0.0, %v595
      %v597 = vpop.f32.mrb[0].mxu0
      %598 = vmatprep.mubr.f32.mxu0 0.0
      %599 = vmatmul.mubr.f32.gmra.mrb[0].mxu0 %v323
      %v600 = vpop.f32.mrb[0].mxu0
      %v601 = vadd.f32 0.0, %v600
      %v602 = vpop.f32.mrb[0].mxu0
      %603 = vmatprep.mubr.f32.mxu0 0.0
      %604 = vmatmul.mubr.f32.gmra.mrb[0].mxu0 %v326
      %v605 = vpop.f32.mrb[0].mxu0
      %v606 = vadd.f32 0.0, %v605
      %v607 = vpop.f32.mrb[0].mxu0
      %608 = vmatprep.mubr.f32.mxu0 0.0
      %609 = vmatmul.mubr.f32.gmra.mrb[0].mxu0 %v329
      %v610 = vpop.f32.mrb[0].mxu0
      %v611 = vadd.f32 0.0, %v610
      %v612 = vpop.f32.mrb[0].mxu0
      %613 = vmatprep.mubr.f32.mxu0 0.0
      %614 = vmatmul.mubr.f32.gmra.mrb[0].mxu0 %v332
      %v615 = vpop.f32.mrb[0].mxu0
      %v616 = vadd.f32 0.0, %v615
      %v617 = vpop.f32.mrb[0].mxu0
      %618 = vmatprep.mubr.f32.mxu0 0.0
      %619 = vmatmul.mubr.f32.gmra.mrb[0].mxu0 %v335
      %v620 = vpop.f32.mrb[0].mxu0
      %v621 = vadd.f32 0.0, %v620
      %v622 = vpop.f32.mrb[0].mxu0
      %623 = vmatprep.mubr.f32.mxu0 0.0
      %624 = vmatmul.mubr.f32.gmra.mrb[0].mxu0 %v338
      %v625 = vpop.f32.mrb[0].mxu0
      %v626 = vadd.f32 0.0, %v625
      %v627 = vpop.f32.mrb[0].mxu0
      %628 = vmatprep.mubr.f32.mxu0 0.0
      %629 = vmatmul.mubr.f32.gmra.mrb[0].mxu0 %v341
      %v630 = vpop.f32.mrb[0].mxu0
      %v631 = vadd.f32 0.0, %v630
      %v632 = vpop.f32.mrb[0].mxu0
      %633 = vmatprep.mubr.f32.mxu0 0.0
      %634 = vmatmul.mubr.f32.gmra.mrb[0].mxu0 %v344
      %v635 = vpop.f32.mrb[0].mxu0
      %v636 = vadd.f32 0.0, %v635
      %v637 = vpop.f32.mrb[0].mxu0
      %638 = vmatprep.mubr.f32.mxu0 0.0
      %639 = vmatmul.mubr.f32.gmra.mrb[0].mxu0 %v347
      %v640 = vpop.f32.mrb[0].mxu0
      %v641 = vadd.f32 0.0, %v640
      %v642 = vpop.f32.mrb[0].mxu0
      %643 = vmatprep.mubr.f32.mxu0 0.0
      %644 = vmatmul.mubr.f32.gmra.mrb[0].mxu0 %v350
      %v645 = vpop.f32.mrb[0].mxu0
      %v646 = vadd.f32 0.0, %v645
      %v647 = vpop.f32.mrb[0].mxu0
      %648 = vmatprep.mubr.f32.mxu0 0.0
      %649 = vmatmul.mubr.f32.gmra.mrb[0].mxu0 %v353
      %v650 = vpop.f32.mrb[0].mxu0
      %v651 = vadd.f32 0.0, %v650
      %v652 = vpop.f32.mrb[0].mxu0
      %653 = vmatprep.mubr.f32.mxu0 0.0
      %654 = vmatmul.mubr.f32.gmra.mrb[0].mxu0 %v356
      %v655 = vpop.f32.mrb[0].mxu0
      %v656 = vadd.f32 0.0, %v655
      %v657 = vpop.f32.mrb[0].mxu0
      %658 = vmatprep.mubr.f32.mxu0 0.0
      %659 = vmatmul.mubr.f32.gmra.mrb[0].mxu0 %v359
      %v660 = vpop.f32.mrb[0].mxu0
      %v661 = vadd.f32 0.0, %v660
      %v662 = vpop.f32.mrb[0].mxu0
      %663 = vmatprep.mubr.f32.mxu0 0.0
      %664 = vmatmul.mubr.f32.gmra.mrb[0].mxu0 %v362
      %v665 = vpop.f32.mrb[0].mxu0
      %v666 = vadd.f32 0.0, %v665
      %v667 = vpop.f32.mrb[0].mxu0
      %668 = vmatprep.mubr.f32.mxu0 0.0
      %669 = vmatmul.mubr.f32.gmra.mrb[0].mxu0 %v365
      %v670 = vpop.f32.mrb[0].mxu0
      %v671 = vadd.f32 0.0, %v670
      %v672 = vpop.f32.mrb[0].mxu0
      %673 = vmatprep.mubr.f32.mxu0 0.0
      %674 = vmatmul.mubr.f32.gmra.mrb[0].mxu0 %v368
      %v675 = vpop.f32.mrb[0].mxu0
      %v676 = vadd.f32 0.0, %v675
      %v677 = vpop.f32.mrb[0].mxu0
      %678 = vmatprep.mubr.f32.mxu0 0.0
      %679 = vmatmul.mubr.f32.gmra.mrb[0].mxu0 %v371
      %v680 = vpop.f32.mrb[0].mxu0
      %v681 = vadd.f32 0.0, %v680
      %v682 = vpop.f32.mrb[0].mxu0
      %683 = vmatprep.mubr.f32.mxu0 0.0
      %684 = vmatmul.mubr.f32.gmra.mrb[0].mxu0 %v374
      %v685 = vpop.f32.mrb[0].mxu0
      %v686 = vadd.f32 0.0, %v685
      %v687 = vpop.f32.mrb[0].mxu0
      %688 = vmatprep.mubr.f32.mxu0 0.0
      %689 = vmatmul.mubr.f32.gmra.mrb[0].mxu0 %v377
      %v690 = vpop.f32.mrb[0].mxu0
      %v691 = vadd.f32 0.0, %v690
      %v692 = vpop.f32.mrb[0].mxu0
      %693 = vmatprep.mubr.f32.mxu0 0.0
      %694 = vmatmul.mubr.f32.gmra.mrb[0].mxu0 %v380
      %v695 = vpop.f32.mrb[0].mxu0
      %v696 = vadd.f32 0.0, %v695
      %v697 = vpop.f32.mrb[0].mxu0
      %698 = vmatprep.mubr.f32.mxu0 0.0
      %699 = vmatmul.mubr.f32.gmra.mrb[0].mxu0 %v383
      %v700 = vpop.f32.mrb[0].mxu0
      %v701 = vadd.f32 0.0, %v700
      %v702 = vpop.f32.mrb[0].mxu0
      %703 = vmatprep.mubr.f32.mxu0 0.0
      %704 = vmatmul.mubr.f32.gmra.mrb[0].mxu0 %v386
      %v705 = vpop.f32.mrb[0].mxu0
      %v706 = vadd.f32 0.0, %v705
      %v707 = vpop.f32.mrb[0].mxu0
      %708 = vmatprep.mubr.f32.mxu0 0.0
      %709 = vmatmul.mubr.f32.gmra.mrb[0].mxu0 %v389
      %v710 = vpop.f32.mrb[0].mxu0
      %v711 = vadd.f32 0.0, %v710
      %v712 = vpop.f32.mrb[0].mxu0
      %713 = vmatprep.mubr.f32.mxu0 0.0
      %714 = vmatmul.mubr.f32.gmra.mrb[0].mxu0 %v392
      %v715 = vpop.f32.mrb[0].mxu0
      %v716 = vadd.f32 0.0, %v715
      %v717 = vpop.f32.mrb[0].mxu0
      %718 = vmatprep.mubr.f32.mxu0 0.0
      %719 = vmatmul.mubr.f32.gmra.mrb[0].mxu0 %v395
      %v720 = vpop.f32.mrb[0].mxu0
      %v721 = vadd.f32 0.0, %v720
      %v722 = vpop.f32.mrb[0].mxu0
      %723 = vmatprep.mubr.f32.mxu0 0.0
      %724 = vmatmul.mubr.f32.gmra.mrb[0].mxu0 %v398
      %v725 = vpop.f32.mrb[0].mxu0
      %v726 = vadd.f32 0.0, %v725
      %v727 = vpop.f32.mrb[0].mxu0
      %728 = vmatprep.mubr.f32.mxu0 0.0
      %729 = vmatmul.mubr.f32.gmra.mrb[0].mxu0 %v401
      %v730 = vpop.f32.mrb[0].mxu0
      %v731 = vadd.f32 0.0, %v730
      %v732 = vpop.f32.mrb[0].mxu0
      %733 = vmatprep.mubr.f32.mxu0 0.0
      %734 = vmatmul.mubr.f32.gmra.mrb[0].mxu0 %v404
      %v735 = vpop.f32.mrb[0].mxu0
      %v736 = vadd.f32 0.0, %v735
      %v737 = vpop.f32.mrb[0].mxu0
      %738 = vmatprep.mubr.f32.mxu0 0.0
      %739 = vmatmul.mubr.f32.gmra.mrb[0].mxu0 %v407
      %v740 = vpop.f32.mrb[0].mxu0
      %v741 = vadd.f32 0.0, %v740
      %v742 = vpop.f32.mrb[0].mxu0
      %743 = vmatprep.mubr.f32.mxu0 0.0
      %744 = vmatmul.mubr.f32.gmra.mrb[0].mxu0 %v410
      %v745 = vpop.f32.mrb[0].mxu0
      %v746 = vadd.f32 0.0, %v745
      %v747 = vpop.f32.mrb[0].mxu0
      %748 = vmatprep.mubr.f32.mxu0 0.0
      %749 = vmatmul.mubr.f32.gmra.mrb[0].mxu0 %v413
      %v750 = vpop.f32.mrb[0].mxu0
      %v751 = vadd.f32 0.0, %v750
      %v752 = vpop.f32.mrb[0].mxu0
      %753 = vmatprep.mubr.f32.mxu0 0.0
      %754 = vmatmul.mubr.f32.gmra.mrb[0].mxu0 %v416
      %v755 = vpop.f32.mrb[0].mxu0
      %v756 = vadd.f32 0.0, %v755
      %v757 = vpop.f32.mrb[0].mxu0
      %758 = vmatprep.mubr.f32.mxu0 0.0
      %759 = vmatmul.mubr.f32.gmra.mrb[0].mxu0 %v419
      %v760 = vpop.f32.mrb[0].mxu0
      %v761 = vadd.f32 0.0, %v760
      %v762 = vpop.f32.mrb[0].mxu0
      %763 = vmatprep.mubr.f32.mxu0 0.0
      %764 = vmatmul.mubr.f32.gmra.mrb[0].mxu0 %v422
      %v765 = vpop.f32.mrb[0].mxu0
      %v766 = vadd.f32 0.0, %v765
      %v767 = vpop.f32.mrb[0].mxu0
      %768 = vmatprep.mubr.f32.mxu0 0.0
      %769 = vmatmul.mubr.f32.gmra.mrb[0].mxu0 %v425
      %v770 = vpop.f32.mrb[0].mxu0
      %v771 = vadd.f32 0.0, %v770
      %v772 = vpop.f32.mrb[0].mxu0
      %773 = vmatprep.mubr.f32.mxu0 0.0
      %774 = vmatmul.mubr.f32.gmra.mrb[0].mxu0 %v428
      %v775 = vpop.f32.mrb[0].mxu0
      %v776 = vadd.f32 0.0, %v775
      %v777 = vpop.f32.mrb[0].mxu0
      %778 = vmatprep.mubr.f32.mxu0 0.0
      %779 = vmatmul.mubr.f32.gmra.mrb[0].mxu0 %v431
      %v780 = vpop.f32.mrb[0].mxu0
      %v781 = vadd.f32 0.0, %v780
      %v782 = vpop.f32.mrb[0].mxu0
      %783 = vmatprep.mubr.f32.mxu0 0.0
      %784 = vmatmul.mubr.f32.gmra.mrb[0].mxu0 %v434
      %v785 = vpop.f32.mrb[0].mxu0
      %v786 = vadd.f32 0.0, %v785
      %v787 = vpop.f32.mrb[0].mxu0
      %788 = vmatprep.mubr.f32.mxu0 0.0
      %789 = vmatmul.mubr.f32.gmra.mrb[0].mxu0 %v437
      %v790 = vpop.f32.mrb[0].mxu0
      %v791 = vadd.f32 0.0, %v790
      %v792 = vpop.f32.mrb[0].mxu0
      %793 = vmatprep.mubr.f32.mxu0 0.0
      %794 = vmatmul.mubr.f32.gmra.mrb[0].mxu0 %v440
      %v795 = vpop.f32.mrb[0].mxu0
      %v796 = vadd.f32 0.0, %v795
      %v797 = vpop.f32.mrb[0].mxu0
      %798 = vmatprep.mubr.f32.mxu0 0.0
      %799 = vmatmul.mubr.f32.gmra.mrb[0].mxu0 %v443
      %v800 = vpop.f32.mrb[0].mxu0
      %v801 = vadd.f32 0.0, %v800
      %v802 = vpop.f32.mrb[0].mxu0
      %803 = vmatprep.mubr.f32.mxu0 0.0
      %804 = vmatmul.mubr.f32.gmra.mrb[0].mxu0 %v446
      %v805 = vpop.f32.mrb[0].mxu0
      %v806 = vadd.f32 0.0, %v805
      %v807 = vpop.f32.mrb[0].mxu0
      %808 = vmatprep.mubr.f32.mxu0 0.0
      %809 = vmatmul.mubr.f32.gmra.mrb[0].mxu0 %v449
      %v810 = vpop.f32.mrb[0].mxu0
      %v811 = vadd.f32 0.0, %v810
      %v812 = vpop.f32.mrb[0].mxu0
      %813 = vmatprep.mubr.f32.mxu0 0.0
      %814 = vmatmul.mubr.f32.gmra.mrb[0].mxu0 %v452
      %v815 = vpop.f32.mrb[0].mxu0
      %v816 = vadd.f32 0.0, %v815
      %v817 = vpop.f32.mrb[0].mxu0
      %818 = vmatprep.mubr.f32.mxu0 0.0
      %819 = vmatmul.mubr.f32.gmra.mrb[0].mxu0 %v455
      %v820 = vpop.f32.mrb[0].mxu0
      %v821 = vadd.f32 0.0, %v820
      %v822 = vpop.f32.mrb[0].mxu0
      %823 = vmatprep.mubr.f32.mxu0 0.0
      %824 = vmatmul.mubr.f32.gmra.mrb[0].mxu0 %v458
      %v825 = vpop.f32.mrb[0].mxu0
      %v826 = vadd.f32 0.0, %v825
      %v827 = vpop.f32.mrb[0].mxu0
      %828 = vmatprep.mubr.f32.mxu0 0.0
      %829 = vmatmul.mubr.f32.gmra.mrb[0].mxu0 %v461
      %v830 = vpop.f32.mrb[0].mxu0
      %v831 = vadd.f32 0.0, %v830
      %v832 = vpop.f32.mrb[0].mxu0
      %833 = vmatprep.mubr.f32.mxu0 0.0
      %834 = vmatmul.mubr.f32.gmra.mrb[0].mxu0 %v464
      %v835 = vpop.f32.mrb[0].mxu0
      %v836 = vadd.f32 0.0, %v835
      %v837 = vpop.f32.mrb[0].mxu0
      %838 = vmatprep.mubr.f32.mxu0 0.0
      %839 = vmatmul.mubr.f32.gmra.mrb[0].mxu0 %v467
      %v840 = vpop.f32.mrb[0].mxu0
      %v841 = vadd.f32 0.0, %v840
      %v842 = vpop.f32.mrb[0].mxu0
      %843 = vmatprep.mubr.f32.mxu0 0.0
      %844 = vmatmul.mubr.f32.gmra.mrb[0].mxu0 %v470
      %v845 = vpop.f32.mrb[0].mxu0
      %v846 = vadd.f32 0.0, %v845
      %v847 = vpop.f32.mrb[0].mxu0
      %848 = vmatprep.mubr.f32.mxu0 0.0
      %849 = vmatmul.mubr.f32.gmra.mrb[0].mxu0 %v473
      %v850 = vpop.f32.mrb[0].mxu0
      %v851 = vadd.f32 0.0, %v850
      %v852 = vpop.f32.mrb[0].mxu0
      %853 = vmatprep.mubr.f32.mxu0 0.0
      %854 = vmatmul.mubr.f32.gmra.mrb[0].mxu0 %v476
      %v855 = vpop.f32.mrb[0].mxu0
      %v856 = vadd.f32 0.0, %v855
      %v857 = vpop.f32.mrb[0].mxu0
      %858 = vmatprep.mubr.f32.mxu0 0.0
      %859 = vmatmul.mubr.f32.gmra.mrb[0].mxu0 %v479
      %v860 = vpop.f32.mrb[0].mxu0
      %v861 = vadd.f32 0.0, %v860
      %v862 = vpop.f32.mrb[0].mxu0
      %863 = vmatprep.mubr.f32.mxu0 0.0
      %864 = vmatmul.mubr.f32.gmra.mrb[0].mxu0 %v482
      %v865 = vpop.f32.mrb[0].mxu0
      %v866 = vadd.f32 0.0, %v865
      %v867 = vpop.f32.mrb[0].mxu0
      %868 = vdwg.mxu0
      %vm869 = vcmp.gt.f32.partialorder %v551, 0.0
      %vm870 = vcmp.gt.f32.partialorder %v556, 0.0
      %vm871 = vcmp.gt.f32.partialorder %v561, 0.0
      %vm872 = vcmp.gt.f32.partialorder %v566, 0.0
      %vm873 = vcmp.gt.f32.partialorder %v571, 0.0
      %vm874 = vcmp.gt.f32.partialorder %v576, 0.0
      %vm875 = vcmp.gt.f32.partialorder %v581, 0.0
      %vm876 = vcmp.gt.f32.partialorder %v586, 0.0
      %vm877 = vcmp.gt.f32.partialorder %v591, 0.0
      %vm878 = vcmp.gt.f32.partialorder %v596, 0.0
      %vm879 = vcmp.gt.f32.partialorder %v601, 0.0
      %vm880 = vcmp.gt.f32.partialorder %v606, 0.0
      %vm881 = vcmp.gt.f32.partialorder %v611, 0.0
      %vm882 = vcmp.gt.f32.partialorder %v616, 0.0
      %vm883 = vcmp.gt.f32.partialorder %v621, 0.0
      %vm884 = vcmp.gt.f32.partialorder %v626, 0.0
      %vm885 = vcmp.gt.f32.partialorder %v631, 0.0
      %vm886 = vcmp.gt.f32.partialorder %v636, 0.0
      %vm887 = vcmp.gt.f32.partialorder %v641, 0.0
      %vm888 = vcmp.gt.f32.partialorder %v646, 0.0
      %vm889 = vcmp.gt.f32.partialorder %v651, 0.0
      %vm890 = vcmp.gt.f32.partialorder %v656, 0.0
      %vm891 = vcmp.gt.f32.partialorder %v661, 0.0
      %vm892 = vcmp.gt.f32.partialorder %v666, 0.0
      %vm893 = vcmp.gt.f32.partialorder %v671, 0.0
      %vm894 = vcmp.gt.f32.partialorder %v676, 0.0
      %vm895 = vcmp.gt.f32.partialorder %v681, 0.0
      %vm896 = vcmp.gt.f32.partialorder %v686, 0.0
      %vm897 = vcmp.gt.f32.partialorder %v691, 0.0
      %vm898 = vcmp.gt.f32.partialorder %v696, 0.0
      %vm899 = vcmp.gt.f32.partialorder %v701, 0.0
      %vm900 = vcmp.gt.f32.partialorder %v706, 0.0
      %vm901 = vcmp.gt.f32.partialorder %v711, 0.0
      %vm902 = vcmp.gt.f32.partialorder %v716, 0.0
      %vm903 = vcmp.gt.f32.partialorder %v721, 0.0
      %vm904 = vcmp.gt.f32.partialorder %v726, 0.0
      %vm905 = vcmp.gt.f32.partialorder %v731, 0.0
      %vm906 = vcmp.gt.f32.partialorder %v736, 0.0
      %vm907 = vcmp.gt.f32.partialorder %v741, 0.0
      %vm908 = vcmp.gt.f32.partialorder %v746, 0.0
      %vm909 = vcmp.gt.f32.partialorder %v751, 0.0
      %vm910 = vcmp.gt.f32.partialorder %v756, 0.0
      %vm911 = vcmp.gt.f32.partialorder %v761, 0.0
      %vm912 = vcmp.gt.f32.partialorder %v766, 0.0
      %vm913 = vcmp.gt.f32.partialorder %v771, 0.0
      %vm914 = vcmp.gt.f32.partialorder %v776, 0.0
      %vm915 = vcmp.gt.f32.partialorder %v781, 0.0
      %vm916 = vcmp.gt.f32.partialorder %v786, 0.0
      %vm917 = vcmp.gt.f32.partialorder %v791, 0.0
      %vm918 = vcmp.gt.f32.partialorder %v796, 0.0
      %vm919 = vcmp.gt.f32.partialorder %v801, 0.0
      %vm920 = vcmp.gt.f32.partialorder %v806, 0.0
      %vm921 = vcmp.gt.f32.partialorder %v811, 0.0
      %vm922 = vcmp.gt.f32.partialorder %v816, 0.0
      %vm923 = vcmp.gt.f32.partialorder %v821, 0.0
      %vm924 = vcmp.gt.f32.partialorder %v826, 0.0
      %vm925 = vcmp.gt.f32.partialorder %v831, 0.0
      %vm926 = vcmp.gt.f32.partialorder %v836, 0.0
      %vm927 = vcmp.gt.f32.partialorder %v841, 0.0
      %vm928 = vcmp.gt.f32.partialorder %v846, 0.0
      %vm929 = vcmp.gt.f32.partialorder %v851, 0.0
      %vm930 = vcmp.gt.f32.partialorder %v856, 0.0
      %vm931 = vcmp.gt.f32.partialorder %v861, 0.0
      %vm932 = vcmp.gt.f32.partialorder %v866, 0.0
      %v933 = vmul.f32 %v551, 0.2
      %v934 = vmul.f32 %v556, 0.2
      %v935 = vmul.f32 %v561, 0.2
      %v936 = vmul.f32 %v566, 0.2
      %v937 = vmul.f32 %v571, 0.2
      %v938 = vmul.f32 %v576, 0.2
      %v939 = vmul.f32 %v581, 0.2
      %v940 = vmul.f32 %v586, 0.2
      %v941 = vmul.f32 %v591, 0.2
      %v942 = vmul.f32 %v596, 0.2
      %v943 = vmul.f32 %v601, 0.2
      %v944 = vmul.f32 %v606, 0.2
      %v945 = vmul.f32 %v611, 0.2
      %v946 = vmul.f32 %v616, 0.2
      %v947 = vmul.f32 %v621, 0.2
      %v948 = vmul.f32 %v626, 0.2
      %v949 = vmul.f32 %v631, 0.2
      %v950 = vmul.f32 %v636, 0.2
      %v951 = vmul.f32 %v641, 0.2
      %v952 = vmul.f32 %v646, 0.2
      %v953 = vmul.f32 %v651, 0.2
      %v954 = vmul.f32 %v656, 0.2
      %v955 = vmul.f32 %v661, 0.2
      %v956 = vmul.f32 %v666, 0.2
      %v957 = vmul.f32 %v671, 0.2
      %v958 = vmul.f32 %v676, 0.2
      %v959 = vmul.f32 %v681, 0.2
      %v960 = vmul.f32 %v686, 0.2
      %v961 = vmul.f32 %v691, 0.2
      %v962 = vmul.f32 %v696, 0.2
      %v963 = vmul.f32 %v701, 0.2
      %v964 = vmul.f32 %v706, 0.2
      %v965 = vmul.f32 %v711, 0.2
      %v966 = vmul.f32 %v716, 0.2
      %v967 = vmul.f32 %v721, 0.2
      %v968 = vmul.f32 %v726, 0.2
      %v969 = vmul.f32 %v731, 0.2
      %v970 = vmul.f32 %v736, 0.2
      %v971 = vmul.f32 %v741, 0.2
      %v972 = vmul.f32 %v746, 0.2
      %v973 = vmul.f32 %v751, 0.2
      %v974 = vmul.f32 %v756, 0.2
      %v975 = vmul.f32 %v761, 0.2
      %v976 = vmul.f32 %v766, 0.2
      %v977 = vmul.f32 %v771, 0.2
      %v978 = vmul.f32 %v776, 0.2
      %v979 = vmul.f32 %v781, 0.2
      %v980 = vmul.f32 %v786, 0.2
      %v981 = vmul.f32 %v791, 0.2
      %v982 = vmul.f32 %v796, 0.2
      %v983 = vmul.f32 %v801, 0.2
      %v984 = vmul.f32 %v806, 0.2
      %v985 = vmul.f32 %v811, 0.2
      %v986 = vmul.f32 %v816, 0.2
      %v987 = vmul.f32 %v821, 0.2
      %v988 = vmul.f32 %v826, 0.2
      %v989 = vmul.f32 %v831, 0.2
      %v990 = vmul.f32 %v836, 0.2
      %v991 = vmul.f32 %v841, 0.2
      %v992 = vmul.f32 %v846, 0.2
      %v993 = vmul.f32 %v851, 0.2
      %v994 = vmul.f32 %v856, 0.2
      %v995 = vmul.f32 %v861, 0.2
      %v996 = vmul.f32 %v866, 0.2
      %v997 = vsel %vm869, %v551, %v933
      %v998 = vsel %vm870, %v556, %v934
      %v999 = vsel %vm871, %v561, %v935
      %v1000 = vsel %vm872, %v566, %v936
      %v1001 = vsel %vm873, %v571, %v937
      %v1002 = vsel %vm874, %v576, %v938
      %v1003 = vsel %vm875, %v581, %v939
      %v1004 = vsel %vm876, %v586, %v940
      %v1005 = vsel %vm877, %v591, %v941
      %v1006 = vsel %vm878, %v596, %v942
      %v1007 = vsel %vm879, %v601, %v943
      %v1008 = vsel %vm880, %v606, %v944
      %v1009 = vsel %vm881, %v611, %v945
      %v1010 = vsel %vm882, %v616, %v946
      %v1011 = vsel %vm883, %v621, %v947
      %v1012 = vsel %vm884, %v626, %v948
      %v1013 = vsel %vm885, %v631, %v949
      %v1014 = vsel %vm886, %v636, %v950
      %v1015 = vsel %vm887, %v641, %v951
      %v1016 = vsel %vm888, %v646, %v952
      %v1017 = vsel %vm889, %v651, %v953
      %v1018 = vsel %vm890, %v656, %v954
      %v1019 = vsel %vm891, %v661, %v955
      %v1020 = vsel %vm892, %v666, %v956
      %v1021 = vsel %vm893, %v671, %v957
      %v1022 = vsel %vm894, %v676, %v958
      %v1023 = vsel %vm895, %v681, %v959
      %v1024 = vsel %vm896, %v686, %v960
      %v1025 = vsel %vm897, %v691, %v961
      %v1026 = vsel %vm898, %v696, %v962
      %v1027 = vsel %vm899, %v701, %v963
      %v1028 = vsel %vm900, %v706, %v964
      %v1029 = vsel %vm901, %v711, %v965
      %v1030 = vsel %vm902, %v716, %v966
      %v1031 = vsel %vm903, %v721, %v967
      %v1032 = vsel %vm904, %v726, %v968
      %v1033 = vsel %vm905, %v731, %v969
      %v1034 = vsel %vm906, %v736, %v970
      %v1035 = vsel %vm907, %v741, %v971
      %v1036 = vsel %vm908, %v746, %v972
      %v1037 = vsel %vm909, %v751, %v973
      %v1038 = vsel %vm910, %v756, %v974
      %v1039 = vsel %vm911, %v761, %v975
      %v1040 = vsel %vm912, %v766, %v976
      %v1041 = vsel %vm913, %v771, %v977
      %v1042 = vsel %vm914, %v776, %v978
      %v1043 = vsel %vm915, %v781, %v979
      %v1044 = vsel %vm916, %v786, %v980
      %v1045 = vsel %vm917, %v791, %v981
      %v1046 = vsel %vm918, %v796, %v982
      %v1047 = vsel %vm919, %v801, %v983
      %v1048 = vsel %vm920, %v806, %v984
      %v1049 = vsel %vm921, %v811, %v985
      %v1050 = vsel %vm922, %v816, %v986
      %v1051 = vsel %vm923, %v821, %v987
      %v1052 = vsel %vm924, %v826, %v988
      %v1053 = vsel %vm925, %v831, %v989
      %v1054 = vsel %vm926, %v836, %v990
      %v1055 = vsel %vm927, %v841, %v991
      %v1056 = vsel %vm928, %v846, %v992
      %v1057 = vsel %vm929, %v851, %v993
      %v1058 = vsel %vm930, %v856, %v994
      %v1059 = vsel %vm931, %v861, %v995
      %v1060 = vsel %vm932, %v866, %v996
      %v1061 = vpack.c.bf16 %v998, %v997
      %v1062 = vpack.c.bf16 %v1000, %v999
      %v1063 = vpack.c.bf16 %v1002, %v1001
      %v1064 = vpack.c.bf16 %v1004, %v1003
      %v1065 = vpack.c.bf16 %v1006, %v1005
      %v1066 = vpack.c.bf16 %v1008, %v1007
      %v1067 = vpack.c.bf16 %v1010, %v1009
      %v1068 = vpack.c.bf16 %v1012, %v1011
      %v1069 = vpack.c.bf16 %v1014, %v1013
      %v1070 = vpack.c.bf16 %v1016, %v1015
      %v1071 = vpack.c.bf16 %v1018, %v1017
      %v1072 = vpack.c.bf16 %v1020, %v1019
      %v1073 = vpack.c.bf16 %v1022, %v1021
      %v1074 = vpack.c.bf16 %v1024, %v1023
      %v1075 = vpack.c.bf16 %v1026, %v1025
      %v1076 = vpack.c.bf16 %v1028, %v1027
      %v1077 = vpack.c.bf16 %v1030, %v1029
      %v1078 = vpack.c.bf16 %v1032, %v1031
      %v1079 = vpack.c.bf16 %v1034, %v1033
      %v1080 = vpack.c.bf16 %v1036, %v1035
      %v1081 = vpack.c.bf16 %v1038, %v1037
      %v1082 = vpack.c.bf16 %v1040, %v1039
      %v1083 = vpack.c.bf16 %v1042, %v1041
      %v1084 = vpack.c.bf16 %v1044, %v1043
      %v1085 = vpack.c.bf16 %v1046, %v1045
      %v1086 = vpack.c.bf16 %v1048, %v1047
      %v1087 = vpack.c.bf16 %v1050, %v1049
      %v1088 = vpack.c.bf16 %v1052, %v1051
      %v1089 = vpack.c.bf16 %v1054, %v1053
      %v1090 = vpack.c.bf16 %v1056, %v1055
      %v1091 = vpack.c.bf16 %v1058, %v1057
      %v1092 = vpack.c.bf16 %v1060, %v1059
      %v1125 = vunpack.c.l.b16 %v1061
      %v1126 = vunpack.c.h.b16 %v1061
      %v1127 = vunpack.c.l.b16 %v1062
      %v1128 = vunpack.c.h.b16 %v1062
      %v1129 = vunpack.c.l.b16 %v1063
      %v1130 = vunpack.c.h.b16 %v1063
      %v1131 = vunpack.c.l.b16 %v1064
      %v1132 = vunpack.c.h.b16 %v1064
      %v1133 = vunpack.c.l.b16 %v1065
      %v1134 = vunpack.c.h.b16 %v1065
      %v1135 = vunpack.c.l.b16 %v1066
      %v1136 = vunpack.c.h.b16 %v1066
      %v1137 = vunpack.c.l.b16 %v1067
      %v1138 = vunpack.c.h.b16 %v1067
      %v1139 = vunpack.c.l.b16 %v1068
      %v1140 = vunpack.c.h.b16 %v1068
      %v1141 = vunpack.c.l.b16 %v1069
      %v1142 = vunpack.c.h.b16 %v1069
      %v1143 = vunpack.c.l.b16 %v1070
      %v1144 = vunpack.c.h.b16 %v1070
      %v1145 = vunpack.c.l.b16 %v1071
      %v1146 = vunpack.c.h.b16 %v1071
      %v1147 = vunpack.c.l.b16 %v1072
      %v1148 = vunpack.c.h.b16 %v1072
      %v1149 = vunpack.c.l.b16 %v1073
      %v1150 = vunpack.c.h.b16 %v1073
      %v1151 = vunpack.c.l.b16 %v1074
      %v1152 = vunpack.c.h.b16 %v1074
      %v1153 = vunpack.c.l.b16 %v1075
      %v1154 = vunpack.c.h.b16 %v1075
      %v1155 = vunpack.c.l.b16 %v1076
      %v1156 = vunpack.c.h.b16 %v1076
      %v1157 = vunpack.c.l.b16 %v1077
      %v1158 = vunpack.c.h.b16 %v1077
      %v1159 = vunpack.c.l.b16 %v1078
      %v1160 = vunpack.c.h.b16 %v1078
      %v1161 = vunpack.c.l.b16 %v1079
      %v1162 = vunpack.c.h.b16 %v1079
      %v1163 = vunpack.c.l.b16 %v1080
      %v1164 = vunpack.c.h.b16 %v1080
      %v1165 = vunpack.c.l.b16 %v1081
      %v1166 = vunpack.c.h.b16 %v1081
      %v1167 = vunpack.c.l.b16 %v1082
      %v1168 = vunpack.c.h.b16 %v1082
      %v1169 = vunpack.c.l.b16 %v1083
      %v1170 = vunpack.c.h.b16 %v1083
      %v1171 = vunpack.c.l.b16 %v1084
      %v1172 = vunpack.c.h.b16 %v1084
      %v1173 = vunpack.c.l.b16 %v1085
      %v1174 = vunpack.c.h.b16 %v1085
      %v1175 = vunpack.c.l.b16 %v1086
      %v1176 = vunpack.c.h.b16 %v1086
      %v1177 = vunpack.c.l.b16 %v1087
      %v1178 = vunpack.c.h.b16 %v1087
      %v1179 = vunpack.c.l.b16 %v1088
      %v1180 = vunpack.c.h.b16 %v1088
      %v1181 = vunpack.c.l.b16 %v1089
      %v1182 = vunpack.c.h.b16 %v1089
      %v1183 = vunpack.c.l.b16 %v1090
      %v1184 = vunpack.c.h.b16 %v1090
      %v1185 = vunpack.c.l.b16 %v1091
      %v1186 = vunpack.c.h.b16 %v1091
      %v1187 = vunpack.c.l.b16 %v1092
      %v1188 = vunpack.c.h.b16 %v1092
      %v1189 = vpack.c.b16 %v1125, %v1125
      %v1190 = vpack.c.b16 %v1126, %v1126
      %v1191 = vpack.c.b16 %v1127, %v1127
      %v1192 = vpack.c.b16 %v1128, %v1128
      %v1193 = vpack.c.b16 %v1129, %v1129
      %v1194 = vpack.c.b16 %v1130, %v1130
      %v1195 = vpack.c.b16 %v1131, %v1131
      %v1196 = vpack.c.b16 %v1132, %v1132
      %v1197 = vpack.c.b16 %v1133, %v1133
      %v1198 = vpack.c.b16 %v1134, %v1134
      %v1199 = vpack.c.b16 %v1135, %v1135
      %v1200 = vpack.c.b16 %v1136, %v1136
      %v1201 = vpack.c.b16 %v1137, %v1137
      %v1202 = vpack.c.b16 %v1138, %v1138
      %v1203 = vpack.c.b16 %v1139, %v1139
      %v1204 = vpack.c.b16 %v1140, %v1140
      %v1205 = vpack.c.b16 %v1141, %v1141
      %v1206 = vpack.c.b16 %v1142, %v1142
      %v1207 = vpack.c.b16 %v1143, %v1143
      %v1208 = vpack.c.b16 %v1144, %v1144
      %v1209 = vpack.c.b16 %v1145, %v1145
      %v1210 = vpack.c.b16 %v1146, %v1146
      %v1211 = vpack.c.b16 %v1147, %v1147
      %v1212 = vpack.c.b16 %v1148, %v1148
      %v1213 = vpack.c.b16 %v1149, %v1149
      %v1214 = vpack.c.b16 %v1150, %v1150
      %v1215 = vpack.c.b16 %v1151, %v1151
      %v1216 = vpack.c.b16 %v1152, %v1152
      %v1217 = vpack.c.b16 %v1153, %v1153
      %v1218 = vpack.c.b16 %v1154, %v1154
      %v1219 = vpack.c.b16 %v1155, %v1155
      %v1220 = vpack.c.b16 %v1156, %v1156
      %v1221 = vpack.c.b16 %v1157, %v1157
      %v1222 = vpack.c.b16 %v1158, %v1158
      %v1223 = vpack.c.b16 %v1159, %v1159
      %v1224 = vpack.c.b16 %v1160, %v1160
      %v1225 = vpack.c.b16 %v1161, %v1161
      %v1226 = vpack.c.b16 %v1162, %v1162
      %v1227 = vpack.c.b16 %v1163, %v1163
      %v1228 = vpack.c.b16 %v1164, %v1164
      %v1229 = vpack.c.b16 %v1165, %v1165
      %v1230 = vpack.c.b16 %v1166, %v1166
      %v1231 = vpack.c.b16 %v1167, %v1167
      %v1232 = vpack.c.b16 %v1168, %v1168
      %v1233 = vpack.c.b16 %v1169, %v1169
      %v1234 = vpack.c.b16 %v1170, %v1170
      %v1235 = vpack.c.b16 %v1171, %v1171
      %v1236 = vpack.c.b16 %v1172, %v1172
      %v1237 = vpack.c.b16 %v1173, %v1173
      %v1238 = vpack.c.b16 %v1174, %v1174
      %v1239 = vpack.c.b16 %v1175, %v1175
      %v1240 = vpack.c.b16 %v1176, %v1176
      %v1241 = vpack.c.b16 %v1177, %v1177
      %v1242 = vpack.c.b16 %v1178, %v1178
      %v1243 = vpack.c.b16 %v1179, %v1179
      %v1244 = vpack.c.b16 %v1180, %v1180
      %v1245 = vpack.c.b16 %v1181, %v1181
      %v1246 = vpack.c.b16 %v1182, %v1182
      %v1247 = vpack.c.b16 %v1183, %v1183
      %v1248 = vpack.c.b16 %v1184, %v1184
      %v1249 = vpack.c.b16 %v1185, %v1185
      %v1250 = vpack.c.b16 %v1186, %v1186
      %v1251 = vpack.c.b16 %v1187, %v1187
      %v1252 = vpack.c.b16 %v1188, %v1188
      %1317 = vst [vmem:[%s145] sm:$0xf] %v1189
      %1318 = vst [vmem:[%s145 + $0x4] sm:$0xf] %v1190
      %1319 = vst [vmem:[%s145 + $0x8] sm:$0xf] %v1191
      %1320 = vst [vmem:[%s145 + $0xc] sm:$0xf] %v1192
      %1321 = vst [vmem:[%s145 + $0x10] sm:$0xf] %v1193
      %1322 = vst [vmem:[%s145 + $0x14] sm:$0xf] %v1194
      %1323 = vst [vmem:[%s145 + $0x18] sm:$0xf] %v1195
      %1324 = vst [vmem:[%s145 + $0x1c] sm:$0xf] %v1196
      %1325 = vst [vmem:[%s145 + $0x20] sm:$0xf] %v1197
      %1326 = vst [vmem:[%s145 + $0x24] sm:$0xf] %v1198
      %1327 = vst [vmem:[%s145 + $0x28] sm:$0xf] %v1199
      %1328 = vst [vmem:[%s145 + $0x2c] sm:$0xf] %v1200
      %1329 = vst [vmem:[%s145 + $0x30] sm:$0xf] %v1201
      %1330 = vst [vmem:[%s145 + $0x34] sm:$0xf] %v1202
      %1331 = vst [vmem:[%s145 + $0x38] sm:$0xf] %v1203
      %1332 = vst [vmem:[%s145 + $0x3c] sm:$0xf] %v1204
      %1333 = vst [vmem:[%s145 + $0x40] sm:$0xf] %v1205
      %1334 = vst [vmem:[%s145 + $0x44] sm:$0xf] %v1206
      %1335 = vst [vmem:[%s145 + $0x48] sm:$0xf] %v1207
      %1336 = vst [vmem:[%s145 + $0x4c] sm:$0xf] %v1208
      %1337 = vst [vmem:[%s145 + $0x50] sm:$0xf] %v1209
      %1338 = vst [vmem:[%s145 + $0x54] sm:$0xf] %v1210
      %1339 = vst [vmem:[%s145 + $0x58] sm:$0xf] %v1211
      %1340 = vst [vmem:[%s145 + $0x5c] sm:$0xf] %v1212
      %1341 = vst [vmem:[%s145 + $0x60] sm:$0xf] %v1213
      %1342 = vst [vmem:[%s145 + $0x64] sm:$0xf] %v1214
      %1343 = vst [vmem:[%s145 + $0x68] sm:$0xf] %v1215
      %1344 = vst [vmem:[%s145 + $0x6c] sm:$0xf] %v1216
      %1345 = vst [vmem:[%s145 + $0x70] sm:$0xf] %v1217
      %1346 = vst [vmem:[%s145 + $0x74] sm:$0xf] %v1218
      %1347 = vst [vmem:[%s145 + $0x78] sm:$0xf] %v1219
      %1348 = vst [vmem:[%s145 + $0x7c] sm:$0xf] %v1220
      %1349 = vst [vmem:[%s145 + $0x80] sm:$0xf] %v1221
      %1350 = vst [vmem:[%s145 + $0x84] sm:$0xf] %v1222
      %1351 = vst [vmem:[%s145 + $0x88] sm:$0xf] %v1223
      %1352 = vst [vmem:[%s145 + $0x8c] sm:$0xf] %v1224
      %1353 = vst [vmem:[%s145 + $0x90] sm:$0xf] %v1225
      %1354 = vst [vmem:[%s145 + $0x94] sm:$0xf] %v1226
      %1355 = vst [vmem:[%s145 + $0x98] sm:$0xf] %v1227
      %1356 = vst [vmem:[%s145 + $0x9c] sm:$0xf] %v1228
      %1357 = vst [vmem:[%s145 + $0xa0] sm:$0xf] %v1229
      %1358 = vst [vmem:[%s145 + $0xa4] sm:$0xf] %v1230
      %1359 = vst [vmem:[%s145 + $0xa8] sm:$0xf] %v1231
      %1360 = vst [vmem:[%s145 + $0xac] sm:$0xf] %v1232
      %1361 = vst [vmem:[%s145 + $0xb0] sm:$0xf] %v1233
      %1362 = vst [vmem:[%s145 + $0xb4] sm:$0xf] %v1234
      %1363 = vst [vmem:[%s145 + $0xb8] sm:$0xf] %v1235
      %1364 = vst [vmem:[%s145 + $0xbc] sm:$0xf] %v1236
      %1365 = vst [vmem:[%s145 + $0xc0] sm:$0xf] %v1237
      %1366 = vst [vmem:[%s145 + $0xc4] sm:$0xf] %v1238
      %1367 = vst [vmem:[%s145 + $0xc8] sm:$0xf] %v1239
      %1368 = vst [vmem:[%s145 + $0xcc] sm:$0xf] %v1240
      %1369 = vst [vmem:[%s145 + $0xd0] sm:$0xf] %v1241
      %1370 = vst [vmem:[%s145 + $0xd4] sm:$0xf] %v1242
      %1371 = vst [vmem:[%s145 + $0xd8] sm:$0xf] %v1243
      %1372 = vst [vmem:[%s145 + $0xdc] sm:$0xf] %v1244
      %1373 = vst [vmem:[%s145 + $0xe0] sm:$0xf] %v1245
      %1374 = vst [vmem:[%s145 + $0xe4] sm:$0xf] %v1246
      %1375 = vst [vmem:[%s145 + $0xe8] sm:$0xf] %v1247
      %1376 = vst [vmem:[%s145 + $0xec] sm:$0xf] %v1248
      %1377 = vst [vmem:[%s145 + $0xf0] sm:$0xf] %v1249
      %1378 = vst [vmem:[%s145 + $0xf4] sm:$0xf] %v1250
      %1379 = vst [vmem:[%s145 + $0xf8] sm:$0xf] %v1251
      %1380 = vst [vmem:[%s145 + $0xfc] sm:$0xf] %v1252
      %s1381 = smul.u32 64, %s13
      %p1382 = scmp.lt.s32.totalorder %s1381, 255
      %s1383 = scalar_select %p1382, %s1381, 255
      %s1384 = smul.addr %s1383, 4
      %s1385 = scalar_lea.vmem %s2, %s1384
      // Predicated region
      $region29: #{_lambda_.6} parent=27 // pred_check
        %p1386 = pneg %p78
      $region30: #{_lambda_.6} parent=27 // pred_check_branch
        %1388 = sbr.rel (%p1386) target = $region32
      $region31: #{_lambda_.6} parent=27 // pred_region
        %s1389 = smul.u32 64, %s13
      $region32: #{_lambda_.6} parent=27 // pred_fallthru
        _
    $region28: #{_lambda_.6} parent=5 // pred_fallthru
      _
    %p1390 = scmp.le.s32.totalorder 2, %s8
    // Predicated region
    $region33: #{_lambda_.6} parent=5 // pred_check
      %p1391 = pneg %p1390
    $region34: #{_lambda_.6} parent=5 // pred_check_branch
      %1393 = sbr.rel (%p1391) target = $region36
    $region35: #{_lambda_.6} parent=5 // pred_region
      %s1394 = ssub.s32 %s8, 2
      // Predicated region
      $region37: #{_lambda_.6} parent=35 // pred_check
        %p1395 = pneg %p84
      $region38: #{_lambda_.6} parent=35 // pred_check_branch
        %1397 = sbr.rel (%p1395) target = $region40
      $region39: #{_lambda_.6} parent=35 // pred_region
        %s1398 = smul.u32 64, %s14
        %p1399 = scmp.lt.s32.totalorder %s1398, 255
        %s1400 = scalar_select %p1399, %s1398, 255
        %s1401 = smul.addr %s1400, 4
        %s1402 = scalar_lea.vmem %s2, %s1401
      $region40: #{_lambda_.6} parent=35 // pred_fallthru
        _
    $region36: #{_lambda_.6} parent=5 // pred_fallthru
      _
  $region6: #{_lambda_.6} parent=0 // loop_footer
    %s12 = sadd.s32 1, %s8
  $region7: #{_lambda_.6} parent=0 // loop_footer_branch
    %7 = sbr.rel target = $region3
  $region8: #{_lambda_.6} parent=0 // loop_exit
    _

// kernel: _lambda_.7
$region0: #{_lambda_.7}
  #allocation0 [shape = 'u32[]', space=smem, size = 0x4, offset = 0x4, fixed_abs, tag = 'smem constant byte address 0x4 - core index']
  #allocation1 [shape = 'u32[144,128]{1,0:T(1,128)}', space=vmem, size = 0x12000, scoped, tag = 'internal scratch']
  #allocation2 [shape = 'f32[512,128]{1,0:T(8,128)}', space=vmem, size = 0x40000, scoped, tag = 'scratch operand']
  #allocation3 [shape = 'f32[1,128]{1,0:T(1,128)}', space=vmem, size = 0x200, scoped, tag = 'scratch operand']
  #allocation4 [shape = 'f32[1,128]{1,0:T(1,128)}', space=vmem, size = 0x200, scoped, tag = 'scratch operand']
  %s0 = inlined_call_operand.vmem [shape: bf16[512,128], index: 0, kind: input, shape index: {}]
  %s1 = inlined_call_operand.vmem [shape: bf16[128,128], index: 1, kind: input, shape index: {}]
  %s2 = inlined_call_operand.vmem [shape: f32[1,128], index: 2, kind: input, shape index: {}]
  %s3 = inlined_call_operand.vmem [shape: f32[1,128], index: 3, kind: input, shape index: {}]
  %s4 = inlined_call_operand.vmem [shape: bf16[512,128], index: 4, kind: output, shape index: {}]
  %s5 = sld [smem:[#allocation0]]
  $region34: #{_lambda_.7} parent=0
    _
  %s7 = ssub.s32 1, %s5
  %s8 = scalar_select 0, %s7, %s5
  // Predicated region
  $region2: #{_lambda_.7} parent=0 // pred_check
    _
  $region3: #{_lambda_.7} parent=0 // pred_check_branch
    %10 = sbr.rel (0) target = $region5
  $region4: #{_lambda_.7} parent=0 // pred_region
    _
  $region5: #{_lambda_.7} parent=0 // pred_fallthru
    _
  // Predicated region
  $region6: #{_lambda_.7} parent=0 // pred_check
    _
  $region7: #{_lambda_.7} parent=0 // pred_check_branch
    %12 = sbr.rel (0) target = $region9
  $region8: #{_lambda_.7} parent=0 // pred_region
    _
  $region9: #{_lambda_.7} parent=0 // pred_fallthru
    _
  // Predicated region
  $region10: #{_lambda_.7} parent=0 // pred_check
    _
  $region11: #{_lambda_.7} parent=0 // pred_check_branch
    %14 = sbr.rel (0) target = $region13
  $region12: #{_lambda_.7} parent=0 // pred_region
    _
  $region13: #{_lambda_.7} parent=0 // pred_fallthru
    _
  // Predicated region
  $region14: #{_lambda_.7} parent=0 // pred_check
    _
  $region15: #{_lambda_.7} parent=0 // pred_check_branch
    %16 = sbr.rel (0) target = $region17
  $region16: #{_lambda_.7} parent=0 // pred_region
    _
  $region17: #{_lambda_.7} parent=0 // pred_fallthru
    _
  %p17 = scmp.eq.s32.totalorder 0, 0
  // Predicated region
  $region18: #{_lambda_.7} parent=0 // pred_check
    %p18 = pneg %p17
  $region19: #{_lambda_.7} parent=0 // pred_check_branch
    %20 = sbr.rel (%p18) target = $region21
  $region20: #{_lambda_.7} parent=0 // pred_region
    %21 = vst [vmem:[#allocation3] sm:$0x1] 0.0
    %22 = vst [vmem:[#allocation4] sm:$0x1] 0.0
  $region21: #{_lambda_.7} parent=0 // pred_fallthru
    _
  %v23 = vld [vmem:[%s0] sm:$0xf]
  %v24 = vld [vmem:[%s0 + $0x4] sm:$0xf]
  %v25 = vld [vmem:[%s0 + $0x8] sm:$0xf]
  %v26 = vld [vmem:[%s0 + $0xc] sm:$0xf]
  %v27 = vld [vmem:[%s0 + $0x10] sm:$0xf]
  %v28 = vld [vmem:[%s0 + $0x14] sm:$0xf]
  %v29 = vld [vmem:[%s0 + $0x18] sm:$0xf]
  %v30 = vld [vmem:[%s0 + $0x1c] sm:$0xf]
  %v31 = vld [vmem:[%s0 + $0x20] sm:$0xf]
  %v32 = vld [vmem:[%s0 + $0x24] sm:$0xf]
  %v33 = vld [vmem:[%s0 + $0x28] sm:$0xf]
  %v34 = vld [vmem:[%s0 + $0x2c] sm:$0xf]
  %v35 = vld [vmem:[%s0 + $0x30] sm:$0xf]
  %v36 = vld [vmem:[%s0 + $0x34] sm:$0xf]
  %v37 = vld [vmem:[%s0 + $0x38] sm:$0xf]
  %v38 = vld [vmem:[%s0 + $0x3c] sm:$0xf]
  %v39 = vld [vmem:[%s0 + $0x40] sm:$0xf]
  %v40 = vld [vmem:[%s0 + $0x44] sm:$0xf]
  %v41 = vld [vmem:[%s0 + $0x48] sm:$0xf]
  %v42 = vld [vmem:[%s0 + $0x4c] sm:$0xf]
  %v43 = vld [vmem:[%s0 + $0x50] sm:$0xf]
  %v44 = vld [vmem:[%s0 + $0x54] sm:$0xf]
  %v45 = vld [vmem:[%s0 + $0x58] sm:$0xf]
  %v46 = vld [vmem:[%s0 + $0x5c] sm:$0xf]
  %v47 = vld [vmem:[%s0 + $0x60] sm:$0xf]
  %v48 = vld [vmem:[%s0 + $0x64] sm:$0xf]
  %v49 = vld [vmem:[%s0 + $0x68] sm:$0xf]
  %v50 = vld [vmem:[%s0 + $0x6c] sm:$0xf]
  %v51 = vld [vmem:[%s0 + $0x70] sm:$0xf]
  %v52 = vld [vmem:[%s0 + $0x74] sm:$0xf]
  %v53 = vld [vmem:[%s0 + $0x78] sm:$0xf]
  %v54 = vld [vmem:[%s0 + $0x7c] sm:$0xf]
  %v55 = vld [vmem:[%s0 + $0x80] sm:$0xf]
  %v56 = vld [vmem:[%s0 + $0x84] sm:$0xf]
  %v57 = vld [vmem:[%s0 + $0x88] sm:$0xf]
  %v58 = vld [vmem:[%s0 + $0x8c] sm:$0xf]
  %v59 = vld [vmem:[%s0 + $0x90] sm:$0xf]
  %v60 = vld [vmem:[%s0 + $0x94] sm:$0xf]
  %v61 = vld [vmem:[%s0 + $0x98] sm:$0xf]
  %v62 = vld [vmem:[%s0 + $0x9c] sm:$0xf]
  %v63 = vld [vmem:[%s0 + $0xa0] sm:$0xf]
  %v64 = vld [vmem:[%s0 + $0xa4] sm:$0xf]
  %v65 = vld [vmem:[%s0 + $0xa8] sm:$0xf]
  %v66 = vld [vmem:[%s0 + $0xac] sm:$0xf]
  %v67 = vld [vmem:[%s0 + $0xb0] sm:$0xf]
  %v68 = vld [vmem:[%s0 + $0xb4] sm:$0xf]
  %v69 = vld [vmem:[%s0 + $0xb8] sm:$0xf]
  %v70 = vld [vmem:[%s0 + $0xbc] sm:$0xf]
  %v71 = vld [vmem:[%s0 + $0xc0] sm:$0xf]
  %v72 = vld [vmem:[%s0 + $0xc4] sm:$0xf]
  %v73 = vld [vmem:[%s0 + $0xc8] sm:$0xf]
  %v74 = vld [vmem:[%s0 + $0xcc] sm:$0xf]
  %v75 = vld [vmem:[%s0 + $0xd0] sm:$0xf]
  %v76 = vld [vmem:[%s0 + $0xd4] sm:$0xf]
  %v77 = vld [vmem:[%s0 + $0xd8] sm:$0xf]
  %v78 = vld [vmem:[%s0 + $0xdc] sm:$0xf]
  %v79 = vld [vmem:[%s0 + $0xe0] sm:$0xf]
  %v80 = vld [vmem:[%s0 + $0xe4] sm:$0xf]
  %v81 = vld [vmem:[%s0 + $0xe8] sm:$0xf]
  %v82 = vld [vmem:[%s0 + $0xec] sm:$0xf]
  %v83 = vld [vmem:[%s0 + $0xf0] sm:$0xf]
  %v84 = vld [vmem:[%s0 + $0xf4] sm:$0xf]
  %v85 = vld [vmem:[%s0 + $0xf8] sm:$0xf]
  %v86 = vld [vmem:[%s0 + $0xfc] sm:$0xf]
  %v87 = vunpack.c.l.bf16 %v23
  %v88 = vunpack.c.l.bf16 %v24
  %v89 = vunpack.c.l.bf16 %v25
  %v90 = vunpack.c.l.bf16 %v26
  %v91 = vunpack.c.l.bf16 %v27
  %v92 = vunpack.c.l.bf16 %v28
  %v93 = vunpack.c.l.bf16 %v29
  %v94 = vunpack.c.l.bf16 %v30
  %v95 = vunpack.c.l.bf16 %v31
  %v96 = vunpack.c.l.bf16 %v32
  %v97 = vunpack.c.l.bf16 %v33
  %v98 = vunpack.c.l.bf16 %v34
  %v99 = vunpack.c.l.bf16 %v35
  %v100 = vunpack.c.l.bf16 %v36
  %v101 = vunpack.c.l.bf16 %v37
  %v102 = vunpack.c.l.bf16 %v38
  %v103 = vunpack.c.l.bf16 %v39
  %v104 = vunpack.c.l.bf16 %v40
  %v105 = vunpack.c.l.bf16 %v41
  %v106 = vunpack.c.l.bf16 %v42
  %v107 = vunpack.c.l.bf16 %v43
  %v108 = vunpack.c.l.bf16 %v44
  %v109 = vunpack.c.l.bf16 %v45
  %v110 = vunpack.c.l.bf16 %v46
  %v111 = vunpack.c.l.bf16 %v47
  %v112 = vunpack.c.l.bf16 %v48
  %v113 = vunpack.c.l.bf16 %v49
  %v114 = vunpack.c.l.bf16 %v50
  %v115 = vunpack.c.l.bf16 %v51
  %v116 = vunpack.c.l.bf16 %v52
  %v117 = vunpack.c.l.bf16 %v53
  %v118 = vunpack.c.l.bf16 %v54
  %v119 = vunpack.c.l.bf16 %v55
  %v120 = vunpack.c.l.bf16 %v56
  %v121 = vunpack.c.l.bf16 %v57
  %v122 = vunpack.c.l.bf16 %v58
  %v123 = vunpack.c.l.bf16 %v59
  %v124 = vunpack.c.l.bf16 %v60
  %v125 = vunpack.c.l.bf16 %v61
  %v126 = vunpack.c.l.bf16 %v62
  %v127 = vunpack.c.l.bf16 %v63
  %v128 = vunpack.c.l.bf16 %v64
  %v129 = vunpack.c.l.bf16 %v65
  %v130 = vunpack.c.l.bf16 %v66
  %v131 = vunpack.c.l.bf16 %v67
  %v132 = vunpack.c.l.bf16 %v68
  %v133 = vunpack.c.l.bf16 %v69
  %v134 = vunpack.c.l.bf16 %v70
  %v135 = vunpack.c.l.bf16 %v71
  %v136 = vunpack.c.l.bf16 %v72
  %v137 = vunpack.c.l.bf16 %v73
  %v138 = vunpack.c.l.bf16 %v74
  %v139 = vunpack.c.l.bf16 %v75
  %v140 = vunpack.c.l.bf16 %v76
  %v141 = vunpack.c.l.bf16 %v77
  %v142 = vunpack.c.l.bf16 %v78
  %v143 = vunpack.c.l.bf16 %v79
  %v144 = vunpack.c.l.bf16 %v80
  %v145 = vunpack.c.l.bf16 %v81
  %v146 = vunpack.c.l.bf16 %v82
  %v147 = vunpack.c.l.bf16 %v83
  %v148 = vunpack.c.l.bf16 %v84
  %v149 = vunpack.c.l.bf16 %v85
  %v150 = vunpack.c.l.bf16 %v86
  %v151 = vld [vmem:[%s1] sm:$0xf]
  %v152 = vld [vmem:[%s1 + $0x4] sm:$0xf]
  %v153 = vld [vmem:[%s1 + $0x8] sm:$0xf]
  %v154 = vld [vmem:[%s1 + $0xc] sm:$0xf]
  %v155 = vld [vmem:[%s1 + $0x10] sm:$0xf]
  %v156 = vld [vmem:[%s1 + $0x14] sm:$0xf]
  %v157 = vld [vmem:[%s1 + $0x18] sm:$0xf]
  %v158 = vld [vmem:[%s1 + $0x1c] sm:$0xf]
  %v159 = vld [vmem:[%s1 + $0x20] sm:$0xf]
  %v160 = vld [vmem:[%s1 + $0x24] sm:$0xf]
  %v161 = vld [vmem:[%s1 + $0x28] sm:$0xf]
  %v162 = vld [vmem:[%s1 + $0x2c] sm:$0xf]
  %v163 = vld [vmem:[%s1 + $0x30] sm:$0xf]
  %v164 = vld [vmem:[%s1 + $0x34] sm:$0xf]
  %v165 = vld [vmem:[%s1 + $0x38] sm:$0xf]
  %v166 = vld [vmem:[%s1 + $0x3c] sm:$0xf]
  %v167 = vunpack.c.l.bf16 %v151
  %v168 = vunpack.c.l.bf16 %v152
  %v169 = vunpack.c.l.bf16 %v153
  %v170 = vunpack.c.l.bf16 %v154
  %v171 = vunpack.c.l.bf16 %v155
  %v172 = vunpack.c.l.bf16 %v156
  %v173 = vunpack.c.l.bf16 %v157
  %v174 = vunpack.c.l.bf16 %v158
  %v175 = vunpack.c.l.bf16 %v159
  %v176 = vunpack.c.l.bf16 %v160
  %v177 = vunpack.c.l.bf16 %v161
  %v178 = vunpack.c.l.bf16 %v162
  %v179 = vunpack.c.l.bf16 %v163
  %v180 = vunpack.c.l.bf16 %v164
  %v181 = vunpack.c.l.bf16 %v165
  %v182 = vunpack.c.l.bf16 %v166
  %183 = vmatprep.subr.mxu0 0.0
  %184 = vmatpush1.msra.mxu0 %v167
  %185 = vmatprep.subr.mxu0 0.0
  %186 = vmatpush1.msra.mxu0 %v168
  %187 = vmatprep.subr.mxu0 0.0
  %188 = vmatpush1.msra.mxu0 %v169
  %189 = vmatprep.subr.mxu0 0.0
  %190 = vmatpush1.msra.mxu0 %v170
  %191 = vmatprep.subr.mxu0 0.0
  %192 = vmatpush1.msra.mxu0 %v171
  %193 = vmatprep.subr.mxu0 0.0
  %194 = vmatpush1.msra.mxu0 %v172
  %195 = vmatprep.subr.mxu0 0.0
  %196 = vmatpush1.msra.mxu0 %v173
  %197 = vmatprep.subr.mxu0 0.0
  %198 = vmatpush1.msra.mxu0 %v174
  %199 = vmatprep.subr.mxu0 0.0
  %200 = vmatpush1.msra.mxu0 %v175
  %201 = vmatprep.subr.mxu0 0.0
  %202 = vmatpush1.msra.mxu0 %v176
  %203 = vmatprep.subr.mxu0 0.0
  %204 = vmatpush1.msra.mxu0 %v177
  %205 = vmatprep.subr.mxu0 0.0
  %206 = vmatpush1.msra.mxu0 %v178
  %207 = vmatprep.subr.mxu0 0.0
  %208 = vmatpush1.msra.mxu0 %v179
  %209 = vmatprep.subr.mxu0 0.0
  %210 = vmatpush1.msra.mxu0 %v180
  %211 = vmatprep.subr.mxu0 0.0
  %212 = vmatpush1.msra.mxu0 %v181
  %213 = vmatprep.subr.mxu0 0.0
  %214 = vmatpush1.msra.mxu0 %v182
  %215 = vmatprep.subr.mxu0 0.0
  %216 = vmatpush1.msra.mxu0 0.0
  %217 = vmatprep.subr.mxu0 0.0
  %218 = vmatpush1.msra.mxu0 0.0
  %219 = vmatprep.subr.mxu0 0.0
  %220 = vmatpush1.msra.mxu0 0.0
  %221 = vmatprep.subr.mxu0 0.0
  %222 = vmatpush1.msra.mxu0 0.0
  %223 = vmatprep.subr.mxu0 0.0
  %224 = vmatpush1.msra.mxu0 0.0
  %225 = vmatprep.subr.mxu0 0.0
  %226 = vmatpush1.msra.mxu0 0.0
  %227 = vmatprep.subr.mxu0 0.0
  %228 = vmatpush1.msra.mxu0 0.0
  %229 = vmatprep.subr.mxu0 0.0
  %230 = vmatpush1.msra.mxu0 0.0
  %231 = vmatprep.subr.mxu0 0.0
  %232 = vmatpush1.msra.mxu0 0.0
  %233 = vmatprep.subr.mxu0 0.0
  %234 = vmatpush1.msra.mxu0 0.0
  %235 = vmatprep.subr.mxu0 0.0
  %236 = vmatpush1.msra.mxu0 0.0
  %237 = vmatprep.subr.mxu0 0.0
  %238 = vmatpush1.msra.mxu0 0.0
  %239 = vmatprep.subr.mxu0 0.0
  %240 = vmatpush1.msra.mxu0 0.0
  %241 = vmatprep.subr.mxu0 0.0
  %242 = vmatpush1.msra.mxu0 0.0
  %243 = vmatprep.subr.mxu0 0.0
  %244 = vmatpush1.msra.mxu0 0.0
  %245 = vmatprep.subr.mxu0 0.0
  %246 = vmatpush1.msra.mxu0 0.0
  %247 = vmatprep.mubr.f32.mxu0 0.0
  %248 = vmatmul.mubr.f32.gmra.mrb[0].mxu0 %v87
  %v249 = vpop.f32.mrb[0].mxu0
  %v250 = vadd.f32 0.0, %v249
  %v251 = vpop.f32.mrb[0].mxu0
  %252 = vmatprep.mubr.f32.mxu0 0.0
  %253 = vmatmul.mubr.f32.gmra.mrb[0].mxu0 %v88
  %v254 = vpop.f32.mrb[0].mxu0
  %v255 = vadd.f32 0.0, %v254
  %v256 = vpop.f32.mrb[0].mxu0
  %257 = vmatprep.mubr.f32.mxu0 0.0
  %258 = vmatmul.mubr.f32.gmra.mrb[0].mxu0 %v89
  %v259 = vpop.f32.mrb[0].mxu0
  %v260 = vadd.f32 0.0, %v259
  %v261 = vpop.f32.mrb[0].mxu0
  %262 = vmatprep.mubr.f32.mxu0 0.0
  %263 = vmatmul.mubr.f32.gmra.mrb[0].mxu0 %v90
  %v264 = vpop.f32.mrb[0].mxu0
  %v265 = vadd.f32 0.0, %v264
  %v266 = vpop.f32.mrb[0].mxu0
  %267 = vmatprep.mubr.f32.mxu0 0.0
  %268 = vmatmul.mubr.f32.gmra.mrb[0].mxu0 %v91
  %v269 = vpop.f32.mrb[0].mxu0
  %v270 = vadd.f32 0.0, %v269
  %v271 = vpop.f32.mrb[0].mxu0
  %272 = vmatprep.mubr.f32.mxu0 0.0
  %273 = vmatmul.mubr.f32.gmra.mrb[0].mxu0 %v92
  %v274 = vpop.f32.mrb[0].mxu0
  %v275 = vadd.f32 0.0, %v274
  %v276 = vpop.f32.mrb[0].mxu0
  %277 = vmatprep.mubr.f32.mxu0 0.0
  %278 = vmatmul.mubr.f32.gmra.mrb[0].mxu0 %v93
  %v279 = vpop.f32.mrb[0].mxu0
  %v280 = vadd.f32 0.0, %v279
  %v281 = vpop.f32.mrb[0].mxu0
  %282 = vmatprep.mubr.f32.mxu0 0.0
  %283 = vmatmul.mubr.f32.gmra.mrb[0].mxu0 %v94
  %v284 = vpop.f32.mrb[0].mxu0
  %v285 = vadd.f32 0.0, %v284
  %v286 = vpop.f32.mrb[0].mxu0
  %287 = vmatprep.mubr.f32.mxu0 0.0
  %288 = vmatmul.mubr.f32.gmra.mrb[0].mxu0 %v95
  %v289 = vpop.f32.mrb[0].mxu0
  %v290 = vadd.f32 0.0, %v289
  %v291 = vpop.f32.mrb[0].mxu0
  %292 = vmatprep.mubr.f32.mxu0 0.0
  %293 = vmatmul.mubr.f32.gmra.mrb[0].mxu0 %v96
  %v294 = vpop.f32.mrb[0].mxu0
  %v295 = vadd.f32 0.0, %v294
  %v296 = vpop.f32.mrb[0].mxu0
  %297 = vmatprep.mubr.f32.mxu0 0.0
  %298 = vmatmul.mubr.f32.gmra.mrb[0].mxu0 %v97
  %v299 = vpop.f32.mrb[0].mxu0
  %v300 = vadd.f32 0.0, %v299
  %v301 = vpop.f32.mrb[0].mxu0
  %302 = vmatprep.mubr.f32.mxu0 0.0
  %303 = vmatmul.mubr.f32.gmra.mrb[0].mxu0 %v98
  %v304 = vpop.f32.mrb[0].mxu0
  %v305 = vadd.f32 0.0, %v304
  %v306 = vpop.f32.mrb[0].mxu0
  %307 = vmatprep.mubr.f32.mxu0 0.0
  %308 = vmatmul.mubr.f32.gmra.mrb[0].mxu0 %v99
  %v309 = vpop.f32.mrb[0].mxu0
  %v310 = vadd.f32 0.0, %v309
  %v311 = vpop.f32.mrb[0].mxu0
  %312 = vmatprep.mubr.f32.mxu0 0.0
  %313 = vmatmul.mubr.f32.gmra.mrb[0].mxu0 %v100
  %v314 = vpop.f32.mrb[0].mxu0
  %v315 = vadd.f32 0.0, %v314
  %v316 = vpop.f32.mrb[0].mxu0
  %317 = vmatprep.mubr.f32.mxu0 0.0
  %318 = vmatmul.mubr.f32.gmra.mrb[0].mxu0 %v101
  %v319 = vpop.f32.mrb[0].mxu0
  %v320 = vadd.f32 0.0, %v319
  %v321 = vpop.f32.mrb[0].mxu0
  %322 = vmatprep.mubr.f32.mxu0 0.0
  %323 = vmatmul.mubr.f32.gmra.mrb[0].mxu0 %v102
  %v324 = vpop.f32.mrb[0].mxu0
  %v325 = vadd.f32 0.0, %v324
  %v326 = vpop.f32.mrb[0].mxu0
  %327 = vmatprep.mubr.f32.mxu0 0.0
  %328 = vmatmul.mubr.f32.gmra.mrb[0].mxu0 %v103
  %v329 = vpop.f32.mrb[0].mxu0
  %v330 = vadd.f32 0.0, %v329
  %v331 = vpop.f32.mrb[0].mxu0
  %332 = vmatprep.mubr.f32.mxu0 0.0
  %333 = vmatmul.mubr.f32.gmra.mrb[0].mxu0 %v104
  %v334 = vpop.f32.mrb[0].mxu0
  %v335 = vadd.f32 0.0, %v334
  %v336 = vpop.f32.mrb[0].mxu0
  %337 = vmatprep.mubr.f32.mxu0 0.0
  %338 = vmatmul.mubr.f32.gmra.mrb[0].mxu0 %v105
  %v339 = vpop.f32.mrb[0].mxu0
  %v340 = vadd.f32 0.0, %v339
  %v341 = vpop.f32.mrb[0].mxu0
  %342 = vmatprep.mubr.f32.mxu0 0.0
  %343 = vmatmul.mubr.f32.gmra.mrb[0].mxu0 %v106
  %v344 = vpop.f32.mrb[0].mxu0
  %v345 = vadd.f32 0.0, %v344
  %v346 = vpop.f32.mrb[0].mxu0
  %347 = vmatprep.mubr.f32.mxu0 0.0
  %348 = vmatmul.mubr.f32.gmra.mrb[0].mxu0 %v107
  %v349 = vpop.f32.mrb[0].mxu0
  %v350 = vadd.f32 0.0, %v349
  %v351 = vpop.f32.mrb[0].mxu0
  %352 = vmatprep.mubr.f32.mxu0 0.0
  %353 = vmatmul.mubr.f32.gmra.mrb[0].mxu0 %v108
  %v354 = vpop.f32.mrb[0].mxu0
  %v355 = vadd.f32 0.0, %v354
  %v356 = vpop.f32.mrb[0].mxu0
  %357 = vmatprep.mubr.f32.mxu0 0.0
  %358 = vmatmul.mubr.f32.gmra.mrb[0].mxu0 %v109
  %v359 = vpop.f32.mrb[0].mxu0
  %v360 = vadd.f32 0.0, %v359
  %v361 = vpop.f32.mrb[0].mxu0
  %362 = vmatprep.mubr.f32.mxu0 0.0
  %363 = vmatmul.mubr.f32.gmra.mrb[0].mxu0 %v110
  %v364 = vpop.f32.mrb[0].mxu0
  %v365 = vadd.f32 0.0, %v364
  %v366 = vpop.f32.mrb[0].mxu0
  %367 = vmatprep.mubr.f32.mxu0 0.0
  %368 = vmatmul.mubr.f32.gmra.mrb[0].mxu0 %v111
  %v369 = vpop.f32.mrb[0].mxu0
  %v370 = vadd.f32 0.0, %v369
  %v371 = vpop.f32.mrb[0].mxu0
  %372 = vmatprep.mubr.f32.mxu0 0.0
  %373 = vmatmul.mubr.f32.gmra.mrb[0].mxu0 %v112
  %v374 = vpop.f32.mrb[0].mxu0
  %v375 = vadd.f32 0.0, %v374
  %v376 = vpop.f32.mrb[0].mxu0
  %377 = vmatprep.mubr.f32.mxu0 0.0
  %378 = vmatmul.mubr.f32.gmra.mrb[0].mxu0 %v113
  %v379 = vpop.f32.mrb[0].mxu0
  %v380 = vadd.f32 0.0, %v379
  %v381 = vpop.f32.mrb[0].mxu0
  %382 = vmatprep.mubr.f32.mxu0 0.0
  %383 = vmatmul.mubr.f32.gmra.mrb[0].mxu0 %v114
  %v384 = vpop.f32.mrb[0].mxu0
  %v385 = vadd.f32 0.0, %v384
  %v386 = vpop.f32.mrb[0].mxu0
  %387 = vmatprep.mubr.f32.mxu0 0.0
  %388 = vmatmul.mubr.f32.gmra.mrb[0].mxu0 %v115
  %v389 = vpop.f32.mrb[0].mxu0
  %v390 = vadd.f32 0.0, %v389
  %v391 = vpop.f32.mrb[0].mxu0
  %392 = vmatprep.mubr.f32.mxu0 0.0
  %393 = vmatmul.mubr.f32.gmra.mrb[0].mxu0 %v116
  %v394 = vpop.f32.mrb[0].mxu0
  %v395 = vadd.f32 0.0, %v394
  %v396 = vpop.f32.mrb[0].mxu0
  %397 = vmatprep.mubr.f32.mxu0 0.0
  %398 = vmatmul.mubr.f32.gmra.mrb[0].mxu0 %v117
  %v399 = vpop.f32.mrb[0].mxu0
  %v400 = vadd.f32 0.0, %v399
  %v401 = vpop.f32.mrb[0].mxu0
  %402 = vmatprep.mubr.f32.mxu0 0.0
  %403 = vmatmul.mubr.f32.gmra.mrb[0].mxu0 %v118
  %v404 = vpop.f32.mrb[0].mxu0
  %v405 = vadd.f32 0.0, %v404
  %v406 = vpop.f32.mrb[0].mxu0
  %407 = vmatprep.mubr.f32.mxu0 0.0
  %408 = vmatmul.mubr.f32.gmra.mrb[0].mxu0 %v119
  %v409 = vpop.f32.mrb[0].mxu0
  %v410 = vadd.f32 0.0, %v409
  %v411 = vpop.f32.mrb[0].mxu0
  %412 = vmatprep.mubr.f32.mxu0 0.0
  %413 = vmatmul.mubr.f32.gmra.mrb[0].mxu0 %v120
  %v414 = vpop.f32.mrb[0].mxu0
  %v415 = vadd.f32 0.0, %v414
  %v416 = vpop.f32.mrb[0].mxu0
  %417 = vmatprep.mubr.f32.mxu0 0.0
  %418 = vmatmul.mubr.f32.gmra.mrb[0].mxu0 %v121
  %v419 = vpop.f32.mrb[0].mxu0
  %v420 = vadd.f32 0.0, %v419
  %v421 = vpop.f32.mrb[0].mxu0
  %422 = vmatprep.mubr.f32.mxu0 0.0
  %423 = vmatmul.mubr.f32.gmra.mrb[0].mxu0 %v122
  %v424 = vpop.f32.mrb[0].mxu0
  %v425 = vadd.f32 0.0, %v424
  %v426 = vpop.f32.mrb[0].mxu0
  %427 = vmatprep.mubr.f32.mxu0 0.0
  %428 = vmatmul.mubr.f32.gmra.mrb[0].mxu0 %v123
  %v429 = vpop.f32.mrb[0].mxu0
  %v430 = vadd.f32 0.0, %v429
  %v431 = vpop.f32.mrb[0].mxu0
  %432 = vmatprep.mubr.f32.mxu0 0.0
  %433 = vmatmul.mubr.f32.gmra.mrb[0].mxu0 %v124
  %v434 = vpop.f32.mrb[0].mxu0
  %v435 = vadd.f32 0.0, %v434
  %v436 = vpop.f32.mrb[0].mxu0
  %437 = vmatprep.mubr.f32.mxu0 0.0
  %438 = vmatmul.mubr.f32.gmra.mrb[0].mxu0 %v125
  %v439 = vpop.f32.mrb[0].mxu0
  %v440 = vadd.f32 0.0, %v439
  %v441 = vpop.f32.mrb[0].mxu0
  %442 = vmatprep.mubr.f32.mxu0 0.0
  %443 = vmatmul.mubr.f32.gmra.mrb[0].mxu0 %v126
  %v444 = vpop.f32.mrb[0].mxu0
  %v445 = vadd.f32 0.0, %v444
  %v446 = vpop.f32.mrb[0].mxu0
  %447 = vmatprep.mubr.f32.mxu0 0.0
  %448 = vmatmul.mubr.f32.gmra.mrb[0].mxu0 %v127
  %v449 = vpop.f32.mrb[0].mxu0
  %v450 = vadd.f32 0.0, %v449
  %v451 = vpop.f32.mrb[0].mxu0
  %452 = vmatprep.mubr.f32.mxu0 0.0
  %453 = vmatmul.mubr.f32.gmra.mrb[0].mxu0 %v128
  %v454 = vpop.f32.mrb[0].mxu0
  %v455 = vadd.f32 0.0, %v454
  %v456 = vpop.f32.mrb[0].mxu0
  %457 = vmatprep.mubr.f32.mxu0 0.0
  %458 = vmatmul.mubr.f32.gmra.mrb[0].mxu0 %v129
  %v459 = vpop.f32.mrb[0].mxu0
  %v460 = vadd.f32 0.0, %v459
  %v461 = vpop.f32.mrb[0].mxu0
  %462 = vmatprep.mubr.f32.mxu0 0.0
  %463 = vmatmul.mubr.f32.gmra.mrb[0].mxu0 %v130
  %v464 = vpop.f32.mrb[0].mxu0
  %v465 = vadd.f32 0.0, %v464
  %v466 = vpop.f32.mrb[0].mxu0
  %467 = vmatprep.mubr.f32.mxu0 0.0
  %468 = vmatmul.mubr.f32.gmra.mrb[0].mxu0 %v131
  %v469 = vpop.f32.mrb[0].mxu0
  %v470 = vadd.f32 0.0, %v469
  %v471 = vpop.f32.mrb[0].mxu0
  %472 = vmatprep.mubr.f32.mxu0 0.0
  %473 = vmatmul.mubr.f32.gmra.mrb[0].mxu0 %v132
  %v474 = vpop.f32.mrb[0].mxu0
  %v475 = vadd.f32 0.0, %v474
  %v476 = vpop.f32.mrb[0].mxu0
  %477 = vmatprep.mubr.f32.mxu0 0.0
  %478 = vmatmul.mubr.f32.gmra.mrb[0].mxu0 %v133
  %v479 = vpop.f32.mrb[0].mxu0
  %v480 = vadd.f32 0.0, %v479
  %v481 = vpop.f32.mrb[0].mxu0
  %482 = vmatprep.mubr.f32.mxu0 0.0
  %483 = vmatmul.mubr.f32.gmra.mrb[0].mxu0 %v134
  %v484 = vpop.f32.mrb[0].mxu0
  %v485 = vadd.f32 0.0, %v484
  %v486 = vpop.f32.mrb[0].mxu0
  %487 = vmatprep.mubr.f32.mxu0 0.0
  %488 = vmatmul.mubr.f32.gmra.mrb[0].mxu0 %v135
  %v489 = vpop.f32.mrb[0].mxu0
  %v490 = vadd.f32 0.0, %v489
  %v491 = vpop.f32.mrb[0].mxu0
  %492 = vmatprep.mubr.f32.mxu0 0.0
  %493 = vmatmul.mubr.f32.gmra.mrb[0].mxu0 %v136
  %v494 = vpop.f32.mrb[0].mxu0
  %v495 = vadd.f32 0.0, %v494
  %v496 = vpop.f32.mrb[0].mxu0
  %497 = vmatprep.mubr.f32.mxu0 0.0
  %498 = vmatmul.mubr.f32.gmra.mrb[0].mxu0 %v137
  %v499 = vpop.f32.mrb[0].mxu0
  %v500 = vadd.f32 0.0, %v499
  %v501 = vpop.f32.mrb[0].mxu0
  %502 = vmatprep.mubr.f32.mxu0 0.0
  %503 = vmatmul.mubr.f32.gmra.mrb[0].mxu0 %v138
  %v504 = vpop.f32.mrb[0].mxu0
  %v505 = vadd.f32 0.0, %v504
  %v506 = vpop.f32.mrb[0].mxu0
  %507 = vmatprep.mubr.f32.mxu0 0.0
  %508 = vmatmul.mubr.f32.gmra.mrb[0].mxu0 %v139
  %v509 = vpop.f32.mrb[0].mxu0
  %v510 = vadd.f32 0.0, %v509
  %v511 = vpop.f32.mrb[0].mxu0
  %512 = vmatprep.mubr.f32.mxu0 0.0
  %513 = vmatmul.mubr.f32.gmra.mrb[0].mxu0 %v140
  %v514 = vpop.f32.mrb[0].mxu0
  %v515 = vadd.f32 0.0, %v514
  %v516 = vpop.f32.mrb[0].mxu0
  %517 = vmatprep.mubr.f32.mxu0 0.0
  %518 = vmatmul.mubr.f32.gmra.mrb[0].mxu0 %v141
  %v519 = vpop.f32.mrb[0].mxu0
  %v520 = vadd.f32 0.0, %v519
  %v521 = vpop.f32.mrb[0].mxu0
  %522 = vmatprep.mubr.f32.mxu0 0.0
  %523 = vmatmul.mubr.f32.gmra.mrb[0].mxu0 %v142
  %v524 = vpop.f32.mrb[0].mxu0
  %v525 = vadd.f32 0.0, %v524
  %v526 = vpop.f32.mrb[0].mxu0
  %527 = vmatprep.mubr.f32.mxu0 0.0
  %528 = vmatmul.mubr.f32.gmra.mrb[0].mxu0 %v143
  %v529 = vpop.f32.mrb[0].mxu0
  %v530 = vadd.f32 0.0, %v529
  %v531 = vpop.f32.mrb[0].mxu0
  %532 = vmatprep.mubr.f32.mxu0 0.0
  %533 = vmatmul.mubr.f32.gmra.mrb[0].mxu0 %v144
  %v534 = vpop.f32.mrb[0].mxu0
  %v535 = vadd.f32 0.0, %v534
  %v536 = vpop.f32.mrb[0].mxu0
  %537 = vmatprep.mubr.f32.mxu0 0.0
  %538 = vmatmul.mubr.f32.gmra.mrb[0].mxu0 %v145
  %v539 = vpop.f32.mrb[0].mxu0
  %v540 = vadd.f32 0.0, %v539
  %v541 = vpop.f32.mrb[0].mxu0
  %542 = vmatprep.mubr.f32.mxu0 0.0
  %543 = vmatmul.mubr.f32.gmra.mrb[0].mxu0 %v146
  %v544 = vpop.f32.mrb[0].mxu0
  %v545 = vadd.f32 0.0, %v544
  %v546 = vpop.f32.mrb[0].mxu0
  %547 = vmatprep.mubr.f32.mxu0 0.0
  %548 = vmatmul.mubr.f32.gmra.mrb[0].mxu0 %v147
  %v549 = vpop.f32.mrb[0].mxu0
  %v550 = vadd.f32 0.0, %v549
  %v551 = vpop.f32.mrb[0].mxu0
  %552 = vmatprep.mubr.f32.mxu0 0.0
  %553 = vmatmul.mubr.f32.gmra.mrb[0].mxu0 %v148
  %v554 = vpop.f32.mrb[0].mxu0
  %v555 = vadd.f32 0.0, %v554
  %v556 = vpop.f32.mrb[0].mxu0
  %557 = vmatprep.mubr.f32.mxu0 0.0
  %558 = vmatmul.mubr.f32.gmra.mrb[0].mxu0 %v149
  %v559 = vpop.f32.mrb[0].mxu0
  %v560 = vadd.f32 0.0, %v559
  %v561 = vpop.f32.mrb[0].mxu0
  %562 = vmatprep.mubr.f32.mxu0 0.0
  %563 = vmatmul.mubr.f32.gmra.mrb[0].mxu0 %v150
  %v564 = vpop.f32.mrb[0].mxu0
  %v565 = vadd.f32 0.0, %v564
  %v566 = vpop.f32.mrb[0].mxu0
  %567 = vdwg.mxu0
  %v568 = vld [vmem:[#allocation3] sm:$0x1]
  %v569 = vadd.f32 %v250, %v255
  %v570 = vadd.f32 %v569, %v260
  %v571 = vadd.f32 %v570, %v265
  %v572 = vadd.f32 %v571, %v270
  %v573 = vadd.f32 %v572, %v275
  %v574 = vadd.f32 %v573, %v280
  %v575 = vadd.f32 %v574, %v285
  %v576 = vadd.f32 %v575, %v290
  %v577 = vadd.f32 %v576, %v295
  %v578 = vadd.f32 %v577, %v300
  %v579 = vadd.f32 %v578, %v305
  %v580 = vadd.f32 %v579, %v310
  %v581 = vadd.f32 %v580, %v315
  %v582 = vadd.f32 %v581, %v320
  %v583 = vadd.f32 %v582, %v325
  %v584 = vadd.f32 %v583, %v330
  %v585 = vadd.f32 %v584, %v335
  %v586 = vadd.f32 %v585, %v340
  %v587 = vadd.f32 %v586, %v345
  %v588 = vadd.f32 %v587, %v350
  %v589 = vadd.f32 %v588, %v355
  %v590 = vadd.f32 %v589, %v360
  %v591 = vadd.f32 %v590, %v365
  %v592 = vadd.f32 %v591, %v370
  %v593 = vadd.f32 %v592, %v375
  %v594 = vadd.f32 %v593, %v380
  %v595 = vadd.f32 %v594, %v385
  %v596 = vadd.f32 %v595, %v390
  %v597 = vadd.f32 %v596, %v395
  %v598 = vadd.f32 %v597, %v400
  %v599 = vadd.f32 %v598, %v405
  %v600 = vadd.f32 %v599, %v410
  %v601 = vadd.f32 %v600, %v415
  %v602 = vadd.f32 %v601, %v420
  %v603 = vadd.f32 %v602, %v425
  %v604 = vadd.f32 %v603, %v430
  %v605 = vadd.f32 %v604, %v435
  %v606 = vadd.f32 %v605, %v440
  %v607 = vadd.f32 %v606, %v445
  %v608 = vadd.f32 %v607, %v450
  %v609 = vadd.f32 %v608, %v455
  %v610 = vadd.f32 %v609, %v460
  %v611 = vadd.f32 %v610, %v465
  %v612 = vadd.f32 %v611, %v470
  %v613 = vadd.f32 %v612, %v475
  %v614 = vadd.f32 %v613, %v480
  %v615 = vadd.f32 %v614, %v485
  %v616 = vadd.f32 %v615, %v490
  %v617 = vadd.f32 %v616, %v495
  %v618 = vadd.f32 %v617, %v500
  %v619 = vadd.f32 %v618, %v505
  %v620 = vadd.f32 %v619, %v510
  %v621 = vadd.f32 %v620, %v515
  %v622 = vadd.f32 %v621, %v520
  %v623 = vadd.f32 %v622, %v525
  %v624 = vadd.f32 %v623, %v530
  %v625 = vadd.f32 %v624, %v535
  %v626 = vadd.f32 %v625, %v540
  %v627 = vadd.f32 %v626, %v545
  %v628 = vadd.f32 %v627, %v550
  %v629 = vadd.f32 %v628, %v555
  %v630 = vadd.f32 %v629, %v560
  %v631 = vadd.f32 %v630, %v565
  %v632 = vrot.slane %v631, 4
  %v633 = vadd.f32 %v631, %v632
  %v634 = vrot.slane %v633, 2
  %v635 = vadd.f32 %v633, %v634
  %v636 = vrot.slane %v635, 1
  %v637 = vadd.f32 %v635, %v636
  %v638 = vadd.f32 %v568, %v637
  %639 = vst [vmem:[#allocation3] sm:$0x1] %v638
  %v640 = vld [vmem:[#allocation4] sm:$0x1]
  %v641 = vmul.f32 %v250, %v250
  %v642 = vmul.f32 %v255, %v255
  %v643 = vmul.f32 %v260, %v260
  %v644 = vmul.f32 %v265, %v265
  %v645 = vmul.f32 %v270, %v270
  %v646 = vmul.f32 %v275, %v275
  %v647 = vmul.f32 %v280, %v280
  %v648 = vmul.f32 %v285, %v285
  %v649 = vmul.f32 %v290, %v290
  %v650 = vmul.f32 %v295, %v295
  %v651 = vmul.f32 %v300, %v300
  %v652 = vmul.f32 %v305, %v305
  %v653 = vmul.f32 %v310, %v310
  %v654 = vmul.f32 %v315, %v315
  %v655 = vmul.f32 %v320, %v320
  %v656 = vmul.f32 %v325, %v325
  %v657 = vmul.f32 %v330, %v330
  %v658 = vmul.f32 %v335, %v335
  %v659 = vmul.f32 %v340, %v340
  %v660 = vmul.f32 %v345, %v345
  %v661 = vmul.f32 %v350, %v350
  %v662 = vmul.f32 %v355, %v355
  %v663 = vmul.f32 %v360, %v360
  %v664 = vmul.f32 %v365, %v365
  %v665 = vmul.f32 %v370, %v370
  %v666 = vmul.f32 %v375, %v375
  %v667 = vmul.f32 %v380, %v380
  %v668 = vmul.f32 %v385, %v385
  %v669 = vmul.f32 %v390, %v390
  %v670 = vmul.f32 %v395, %v395
  %v671 = vmul.f32 %v400, %v400
  %v672 = vmul.f32 %v405, %v405
  %v673 = vmul.f32 %v410, %v410
  %v674 = vmul.f32 %v415, %v415
  %v675 = vmul.f32 %v420, %v420
  %v676 = vmul.f32 %v425, %v425
  %v677 = vmul.f32 %v430, %v430
  %v678 = vmul.f32 %v435, %v435
  %v679 = vmul.f32 %v440, %v440
  %v680 = vmul.f32 %v445, %v445
  %v681 = vmul.f32 %v450, %v450
  %v682 = vmul.f32 %v455, %v455
  %v683 = vmul.f32 %v460, %v460
  %v684 = vmul.f32 %v465, %v465
  %v685 = vmul.f32 %v470, %v470
  %v686 = vmul.f32 %v475, %v475
  %v687 = vmul.f32 %v480, %v480
  %v688 = vmul.f32 %v485, %v485
  %v689 = vmul.f32 %v490, %v490
  %v690 = vmul.f32 %v495, %v495
  %v691 = vmul.f32 %v500, %v500
  %v692 = vmul.f32 %v505, %v505
  %v693 = vmul.f32 %v510, %v510
  %v694 = vmul.f32 %v515, %v515
  %v695 = vmul.f32 %v520, %v520
  %v696 = vmul.f32 %v525, %v525
  %v697 = vmul.f32 %v530, %v530
  %v698 = vmul.f32 %v535, %v535
  %v699 = vmul.f32 %v540, %v540
  %v700 = vmul.f32 %v545, %v545
  %v701 = vmul.f32 %v550, %v550
  %v702 = vmul.f32 %v555, %v555
  %v703 = vmul.f32 %v560, %v560
  %v704 = vmul.f32 %v565, %v565
  %v705 = vadd.f32 %v641, %v642
  %v706 = vadd.f32 %v705, %v643
  %v707 = vadd.f32 %v706, %v644
  %v708 = vadd.f32 %v707, %v645
  %v709 = vadd.f32 %v708, %v646
  %v710 = vadd.f32 %v709, %v647
  %v711 = vadd.f32 %v710, %v648
  %v712 = vadd.f32 %v711, %v649
  %v713 = vadd.f32 %v712, %v650
  %v714 = vadd.f32 %v713, %v651
  %v715 = vadd.f32 %v714, %v652
  %v716 = vadd.f32 %v715, %v653
  %v717 = vadd.f32 %v716, %v654
  %v718 = vadd.f32 %v717, %v655
  %v719 = vadd.f32 %v718, %v656
  %v720 = vadd.f32 %v719, %v657
  %v721 = vadd.f32 %v720, %v658
  %v722 = vadd.f32 %v721, %v659
  %v723 = vadd.f32 %v722, %v660
  %v724 = vadd.f32 %v723, %v661
  %v725 = vadd.f32 %v724, %v662
  %v726 = vadd.f32 %v725, %v663
  %v727 = vadd.f32 %v726, %v664
  %v728 = vadd.f32 %v727, %v665
  %v729 = vadd.f32 %v728, %v666
  %v730 = vadd.f32 %v729, %v667
  %v731 = vadd.f32 %v730, %v668
  %v732 = vadd.f32 %v731, %v669
  %v733 = vadd.f32 %v732, %v670
  %v734 = vadd.f32 %v733, %v671
  %v735 = vadd.f32 %v734, %v672
  %v736 = vadd.f32 %v735, %v673
  %v737 = vadd.f32 %v736, %v674
  %v738 = vadd.f32 %v737, %v675
  %v739 = vadd.f32 %v738, %v676
  %v740 = vadd.f32 %v739, %v677
  %v741 = vadd.f32 %v740, %v678
  %v742 = vadd.f32 %v741, %v679
  %v743 = vadd.f32 %v742, %v680
  %v744 = vadd.f32 %v743, %v681
  %v745 = vadd.f32 %v744, %v682
  %v746 = vadd.f32 %v745, %v683
  %v747 = vadd.f32 %v746, %v684
  %v748 = vadd.f32 %v747, %v685
  %v749 = vadd.f32 %v748, %v686
  %v750 = vadd.f32 %v749, %v687
  %v751 = vadd.f32 %v750, %v688
  %v752 = vadd.f32 %v751, %v689
  %v753 = vadd.f32 %v752, %v690
  %v754 = vadd.f32 %v753, %v691
  %v755 = vadd.f32 %v754, %v692
  %v756 = vadd.f32 %v755, %v693
  %v757 = vadd.f32 %v756, %v694
  %v758 = vadd.f32 %v757, %v695
  %v759 = vadd.f32 %v758, %v696
  %v760 = vadd.f32 %v759, %v697
  %v761 = vadd.f32 %v760, %v698
  %v762 = vadd.f32 %v761, %v699
  %v763 = vadd.f32 %v762, %v700
  %v764 = vadd.f32 %v763, %v701
  %v765 = vadd.f32 %v764, %v702
  %v766 = vadd.f32 %v765, %v703
  %v767 = vadd.f32 %v766, %v704
  %v768 = vrot.slane %v767, 4
  %v769 = vadd.f32 %v767, %v768
  %v770 = vrot.slane %v769, 2
  %v771 = vadd.f32 %v769, %v770
  %v772 = vrot.slane %v771, 1
  %v773 = vadd.f32 %v771, %v772
  %v774 = vadd.f32 %v640, %v773
  %775 = vst [vmem:[#allocation4] sm:$0x1] %v774
  %s776 = smul.u32 0, 512
  %s777 = scalar_lea.vmem [#allocation2], %s776
  %778 = vst [vmem:[%s777] sm:$0xff] %v250
  %779 = vst [vmem:[%s777 + $0x8] sm:$0xff] %v255
  %780 = vst [vmem:[%s777 + $0x10] sm:$0xff] %v260
  %781 = vst [vmem:[%s777 + $0x18] sm:$0xff] %v265
  %782 = vst [vmem:[%s777 + $0x20] sm:$0xff] %v270
  %783 = vst [vmem:[%s777 + $0x28] sm:$0xff] %v275
  %784 = vst [vmem:[%s777 + $0x30] sm:$0xff] %v280
  %785 = vst [vmem:[%s777 + $0x38] sm:$0xff] %v285
  %786 = vst [vmem:[%s777 + $0x40] sm:$0xff] %v290
  %787 = vst [vmem:[%s777 + $0x48] sm:$0xff] %v295
  %788 = vst [vmem:[%s777 + $0x50] sm:$0xff] %v300
  %789 = vst [vmem:[%s777 + $0x58] sm:$0xff] %v305
  %790 = vst [vmem:[%s777 + $0x60] sm:$0xff] %v310
  %791 = vst [vmem:[%s777 + $0x68] sm:$0xff] %v315
  %792 = vst [vmem:[%s777 + $0x70] sm:$0xff] %v320
  %793 = vst [vmem:[%s777 + $0x78] sm:$0xff] %v325
  %794 = vst [vmem:[%s777 + $0x80] sm:$0xff] %v330
  %795 = vst [vmem:[%s777 + $0x88] sm:$0xff] %v335
  %796 = vst [vmem:[%s777 + $0x90] sm:$0xff] %v340
  %797 = vst [vmem:[%s777 + $0x98] sm:$0xff] %v345
  %798 = vst [vmem:[%s777 + $0xa0] sm:$0xff] %v350
  %799 = vst [vmem:[%s777 + $0xa8] sm:$0xff] %v355
  %800 = vst [vmem:[%s777 + $0xb0] sm:$0xff] %v360
  %801 = vst [vmem:[%s777 + $0xb8] sm:$0xff] %v365
  %802 = vst [vmem:[%s777 + $0xc0] sm:$0xff] %v370
  %803 = vst [vmem:[%s777 + $0xc8] sm:$0xff] %v375
  %804 = vst [vmem:[%s777 + $0xd0] sm:$0xff] %v380
  %805 = vst [vmem:[%s777 + $0xd8] sm:$0xff] %v385
  %806 = vst [vmem:[%s777 + $0xe0] sm:$0xff] %v390
  %807 = vst [vmem:[%s777 + $0xe8] sm:$0xff] %v395
  %808 = vst [vmem:[%s777 + $0xf0] sm:$0xff] %v400
  %809 = vst [vmem:[%s777 + $0xf8] sm:$0xff] %v405
  %810 = vst [vmem:[%s777 + $0x100] sm:$0xff] %v410
  %811 = vst [vmem:[%s777 + $0x108] sm:$0xff] %v415
  %812 = vst [vmem:[%s777 + $0x110] sm:$0xff] %v420
  %813 = vst [vmem:[%s777 + $0x118] sm:$0xff] %v425
  %814 = vst [vmem:[%s777 + $0x120] sm:$0xff] %v430
  %815 = vst [vmem:[%s777 + $0x128] sm:$0xff] %v435
  %816 = vst [vmem:[%s777 + $0x130] sm:$0xff] %v440
  %817 = vst [vmem:[%s777 + $0x138] sm:$0xff] %v445
  %818 = vst [vmem:[%s777 + $0x140] sm:$0xff] %v450
  %819 = vst [vmem:[%s777 + $0x148] sm:$0xff] %v455
  %820 = vst [vmem:[%s777 + $0x150] sm:$0xff] %v460
  %821 = vst [vmem:[%s777 + $0x158] sm:$0xff] %v465
  %822 = vst [vmem:[%s777 + $0x160] sm:$0xff] %v470
  %823 = vst [vmem:[%s777 + $0x168] sm:$0xff] %v475
  %824 = vst [vmem:[%s777 + $0x170] sm:$0xff] %v480
  %825 = vst [vmem:[%s777 + $0x178] sm:$0xff] %v485
  %826 = vst [vmem:[%s777 + $0x180] sm:$0xff] %v490
  %827 = vst [vmem:[%s777 + $0x188] sm:$0xff] %v495
  %828 = vst [vmem:[%s777 + $0x190] sm:$0xff] %v500
  %829 = vst [vmem:[%s777 + $0x198] sm:$0xff] %v505
  %830 = vst [vmem:[%s777 + $0x1a0] sm:$0xff] %v510
  %831 = vst [vmem:[%s777 + $0x1a8] sm:$0xff] %v515
  %832 = vst [vmem:[%s777 + $0x1b0] sm:$0xff] %v520
  %833 = vst [vmem:[%s777 + $0x1b8] sm:$0xff] %v525
  %834 = vst [vmem:[%s777 + $0x1c0] sm:$0xff] %v530
  %835 = vst [vmem:[%s777 + $0x1c8] sm:$0xff] %v535
  %836 = vst [vmem:[%s777 + $0x1d0] sm:$0xff] %v540
  %837 = vst [vmem:[%s777 + $0x1d8] sm:$0xff] %v545
  %838 = vst [vmem:[%s777 + $0x1e0] sm:$0xff] %v550
  %839 = vst [vmem:[%s777 + $0x1e8] sm:$0xff] %v555
  %840 = vst [vmem:[%s777 + $0x1f0] sm:$0xff] %v560
  %841 = vst [vmem:[%s777 + $0x1f8] sm:$0xff] %v565
  // Predicated region
  $region22: #{_lambda_.7} parent=0 // pred_check
    %p842 = pneg %p17
  $region23: #{_lambda_.7} parent=0 // pred_check_branch
    %844 = sbr.rel (%p842) target = $region25
  $region24: #{_lambda_.7} parent=0 // pred_region
    %v845 = vld [vmem:[#allocation3] sm:$0x1]
    %v846 = vmul.f32 %v845, 0.001953125
    %v847 = vld [vmem:[#allocation4] sm:$0x1]
    %v848 = vmul.f32 %v847, 0.001953125
    %v849 = vmul.f32 %v846, %v846
    %v850 = vsub.f32 %v848, %v849
    %v851 = vmax.f32 %v850, 0.0
    %v852 = vld [vmem:[%s2] sm:$0x1]
    %v853 = vadd.f32 %v851, 1e-05
    %v854 = vrsqrt.pop %v853
    %v855 = vmul.f32 %v852, %v854
    %v856 = vld [vmem:[%s3] sm:$0x1]
    %v857 = vmul.f32 %v846, %v855
    %v858 = vsub.f32 %v856, %v857
    %v859 = vld [vmem:[#allocation2] sm:$0xff]
    %v860 = vld [vmem:[#allocation2 + $0x8] sm:$0xff]
    %v861 = vld [vmem:[#allocation2 + $0x10] sm:$0xff]
    %v862 = vld [vmem:[#allocation2 + $0x18] sm:$0xff]
    %v863 = vld [vmem:[#allocation2 + $0x20] sm:$0xff]
    %v864 = vld [vmem:[#allocation2 + $0x28] sm:$0xff]
    %v865 = vld [vmem:[#allocation2 + $0x30] sm:$0xff]
    %v866 = vld [vmem:[#allocation2 + $0x38] sm:$0xff]
    %v867 = vld [vmem:[#allocation2 + $0x40] sm:$0xff]
    %v868 = vld [vmem:[#allocation2 + $0x48] sm:$0xff]
    %v869 = vld [vmem:[#allocation2 + $0x50] sm:$0xff]
    %v870 = vld [vmem:[#allocation2 + $0x58] sm:$0xff]
    %v871 = vld [vmem:[#allocation2 + $0x60] sm:$0xff]
    %v872 = vld [vmem:[#allocation2 + $0x68] sm:$0xff]
    %v873 = vld [vmem:[#allocation2 + $0x70] sm:$0xff]
    %v874 = vld [vmem:[#allocation2 + $0x78] sm:$0xff]
    %v875 = vld [vmem:[#allocation2 + $0x80] sm:$0xff]
    %v876 = vld [vmem:[#allocation2 + $0x88] sm:$0xff]
    %v877 = vld [vmem:[#allocation2 + $0x90] sm:$0xff]
    %v878 = vld [vmem:[#allocation2 + $0x98] sm:$0xff]
    %v879 = vld [vmem:[#allocation2 + $0xa0] sm:$0xff]
    %v880 = vld [vmem:[#allocation2 + $0xa8] sm:$0xff]
    %v881 = vld [vmem:[#allocation2 + $0xb0] sm:$0xff]
    %v882 = vld [vmem:[#allocation2 + $0xb8] sm:$0xff]
    %v883 = vld [vmem:[#allocation2 + $0xc0] sm:$0xff]
    %v884 = vld [vmem:[#allocation2 + $0xc8] sm:$0xff]
    %v885 = vld [vmem:[#allocation2 + $0xd0] sm:$0xff]
    %v886 = vld [vmem:[#allocation2 + $0xd8] sm:$0xff]
    %v887 = vld [vmem:[#allocation2 + $0xe0] sm:$0xff]
    %v888 = vld [vmem:[#allocation2 + $0xe8] sm:$0xff]
    %v889 = vld [vmem:[#allocation2 + $0xf0] sm:$0xff]
    %v890 = vld [vmem:[#allocation2 + $0xf8] sm:$0xff]
    %v891 = vld [vmem:[#allocation2 + $0x100] sm:$0xff]
    %v892 = vld [vmem:[#allocation2 + $0x108] sm:$0xff]
    %v893 = vld [vmem:[#allocation2 + $0x110] sm:$0xff]
    %v894 = vld [vmem:[#allocation2 + $0x118] sm:$0xff]
    %v895 = vld [vmem:[#allocation2 + $0x120] sm:$0xff]
    %v896 = vld [vmem:[#allocation2 + $0x128] sm:$0xff]
    %v897 = vld [vmem:[#allocation2 + $0x130] sm:$0xff]
    %v898 = vld [vmem:[#allocation2 + $0x138] sm:$0xff]
    %v899 = vld [vmem:[#allocation2 + $0x140] sm:$0xff]
    %v900 = vld [vmem:[#allocation2 + $0x148] sm:$0xff]
    %v901 = vld [vmem:[#allocation2 + $0x150] sm:$0xff]
    %v902 = vld [vmem:[#allocation2 + $0x158] sm:$0xff]
    %v903 = vld [vmem:[#allocation2 + $0x160] sm:$0xff]
    %v904 = vld [vmem:[#allocation2 + $0x168] sm:$0xff]
    %v905 = vld [vmem:[#allocation2 + $0x170] sm:$0xff]
    %v906 = vld [vmem:[#allocation2 + $0x178] sm:$0xff]
    %v907 = vld [vmem:[#allocation2 + $0x180] sm:$0xff]
    %v908 = vld [vmem:[#allocation2 + $0x188] sm:$0xff]
    %v909 = vld [vmem:[#allocation2 + $0x190] sm:$0xff]
    %v910 = vld [vmem:[#allocation2 + $0x198] sm:$0xff]
    %v911 = vld [vmem:[#allocation2 + $0x1a0] sm:$0xff]
    %v912 = vld [vmem:[#allocation2 + $0x1a8] sm:$0xff]
    %v913 = vld [vmem:[#allocation2 + $0x1b0] sm:$0xff]
    %v914 = vld [vmem:[#allocation2 + $0x1b8] sm:$0xff]
    %v915 = vld [vmem:[#allocation2 + $0x1c0] sm:$0xff]
    %v916 = vld [vmem:[#allocation2 + $0x1c8] sm:$0xff]
    %v917 = vld [vmem:[#allocation2 + $0x1d0] sm:$0xff]
    %v918 = vld [vmem:[#allocation2 + $0x1d8] sm:$0xff]
    %v919 = vld [vmem:[#allocation2 + $0x1e0] sm:$0xff]
    %v920 = vld [vmem:[#allocation2 + $0x1e8] sm:$0xff]
    %v921 = vld [vmem:[#allocation2 + $0x1f0] sm:$0xff]
    %v922 = vld [vmem:[#allocation2 + $0x1f8] sm:$0xff]
    %v924 = vlaneseq
    %v925 = vshrl.u32 %v924, 7
    %v926 = vsub.s32 0, %v925
    %v927 = vrot.slane %v855, %v926
    %v929 = vmul.f32 %v859, %v927
    %v930 = vmul.f32 %v860, %v927
    %v931 = vmul.f32 %v861, %v927
    %v932 = vmul.f32 %v862, %v927
    %v933 = vmul.f32 %v863, %v927
    %v934 = vmul.f32 %v864, %v927
    %v935 = vmul.f32 %v865, %v927
    %v936 = vmul.f32 %v866, %v927
    %v937 = vmul.f32 %v867, %v927
    %v938 = vmul.f32 %v868, %v927
    %v939 = vmul.f32 %v869, %v927
    %v940 = vmul.f32 %v870, %v927
    %v941 = vmul.f32 %v871, %v927
    %v942 = vmul.f32 %v872, %v927
    %v943 = vmul.f32 %v873, %v927
    %v944 = vmul.f32 %v874, %v927
    %v945 = vmul.f32 %v875, %v927
    %v946 = vmul.f32 %v876, %v927
    %v947 = vmul.f32 %v877, %v927
    %v948 = vmul.f32 %v878, %v927
    %v949 = vmul.f32 %v879, %v927
    %v950 = vmul.f32 %v880, %v927
    %v951 = vmul.f32 %v881, %v927
    %v952 = vmul.f32 %v882, %v927
    %v953 = vmul.f32 %v883, %v927
    %v954 = vmul.f32 %v884, %v927
    %v955 = vmul.f32 %v885, %v927
    %v956 = vmul.f32 %v886, %v927
    %v957 = vmul.f32 %v887, %v927
    %v958 = vmul.f32 %v888, %v927
    %v959 = vmul.f32 %v889, %v927
    %v960 = vmul.f32 %v890, %v927
    %v961 = vmul.f32 %v891, %v927
    %v962 = vmul.f32 %v892, %v927
    %v963 = vmul.f32 %v893, %v927
    %v964 = vmul.f32 %v894, %v927
    %v965 = vmul.f32 %v895, %v927
    %v966 = vmul.f32 %v896, %v927
    %v967 = vmul.f32 %v897, %v927
    %v968 = vmul.f32 %v898, %v927
    %v969 = vmul.f32 %v899, %v927
    %v970 = vmul.f32 %v900, %v927
    %v971 = vmul.f32 %v901, %v927
    %v972 = vmul.f32 %v902, %v927
    %v973 = vmul.f32 %v903, %v927
    %v974 = vmul.f32 %v904, %v927
    %v975 = vmul.f32 %v905, %v927
    %v976 = vmul.f32 %v906, %v927
    %v977 = vmul.f32 %v907, %v927
    %v978 = vmul.f32 %v908, %v927
    %v979 = vmul.f32 %v909, %v927
    %v980 = vmul.f32 %v910, %v927
    %v981 = vmul.f32 %v911, %v927
    %v982 = vmul.f32 %v912, %v927
    %v983 = vmul.f32 %v913, %v927
    %v984 = vmul.f32 %v914, %v927
    %v985 = vmul.f32 %v915, %v927
    %v986 = vmul.f32 %v916, %v927
    %v987 = vmul.f32 %v917, %v927
    %v988 = vmul.f32 %v918, %v927
    %v989 = vmul.f32 %v919, %v927
    %v990 = vmul.f32 %v920, %v927
    %v991 = vmul.f32 %v921, %v927
    %v992 = vmul.f32 %v922, %v927
    %v994 = vlaneseq
    %v995 = vshrl.u32 %v994, 7
    %v996 = vsub.s32 0, %v995
    %v997 = vrot.slane %v858, %v996
    %v999 = vadd.f32 %v929, %v997
    %v1000 = vadd.f32 %v930, %v997
    %v1001 = vadd.f32 %v931, %v997
    %v1002 = vadd.f32 %v932, %v997
    %v1003 = vadd.f32 %v933, %v997
    %v1004 = vadd.f32 %v934, %v997
    %v1005 = vadd.f32 %v935, %v997
    %v1006 = vadd.f32 %v936, %v997
    %v1007 = vadd.f32 %v937, %v997
    %v1008 = vadd.f32 %v938, %v997
    %v1009 = vadd.f32 %v939, %v997
    %v1010 = vadd.f32 %v940, %v997
    %v1011 = vadd.f32 %v941, %v997
    %v1012 = vadd.f32 %v942, %v997
    %v1013 = vadd.f32 %v943, %v997
    %v1014 = vadd.f32 %v944, %v997
    %v1015 = vadd.f32 %v945, %v997
    %v1016 = vadd.f32 %v946, %v997
    %v1017 = vadd.f32 %v947, %v997
    %v1018 = vadd.f32 %v948, %v997
    %v1019 = vadd.f32 %v949, %v997
    %v1020 = vadd.f32 %v950, %v997
    %v1021 = vadd.f32 %v951, %v997
    %v1022 = vadd.f32 %v952, %v997
    %v1023 = vadd.f32 %v953, %v997
    %v1024 = vadd.f32 %v954, %v997
    %v1025 = vadd.f32 %v955, %v997
    %v1026 = vadd.f32 %v956, %v997
    %v1027 = vadd.f32 %v957, %v997
    %v1028 = vadd.f32 %v958, %v997
    %v1029 = vadd.f32 %v959, %v997
    %v1030 = vadd.f32 %v960, %v997
    %v1031 = vadd.f32 %v961, %v997
    %v1032 = vadd.f32 %v962, %v997
    %v1033 = vadd.f32 %v963, %v997
    %v1034 = vadd.f32 %v964, %v997
    %v1035 = vadd.f32 %v965, %v997
    %v1036 = vadd.f32 %v966, %v997
    %v1037 = vadd.f32 %v967, %v997
    %v1038 = vadd.f32 %v968, %v997
    %v1039 = vadd.f32 %v969, %v997
    %v1040 = vadd.f32 %v970, %v997
    %v1041 = vadd.f32 %v971, %v997
    %v1042 = vadd.f32 %v972, %v997
    %v1043 = vadd.f32 %v973, %v997
    %v1044 = vadd.f32 %v974, %v997
    %v1045 = vadd.f32 %v975, %v997
    %v1046 = vadd.f32 %v976, %v997
    %v1047 = vadd.f32 %v977, %v997
    %v1048 = vadd.f32 %v978, %v997
    %v1049 = vadd.f32 %v979, %v997
    %v1050 = vadd.f32 %v980, %v997
    %v1051 = vadd.f32 %v981, %v997
    %v1052 = vadd.f32 %v982, %v997
    %v1053 = vadd.f32 %v983, %v997
    %v1054 = vadd.f32 %v984, %v997
    %v1055 = vadd.f32 %v985, %v997
    %v1056 = vadd.f32 %v986, %v997
    %v1057 = vadd.f32 %v987, %v997
    %v1058 = vadd.f32 %v988, %v997
    %v1059 = vadd.f32 %v989, %v997
    %v1060 = vadd.f32 %v990, %v997
    %v1061 = vadd.f32 %v991, %v997
    %v1062 = vadd.f32 %v992, %v997
    %vm1063 = vcmp.gt.f32.partialorder %v999, 0.0
    %vm1064 = vcmp.gt.f32.partialorder %v1000, 0.0
    %vm1065 = vcmp.gt.f32.partialorder %v1001, 0.0
    %vm1066 = vcmp.gt.f32.partialorder %v1002, 0.0
    %vm1067 = vcmp.gt.f32.partialorder %v1003, 0.0
    %vm1068 = vcmp.gt.f32.partialorder %v1004, 0.0
    %vm1069 = vcmp.gt.f32.partialorder %v1005, 0.0
    %vm1070 = vcmp.gt.f32.partialorder %v1006, 0.0
    %vm1071 = vcmp.gt.f32.partialorder %v1007, 0.0
    %vm1072 = vcmp.gt.f32.partialorder %v1008, 0.0
    %vm1073 = vcmp.gt.f32.partialorder %v1009, 0.0
    %vm1074 = vcmp.gt.f32.partialorder %v1010, 0.0
    %vm1075 = vcmp.gt.f32.partialorder %v1011, 0.0
    %vm1076 = vcmp.gt.f32.partialorder %v1012, 0.0
    %vm1077 = vcmp.gt.f32.partialorder %v1013, 0.0
    %vm1078 = vcmp.gt.f32.partialorder %v1014, 0.0
    %vm1079 = vcmp.gt.f32.partialorder %v1015, 0.0
    %vm1080 = vcmp.gt.f32.partialorder %v1016, 0.0
    %vm1081 = vcmp.gt.f32.partialorder %v1017, 0.0
    %vm1082 = vcmp.gt.f32.partialorder %v1018, 0.0
    %vm1083 = vcmp.gt.f32.partialorder %v1019, 0.0
    %vm1084 = vcmp.gt.f32.partialorder %v1020, 0.0
    %vm1085 = vcmp.gt.f32.partialorder %v1021, 0.0
    %vm1086 = vcmp.gt.f32.partialorder %v1022, 0.0
    %vm1087 = vcmp.gt.f32.partialorder %v1023, 0.0
    %vm1088 = vcmp.gt.f32.partialorder %v1024, 0.0
    %vm1089 = vcmp.gt.f32.partialorder %v1025, 0.0
    %vm1090 = vcmp.gt.f32.partialorder %v1026, 0.0
    %vm1091 = vcmp.gt.f32.partialorder %v1027, 0.0
    %vm1092 = vcmp.gt.f32.partialorder %v1028, 0.0
    %vm1093 = vcmp.gt.f32.partialorder %v1029, 0.0
    %vm1094 = vcmp.gt.f32.partialorder %v1030, 0.0
    %vm1095 = vcmp.gt.f32.partialorder %v1031, 0.0
    %vm1096 = vcmp.gt.f32.partialorder %v1032, 0.0
    %vm1097 = vcmp.gt.f32.partialorder %v1033, 0.0
    %vm1098 = vcmp.gt.f32.partialorder %v1034, 0.0
    %vm1099 = vcmp.gt.f32.partialorder %v1035, 0.0
    %vm1100 = vcmp.gt.f32.partialorder %v1036, 0.0
    %vm1101 = vcmp.gt.f32.partialorder %v1037, 0.0
    %vm1102 = vcmp.gt.f32.partialorder %v1038, 0.0
    %vm1103 = vcmp.gt.f32.partialorder %v1039, 0.0
    %vm1104 = vcmp.gt.f32.partialorder %v1040, 0.0
    %vm1105 = vcmp.gt.f32.partialorder %v1041, 0.0
    %vm1106 = vcmp.gt.f32.partialorder %v1042, 0.0
    %vm1107 = vcmp.gt.f32.partialorder %v1043, 0.0
    %vm1108 = vcmp.gt.f32.partialorder %v1044, 0.0
    %vm1109 = vcmp.gt.f32.partialorder %v1045, 0.0
    %vm1110 = vcmp.gt.f32.partialorder %v1046, 0.0
    %vm1111 = vcmp.gt.f32.partialorder %v1047, 0.0
    %vm1112 = vcmp.gt.f32.partialorder %v1048, 0.0
    %vm1113 = vcmp.gt.f32.partialorder %v1049, 0.0
    %vm1114 = vcmp.gt.f32.partialorder %v1050, 0.0
    %vm1115 = vcmp.gt.f32.partialorder %v1051, 0.0
    %vm1116 = vcmp.gt.f32.partialorder %v1052, 0.0
    %vm1117 = vcmp.gt.f32.partialorder %v1053, 0.0
    %vm1118 = vcmp.gt.f32.partialorder %v1054, 0.0
    %vm1119 = vcmp.gt.f32.partialorder %v1055, 0.0
    %vm1120 = vcmp.gt.f32.partialorder %v1056, 0.0
    %vm1121 = vcmp.gt.f32.partialorder %v1057, 0.0
    %vm1122 = vcmp.gt.f32.partialorder %v1058, 0.0
    %vm1123 = vcmp.gt.f32.partialorder %v1059, 0.0
    %vm1124 = vcmp.gt.f32.partialorder %v1060, 0.0
    %vm1125 = vcmp.gt.f32.partialorder %v1061, 0.0
    %vm1126 = vcmp.gt.f32.partialorder %v1062, 0.0
    %v1127 = vmul.f32 %v999, 0.2
    %v1128 = vmul.f32 %v1000, 0.2
    %v1129 = vmul.f32 %v1001, 0.2
    %v1130 = vmul.f32 %v1002, 0.2
    %v1131 = vmul.f32 %v1003, 0.2
    %v1132 = vmul.f32 %v1004, 0.2
    %v1133 = vmul.f32 %v1005, 0.2
    %v1134 = vmul.f32 %v1006, 0.2
    %v1135 = vmul.f32 %v1007, 0.2
    %v1136 = vmul.f32 %v1008, 0.2
    %v1137 = vmul.f32 %v1009, 0.2
    %v1138 = vmul.f32 %v1010, 0.2
    %v1139 = vmul.f32 %v1011, 0.2
    %v1140 = vmul.f32 %v1012, 0.2
    %v1141 = vmul.f32 %v1013, 0.2
    %v1142 = vmul.f32 %v1014, 0.2
    %v1143 = vmul.f32 %v1015, 0.2
    %v1144 = vmul.f32 %v1016, 0.2
    %v1145 = vmul.f32 %v1017, 0.2
    %v1146 = vmul.f32 %v1018, 0.2
    %v1147 = vmul.f32 %v1019, 0.2
    %v1148 = vmul.f32 %v1020, 0.2
    %v1149 = vmul.f32 %v1021, 0.2
    %v1150 = vmul.f32 %v1022, 0.2
    %v1151 = vmul.f32 %v1023, 0.2
    %v1152 = vmul.f32 %v1024, 0.2
    %v1153 = vmul.f32 %v1025, 0.2
    %v1154 = vmul.f32 %v1026, 0.2
    %v1155 = vmul.f32 %v1027, 0.2
    %v1156 = vmul.f32 %v1028, 0.2
    %v1157 = vmul.f32 %v1029, 0.2
    %v1158 = vmul.f32 %v1030, 0.2
    %v1159 = vmul.f32 %v1031, 0.2
    %v1160 = vmul.f32 %v1032, 0.2
    %v1161 = vmul.f32 %v1033, 0.2
    %v1162 = vmul.f32 %v1034, 0.2
    %v1163 = vmul.f32 %v1035, 0.2
    %v1164 = vmul.f32 %v1036, 0.2
    %v1165 = vmul.f32 %v1037, 0.2
    %v1166 = vmul.f32 %v1038, 0.2
    %v1167 = vmul.f32 %v1039, 0.2
    %v1168 = vmul.f32 %v1040, 0.2
    %v1169 = vmul.f32 %v1041, 0.2
    %v1170 = vmul.f32 %v1042, 0.2
    %v1171 = vmul.f32 %v1043, 0.2
    %v1172 = vmul.f32 %v1044, 0.2
    %v1173 = vmul.f32 %v1045, 0.2
    %v1174 = vmul.f32 %v1046, 0.2
    %v1175 = vmul.f32 %v1047, 0.2
    %v1176 = vmul.f32 %v1048, 0.2
    %v1177 = vmul.f32 %v1049, 0.2
    %v1178 = vmul.f32 %v1050, 0.2
    %v1179 = vmul.f32 %v1051, 0.2
    %v1180 = vmul.f32 %v1052, 0.2
    %v1181 = vmul.f32 %v1053, 0.2
    %v1182 = vmul.f32 %v1054, 0.2
    %v1183 = vmul.f32 %v1055, 0.2
    %v1184 = vmul.f32 %v1056, 0.2
    %v1185 = vmul.f32 %v1057, 0.2
    %v1186 = vmul.f32 %v1058, 0.2
    %v1187 = vmul.f32 %v1059, 0.2
    %v1188 = vmul.f32 %v1060, 0.2
    %v1189 = vmul.f32 %v1061, 0.2
    %v1190 = vmul.f32 %v1062, 0.2
    %v1191 = vsel %vm1063, %v999, %v1127
    %v1192 = vsel %vm1064, %v1000, %v1128
    %v1193 = vsel %vm1065, %v1001, %v1129
    %v1194 = vsel %vm1066, %v1002, %v1130
    %v1195 = vsel %vm1067, %v1003, %v1131
    %v1196 = vsel %vm1068, %v1004, %v1132
    %v1197 = vsel %vm1069, %v1005, %v1133
    %v1198 = vsel %vm1070, %v1006, %v1134
    %v1199 = vsel %vm1071, %v1007, %v1135
    %v1200 = vsel %vm1072, %v1008, %v1136
    %v1201 = vsel %vm1073, %v1009, %v1137
    %v1202 = vsel %vm1074, %v1010, %v1138
    %v1203 = vsel %vm1075, %v1011, %v1139
    %v1204 = vsel %vm1076, %v1012, %v1140
    %v1205 = vsel %vm1077, %v1013, %v1141
    %v1206 = vsel %vm1078, %v1014, %v1142
    %v1207 = vsel %vm1079, %v1015, %v1143
    %v1208 = vsel %vm1080, %v1016, %v1144
    %v1209 = vsel %vm1081, %v1017, %v1145
    %v1210 = vsel %vm1082, %v1018, %v1146
    %v1211 = vsel %vm1083, %v1019, %v1147
    %v1212 = vsel %vm1084, %v1020, %v1148
    %v1213 = vsel %vm1085, %v1021, %v1149
    %v1214 = vsel %vm1086, %v1022, %v1150
    %v1215 = vsel %vm1087, %v1023, %v1151
    %v1216 = vsel %vm1088, %v1024, %v1152
    %v1217 = vsel %vm1089, %v1025, %v1153
    %v1218 = vsel %vm1090, %v1026, %v1154
    %v1219 = vsel %vm1091, %v1027, %v1155
    %v1220 = vsel %vm1092, %v1028, %v1156
    %v1221 = vsel %vm1093, %v1029, %v1157
    %v1222 = vsel %vm1094, %v1030, %v1158
    %v1223 = vsel %vm1095, %v1031, %v1159
    %v1224 = vsel %vm1096, %v1032, %v1160
    %v1225 = vsel %vm1097, %v1033, %v1161
    %v1226 = vsel %vm1098, %v1034, %v1162
    %v1227 = vsel %vm1099, %v1035, %v1163
    %v1228 = vsel %vm1100, %v1036, %v1164
    %v1229 = vsel %vm1101, %v1037, %v1165
    %v1230 = vsel %vm1102, %v1038, %v1166
    %v1231 = vsel %vm1103, %v1039, %v1167
    %v1232 = vsel %vm1104, %v1040, %v1168
    %v1233 = vsel %vm1105, %v1041, %v1169
    %v1234 = vsel %vm1106, %v1042, %v1170
    %v1235 = vsel %vm1107, %v1043, %v1171
    %v1236 = vsel %vm1108, %v1044, %v1172
    %v1237 = vsel %vm1109, %v1045, %v1173
    %v1238 = vsel %vm1110, %v1046, %v1174
    %v1239 = vsel %vm1111, %v1047, %v1175
    %v1240 = vsel %vm1112, %v1048, %v1176
    %v1241 = vsel %vm1113, %v1049, %v1177
    %v1242 = vsel %vm1114, %v1050, %v1178
    %v1243 = vsel %vm1115, %v1051, %v1179
    %v1244 = vsel %vm1116, %v1052, %v1180
    %v1245 = vsel %vm1117, %v1053, %v1181
    %v1246 = vsel %vm1118, %v1054, %v1182
    %v1247 = vsel %vm1119, %v1055, %v1183
    %v1248 = vsel %vm1120, %v1056, %v1184
    %v1249 = vsel %vm1121, %v1057, %v1185
    %v1250 = vsel %vm1122, %v1058, %v1186
    %v1251 = vsel %vm1123, %v1059, %v1187
    %v1252 = vsel %vm1124, %v1060, %v1188
    %v1253 = vsel %vm1125, %v1061, %v1189
    %v1254 = vsel %vm1126, %v1062, %v1190
    %v1255 = vpack.c.bf16 %v1192, %v1191
    %v1256 = vpack.c.bf16 %v1194, %v1193
    %v1257 = vpack.c.bf16 %v1196, %v1195
    %v1258 = vpack.c.bf16 %v1198, %v1197
    %v1259 = vpack.c.bf16 %v1200, %v1199
    %v1260 = vpack.c.bf16 %v1202, %v1201
    %v1261 = vpack.c.bf16 %v1204, %v1203
    %v1262 = vpack.c.bf16 %v1206, %v1205
    %v1263 = vpack.c.bf16 %v1208, %v1207
    %v1264 = vpack.c.bf16 %v1210, %v1209
    %v1265 = vpack.c.bf16 %v1212, %v1211
    %v1266 = vpack.c.bf16 %v1214, %v1213
    %v1267 = vpack.c.bf16 %v1216, %v1215
    %v1268 = vpack.c.bf16 %v1218, %v1217
    %v1269 = vpack.c.bf16 %v1220, %v1219
    %v1270 = vpack.c.bf16 %v1222, %v1221
    %v1271 = vpack.c.bf16 %v1224, %v1223
    %v1272 = vpack.c.bf16 %v1226, %v1225
    %v1273 = vpack.c.bf16 %v1228, %v1227
    %v1274 = vpack.c.bf16 %v1230, %v1229
    %v1275 = vpack.c.bf16 %v1232, %v1231
    %v1276 = vpack.c.bf16 %v1234, %v1233
    %v1277 = vpack.c.bf16 %v1236, %v1235
    %v1278 = vpack.c.bf16 %v1238, %v1237
    %v1279 = vpack.c.bf16 %v1240, %v1239
    %v1280 = vpack.c.bf16 %v1242, %v1241
    %v1281 = vpack.c.bf16 %v1244, %v1243
    %v1282 = vpack.c.bf16 %v1246, %v1245
    %v1283 = vpack.c.bf16 %v1248, %v1247
    %v1284 = vpack.c.bf16 %v1250, %v1249
    %v1285 = vpack.c.bf16 %v1252, %v1251
    %v1286 = vpack.c.bf16 %v1254, %v1253
    %v1319 = vunpack.c.l.b16 %v1255
    %v1320 = vunpack.c.h.b16 %v1255
    %v1321 = vunpack.c.l.b16 %v1256
    %v1322 = vunpack.c.h.b16 %v1256
    %v1323 = vunpack.c.l.b16 %v1257
    %v1324 = vunpack.c.h.b16 %v1257
    %v1325 = vunpack.c.l.b16 %v1258
    %v1326 = vunpack.c.h.b16 %v1258
    %v1327 = vunpack.c.l.b16 %v1259
    %v1328 = vunpack.c.h.b16 %v1259
    %v1329 = vunpack.c.l.b16 %v1260
    %v1330 = vunpack.c.h.b16 %v1260
    %v1331 = vunpack.c.l.b16 %v1261
    %v1332 = vunpack.c.h.b16 %v1261
    %v1333 = vunpack.c.l.b16 %v1262
    %v1334 = vunpack.c.h.b16 %v1262
    %v1335 = vunpack.c.l.b16 %v1263
    %v1336 = vunpack.c.h.b16 %v1263
    %v1337 = vunpack.c.l.b16 %v1264
    %v1338 = vunpack.c.h.b16 %v1264
    %v1339 = vunpack.c.l.b16 %v1265
    %v1340 = vunpack.c.h.b16 %v1265
    %v1341 = vunpack.c.l.b16 %v1266
    %v1342 = vunpack.c.h.b16 %v1266
    %v1343 = vunpack.c.l.b16 %v1267
    %v1344 = vunpack.c.h.b16 %v1267
    %v1345 = vunpack.c.l.b16 %v1268
    %v1346 = vunpack.c.h.b16 %v1268
    %v1347 = vunpack.c.l.b16 %v1269
    %v1348 = vunpack.c.h.b16 %v1269
    %v1349 = vunpack.c.l.b16 %v1270
    %v1350 = vunpack.c.h.b16 %v1270
    %v1351 = vunpack.c.l.b16 %v1271
    %v1352 = vunpack.c.h.b16 %v1271
    %v1353 = vunpack.c.l.b16 %v1272
    %v1354 = vunpack.c.h.b16 %v1272
    %v1355 = vunpack.c.l.b16 %v1273
    %v1356 = vunpack.c.h.b16 %v1273
    %v1357 = vunpack.c.l.b16 %v1274
    %v1358 = vunpack.c.h.b16 %v1274
    %v1359 = vunpack.c.l.b16 %v1275
    %v1360 = vunpack.c.h.b16 %v1275
    %v1361 = vunpack.c.l.b16 %v1276
    %v1362 = vunpack.c.h.b16 %v1276
    %v1363 = vunpack.c.l.b16 %v1277
    %v1364 = vunpack.c.h.b16 %v1277
    %v1365 = vunpack.c.l.b16 %v1278
    %v1366 = vunpack.c.h.b16 %v1278
    %v1367 = vunpack.c.l.b16 %v1279
    %v1368 = vunpack.c.h.b16 %v1279
    %v1369 = vunpack.c.l.b16 %v1280
    %v1370 = vunpack.c.h.b16 %v1280
    %v1371 = vunpack.c.l.b16 %v1281
    %v1372 = vunpack.c.h.b16 %v1281
    %v1373 = vunpack.c.l.b16 %v1282
    %v1374 = vunpack.c.h.b16 %v1282
    %v1375 = vunpack.c.l.b16 %v1283
    %v1376 = vunpack.c.h.b16 %v1283
    %v1377 = vunpack.c.l.b16 %v1284
    %v1378 = vunpack.c.h.b16 %v1284
    %v1379 = vunpack.c.l.b16 %v1285
    %v1380 = vunpack.c.h.b16 %v1285
    %v1381 = vunpack.c.l.b16 %v1286
    %v1382 = vunpack.c.h.b16 %v1286
    %v1383 = vpack.c.b16 %v1319, %v1319
    %v1384 = vpack.c.b16 %v1320, %v1320
    %v1385 = vpack.c.b16 %v1321, %v1321
    %v1386 = vpack.c.b16 %v1322, %v1322
    %v1387 = vpack.c.b16 %v1323, %v1323
    %v1388 = vpack.c.b16 %v1324, %v1324
    %v1389 = vpack.c.b16 %v1325, %v1325
    %v1390 = vpack.c.b16 %v1326, %v1326
    %v1391 = vpack.c.b16 %v1327, %v1327
    %v1392 = vpack.c.b16 %v1328, %v1328
    %v1393 = vpack.c.b16 %v1329, %v1329
    %v1394 = vpack.c.b16 %v1330, %v1330
    %v1395 = vpack.c.b16 %v1331, %v1331
    %v1396 = vpack.c.b16 %v1332, %v1332
    %v1397 = vpack.c.b16 %v1333, %v1333
    %v1398 = vpack.c.b16 %v1334, %v1334
    %v1399 = vpack.c.b16 %v1335, %v1335
    %v1400 = vpack.c.b16 %v1336, %v1336
    %v1401 = vpack.c.b16 %v1337, %v1337
    %v1402 = vpack.c.b16 %v1338, %v1338
    %v1403 = vpack.c.b16 %v1339, %v1339
    %v1404 = vpack.c.b16 %v1340, %v1340
    %v1405 = vpack.c.b16 %v1341, %v1341
    %v1406 = vpack.c.b16 %v1342, %v1342
    %v1407 = vpack.c.b16 %v1343, %v1343
    %v1408 = vpack.c.b16 %v1344, %v1344
    %v1409 = vpack.c.b16 %v1345, %v1345
    %v1410 = vpack.c.b16 %v1346, %v1346
    %v1411 = vpack.c.b16 %v1347, %v1347
    %v1412 = vpack.c.b16 %v1348, %v1348
    %v1413 = vpack.c.b16 %v1349, %v1349
    %v1414 = vpack.c.b16 %v1350, %v1350
    %v1415 = vpack.c.b16 %v1351, %v1351
    %v1416 = vpack.c.b16 %v1352, %v1352
    %v1417 = vpack.c.b16 %v1353, %v1353
    %v1418 = vpack.c.b16 %v1354, %v1354
    %v1419 = vpack.c.b16 %v1355, %v1355
    %v1420 = vpack.c.b16 %v1356, %v1356
    %v1421 = vpack.c.b16 %v1357, %v1357
    %v1422 = vpack.c.b16 %v1358, %v1358
    %v1423 = vpack.c.b16 %v1359, %v1359
    %v1424 = vpack.c.b16 %v1360, %v1360
    %v1425 = vpack.c.b16 %v1361, %v1361
    %v1426 = vpack.c.b16 %v1362, %v1362
    %v1427 = vpack.c.b16 %v1363, %v1363
    %v1428 = vpack.c.b16 %v1364, %v1364
    %v1429 = vpack.c.b16 %v1365, %v1365
    %v1430 = vpack.c.b16 %v1366, %v1366
    %v1431 = vpack.c.b16 %v1367, %v1367
    %v1432 = vpack.c.b16 %v1368, %v1368
    %v1433 = vpack.c.b16 %v1369, %v1369
    %v1434 = vpack.c.b16 %v1370, %v1370
    %v1435 = vpack.c.b16 %v1371, %v1371
    %v1436 = vpack.c.b16 %v1372, %v1372
    %v1437 = vpack.c.b16 %v1373, %v1373
    %v1438 = vpack.c.b16 %v1374, %v1374
    %v1439 = vpack.c.b16 %v1375, %v1375
    %v1440 = vpack.c.b16 %v1376, %v1376
    %v1441 = vpack.c.b16 %v1377, %v1377
    %v1442 = vpack.c.b16 %v1378, %v1378
    %v1443 = vpack.c.b16 %v1379, %v1379
    %v1444 = vpack.c.b16 %v1380, %v1380
    %v1445 = vpack.c.b16 %v1381, %v1381
    %v1446 = vpack.c.b16 %v1382, %v1382
    %1511 = vst [vmem:[%s4] sm:$0xf] %v1383
    %1512 = vst [vmem:[%s4 + $0x4] sm:$0xf] %v1384
    %1513 = vst [vmem:[%s4 + $0x8] sm:$0xf] %v1385
    %1514 = vst [vmem:[%s4 + $0xc] sm:$0xf] %v1386
    %1515 = vst [vmem:[%s4 + $0x10] sm:$0xf] %v1387
    %1516 = vst [vmem:[%s4 + $0x14] sm:$0xf] %v1388
    %1517 = vst [vmem:[%s4 + $0x18] sm:$0xf] %v1389
    %1518 = vst [vmem:[%s4 + $0x1c] sm:$0xf] %v1390
    %1519 = vst [vmem:[%s4 + $0x20] sm:$0xf] %v1391
    %1520 = vst [vmem:[%s4 + $0x24] sm:$0xf] %v1392
    %1521 = vst [vmem:[%s4 + $0x28] sm:$0xf] %v1393
    %1522 = vst [vmem:[%s4 + $0x2c] sm:$0xf] %v1394
    %1523 = vst [vmem:[%s4 + $0x30] sm:$0xf] %v1395
    %1524 = vst [vmem:[%s4 + $0x34] sm:$0xf] %v1396
    %1525 = vst [vmem:[%s4 + $0x38] sm:$0xf] %v1397
    %1526 = vst [vmem:[%s4 + $0x3c] sm:$0xf] %v1398
    %1527 = vst [vmem:[%s4 + $0x40] sm:$0xf] %v1399
    %1528 = vst [vmem:[%s4 + $0x44] sm:$0xf] %v1400
    %1529 = vst [vmem:[%s4 + $0x48] sm:$0xf] %v1401
    %1530 = vst [vmem:[%s4 + $0x4c] sm:$0xf] %v1402
    %1531 = vst [vmem:[%s4 + $0x50] sm:$0xf] %v1403
    %1532 = vst [vmem:[%s4 + $0x54] sm:$0xf] %v1404
    %1533 = vst [vmem:[%s4 + $0x58] sm:$0xf] %v1405
    %1534 = vst [vmem:[%s4 + $0x5c] sm:$0xf] %v1406
    %1535 = vst [vmem:[%s4 + $0x60] sm:$0xf] %v1407
    %1536 = vst [vmem:[%s4 + $0x64] sm:$0xf] %v1408
    %1537 = vst [vmem:[%s4 + $0x68] sm:$0xf] %v1409
    %1538 = vst [vmem:[%s4 + $0x6c] sm:$0xf] %v1410
    %1539 = vst [vmem:[%s4 + $0x70] sm:$0xf] %v1411
    %1540 = vst [vmem:[%s4 + $0x74] sm:$0xf] %v1412
    %1541 = vst [vmem:[%s4 + $0x78] sm:$0xf] %v1413
    %1542 = vst [vmem:[%s4 + $0x7c] sm:$0xf] %v1414
    %1543 = vst [vmem:[%s4 + $0x80] sm:$0xf] %v1415
    %1544 = vst [vmem:[%s4 + $0x84] sm:$0xf] %v1416
    %1545 = vst [vmem:[%s4 + $0x88] sm:$0xf] %v1417
    %1546 = vst [vmem:[%s4 + $0x8c] sm:$0xf] %v1418
    %1547 = vst [vmem:[%s4 + $0x90] sm:$0xf] %v1419
    %1548 = vst [vmem:[%s4 + $0x94] sm:$0xf] %v1420
    %1549 = vst [vmem:[%s4 + $0x98] sm:$0xf] %v1421
    %1550 = vst [vmem:[%s4 + $0x9c] sm:$0xf] %v1422
    %1551 = vst [vmem:[%s4 + $0xa0] sm:$0xf] %v1423
    %1552 = vst [vmem:[%s4 + $0xa4] sm:$0xf] %v1424
    %1553 = vst [vmem:[%s4 + $0xa8] sm:$0xf] %v1425
    %1554 = vst [vmem:[%s4 + $0xac] sm:$0xf] %v1426
    %1555 = vst [vmem:[%s4 + $0xb0] sm:$0xf] %v1427
    %1556 = vst [vmem:[%s4 + $0xb4] sm:$0xf] %v1428
    %1557 = vst [vmem:[%s4 + $0xb8] sm:$0xf] %v1429
    %1558 = vst [vmem:[%s4 + $0xbc] sm:$0xf] %v1430
    %1559 = vst [vmem:[%s4 + $0xc0] sm:$0xf] %v1431
    %1560 = vst [vmem:[%s4 + $0xc4] sm:$0xf] %v1432
    %1561 = vst [vmem:[%s4 + $0xc8] sm:$0xf] %v1433
    %1562 = vst [vmem:[%s4 + $0xcc] sm:$0xf] %v1434
    %1563 = vst [vmem:[%s4 + $0xd0] sm:$0xf] %v1435
    %1564 = vst [vmem:[%s4 + $0xd4] sm:$0xf] %v1436
    %1565 = vst [vmem:[%s4 + $0xd8] sm:$0xf] %v1437
    %1566 = vst [vmem:[%s4 + $0xdc] sm:$0xf] %v1438
    %1567 = vst [vmem:[%s4 + $0xe0] sm:$0xf] %v1439
    %1568 = vst [vmem:[%s4 + $0xe4] sm:$0xf] %v1440
    %1569 = vst [vmem:[%s4 + $0xe8] sm:$0xf] %v1441
    %1570 = vst [vmem:[%s4 + $0xec] sm:$0xf] %v1442
    %1571 = vst [vmem:[%s4 + $0xf0] sm:$0xf] %v1443
    %1572 = vst [vmem:[%s4 + $0xf4] sm:$0xf] %v1444
    %1573 = vst [vmem:[%s4 + $0xf8] sm:$0xf] %v1445
    %1574 = vst [vmem:[%s4 + $0xfc] sm:$0xf] %v1446
  $region25: #{_lambda_.7} parent=0 // pred_fallthru
    _
  // Predicated region
  $region26: #{_lambda_.7} parent=0 // pred_check
    _
  $region27: #{_lambda_.7} parent=0 // pred_check_branch
    %1576 = sbr.rel (0) target = $region29
  $region28: #{_lambda_.7} parent=0 // pred_region
    _
  $region29: #{_lambda_.7} parent=0 // pred_fallthru
    _
  // Predicated region
  $region30: #{_lambda_.7} parent=0 // pred_check
    _
  $region31: #{_lambda_.7} parent=0 // pred_check_branch
    %1578 = sbr.rel (0) target = $region33
  $region32: #{_lambda_.7} parent=0 // pred_region
    _
  $region33: #{_lambda_.7} parent=0 // pred_fallthru
    _

// kernel: _lambda_.8
$region0: #{_lambda_.8}
  #allocation0 [shape = 'u32[]', space=smem, size = 0x4, offset = 0x4, fixed_abs, tag = 'smem constant byte address 0x4 - core index']
  #allocation1 [shape = 'u32[144,128]{1,0:T(1,128)}', space=vmem, size = 0x12000, scoped, tag = 'internal scratch']
  #allocation2 [shape = 'f32[128,128]{1,0:T(8,128)}', space=vmem, size = 0x10000, scoped, tag = 'scratch operand']
  #allocation3 [shape = 'f32[1,128]{1,0:T(1,128)}', space=vmem, size = 0x200, scoped, tag = 'scratch operand']
  #allocation4 [shape = 'f32[1,128]{1,0:T(1,128)}', space=vmem, size = 0x200, scoped, tag = 'scratch operand']
  %s0 = inlined_call_operand.vmem [shape: bf16[128,256], index: 0, kind: input, shape index: {}]
  %s1 = inlined_call_operand.vmem [shape: bf16[256,128], index: 1, kind: input, shape index: {}]
  %s2 = inlined_call_operand.vmem [shape: f32[1,128], index: 2, kind: input, shape index: {}]
  %s3 = inlined_call_operand.vmem [shape: f32[1,128], index: 3, kind: input, shape index: {}]
  %s4 = inlined_call_operand.vmem [shape: bf16[128,128], index: 4, kind: output, shape index: {}]
  %s5 = sld [smem:[#allocation0]]
  $region34: #{_lambda_.8} parent=0
    _
  %s7 = ssub.s32 1, %s5
  %s8 = scalar_select 0, %s7, %s5
  // Predicated region
  $region2: #{_lambda_.8} parent=0 // pred_check
    _
  $region3: #{_lambda_.8} parent=0 // pred_check_branch
    %10 = sbr.rel (0) target = $region5
  $region4: #{_lambda_.8} parent=0 // pred_region
    _
  $region5: #{_lambda_.8} parent=0 // pred_fallthru
    _
  // Predicated region
  $region6: #{_lambda_.8} parent=0 // pred_check
    _
  $region7: #{_lambda_.8} parent=0 // pred_check_branch
    %12 = sbr.rel (0) target = $region9
  $region8: #{_lambda_.8} parent=0 // pred_region
    _
  $region9: #{_lambda_.8} parent=0 // pred_fallthru
    _
  // Predicated region
  $region10: #{_lambda_.8} parent=0 // pred_check
    _
  $region11: #{_lambda_.8} parent=0 // pred_check_branch
    %14 = sbr.rel (0) target = $region13
  $region12: #{_lambda_.8} parent=0 // pred_region
    _
  $region13: #{_lambda_.8} parent=0 // pred_fallthru
    _
  // Predicated region
  $region14: #{_lambda_.8} parent=0 // pred_check
    _
  $region15: #{_lambda_.8} parent=0 // pred_check_branch
    %16 = sbr.rel (0) target = $region17
  $region16: #{_lambda_.8} parent=0 // pred_region
    _
  $region17: #{_lambda_.8} parent=0 // pred_fallthru
    _
  %p17 = scmp.eq.s32.totalorder 0, 0
  // Predicated region
  $region18: #{_lambda_.8} parent=0 // pred_check
    %p18 = pneg %p17
  $region19: #{_lambda_.8} parent=0 // pred_check_branch
    %20 = sbr.rel (%p18) target = $region21
  $region20: #{_lambda_.8} parent=0 // pred_region
    %21 = vst [vmem:[#allocation3] sm:$0x1] 0.0
    %22 = vst [vmem:[#allocation4] sm:$0x1] 0.0
  $region21: #{_lambda_.8} parent=0 // pred_fallthru
    _
  %v23 = vld [vmem:[%s0] sm:$0xff]
  %v24 = vld [vmem:[%s0 + $0x8] sm:$0xff]
  %v25 = vld [vmem:[%s0 + $0x10] sm:$0xff]
  %v26 = vld [vmem:[%s0 + $0x18] sm:$0xff]
  %v27 = vld [vmem:[%s0 + $0x20] sm:$0xff]
  %v28 = vld [vmem:[%s0 + $0x28] sm:$0xff]
  %v29 = vld [vmem:[%s0 + $0x30] sm:$0xff]
  %v30 = vld [vmem:[%s0 + $0x38] sm:$0xff]
  %v31 = vld [vmem:[%s0 + $0x40] sm:$0xff]
  %v32 = vld [vmem:[%s0 + $0x48] sm:$0xff]
  %v33 = vld [vmem:[%s0 + $0x50] sm:$0xff]
  %v34 = vld [vmem:[%s0 + $0x58] sm:$0xff]
  %v35 = vld [vmem:[%s0 + $0x60] sm:$0xff]
  %v36 = vld [vmem:[%s0 + $0x68] sm:$0xff]
  %v37 = vld [vmem:[%s0 + $0x70] sm:$0xff]
  %v38 = vld [vmem:[%s0 + $0x78] sm:$0xff]
  %v39 = vunpack.c.l.bf16 %v23
  %v40 = vunpack.c.h.bf16 %v23
  %v41 = vunpack.c.l.bf16 %v24
  %v42 = vunpack.c.h.bf16 %v24
  %v43 = vunpack.c.l.bf16 %v25
  %v44 = vunpack.c.h.bf16 %v25
  %v45 = vunpack.c.l.bf16 %v26
  %v46 = vunpack.c.h.bf16 %v26
  %v47 = vunpack.c.l.bf16 %v27
  %v48 = vunpack.c.h.bf16 %v27
  %v49 = vunpack.c.l.bf16 %v28
  %v50 = vunpack.c.h.bf16 %v28
  %v51 = vunpack.c.l.bf16 %v29
  %v52 = vunpack.c.h.bf16 %v29
  %v53 = vunpack.c.l.bf16 %v30
  %v54 = vunpack.c.h.bf16 %v30
  %v55 = vunpack.c.l.bf16 %v31
  %v56 = vunpack.c.h.bf16 %v31
  %v57 = vunpack.c.l.bf16 %v32
  %v58 = vunpack.c.h.bf16 %v32
  %v59 = vunpack.c.l.bf16 %v33
  %v60 = vunpack.c.h.bf16 %v33
  %v61 = vunpack.c.l.bf16 %v34
  %v62 = vunpack.c.h.bf16 %v34
  %v63 = vunpack.c.l.bf16 %v35
  %v64 = vunpack.c.h.bf16 %v35
  %v65 = vunpack.c.l.bf16 %v36
  %v66 = vunpack.c.h.bf16 %v36
  %v67 = vunpack.c.l.bf16 %v37
  %v68 = vunpack.c.h.bf16 %v37
  %v69 = vunpack.c.l.bf16 %v38
  %v70 = vunpack.c.h.bf16 %v38
  %v71 = vld [vmem:[%s1] sm:$0xf]
  %v72 = vld [vmem:[%s1 + $0x4] sm:$0xf]
  %v73 = vld [vmem:[%s1 + $0x8] sm:$0xf]
  %v74 = vld [vmem:[%s1 + $0xc] sm:$0xf]
  %v75 = vld [vmem:[%s1 + $0x10] sm:$0xf]
  %v76 = vld [vmem:[%s1 + $0x14] sm:$0xf]
  %v77 = vld [vmem:[%s1 + $0x18] sm:$0xf]
  %v78 = vld [vmem:[%s1 + $0x1c] sm:$0xf]
  %v79 = vld [vmem:[%s1 + $0x20] sm:$0xf]
  %v80 = vld [vmem:[%s1 + $0x24] sm:$0xf]
  %v81 = vld [vmem:[%s1 + $0x28] sm:$0xf]
  %v82 = vld [vmem:[%s1 + $0x2c] sm:$0xf]
  %v83 = vld [vmem:[%s1 + $0x30] sm:$0xf]
  %v84 = vld [vmem:[%s1 + $0x34] sm:$0xf]
  %v85 = vld [vmem:[%s1 + $0x38] sm:$0xf]
  %v86 = vld [vmem:[%s1 + $0x3c] sm:$0xf]
  %v87 = vld [vmem:[%s1 + $0x40] sm:$0xf]
  %v88 = vld [vmem:[%s1 + $0x44] sm:$0xf]
  %v89 = vld [vmem:[%s1 + $0x48] sm:$0xf]
  %v90 = vld [vmem:[%s1 + $0x4c] sm:$0xf]
  %v91 = vld [vmem:[%s1 + $0x50] sm:$0xf]
  %v92 = vld [vmem:[%s1 + $0x54] sm:$0xf]
  %v93 = vld [vmem:[%s1 + $0x58] sm:$0xf]
  %v94 = vld [vmem:[%s1 + $0x5c] sm:$0xf]
  %v95 = vld [vmem:[%s1 + $0x60] sm:$0xf]
  %v96 = vld [vmem:[%s1 + $0x64] sm:$0xf]
  %v97 = vld [vmem:[%s1 + $0x68] sm:$0xf]
  %v98 = vld [vmem:[%s1 + $0x6c] sm:$0xf]
  %v99 = vld [vmem:[%s1 + $0x70] sm:$0xf]
  %v100 = vld [vmem:[%s1 + $0x74] sm:$0xf]
  %v101 = vld [vmem:[%s1 + $0x78] sm:$0xf]
  %v102 = vld [vmem:[%s1 + $0x7c] sm:$0xf]
  %v103 = vunpack.c.l.bf16 %v71
  %v104 = vunpack.c.l.bf16 %v72
  %v105 = vunpack.c.l.bf16 %v73
  %v106 = vunpack.c.l.bf16 %v74
  %v107 = vunpack.c.l.bf16 %v75
  %v108 = vunpack.c.l.bf16 %v76
  %v109 = vunpack.c.l.bf16 %v77
  %v110 = vunpack.c.l.bf16 %v78
  %v111 = vunpack.c.l.bf16 %v79
  %v112 = vunpack.c.l.bf16 %v80
  %v113 = vunpack.c.l.bf16 %v81
  %v114 = vunpack.c.l.bf16 %v82
  %v115 = vunpack.c.l.bf16 %v83
  %v116 = vunpack.c.l.bf16 %v84
  %v117 = vunpack.c.l.bf16 %v85
  %v118 = vunpack.c.l.bf16 %v86
  %v119 = vunpack.c.l.bf16 %v87
  %v120 = vunpack.c.l.bf16 %v88
  %v121 = vunpack.c.l.bf16 %v89
  %v122 = vunpack.c.l.bf16 %v90
  %v123 = vunpack.c.l.bf16 %v91
  %v124 = vunpack.c.l.bf16 %v92
  %v125 = vunpack.c.l.bf16 %v93
  %v126 = vunpack.c.l.bf16 %v94
  %v127 = vunpack.c.l.bf16 %v95
  %v128 = vunpack.c.l.bf16 %v96
  %v129 = vunpack.c.l.bf16 %v97
  %v130 = vunpack.c.l.bf16 %v98
  %v131 = vunpack.c.l.bf16 %v99
  %v132 = vunpack.c.l.bf16 %v100
  %v133 = vunpack.c.l.bf16 %v101
  %v134 = vunpack.c.l.bf16 %v102
  %135 = vmatprep.subr.mxu0 0.0
  %136 = vmatpush1.msra.mxu0 %v103
  %137 = vmatprep.subr.mxu0 0.0
  %138 = vmatpush1.msra.mxu0 %v104
  %139 = vmatprep.subr.mxu0 0.0
  %140 = vmatpush1.msra.mxu0 %v105
  %141 = vmatprep.subr.mxu0 0.0
  %142 = vmatpush1.msra.mxu0 %v106
  %143 = vmatprep.subr.mxu0 0.0
  %144 = vmatpush1.msra.mxu0 %v107
  %145 = vmatprep.subr.mxu0 0.0
  %146 = vmatpush1.msra.mxu0 %v108
  %147 = vmatprep.subr.mxu0 0.0
  %148 = vmatpush1.msra.mxu0 %v109
  %149 = vmatprep.subr.mxu0 0.0
  %150 = vmatpush1.msra.mxu0 %v110
  %151 = vmatprep.subr.mxu0 0.0
  %152 = vmatpush1.msra.mxu0 %v111
  %153 = vmatprep.subr.mxu0 0.0
  %154 = vmatpush1.msra.mxu0 %v112
  %155 = vmatprep.subr.mxu0 0.0
  %156 = vmatpush1.msra.mxu0 %v113
  %157 = vmatprep.subr.mxu0 0.0
  %158 = vmatpush1.msra.mxu0 %v114
  %159 = vmatprep.subr.mxu0 0.0
  %160 = vmatpush1.msra.mxu0 %v115
  %161 = vmatprep.subr.mxu0 0.0
  %162 = vmatpush1.msra.mxu0 %v116
  %163 = vmatprep.subr.mxu0 0.0
  %164 = vmatpush1.msra.mxu0 %v117
  %165 = vmatprep.subr.mxu0 0.0
  %166 = vmatpush1.msra.mxu0 %v118
  %167 = vmatprep.subr.mxu0 0.0
  %168 = vmatpush1.msra.mxu0 %v119
  %169 = vmatprep.subr.mxu0 0.0
  %170 = vmatpush1.msra.mxu0 %v120
  %171 = vmatprep.subr.mxu0 0.0
  %172 = vmatpush1.msra.mxu0 %v121
  %173 = vmatprep.subr.mxu0 0.0
  %174 = vmatpush1.msra.mxu0 %v122
  %175 = vmatprep.subr.mxu0 0.0
  %176 = vmatpush1.msra.mxu0 %v123
  %177 = vmatprep.subr.mxu0 0.0
  %178 = vmatpush1.msra.mxu0 %v124
  %179 = vmatprep.subr.mxu0 0.0
  %180 = vmatpush1.msra.mxu0 %v125
  %181 = vmatprep.subr.mxu0 0.0
  %182 = vmatpush1.msra.mxu0 %v126
  %183 = vmatprep.subr.mxu0 0.0
  %184 = vmatpush1.msra.mxu0 %v127
  %185 = vmatprep.subr.mxu0 0.0
  %186 = vmatpush1.msra.mxu0 %v128
  %187 = vmatprep.subr.mxu0 0.0
  %188 = vmatpush1.msra.mxu0 %v129
  %189 = vmatprep.subr.mxu0 0.0
  %190 = vmatpush1.msra.mxu0 %v130
  %191 = vmatprep.subr.mxu0 0.0
  %192 = vmatpush1.msra.mxu0 %v131
  %193 = vmatprep.subr.mxu0 0.0
  %194 = vmatpush1.msra.mxu0 %v132
  %195 = vmatprep.subr.mxu0 0.0
  %196 = vmatpush1.msra.mxu0 %v133
  %197 = vmatprep.subr.mxu0 0.0
  %198 = vmatpush1.msra.mxu0 %v134
  %199 = vmatprep.mubr.f32.mxu0 %v40
  %200 = vmatmul.mubr.f32.gmra.mrb[0].mxu0 %v39
  %v201 = vpop.f32.mrb[0].mxu0
  %v202 = vadd.f32 0.0, %v201
  %v203 = vpop.f32.mrb[0].mxu0
  %204 = vmatprep.mubr.f32.mxu0 %v42
  %205 = vmatmul.mubr.f32.gmra.mrb[0].mxu0 %v41
  %v206 = vpop.f32.mrb[0].mxu0
  %v207 = vadd.f32 0.0, %v206
  %v208 = vpop.f32.mrb[0].mxu0
  %209 = vmatprep.mubr.f32.mxu0 %v44
  %210 = vmatmul.mubr.f32.gmra.mrb[0].mxu0 %v43
  %v211 = vpop.f32.mrb[0].mxu0
  %v212 = vadd.f32 0.0, %v211
  %v213 = vpop.f32.mrb[0].mxu0
  %214 = vmatprep.mubr.f32.mxu0 %v46
  %215 = vmatmul.mubr.f32.gmra.mrb[0].mxu0 %v45
  %v216 = vpop.f32.mrb[0].mxu0
  %v217 = vadd.f32 0.0, %v216
  %v218 = vpop.f32.mrb[0].mxu0
  %219 = vmatprep.mubr.f32.mxu0 %v48
  %220 = vmatmul.mubr.f32.gmra.mrb[0].mxu0 %v47
  %v221 = vpop.f32.mrb[0].mxu0
  %v222 = vadd.f32 0.0, %v221
  %v223 = vpop.f32.mrb[0].mxu0
  %224 = vmatprep.mubr.f32.mxu0 %v50
  %225 = vmatmul.mubr.f32.gmra.mrb[0].mxu0 %v49
  %v226 = vpop.f32.mrb[0].mxu0
  %v227 = vadd.f32 0.0, %v226
  %v228 = vpop.f32.mrb[0].mxu0
  %229 = vmatprep.mubr.f32.mxu0 %v52
  %230 = vmatmul.mubr.f32.gmra.mrb[0].mxu0 %v51
  %v231 = vpop.f32.mrb[0].mxu0
  %v232 = vadd.f32 0.0, %v231
  %v233 = vpop.f32.mrb[0].mxu0
  %234 = vmatprep.mubr.f32.mxu0 %v54
  %235 = vmatmul.mubr.f32.gmra.mrb[0].mxu0 %v53
  %v236 = vpop.f32.mrb[0].mxu0
  %v237 = vadd.f32 0.0, %v236
  %v238 = vpop.f32.mrb[0].mxu0
  %239 = vmatprep.mubr.f32.mxu0 %v56
  %240 = vmatmul.mubr.f32.gmra.mrb[0].mxu0 %v55
  %v241 = vpop.f32.mrb[0].mxu0
  %v242 = vadd.f32 0.0, %v241
  %v243 = vpop.f32.mrb[0].mxu0
  %244 = vmatprep.mubr.f32.mxu0 %v58
  %245 = vmatmul.mubr.f32.gmra.mrb[0].mxu0 %v57
  %v246 = vpop.f32.mrb[0].mxu0
  %v247 = vadd.f32 0.0, %v246
  %v248 = vpop.f32.mrb[0].mxu0
  %249 = vmatprep.mubr.f32.mxu0 %v60
  %250 = vmatmul.mubr.f32.gmra.mrb[0].mxu0 %v59
  %v251 = vpop.f32.mrb[0].mxu0
  %v252 = vadd.f32 0.0, %v251
  %v253 = vpop.f32.mrb[0].mxu0
  %254 = vmatprep.mubr.f32.mxu0 %v62
  %255 = vmatmul.mubr.f32.gmra.mrb[0].mxu0 %v61
  %v256 = vpop.f32.mrb[0].mxu0
  %v257 = vadd.f32 0.0, %v256
  %v258 = vpop.f32.mrb[0].mxu0
  %259 = vmatprep.mubr.f32.mxu0 %v64
  %260 = vmatmul.mubr.f32.gmra.mrb[0].mxu0 %v63
  %v261 = vpop.f32.mrb[0].mxu0
  %v262 = vadd.f32 0.0, %v261
  %v263 = vpop.f32.mrb[0].mxu0
  %264 = vmatprep.mubr.f32.mxu0 %v66
  %265 = vmatmul.mubr.f32.gmra.mrb[0].mxu0 %v65
  %v266 = vpop.f32.mrb[0].mxu0
  %v267 = vadd.f32 0.0, %v266
  %v268 = vpop.f32.mrb[0].mxu0
  %269 = vmatprep.mubr.f32.mxu0 %v68
  %270 = vmatmul.mubr.f32.gmra.mrb[0].mxu0 %v67
  %v271 = vpop.f32.mrb[0].mxu0
  %v272 = vadd.f32 0.0, %v271
  %v273 = vpop.f32.mrb[0].mxu0
  %274 = vmatprep.mubr.f32.mxu0 %v70
  %275 = vmatmul.mubr.f32.gmra.mrb[0].mxu0 %v69
  %v276 = vpop.f32.mrb[0].mxu0
  %v277 = vadd.f32 0.0, %v276
  %v278 = vpop.f32.mrb[0].mxu0
  %279 = vdwg.mxu0
  %v280 = vld [vmem:[#allocation3] sm:$0x1]
  %v281 = vadd.f32 %v202, %v207
  %v282 = vadd.f32 %v281, %v212
  %v283 = vadd.f32 %v282, %v217
  %v284 = vadd.f32 %v283, %v222
  %v285 = vadd.f32 %v284, %v227
  %v286 = vadd.f32 %v285, %v232
  %v287 = vadd.f32 %v286, %v237
  %v288 = vadd.f32 %v287, %v242
  %v289 = vadd.f32 %v288, %v247
  %v290 = vadd.f32 %v289, %v252
  %v291 = vadd.f32 %v290, %v257
  %v292 = vadd.f32 %v291, %v262
  %v293 = vadd.f32 %v292, %v267
  %v294 = vadd.f32 %v293, %v272
  %v295 = vadd.f32 %v294, %v277
  %v296 = vrot.slane %v295, 4
  %v297 = vadd.f32 %v295, %v296
  %v298 = vrot.slane %v297, 2
  %v299 = vadd.f32 %v297, %v298
  %v300 = vrot.slane %v299, 1
  %v301 = vadd.f32 %v299, %v300
  %v302 = vadd.f32 %v280, %v301
  %303 = vst [vmem:[#allocation3] sm:$0x1] %v302
  %v304 = vld [vmem:[#allocation4] sm:$0x1]
  %v305 = vmul.f32 %v202, %v202
  %v306 = vmul.f32 %v207, %v207
  %v307 = vmul.f32 %v212, %v212
  %v308 = vmul.f32 %v217, %v217
  %v309 = vmul.f32 %v222, %v222
  %v310 = vmul.f32 %v227, %v227
  %v311 = vmul.f32 %v232, %v232
  %v312 = vmul.f32 %v237, %v237
  %v313 = vmul.f32 %v242, %v242
  %v314 = vmul.f32 %v247, %v247
  %v315 = vmul.f32 %v252, %v252
  %v316 = vmul.f32 %v257, %v257
  %v317 = vmul.f32 %v262, %v262
  %v318 = vmul.f32 %v267, %v267
  %v319 = vmul.f32 %v272, %v272
  %v320 = vmul.f32 %v277, %v277
  %v321 = vadd.f32 %v305, %v306
  %v322 = vadd.f32 %v321, %v307
  %v323 = vadd.f32 %v322, %v308
  %v324 = vadd.f32 %v323, %v309
  %v325 = vadd.f32 %v324, %v310
  %v326 = vadd.f32 %v325, %v311
  %v327 = vadd.f32 %v326, %v312
  %v328 = vadd.f32 %v327, %v313
  %v329 = vadd.f32 %v328, %v314
  %v330 = vadd.f32 %v329, %v315
  %v331 = vadd.f32 %v330, %v316
  %v332 = vadd.f32 %v331, %v317
  %v333 = vadd.f32 %v332, %v318
  %v334 = vadd.f32 %v333, %v319
  %v335 = vadd.f32 %v334, %v320
  %v336 = vrot.slane %v335, 4
  %v337 = vadd.f32 %v335, %v336
  %v338 = vrot.slane %v337, 2
  %v339 = vadd.f32 %v337, %v338
  %v340 = vrot.slane %v339, 1
  %v341 = vadd.f32 %v339, %v340
  %v342 = vadd.f32 %v304, %v341
  %343 = vst [vmem:[#allocation4] sm:$0x1] %v342
  %s344 = smul.u32 0, 128
  %s345 = scalar_lea.vmem [#allocation2], %s344
  %346 = vst [vmem:[%s345] sm:$0xff] %v202
  %347 = vst [vmem:[%s345 + $0x8] sm:$0xff] %v207
  %348 = vst [vmem:[%s345 + $0x10] sm:$0xff] %v212
  %349 = vst [vmem:[%s345 + $0x18] sm:$0xff] %v217
  %350 = vst [vmem:[%s345 + $0x20] sm:$0xff] %v222
  %351 = vst [vmem:[%s345 + $0x28] sm:$0xff] %v227
  %352 = vst [vmem:[%s345 + $0x30] sm:$0xff] %v232
  %353 = vst [vmem:[%s345 + $0x38] sm:$0xff] %v237
  %354 = vst [vmem:[%s345 + $0x40] sm:$0xff] %v242
  %355 = vst [vmem:[%s345 + $0x48] sm:$0xff] %v247
  %356 = vst [vmem:[%s345 + $0x50] sm:$0xff] %v252
  %357 = vst [vmem:[%s345 + $0x58] sm:$0xff] %v257
  %358 = vst [vmem:[%s345 + $0x60] sm:$0xff] %v262
  %359 = vst [vmem:[%s345 + $0x68] sm:$0xff] %v267
  %360 = vst [vmem:[%s345 + $0x70] sm:$0xff] %v272
  %361 = vst [vmem:[%s345 + $0x78] sm:$0xff] %v277
  // Predicated region
  $region22: #{_lambda_.8} parent=0 // pred_check
    %p362 = pneg %p17
  $region23: #{_lambda_.8} parent=0 // pred_check_branch
    %364 = sbr.rel (%p362) target = $region25
  $region24: #{_lambda_.8} parent=0 // pred_region
    %v365 = vld [vmem:[#allocation3] sm:$0x1]
    %v366 = vmul.f32 %v365, 0.0078125
    %v367 = vld [vmem:[#allocation4] sm:$0x1]
    %v368 = vmul.f32 %v367, 0.0078125
    %v369 = vmul.f32 %v366, %v366
    %v370 = vsub.f32 %v368, %v369
    %v371 = vmax.f32 %v370, 0.0
    %v372 = vld [vmem:[%s2] sm:$0x1]
    %v373 = vadd.f32 %v371, 1e-05
    %v374 = vrsqrt.pop %v373
    %v375 = vmul.f32 %v372, %v374
    %v376 = vld [vmem:[%s3] sm:$0x1]
    %v377 = vmul.f32 %v366, %v375
    %v378 = vsub.f32 %v376, %v377
    %v379 = vld [vmem:[#allocation2] sm:$0xff]
    %v380 = vld [vmem:[#allocation2 + $0x8] sm:$0xff]
    %v381 = vld [vmem:[#allocation2 + $0x10] sm:$0xff]
    %v382 = vld [vmem:[#allocation2 + $0x18] sm:$0xff]
    %v383 = vld [vmem:[#allocation2 + $0x20] sm:$0xff]
    %v384 = vld [vmem:[#allocation2 + $0x28] sm:$0xff]
    %v385 = vld [vmem:[#allocation2 + $0x30] sm:$0xff]
    %v386 = vld [vmem:[#allocation2 + $0x38] sm:$0xff]
    %v387 = vld [vmem:[#allocation2 + $0x40] sm:$0xff]
    %v388 = vld [vmem:[#allocation2 + $0x48] sm:$0xff]
    %v389 = vld [vmem:[#allocation2 + $0x50] sm:$0xff]
    %v390 = vld [vmem:[#allocation2 + $0x58] sm:$0xff]
    %v391 = vld [vmem:[#allocation2 + $0x60] sm:$0xff]
    %v392 = vld [vmem:[#allocation2 + $0x68] sm:$0xff]
    %v393 = vld [vmem:[#allocation2 + $0x70] sm:$0xff]
    %v394 = vld [vmem:[#allocation2 + $0x78] sm:$0xff]
    %v396 = vlaneseq
    %v397 = vshrl.u32 %v396, 7
    %v398 = vsub.s32 0, %v397
    %v399 = vrot.slane %v375, %v398
    %v401 = vmul.f32 %v379, %v399
    %v402 = vmul.f32 %v380, %v399
    %v403 = vmul.f32 %v381, %v399
    %v404 = vmul.f32 %v382, %v399
    %v405 = vmul.f32 %v383, %v399
    %v406 = vmul.f32 %v384, %v399
    %v407 = vmul.f32 %v385, %v399
    %v408 = vmul.f32 %v386, %v399
    %v409 = vmul.f32 %v387, %v399
    %v410 = vmul.f32 %v388, %v399
    %v411 = vmul.f32 %v389, %v399
    %v412 = vmul.f32 %v390, %v399
    %v413 = vmul.f32 %v391, %v399
    %v414 = vmul.f32 %v392, %v399
    %v415 = vmul.f32 %v393, %v399
    %v416 = vmul.f32 %v394, %v399
    %v418 = vlaneseq
    %v419 = vshrl.u32 %v418, 7
    %v420 = vsub.s32 0, %v419
    %v421 = vrot.slane %v378, %v420
    %v423 = vadd.f32 %v401, %v421
    %v424 = vadd.f32 %v402, %v421
    %v425 = vadd.f32 %v403, %v421
    %v426 = vadd.f32 %v404, %v421
    %v427 = vadd.f32 %v405, %v421
    %v428 = vadd.f32 %v406, %v421
    %v429 = vadd.f32 %v407, %v421
    %v430 = vadd.f32 %v408, %v421
    %v431 = vadd.f32 %v409, %v421
    %v432 = vadd.f32 %v410, %v421
    %v433 = vadd.f32 %v411, %v421
    %v434 = vadd.f32 %v412, %v421
    %v435 = vadd.f32 %v413, %v421
    %v436 = vadd.f32 %v414, %v421
    %v437 = vadd.f32 %v415, %v421
    %v438 = vadd.f32 %v416, %v421
    %vm439 = vcmp.gt.f32.partialorder %v423, 0.0
    %vm440 = vcmp.gt.f32.partialorder %v424, 0.0
    %vm441 = vcmp.gt.f32.partialorder %v425, 0.0
    %vm442 = vcmp.gt.f32.partialorder %v426, 0.0
    %vm443 = vcmp.gt.f32.partialorder %v427, 0.0
    %vm444 = vcmp.gt.f32.partialorder %v428, 0.0
    %vm445 = vcmp.gt.f32.partialorder %v429, 0.0
    %vm446 = vcmp.gt.f32.partialorder %v430, 0.0
    %vm447 = vcmp.gt.f32.partialorder %v431, 0.0
    %vm448 = vcmp.gt.f32.partialorder %v432, 0.0
    %vm449 = vcmp.gt.f32.partialorder %v433, 0.0
    %vm450 = vcmp.gt.f32.partialorder %v434, 0.0
    %vm451 = vcmp.gt.f32.partialorder %v435, 0.0
    %vm452 = vcmp.gt.f32.partialorder %v436, 0.0
    %vm453 = vcmp.gt.f32.partialorder %v437, 0.0
    %vm454 = vcmp.gt.f32.partialorder %v438, 0.0
    %v455 = vmul.f32 %v423, 0.2
    %v456 = vmul.f32 %v424, 0.2
    %v457 = vmul.f32 %v425, 0.2
    %v458 = vmul.f32 %v426, 0.2
    %v459 = vmul.f32 %v427, 0.2
    %v460 = vmul.f32 %v428, 0.2
    %v461 = vmul.f32 %v429, 0.2
    %v462 = vmul.f32 %v430, 0.2
    %v463 = vmul.f32 %v431, 0.2
    %v464 = vmul.f32 %v432, 0.2
    %v465 = vmul.f32 %v433, 0.2
    %v466 = vmul.f32 %v434, 0.2
    %v467 = vmul.f32 %v435, 0.2
    %v468 = vmul.f32 %v436, 0.2
    %v469 = vmul.f32 %v437, 0.2
    %v470 = vmul.f32 %v438, 0.2
    %v471 = vsel %vm439, %v423, %v455
    %v472 = vsel %vm440, %v424, %v456
    %v473 = vsel %vm441, %v425, %v457
    %v474 = vsel %vm442, %v426, %v458
    %v475 = vsel %vm443, %v427, %v459
    %v476 = vsel %vm444, %v428, %v460
    %v477 = vsel %vm445, %v429, %v461
    %v478 = vsel %vm446, %v430, %v462
    %v479 = vsel %vm447, %v431, %v463
    %v480 = vsel %vm448, %v432, %v464
    %v481 = vsel %vm449, %v433, %v465
    %v482 = vsel %vm450, %v434, %v466
    %v483 = vsel %vm451, %v435, %v467
    %v484 = vsel %vm452, %v436, %v468
    %v485 = vsel %vm453, %v437, %v469
    %v486 = vsel %vm454, %v438, %v470
    %v487 = vpack.c.bf16 %v472, %v471
    %v488 = vpack.c.bf16 %v474, %v473
    %v489 = vpack.c.bf16 %v476, %v475
    %v490 = vpack.c.bf16 %v478, %v477
    %v491 = vpack.c.bf16 %v480, %v479
    %v492 = vpack.c.bf16 %v482, %v481
    %v493 = vpack.c.bf16 %v484, %v483
    %v494 = vpack.c.bf16 %v486, %v485
    %v503 = vunpack.c.l.b16 %v487
    %v504 = vunpack.c.h.b16 %v487
    %v505 = vunpack.c.l.b16 %v488
    %v506 = vunpack.c.h.b16 %v488
    %v507 = vunpack.c.l.b16 %v489
    %v508 = vunpack.c.h.b16 %v489
    %v509 = vunpack.c.l.b16 %v490
    %v510 = vunpack.c.h.b16 %v490
    %v511 = vunpack.c.l.b16 %v491
    %v512 = vunpack.c.h.b16 %v491
    %v513 = vunpack.c.l.b16 %v492
    %v514 = vunpack.c.h.b16 %v492
    %v515 = vunpack.c.l.b16 %v493
    %v516 = vunpack.c.h.b16 %v493
    %v517 = vunpack.c.l.b16 %v494
    %v518 = vunpack.c.h.b16 %v494
    %v519 = vpack.c.b16 %v503, %v503
    %v520 = vpack.c.b16 %v504, %v504
    %v521 = vpack.c.b16 %v505, %v505
    %v522 = vpack.c.b16 %v506, %v506
    %v523 = vpack.c.b16 %v507, %v507
    %v524 = vpack.c.b16 %v508, %v508
    %v525 = vpack.c.b16 %v509, %v509
    %v526 = vpack.c.b16 %v510, %v510
    %v527 = vpack.c.b16 %v511, %v511
    %v528 = vpack.c.b16 %v512, %v512
    %v529 = vpack.c.b16 %v513, %v513
    %v530 = vpack.c.b16 %v514, %v514
    %v531 = vpack.c.b16 %v515, %v515
    %v532 = vpack.c.b16 %v516, %v516
    %v533 = vpack.c.b16 %v517, %v517
    %v534 = vpack.c.b16 %v518, %v518
    %551 = vst [vmem:[%s4] sm:$0xf] %v519
    %552 = vst [vmem:[%s4 + $0x4] sm:$0xf] %v520
    %553 = vst [vmem:[%s4 + $0x8] sm:$0xf] %v521
    %554 = vst [vmem:[%s4 + $0xc] sm:$0xf] %v522
    %555 = vst [vmem:[%s4 + $0x10] sm:$0xf] %v523
    %556 = vst [vmem:[%s4 + $0x14] sm:$0xf] %v524
    %557 = vst [vmem:[%s4 + $0x18] sm:$0xf] %v525
    %558 = vst [vmem:[%s4 + $0x1c] sm:$0xf] %v526
    %559 = vst [vmem:[%s4 + $0x20] sm:$0xf] %v527
    %560 = vst [vmem:[%s4 + $0x24] sm:$0xf] %v528
    %561 = vst [vmem:[%s4 + $0x28] sm:$0xf] %v529
    %562 = vst [vmem:[%s4 + $0x2c] sm:$0xf] %v530
    %563 = vst [vmem:[%s4 + $0x30] sm:$0xf] %v531
    %564 = vst [vmem:[%s4 + $0x34] sm:$0xf] %v532
    %565 = vst [vmem:[%s4 + $0x38] sm:$0xf] %v533
    %566 = vst [vmem:[%s4 + $0x3c] sm:$0xf] %v534
  $region25: #{_lambda_.8} parent=0 // pred_fallthru
    _
  // Predicated region
  $region26: #{_lambda_.8} parent=0 // pred_check
    _
  $region27: #{_lambda_.8} parent=0 // pred_check_branch
    %568 = sbr.rel (0) target = $region29
  $region28: #{_lambda_.8} parent=0 // pred_region
    _
  $region29: #{_lambda_.8} parent=0 // pred_fallthru
    _
  // Predicated region
  $region30: #{_lambda_.8} parent=0 // pred_check
    _
  $region31: #{_lambda_.8} parent=0 // pred_check_branch
    %570 = sbr.rel (0) target = $region33
  $region32: #{_lambda_.8} parent=0 // pred_region
    _
  $region33: #{_lambda_.8} parent=0 // pred_fallthru
    _

// kernel: _lambda_.9
$region0: #{_lambda_.9}
  #allocation0 [shape = 'u32[]', space=smem, size = 0x4, offset = 0x4, fixed_abs, tag = 'smem constant byte address 0x4 - core index']
  #allocation1 [shape = 'u32[144,128]{1,0:T(1,128)}', space=vmem, size = 0x12000, scoped, tag = 'internal scratch']
  #allocation2 [shape = 'f32[32,128]{1,0:T(8,128)}', space=vmem, size = 0x4000, scoped, tag = 'scratch operand']
  #allocation3 [shape = 'f32[1,128]{1,0:T(1,128)}', space=vmem, size = 0x200, scoped, tag = 'scratch operand']
  #allocation4 [shape = 'f32[1,128]{1,0:T(1,128)}', space=vmem, size = 0x200, scoped, tag = 'scratch operand']
  %s0 = inlined_call_operand.vmem [shape: bf16[32,512], index: 0, kind: input, shape index: {}]
  %s1 = inlined_call_operand.vmem [shape: bf16[512,128], index: 1, kind: input, shape index: {}]
  %s2 = inlined_call_operand.vmem [shape: f32[1,128], index: 2, kind: input, shape index: {}]
  %s3 = inlined_call_operand.vmem [shape: f32[1,128], index: 3, kind: input, shape index: {}]
  %s4 = inlined_call_operand.vmem [shape: bf16[32,128], index: 4, kind: output, shape index: {}]
  %s5 = sld [smem:[#allocation0]]
  $region34: #{_lambda_.9} parent=0
    _
  %s7 = ssub.s32 1, %s5
  %s8 = scalar_select 0, %s7, %s5
  // Predicated region
  $region2: #{_lambda_.9} parent=0 // pred_check
    _
  $region3: #{_lambda_.9} parent=0 // pred_check_branch
    %10 = sbr.rel (0) target = $region5
  $region4: #{_lambda_.9} parent=0 // pred_region
    _
  $region5: #{_lambda_.9} parent=0 // pred_fallthru
    _
  // Predicated region
  $region6: #{_lambda_.9} parent=0 // pred_check
    _
  $region7: #{_lambda_.9} parent=0 // pred_check_branch
    %12 = sbr.rel (0) target = $region9
  $region8: #{_lambda_.9} parent=0 // pred_region
    _
  $region9: #{_lambda_.9} parent=0 // pred_fallthru
    _
  // Predicated region
  $region10: #{_lambda_.9} parent=0 // pred_check
    _
  $region11: #{_lambda_.9} parent=0 // pred_check_branch
    %14 = sbr.rel (0) target = $region13
  $region12: #{_lambda_.9} parent=0 // pred_region
    _
  $region13: #{_lambda_.9} parent=0 // pred_fallthru
    _
  // Predicated region
  $region14: #{_lambda_.9} parent=0 // pred_check
    _
  $region15: #{_lambda_.9} parent=0 // pred_check_branch
    %16 = sbr.rel (0) target = $region17
  $region16: #{_lambda_.9} parent=0 // pred_region
    _
  $region17: #{_lambda_.9} parent=0 // pred_fallthru
    _
  %p17 = scmp.eq.s32.totalorder 0, 0
  // Predicated region
  $region18: #{_lambda_.9} parent=0 // pred_check
    %p18 = pneg %p17
  $region19: #{_lambda_.9} parent=0 // pred_check_branch
    %20 = sbr.rel (%p18) target = $region21
  $region20: #{_lambda_.9} parent=0 // pred_region
    %21 = vst [vmem:[#allocation3] sm:$0x1] 0.0
    %22 = vst [vmem:[#allocation4] sm:$0x1] 0.0
  $region21: #{_lambda_.9} parent=0 // pred_fallthru
    _
  %v23 = vld [vmem:[%s0] sm:$0xff]
  %v24 = vld [vmem:[%s0 + $0x8] sm:$0xff]
  %v25 = vld [vmem:[%s0 + $0x10] sm:$0xff]
  %v26 = vld [vmem:[%s0 + $0x18] sm:$0xff]
  %v27 = vld [vmem:[%s0 + $0x20] sm:$0xff]
  %v28 = vld [vmem:[%s0 + $0x28] sm:$0xff]
  %v29 = vld [vmem:[%s0 + $0x30] sm:$0xff]
  %v30 = vld [vmem:[%s0 + $0x38] sm:$0xff]
  %v31 = vunpack.c.l.bf16 %v23
  %v32 = vunpack.c.h.bf16 %v23
  %v33 = vunpack.c.l.bf16 %v24
  %v34 = vunpack.c.h.bf16 %v24
  %v35 = vunpack.c.l.bf16 %v25
  %v36 = vunpack.c.h.bf16 %v25
  %v37 = vunpack.c.l.bf16 %v26
  %v38 = vunpack.c.h.bf16 %v26
  %v39 = vunpack.c.l.bf16 %v27
  %v40 = vunpack.c.h.bf16 %v27
  %v41 = vunpack.c.l.bf16 %v28
  %v42 = vunpack.c.h.bf16 %v28
  %v43 = vunpack.c.l.bf16 %v29
  %v44 = vunpack.c.h.bf16 %v29
  %v45 = vunpack.c.l.bf16 %v30
  %v46 = vunpack.c.h.bf16 %v30
  %v47 = vld [vmem:[%s1] sm:$0xf]
  %v48 = vld [vmem:[%s1 + $0x4] sm:$0xf]
  %v49 = vld [vmem:[%s1 + $0x8] sm:$0xf]
  %v50 = vld [vmem:[%s1 + $0xc] sm:$0xf]
  %v51 = vld [vmem:[%s1 + $0x10] sm:$0xf]
  %v52 = vld [vmem:[%s1 + $0x14] sm:$0xf]
  %v53 = vld [vmem:[%s1 + $0x18] sm:$0xf]
  %v54 = vld [vmem:[%s1 + $0x1c] sm:$0xf]
  %v55 = vld [vmem:[%s1 + $0x20] sm:$0xf]
  %v56 = vld [vmem:[%s1 + $0x24] sm:$0xf]
  %v57 = vld [vmem:[%s1 + $0x28] sm:$0xf]
  %v58 = vld [vmem:[%s1 + $0x2c] sm:$0xf]
  %v59 = vld [vmem:[%s1 + $0x30] sm:$0xf]
  %v60 = vld [vmem:[%s1 + $0x34] sm:$0xf]
  %v61 = vld [vmem:[%s1 + $0x38] sm:$0xf]
  %v62 = vld [vmem:[%s1 + $0x3c] sm:$0xf]
  %v63 = vld [vmem:[%s1 + $0x40] sm:$0xf]
  %v64 = vld [vmem:[%s1 + $0x44] sm:$0xf]
  %v65 = vld [vmem:[%s1 + $0x48] sm:$0xf]
  %v66 = vld [vmem:[%s1 + $0x4c] sm:$0xf]
  %v67 = vld [vmem:[%s1 + $0x50] sm:$0xf]
  %v68 = vld [vmem:[%s1 + $0x54] sm:$0xf]
  %v69 = vld [vmem:[%s1 + $0x58] sm:$0xf]
  %v70 = vld [vmem:[%s1 + $0x5c] sm:$0xf]
  %v71 = vld [vmem:[%s1 + $0x60] sm:$0xf]
  %v72 = vld [vmem:[%s1 + $0x64] sm:$0xf]
  %v73 = vld [vmem:[%s1 + $0x68] sm:$0xf]
  %v74 = vld [vmem:[%s1 + $0x6c] sm:$0xf]
  %v75 = vld [vmem:[%s1 + $0x70] sm:$0xf]
  %v76 = vld [vmem:[%s1 + $0x74] sm:$0xf]
  %v77 = vld [vmem:[%s1 + $0x78] sm:$0xf]
  %v78 = vld [vmem:[%s1 + $0x7c] sm:$0xf]
  %v79 = vld [vmem:[%s1 + $0x80] sm:$0xf]
  %v80 = vld [vmem:[%s1 + $0x84] sm:$0xf]
  %v81 = vld [vmem:[%s1 + $0x88] sm:$0xf]
  %v82 = vld [vmem:[%s1 + $0x8c] sm:$0xf]
  %v83 = vld [vmem:[%s1 + $0x90] sm:$0xf]
  %v84 = vld [vmem:[%s1 + $0x94] sm:$0xf]
  %v85 = vld [vmem:[%s1 + $0x98] sm:$0xf]
  %v86 = vld [vmem:[%s1 + $0x9c] sm:$0xf]
  %v87 = vld [vmem:[%s1 + $0xa0] sm:$0xf]
  %v88 = vld [vmem:[%s1 + $0xa4] sm:$0xf]
  %v89 = vld [vmem:[%s1 + $0xa8] sm:$0xf]
  %v90 = vld [vmem:[%s1 + $0xac] sm:$0xf]
  %v91 = vld [vmem:[%s1 + $0xb0] sm:$0xf]
  %v92 = vld [vmem:[%s1 + $0xb4] sm:$0xf]
  %v93 = vld [vmem:[%s1 + $0xb8] sm:$0xf]
  %v94 = vld [vmem:[%s1 + $0xbc] sm:$0xf]
  %v95 = vld [vmem:[%s1 + $0xc0] sm:$0xf]
  %v96 = vld [vmem:[%s1 + $0xc4] sm:$0xf]
  %v97 = vld [vmem:[%s1 + $0xc8] sm:$0xf]
  %v98 = vld [vmem:[%s1 + $0xcc] sm:$0xf]
  %v99 = vld [vmem:[%s1 + $0xd0] sm:$0xf]
  %v100 = vld [vmem:[%s1 + $0xd4] sm:$0xf]
  %v101 = vld [vmem:[%s1 + $0xd8] sm:$0xf]
  %v102 = vld [vmem:[%s1 + $0xdc] sm:$0xf]
  %v103 = vld [vmem:[%s1 + $0xe0] sm:$0xf]
  %v104 = vld [vmem:[%s1 + $0xe4] sm:$0xf]
  %v105 = vld [vmem:[%s1 + $0xe8] sm:$0xf]
  %v106 = vld [vmem:[%s1 + $0xec] sm:$0xf]
  %v107 = vld [vmem:[%s1 + $0xf0] sm:$0xf]
  %v108 = vld [vmem:[%s1 + $0xf4] sm:$0xf]
  %v109 = vld [vmem:[%s1 + $0xf8] sm:$0xf]
  %v110 = vld [vmem:[%s1 + $0xfc] sm:$0xf]
  %v111 = vunpack.c.l.bf16 %v47
  %v112 = vunpack.c.l.bf16 %v48
  %v113 = vunpack.c.l.bf16 %v49
  %v114 = vunpack.c.l.bf16 %v50
  %v115 = vunpack.c.l.bf16 %v51
  %v116 = vunpack.c.l.bf16 %v52
  %v117 = vunpack.c.l.bf16 %v53
  %v118 = vunpack.c.l.bf16 %v54
  %v119 = vunpack.c.l.bf16 %v55
  %v120 = vunpack.c.l.bf16 %v56
  %v121 = vunpack.c.l.bf16 %v57
  %v122 = vunpack.c.l.bf16 %v58
  %v123 = vunpack.c.l.bf16 %v59
  %v124 = vunpack.c.l.bf16 %v60
  %v125 = vunpack.c.l.bf16 %v61
  %v126 = vunpack.c.l.bf16 %v62
  %v127 = vunpack.c.l.bf16 %v63
  %v128 = vunpack.c.l.bf16 %v64
  %v129 = vunpack.c.l.bf16 %v65
  %v130 = vunpack.c.l.bf16 %v66
  %v131 = vunpack.c.l.bf16 %v67
  %v132 = vunpack.c.l.bf16 %v68
  %v133 = vunpack.c.l.bf16 %v69
  %v134 = vunpack.c.l.bf16 %v70
  %v135 = vunpack.c.l.bf16 %v71
  %v136 = vunpack.c.l.bf16 %v72
  %v137 = vunpack.c.l.bf16 %v73
  %v138 = vunpack.c.l.bf16 %v74
  %v139 = vunpack.c.l.bf16 %v75
  %v140 = vunpack.c.l.bf16 %v76
  %v141 = vunpack.c.l.bf16 %v77
  %v142 = vunpack.c.l.bf16 %v78
  %v143 = vunpack.c.l.bf16 %v79
  %v144 = vunpack.c.l.bf16 %v80
  %v145 = vunpack.c.l.bf16 %v81
  %v146 = vunpack.c.l.bf16 %v82
  %v147 = vunpack.c.l.bf16 %v83
  %v148 = vunpack.c.l.bf16 %v84
  %v149 = vunpack.c.l.bf16 %v85
  %v150 = vunpack.c.l.bf16 %v86
  %v151 = vunpack.c.l.bf16 %v87
  %v152 = vunpack.c.l.bf16 %v88
  %v153 = vunpack.c.l.bf16 %v89
  %v154 = vunpack.c.l.bf16 %v90
  %v155 = vunpack.c.l.bf16 %v91
  %v156 = vunpack.c.l.bf16 %v92
  %v157 = vunpack.c.l.bf16 %v93
  %v158 = vunpack.c.l.bf16 %v94
  %v159 = vunpack.c.l.bf16 %v95
  %v160 = vunpack.c.l.bf16 %v96
  %v161 = vunpack.c.l.bf16 %v97
  %v162 = vunpack.c.l.bf16 %v98
  %v163 = vunpack.c.l.bf16 %v99
  %v164 = vunpack.c.l.bf16 %v100
  %v165 = vunpack.c.l.bf16 %v101
  %v166 = vunpack.c.l.bf16 %v102
  %v167 = vunpack.c.l.bf16 %v103
  %v168 = vunpack.c.l.bf16 %v104
  %v169 = vunpack.c.l.bf16 %v105
  %v170 = vunpack.c.l.bf16 %v106
  %v171 = vunpack.c.l.bf16 %v107
  %v172 = vunpack.c.l.bf16 %v108
  %v173 = vunpack.c.l.bf16 %v109
  %v174 = vunpack.c.l.bf16 %v110
  %175 = vmatprep.subr.mxu0 0.0
  %176 = vmatpush1.msra.mxu0 %v111
  %177 = vmatprep.subr.mxu0 0.0
  %178 = vmatpush1.msra.mxu0 %v112
  %179 = vmatprep.subr.mxu0 0.0
  %180 = vmatpush1.msra.mxu0 %v113
  %181 = vmatprep.subr.mxu0 0.0
  %182 = vmatpush1.msra.mxu0 %v114
  %183 = vmatprep.subr.mxu0 0.0
  %184 = vmatpush1.msra.mxu0 %v115
  %185 = vmatprep.subr.mxu0 0.0
  %186 = vmatpush1.msra.mxu0 %v116
  %187 = vmatprep.subr.mxu0 0.0
  %188 = vmatpush1.msra.mxu0 %v117
  %189 = vmatprep.subr.mxu0 0.0
  %190 = vmatpush1.msra.mxu0 %v118
  %191 = vmatprep.subr.mxu0 0.0
  %192 = vmatpush1.msra.mxu0 %v119
  %193 = vmatprep.subr.mxu0 0.0
  %194 = vmatpush1.msra.mxu0 %v120
  %195 = vmatprep.subr.mxu0 0.0
  %196 = vmatpush1.msra.mxu0 %v121
  %197 = vmatprep.subr.mxu0 0.0
  %198 = vmatpush1.msra.mxu0 %v122
  %199 = vmatprep.subr.mxu0 0.0
  %200 = vmatpush1.msra.mxu0 %v123
  %201 = vmatprep.subr.mxu0 0.0
  %202 = vmatpush1.msra.mxu0 %v124
  %203 = vmatprep.subr.mxu0 0.0
  %204 = vmatpush1.msra.mxu0 %v125
  %205 = vmatprep.subr.mxu0 0.0
  %206 = vmatpush1.msra.mxu0 %v126
  %207 = vmatprep.subr.mxu0 0.0
  %208 = vmatpush1.msra.mxu0 %v127
  %209 = vmatprep.subr.mxu0 0.0
  %210 = vmatpush1.msra.mxu0 %v128
  %211 = vmatprep.subr.mxu0 0.0
  %212 = vmatpush1.msra.mxu0 %v129
  %213 = vmatprep.subr.mxu0 0.0
  %214 = vmatpush1.msra.mxu0 %v130
  %215 = vmatprep.subr.mxu0 0.0
  %216 = vmatpush1.msra.mxu0 %v131
  %217 = vmatprep.subr.mxu0 0.0
  %218 = vmatpush1.msra.mxu0 %v132
  %219 = vmatprep.subr.mxu0 0.0
  %220 = vmatpush1.msra.mxu0 %v133
  %221 = vmatprep.subr.mxu0 0.0
  %222 = vmatpush1.msra.mxu0 %v134
  %223 = vmatprep.subr.mxu0 0.0
  %224 = vmatpush1.msra.mxu0 %v135
  %225 = vmatprep.subr.mxu0 0.0
  %226 = vmatpush1.msra.mxu0 %v136
  %227 = vmatprep.subr.mxu0 0.0
  %228 = vmatpush1.msra.mxu0 %v137
  %229 = vmatprep.subr.mxu0 0.0
  %230 = vmatpush1.msra.mxu0 %v138
  %231 = vmatprep.subr.mxu0 0.0
  %232 = vmatpush1.msra.mxu0 %v139
  %233 = vmatprep.subr.mxu0 0.0
  %234 = vmatpush1.msra.mxu0 %v140
  %235 = vmatprep.subr.mxu0 0.0
  %236 = vmatpush1.msra.mxu0 %v141
  %237 = vmatprep.subr.mxu0 0.0
  %238 = vmatpush1.msra.mxu0 %v142
  %239 = vmatprep.mubr.f32.mxu0 %v32
  %240 = vmatmul.mubr.f32.gmra.mrb[0].mxu0 %v31
  %v241 = vpop.f32.mrb[0].mxu0
  %v242 = vadd.f32 0.0, %v241
  %v243 = vpop.f32.mrb[0].mxu0
  %244 = vmatprep.mubr.f32.mxu0 %v36
  %245 = vmatmul.mubr.f32.gmra.mrb[0].mxu0 %v35
  %v246 = vpop.f32.mrb[0].mxu0
  %v247 = vadd.f32 0.0, %v246
  %v248 = vpop.f32.mrb[0].mxu0
  %249 = vmatprep.mubr.f32.mxu0 %v40
  %250 = vmatmul.mubr.f32.gmra.mrb[0].mxu0 %v39
  %v251 = vpop.f32.mrb[0].mxu0
  %v252 = vadd.f32 0.0, %v251
  %v253 = vpop.f32.mrb[0].mxu0
  %254 = vmatprep.mubr.f32.mxu0 %v44
  %255 = vmatmul.mubr.f32.gmra.mrb[0].mxu0 %v43
  %v256 = vpop.f32.mrb[0].mxu0
  %v257 = vadd.f32 0.0, %v256
  %v258 = vpop.f32.mrb[0].mxu0
  %259 = vdwg.mxu0
  %260 = vmatprep.subr.mxu0 0.0
  %261 = vmatpush1.msra.mxu0 %v143
  %262 = vmatprep.subr.mxu0 0.0
  %263 = vmatpush1.msra.mxu0 %v144
  %264 = vmatprep.subr.mxu0 0.0
  %265 = vmatpush1.msra.mxu0 %v145
  %266 = vmatprep.subr.mxu0 0.0
  %267 = vmatpush1.msra.mxu0 %v146
  %268 = vmatprep.subr.mxu0 0.0
  %269 = vmatpush1.msra.mxu0 %v147
  %270 = vmatprep.subr.mxu0 0.0
  %271 = vmatpush1.msra.mxu0 %v148
  %272 = vmatprep.subr.mxu0 0.0
  %273 = vmatpush1.msra.mxu0 %v149
  %274 = vmatprep.subr.mxu0 0.0
  %275 = vmatpush1.msra.mxu0 %v150
  %276 = vmatprep.subr.mxu0 0.0
  %277 = vmatpush1.msra.mxu0 %v151
  %278 = vmatprep.subr.mxu0 0.0
  %279 = vmatpush1.msra.mxu0 %v152
  %280 = vmatprep.subr.mxu0 0.0
  %281 = vmatpush1.msra.mxu0 %v153
  %282 = vmatprep.subr.mxu0 0.0
  %283 = vmatpush1.msra.mxu0 %v154
  %284 = vmatprep.subr.mxu0 0.0
  %285 = vmatpush1.msra.mxu0 %v155
  %286 = vmatprep.subr.mxu0 0.0
  %287 = vmatpush1.msra.mxu0 %v156
  %288 = vmatprep.subr.mxu0 0.0
  %289 = vmatpush1.msra.mxu0 %v157
  %290 = vmatprep.subr.mxu0 0.0
  %291 = vmatpush1.msra.mxu0 %v158
  %292 = vmatprep.subr.mxu0 0.0
  %293 = vmatpush1.msra.mxu0 %v159
  %294 = vmatprep.subr.mxu0 0.0
  %295 = vmatpush1.msra.mxu0 %v160
  %296 = vmatprep.subr.mxu0 0.0
  %297 = vmatpush1.msra.mxu0 %v161
  %298 = vmatprep.subr.mxu0 0.0
  %299 = vmatpush1.msra.mxu0 %v162
  %300 = vmatprep.subr.mxu0 0.0
  %301 = vmatpush1.msra.mxu0 %v163
  %302 = vmatprep.subr.mxu0 0.0
  %303 = vmatpush1.msra.mxu0 %v164
  %304 = vmatprep.subr.mxu0 0.0
  %305 = vmatpush1.msra.mxu0 %v165
  %306 = vmatprep.subr.mxu0 0.0
  %307 = vmatpush1.msra.mxu0 %v166
  %308 = vmatprep.subr.mxu0 0.0
  %309 = vmatpush1.msra.mxu0 %v167
  %310 = vmatprep.subr.mxu0 0.0
  %311 = vmatpush1.msra.mxu0 %v168
  %312 = vmatprep.subr.mxu0 0.0
  %313 = vmatpush1.msra.mxu0 %v169
  %314 = vmatprep.subr.mxu0 0.0
  %315 = vmatpush1.msra.mxu0 %v170
  %316 = vmatprep.subr.mxu0 0.0
  %317 = vmatpush1.msra.mxu0 %v171
  %318 = vmatprep.subr.mxu0 0.0
  %319 = vmatpush1.msra.mxu0 %v172
  %320 = vmatprep.subr.mxu0 0.0
  %321 = vmatpush1.msra.mxu0 %v173
  %322 = vmatprep.subr.mxu0 0.0
  %323 = vmatpush1.msra.mxu0 %v174
  %324 = vmatprep.mubr.f32.mxu0 %v34
  %325 = vmatmul.mubr.f32.gmra.mrb[0].mxu0 %v33
  %v326 = vpop.f32.mrb[0].mxu0
  %v327 = vadd.f32 %v242, %v326
  %v328 = vpop.f32.mrb[0].mxu0
  %329 = vmatprep.mubr.f32.mxu0 %v38
  %330 = vmatmul.mubr.f32.gmra.mrb[0].mxu0 %v37
  %v331 = vpop.f32.mrb[0].mxu0
  %v332 = vadd.f32 %v247, %v331
  %v333 = vpop.f32.mrb[0].mxu0
  %334 = vmatprep.mubr.f32.mxu0 %v42
  %335 = vmatmul.mubr.f32.gmra.mrb[0].mxu0 %v41
  %v336 = vpop.f32.mrb[0].mxu0
  %v337 = vadd.f32 %v252, %v336
  %v338 = vpop.f32.mrb[0].mxu0
  %339 = vmatprep.mubr.f32.mxu0 %v46
  %340 = vmatmul.mubr.f32.gmra.mrb[0].mxu0 %v45
  %v341 = vpop.f32.mrb[0].mxu0
  %v342 = vadd.f32 %v257, %v341
  %v343 = vpop.f32.mrb[0].mxu0
  %344 = vdwg.mxu0
  %v345 = vld [vmem:[#allocation3] sm:$0x1]
  %v346 = vadd.f32 %v327, %v332
  %v347 = vadd.f32 %v346, %v337
  %v348 = vadd.f32 %v347, %v342
  %v349 = vrot.slane %v348, 4
  %v350 = vadd.f32 %v348, %v349
  %v351 = vrot.slane %v350, 2
  %v352 = vadd.f32 %v350, %v351
  %v353 = vrot.slane %v352, 1
  %v354 = vadd.f32 %v352, %v353
  %v355 = vadd.f32 %v345, %v354
  %356 = vst [vmem:[#allocation3] sm:$0x1] %v355
  %v357 = vld [vmem:[#allocation4] sm:$0x1]
  %v358 = vmul.f32 %v327, %v327
  %v359 = vmul.f32 %v332, %v332
  %v360 = vmul.f32 %v337, %v337
  %v361 = vmul.f32 %v342, %v342
  %v362 = vadd.f32 %v358, %v359
  %v363 = vadd.f32 %v362, %v360
  %v364 = vadd.f32 %v363, %v361
  %v365 = vrot.slane %v364, 4
  %v366 = vadd.f32 %v364, %v365
  %v367 = vrot.slane %v366, 2
  %v368 = vadd.f32 %v366, %v367
  %v369 = vrot.slane %v368, 1
  %v370 = vadd.f32 %v368, %v369
  %v371 = vadd.f32 %v357, %v370
  %372 = vst [vmem:[#allocation4] sm:$0x1] %v371
  %s373 = smul.u32 0, 32
  %s374 = scalar_lea.vmem [#allocation2], %s373
  %375 = vst [vmem:[%s374] sm:$0xff] %v327
  %376 = vst [vmem:[%s374 + $0x8] sm:$0xff] %v332
  %377 = vst [vmem:[%s374 + $0x10] sm:$0xff] %v337
  %378 = vst [vmem:[%s374 + $0x18] sm:$0xff] %v342
  // Predicated region
  $region22: #{_lambda_.9} parent=0 // pred_check
    %p379 = pneg %p17
  $region23: #{_lambda_.9} parent=0 // pred_check_branch
    %381 = sbr.rel (%p379) target = $region25
  $region24: #{_lambda_.9} parent=0 // pred_region
    %v382 = vld [vmem:[#allocation3] sm:$0x1]
    %v383 = vmul.f32 %v382, 0.03125
    %v384 = vld [vmem:[#allocation4] sm:$0x1]
    %v385 = vmul.f32 %v384, 0.03125
    %v386 = vmul.f32 %v383, %v383
    %v387 = vsub.f32 %v385, %v386
    %v388 = vmax.f32 %v387, 0.0
    %v389 = vld [vmem:[%s2] sm:$0x1]
    %v390 = vadd.f32 %v388, 1e-05
    %v391 = vrsqrt.pop %v390
    %v392 = vmul.f32 %v389, %v391
    %v393 = vld [vmem:[%s3] sm:$0x1]
    %v394 = vmul.f32 %v383, %v392
    %v395 = vsub.f32 %v393, %v394
    %v396 = vld [vmem:[#allocation2] sm:$0xff]
    %v397 = vld [vmem:[#allocation2 + $0x8] sm:$0xff]
    %v398 = vld [vmem:[#allocation2 + $0x10] sm:$0xff]
    %v399 = vld [vmem:[#allocation2 + $0x18] sm:$0xff]
    %v401 = vlaneseq
    %v402 = vshrl.u32 %v401, 7
    %v403 = vsub.s32 0, %v402
    %v404 = vrot.slane %v392, %v403
    %v406 = vmul.f32 %v396, %v404
    %v407 = vmul.f32 %v397, %v404
    %v408 = vmul.f32 %v398, %v404
    %v409 = vmul.f32 %v399, %v404
    %v411 = vlaneseq
    %v412 = vshrl.u32 %v411, 7
    %v413 = vsub.s32 0, %v412
    %v414 = vrot.slane %v395, %v413
    %v416 = vadd.f32 %v406, %v414
    %v417 = vadd.f32 %v407, %v414
    %v418 = vadd.f32 %v408, %v414
    %v419 = vadd.f32 %v409, %v414
    %v420 = vxor.u32 %v416, 2147483648
    %v421 = vxor.u32 %v417, 2147483648
    %v422 = vxor.u32 %v418, 2147483648
    %v423 = vxor.u32 %v419, 2147483648
    %v424 = vmul.f32 %v420, 1.442695
    %v425 = vpow.pop %v424
    %v426 = vmul.f32 %v421, 1.442695
    %v427 = vpow.pop %v426
    %v428 = vmul.f32 %v422, 1.442695
    %v429 = vpow.pop %v428
    %v430 = vmul.f32 %v423, 1.442695
    %v431 = vpow.pop %v430
    %v432 = vadd.f32 %v425, 1.0
    %v433 = vadd.f32 %v427, 1.0
    %v434 = vadd.f32 %v429, 1.0
    %v435 = vadd.f32 %v431, 1.0
    %v436 = vrcp.pop %v432
    %v437 = vmul.f32 1.0, %v436
    %v438 = vrcp.pop %v433
    %v439 = vmul.f32 1.0, %v438
    %v440 = vrcp.pop %v434
    %v441 = vmul.f32 1.0, %v440
    %v442 = vrcp.pop %v435
    %v443 = vmul.f32 1.0, %v442
    %v444 = vpack.c.bf16 %v439, %v437
    %v445 = vpack.c.bf16 %v443, %v441
    %v448 = vunpack.c.l.b16 %v444
    %v449 = vunpack.c.h.b16 %v444
    %v450 = vunpack.c.l.b16 %v445
    %v451 = vunpack.c.h.b16 %v445
    %v452 = vpack.c.b16 %v448, %v448
    %v453 = vpack.c.b16 %v449, %v449
    %v454 = vpack.c.b16 %v450, %v450
    %v455 = vpack.c.b16 %v451, %v451
    %460 = vst [vmem:[%s4] sm:$0xf] %v452
    %461 = vst [vmem:[%s4 + $0x4] sm:$0xf] %v453
    %462 = vst [vmem:[%s4 + $0x8] sm:$0xf] %v454
    %463 = vst [vmem:[%s4 + $0xc] sm:$0xf] %v455
  $region25: #{_lambda_.9} parent=0 // pred_fallthru
    _
  // Predicated region
  $region26: #{_lambda_.9} parent=0 // pred_check
    _
  $region27: #{_lambda_.9} parent=0 // pred_check_branch
    %465 = sbr.rel (0) target = $region29
  $region28: #{_lambda_.9} parent=0 // pred_region
    _
  $region29: #{_lambda_.9} parent=0 // pred_fallthru
    _
  // Predicated region
  $region30: #{_lambda_.9} parent=0 // pred_check
    _
  $region31: #{_lambda_.9} parent=0 // pred_check_branch
    %467 = sbr.rel (0) target = $region33
  $region32: #{_lambda_.9} parent=0 // pred_region
    _
  $region33: #{_lambda_.9} parent=0 // pred_fallthru
    _

// kernel: _lambda_.10
$region0: #{_lambda_.10}
  #allocation0 [shape = 'u32[]', space=smem, size = 0x4, offset = 0x4, fixed_abs, tag = 'smem constant byte address 0x4 - core index']
  #allocation1 [shape = 'u32[144,128]{1,0:T(1,128)}', space=vmem, size = 0x12000, scoped, tag = 'internal scratch']
  %s0 = inlined_call_operand.vmem [shape: f32[1,128], index: 0, kind: input, shape index: {}, may-alias: {0,3,5,7}]
  %s1 = inlined_call_operand.vmem [shape: bf16[2,16,128], index: 1, kind: input, shape index: {}]
  %s2 = inlined_call_operand.vmem [shape: bf16[128,128], index: 2, kind: input, shape index: {}]
  %s3 = inlined_call_operand.vmem [shape: f32[1,128], index: 3, kind: input, shape index: {}, may-alias: {0,3,5,7}]
  %s4 = inlined_call_operand.vmem [shape: bf16[128,128], index: 4, kind: input, shape index: {}]
  %s5 = inlined_call_operand.vmem [shape: f32[1,128], index: 5, kind: input, shape index: {}, may-alias: {0,3,5,7}]
  %s6 = inlined_call_operand.vmem [shape: bf16[128,128], index: 6, kind: input, shape index: {}]
  %s7 = inlined_call_operand.vmem [shape: f32[1,128], index: 7, kind: input, shape index: {}, may-alias: {0,3,5,7}]
  %s8 = inlined_call_operand.vmem [shape: bf16[2,16,128], index: 8, kind: output, shape index: {}]
  %s9 = sld [smem:[#allocation0]]
  $region42: #{_lambda_.10} parent=0
    _
  %s11 = ssub.s32 1, %s9
  %s12 = scalar_select 0, %s11, %s9
  // Predicated region
  $region2: #{_lambda_.10} parent=0 // pred_check
    _
  $region3: #{_lambda_.10} parent=0 // pred_check_branch
    %14 = sbr.rel (0) target = $region5
  $region4: #{_lambda_.10} parent=0 // pred_region
    _
  $region5: #{_lambda_.10} parent=0 // pred_fallthru
    _
  // Predicated region
  $region6: #{_lambda_.10} parent=0 // pred_check
    _
  $region7: #{_lambda_.10} parent=0 // pred_check_branch
    %16 = sbr.rel (0) target = $region9
  $region8: #{_lambda_.10} parent=0 // pred_region
    _
  $region9: #{_lambda_.10} parent=0 // pred_fallthru
    _
  // Predicated region
  $region10: #{_lambda_.10} parent=0 // pred_check
    _
  $region11: #{_lambda_.10} parent=0 // pred_check_branch
    %18 = sbr.rel (0) target = $region13
  $region12: #{_lambda_.10} parent=0 // pred_region
    _
  $region13: #{_lambda_.10} parent=0 // pred_fallthru
    _
  // Predicated region
  $region14: #{_lambda_.10} parent=0 // pred_check
    _
  $region15: #{_lambda_.10} parent=0 // pred_check_branch
    %20 = sbr.rel (0) target = $region17
  $region16: #{_lambda_.10} parent=0 // pred_region
    _
  $region17: #{_lambda_.10} parent=0 // pred_fallthru
    _
  // Predicated region
  $region18: #{_lambda_.10} parent=0 // pred_check
    _
  $region19: #{_lambda_.10} parent=0 // pred_check_branch
    %22 = sbr.rel (0) target = $region21
  $region20: #{_lambda_.10} parent=0 // pred_region
    _
  $region21: #{_lambda_.10} parent=0 // pred_fallthru
    _
  // Predicated region
  $region22: #{_lambda_.10} parent=0 // pred_check
    _
  $region23: #{_lambda_.10} parent=0 // pred_check_branch
    %24 = sbr.rel (0) target = $region25
  $region24: #{_lambda_.10} parent=0 // pred_region
    _
  $region25: #{_lambda_.10} parent=0 // pred_fallthru
    _
  // Predicated region
  $region26: #{_lambda_.10} parent=0 // pred_check
    _
  $region27: #{_lambda_.10} parent=0 // pred_check_branch
    %26 = sbr.rel (0) target = $region29
  $region28: #{_lambda_.10} parent=0 // pred_region
    _
  $region29: #{_lambda_.10} parent=0 // pred_fallthru
    _
  // Predicated region
  $region30: #{_lambda_.10} parent=0 // pred_check
    _
  $region31: #{_lambda_.10} parent=0 // pred_check_branch
    %28 = sbr.rel (0) target = $region33
  $region32: #{_lambda_.10} parent=0 // pred_region
    _
  $region33: #{_lambda_.10} parent=0 // pred_fallthru
    _
  %v29 = vld [vmem:[%s1] sm:$0xf]
  %v30 = vld [vmem:[%s1 + $0x4] sm:$0xf]
  %v31 = vld [vmem:[%s1 + $0x8] sm:$0xf]
  %v32 = vld [vmem:[%s1 + $0xc] sm:$0xf]
  %v33 = vunpack.c.l.bf16 %v29
  %v34 = vunpack.c.l.bf16 %v30
  %v35 = vunpack.c.l.bf16 %v31
  %v36 = vunpack.c.l.bf16 %v32
  %v37 = vld [vmem:[%s2] sm:$0xf]
  %v38 = vld [vmem:[%s2 + $0x4] sm:$0xf]
  %v39 = vld [vmem:[%s2 + $0x8] sm:$0xf]
  %v40 = vld [vmem:[%s2 + $0xc] sm:$0xf]
  %v41 = vld [vmem:[%s2 + $0x10] sm:$0xf]
  %v42 = vld [vmem:[%s2 + $0x14] sm:$0xf]
  %v43 = vld [vmem:[%s2 + $0x18] sm:$0xf]
  %v44 = vld [vmem:[%s2 + $0x1c] sm:$0xf]
  %v45 = vld [vmem:[%s2 + $0x20] sm:$0xf]
  %v46 = vld [vmem:[%s2 + $0x24] sm:$0xf]
  %v47 = vld [vmem:[%s2 + $0x28] sm:$0xf]
  %v48 = vld [vmem:[%s2 + $0x2c] sm:$0xf]
  %v49 = vld [vmem:[%s2 + $0x30] sm:$0xf]
  %v50 = vld [vmem:[%s2 + $0x34] sm:$0xf]
  %v51 = vld [vmem:[%s2 + $0x38] sm:$0xf]
  %v52 = vld [vmem:[%s2 + $0x3c] sm:$0xf]
  %v53 = vunpack.c.l.bf16 %v37
  %v54 = vunpack.c.l.bf16 %v38
  %v55 = vunpack.c.l.bf16 %v39
  %v56 = vunpack.c.l.bf16 %v40
  %v57 = vunpack.c.l.bf16 %v41
  %v58 = vunpack.c.l.bf16 %v42
  %v59 = vunpack.c.l.bf16 %v43
  %v60 = vunpack.c.l.bf16 %v44
  %v61 = vunpack.c.l.bf16 %v45
  %v62 = vunpack.c.l.bf16 %v46
  %v63 = vunpack.c.l.bf16 %v47
  %v64 = vunpack.c.l.bf16 %v48
  %v65 = vunpack.c.l.bf16 %v49
  %v66 = vunpack.c.l.bf16 %v50
  %v67 = vunpack.c.l.bf16 %v51
  %v68 = vunpack.c.l.bf16 %v52
  %v69 = vld [vmem:[%s4] sm:$0xf]
  %v70 = vld [vmem:[%s4 + $0x4] sm:$0xf]
  %v71 = vld [vmem:[%s4 + $0x8] sm:$0xf]
  %v72 = vld [vmem:[%s4 + $0xc] sm:$0xf]
  %v73 = vld [vmem:[%s4 + $0x10] sm:$0xf]
  %v74 = vld [vmem:[%s4 + $0x14] sm:$0xf]
  %v75 = vld [vmem:[%s4 + $0x18] sm:$0xf]
  %v76 = vld [vmem:[%s4 + $0x1c] sm:$0xf]
  %v77 = vld [vmem:[%s4 + $0x20] sm:$0xf]
  %v78 = vld [vmem:[%s4 + $0x24] sm:$0xf]
  %v79 = vld [vmem:[%s4 + $0x28] sm:$0xf]
  %v80 = vld [vmem:[%s4 + $0x2c] sm:$0xf]
  %v81 = vld [vmem:[%s4 + $0x30] sm:$0xf]
  %v82 = vld [vmem:[%s4 + $0x34] sm:$0xf]
  %v83 = vld [vmem:[%s4 + $0x38] sm:$0xf]
  %v84 = vld [vmem:[%s4 + $0x3c] sm:$0xf]
  %v85 = vunpack.c.l.bf16 %v69
  %v86 = vunpack.c.l.bf16 %v70
  %v87 = vunpack.c.l.bf16 %v71
  %v88 = vunpack.c.l.bf16 %v72
  %v89 = vunpack.c.l.bf16 %v73
  %v90 = vunpack.c.l.bf16 %v74
  %v91 = vunpack.c.l.bf16 %v75
  %v92 = vunpack.c.l.bf16 %v76
  %v93 = vunpack.c.l.bf16 %v77
  %v94 = vunpack.c.l.bf16 %v78
  %v95 = vunpack.c.l.bf16 %v79
  %v96 = vunpack.c.l.bf16 %v80
  %v97 = vunpack.c.l.bf16 %v81
  %v98 = vunpack.c.l.bf16 %v82
  %v99 = vunpack.c.l.bf16 %v83
  %v100 = vunpack.c.l.bf16 %v84
  %v101 = vld [vmem:[%s6] sm:$0xf]
  %v102 = vld [vmem:[%s6 + $0x4] sm:$0xf]
  %v103 = vld [vmem:[%s6 + $0x8] sm:$0xf]
  %v104 = vld [vmem:[%s6 + $0xc] sm:$0xf]
  %v105 = vld [vmem:[%s6 + $0x10] sm:$0xf]
  %v106 = vld [vmem:[%s6 + $0x14] sm:$0xf]
  %v107 = vld [vmem:[%s6 + $0x18] sm:$0xf]
  %v108 = vld [vmem:[%s6 + $0x1c] sm:$0xf]
  %v109 = vld [vmem:[%s6 + $0x20] sm:$0xf]
  %v110 = vld [vmem:[%s6 + $0x24] sm:$0xf]
  %v111 = vld [vmem:[%s6 + $0x28] sm:$0xf]
  %v112 = vld [vmem:[%s6 + $0x2c] sm:$0xf]
  %v113 = vld [vmem:[%s6 + $0x30] sm:$0xf]
  %v114 = vld [vmem:[%s6 + $0x34] sm:$0xf]
  %v115 = vld [vmem:[%s6 + $0x38] sm:$0xf]
  %v116 = vld [vmem:[%s6 + $0x3c] sm:$0xf]
  %v117 = vunpack.c.l.bf16 %v101
  %v118 = vunpack.c.l.bf16 %v102
  %v119 = vunpack.c.l.bf16 %v103
  %v120 = vunpack.c.l.bf16 %v104
  %v121 = vunpack.c.l.bf16 %v105
  %v122 = vunpack.c.l.bf16 %v106
  %v123 = vunpack.c.l.bf16 %v107
  %v124 = vunpack.c.l.bf16 %v108
  %v125 = vunpack.c.l.bf16 %v109
  %v126 = vunpack.c.l.bf16 %v110
  %v127 = vunpack.c.l.bf16 %v111
  %v128 = vunpack.c.l.bf16 %v112
  %v129 = vunpack.c.l.bf16 %v113
  %v130 = vunpack.c.l.bf16 %v114
  %v131 = vunpack.c.l.bf16 %v115
  %v132 = vunpack.c.l.bf16 %v116
  %v133 = vld [vmem:[%s3] sm:$0x1]
  %v135 = vlaneseq
  %v136 = vshrl.u32 %v135, 7
  %v137 = vsub.s32 0, %v136
  %v138 = vrot.slane %v133, %v137
  %140 = vmatprep.subr.mxu0 0.0
  %141 = vmatpush1.msra.mxu0 %v53
  %142 = vmatprep.subr.mxu0 0.0
  %143 = vmatpush1.msra.mxu0 %v54
  %144 = vmatprep.subr.mxu0 0.0
  %145 = vmatpush1.msra.mxu0 %v55
  %146 = vmatprep.subr.mxu0 0.0
  %147 = vmatpush1.msra.mxu0 %v56
  %148 = vmatprep.subr.mxu0 0.0
  %149 = vmatpush1.msra.mxu0 %v57
  %150 = vmatprep.subr.mxu0 0.0
  %151 = vmatpush1.msra.mxu0 %v58
  %152 = vmatprep.subr.mxu0 0.0
  %153 = vmatpush1.msra.mxu0 %v59
  %154 = vmatprep.subr.mxu0 0.0
  %155 = vmatpush1.msra.mxu0 %v60
  %156 = vmatprep.subr.mxu0 0.0
  %157 = vmatpush1.msra.mxu0 %v61
  %158 = vmatprep.subr.mxu0 0.0
  %159 = vmatpush1.msra.mxu0 %v62
  %160 = vmatprep.subr.mxu0 0.0
  %161 = vmatpush1.msra.mxu0 %v63
  %162 = vmatprep.subr.mxu0 0.0
  %163 = vmatpush1.msra.mxu0 %v64
  %164 = vmatprep.subr.mxu0 0.0
  %165 = vmatpush1.msra.mxu0 %v65
  %166 = vmatprep.subr.mxu0 0.0
  %167 = vmatpush1.msra.mxu0 %v66
  %168 = vmatprep.subr.mxu0 0.0
  %169 = vmatpush1.msra.mxu0 %v67
  %170 = vmatprep.subr.mxu0 0.0
  %171 = vmatpush1.msra.mxu0 %v68
  %172 = vmatprep.subr.mxu0 0.0
  %173 = vmatpush1.msra.mxu0 0.0
  %174 = vmatprep.subr.mxu0 0.0
  %175 = vmatpush1.msra.mxu0 0.0
  %176 = vmatprep.subr.mxu0 0.0
  %177 = vmatpush1.msra.mxu0 0.0
  %178 = vmatprep.subr.mxu0 0.0
  %179 = vmatpush1.msra.mxu0 0.0
  %180 = vmatprep.subr.mxu0 0.0
  %181 = vmatpush1.msra.mxu0 0.0
  %182 = vmatprep.subr.mxu0 0.0
  %183 = vmatpush1.msra.mxu0 0.0
  %184 = vmatprep.subr.mxu0 0.0
  %185 = vmatpush1.msra.mxu0 0.0
  %186 = vmatprep.subr.mxu0 0.0
  %187 = vmatpush1.msra.mxu0 0.0
  %188 = vmatprep.subr.mxu0 0.0
  %189 = vmatpush1.msra.mxu0 0.0
  %190 = vmatprep.subr.mxu0 0.0
  %191 = vmatpush1.msra.mxu0 0.0
  %192 = vmatprep.subr.mxu0 0.0
  %193 = vmatpush1.msra.mxu0 0.0
  %194 = vmatprep.subr.mxu0 0.0
  %195 = vmatpush1.msra.mxu0 0.0
  %196 = vmatprep.subr.mxu0 0.0
  %197 = vmatpush1.msra.mxu0 0.0
  %198 = vmatprep.subr.mxu0 0.0
  %199 = vmatpush1.msra.mxu0 0.0
  %200 = vmatprep.subr.mxu0 0.0
  %201 = vmatpush1.msra.mxu0 0.0
  %202 = vmatprep.subr.mxu0 0.0
  %203 = vmatpush1.msra.mxu0 0.0
  %204 = vmatprep.mubr.f32.mxu0 0.0
  %205 = vmatmul.mubr.f32.gmra.mrb[0].mxu0 %v33
  %v206 = vpop.f32.mrb[0].mxu0
  %v207 = vadd.f32 %v138, %v206
  %v208 = vpop.f32.mrb[0].mxu0
  %209 = vmatprep.mubr.f32.mxu0 0.0
  %210 = vmatmul.mubr.f32.gmra.mrb[0].mxu0 %v34
  %v211 = vpop.f32.mrb[0].mxu0
  %v212 = vadd.f32 %v138, %v211
  %v213 = vpop.f32.mrb[0].mxu0
  %214 = vmatprep.mubr.f32.mxu0 0.0
  %215 = vmatmul.mubr.f32.gmra.mrb[0].mxu0 %v35
  %v216 = vpop.f32.mrb[0].mxu0
  %v217 = vadd.f32 %v138, %v216
  %v218 = vpop.f32.mrb[0].mxu0
  %219 = vmatprep.mubr.f32.mxu0 0.0
  %220 = vmatmul.mubr.f32.gmra.mrb[0].mxu0 %v36
  %v221 = vpop.f32.mrb[0].mxu0
  %v222 = vadd.f32 %v138, %v221
  %v223 = vpop.f32.mrb[0].mxu0
  %224 = vdwg.mxu0
  %v225 = vld [vmem:[%s5] sm:$0x1]
  %v227 = vlaneseq
  %v228 = vshrl.u32 %v227, 7
  %v229 = vsub.s32 0, %v228
  %v230 = vrot.slane %v225, %v229
  %232 = vmatprep.subr.mxu0 0.0
  %233 = vmatpush1.msra.mxu0 %v85
  %234 = vmatprep.subr.mxu0 0.0
  %235 = vmatpush1.msra.mxu0 %v86
  %236 = vmatprep.subr.mxu0 0.0
  %237 = vmatpush1.msra.mxu0 %v87
  %238 = vmatprep.subr.mxu0 0.0
  %239 = vmatpush1.msra.mxu0 %v88
  %240 = vmatprep.subr.mxu0 0.0
  %241 = vmatpush1.msra.mxu0 %v89
  %242 = vmatprep.subr.mxu0 0.0
  %243 = vmatpush1.msra.mxu0 %v90
  %244 = vmatprep.subr.mxu0 0.0
  %245 = vmatpush1.msra.mxu0 %v91
  %246 = vmatprep.subr.mxu0 0.0
  %247 = vmatpush1.msra.mxu0 %v92
  %248 = vmatprep.subr.mxu0 0.0
  %249 = vmatpush1.msra.mxu0 %v93
  %250 = vmatprep.subr.mxu0 0.0
  %251 = vmatpush1.msra.mxu0 %v94
  %252 = vmatprep.subr.mxu0 0.0
  %253 = vmatpush1.msra.mxu0 %v95
  %254 = vmatprep.subr.mxu0 0.0
  %255 = vmatpush1.msra.mxu0 %v96
  %256 = vmatprep.subr.mxu0 0.0
  %257 = vmatpush1.msra.mxu0 %v97
  %258 = vmatprep.subr.mxu0 0.0
  %259 = vmatpush1.msra.mxu0 %v98
  %260 = vmatprep.subr.mxu0 0.0
  %261 = vmatpush1.msra.mxu0 %v99
  %262 = vmatprep.subr.mxu0 0.0
  %263 = vmatpush1.msra.mxu0 %v100
  %264 = vmatprep.subr.mxu0 0.0
  %265 = vmatpush1.msra.mxu0 0.0
  %266 = vmatprep.subr.mxu0 0.0
  %267 = vmatpush1.msra.mxu0 0.0
  %268 = vmatprep.subr.mxu0 0.0
  %269 = vmatpush1.msra.mxu0 0.0
  %270 = vmatprep.subr.mxu0 0.0
  %271 = vmatpush1.msra.mxu0 0.0
  %272 = vmatprep.subr.mxu0 0.0
  %273 = vmatpush1.msra.mxu0 0.0
  %274 = vmatprep.subr.mxu0 0.0
  %275 = vmatpush1.msra.mxu0 0.0
  %276 = vmatprep.subr.mxu0 0.0
  %277 = vmatpush1.msra.mxu0 0.0
  %278 = vmatprep.subr.mxu0 0.0
  %279 = vmatpush1.msra.mxu0 0.0
  %280 = vmatprep.subr.mxu0 0.0
  %281 = vmatpush1.msra.mxu0 0.0
  %282 = vmatprep.subr.mxu0 0.0
  %283 = vmatpush1.msra.mxu0 0.0
  %284 = vmatprep.subr.mxu0 0.0
  %285 = vmatpush1.msra.mxu0 0.0
  %286 = vmatprep.subr.mxu0 0.0
  %287 = vmatpush1.msra.mxu0 0.0
  %288 = vmatprep.subr.mxu0 0.0
  %289 = vmatpush1.msra.mxu0 0.0
  %290 = vmatprep.subr.mxu0 0.0
  %291 = vmatpush1.msra.mxu0 0.0
  %292 = vmatprep.subr.mxu0 0.0
  %293 = vmatpush1.msra.mxu0 0.0
  %294 = vmatprep.subr.mxu0 0.0
  %295 = vmatpush1.msra.mxu0 0.0
  %296 = vmatprep.mubr.f32.mxu0 0.0
  %297 = vmatmul.mubr.f32.gmra.mrb[0].mxu0 %v33
  %v298 = vpop.f32.mrb[0].mxu0
  %v299 = vadd.f32 %v230, %v298
  %v300 = vpop.f32.mrb[0].mxu0
  %301 = vmatprep.mubr.f32.mxu0 0.0
  %302 = vmatmul.mubr.f32.gmra.mrb[0].mxu0 %v34
  %v303 = vpop.f32.mrb[0].mxu0
  %v304 = vadd.f32 %v230, %v303
  %v305 = vpop.f32.mrb[0].mxu0
  %306 = vmatprep.mubr.f32.mxu0 0.0
  %307 = vmatmul.mubr.f32.gmra.mrb[0].mxu0 %v35
  %v308 = vpop.f32.mrb[0].mxu0
  %v309 = vadd.f32 %v230, %v308
  %v310 = vpop.f32.mrb[0].mxu0
  %311 = vmatprep.mubr.f32.mxu0 0.0
  %312 = vmatmul.mubr.f32.gmra.mrb[0].mxu0 %v36
  %v313 = vpop.f32.mrb[0].mxu0
  %v314 = vadd.f32 %v230, %v313
  %v315 = vpop.f32.mrb[0].mxu0
  %316 = vdwg.mxu0
  %v317 = vld [vmem:[%s7] sm:$0x1]
  %v319 = vlaneseq
  %v320 = vshrl.u32 %v319, 7
  %v321 = vsub.s32 0, %v320
  %v322 = vrot.slane %v317, %v321
  %324 = vmatprep.subr.mxu0 0.0
  %325 = vmatpush1.msra.mxu0 %v117
  %326 = vmatprep.subr.mxu0 0.0
  %327 = vmatpush1.msra.mxu0 %v118
  %328 = vmatprep.subr.mxu0 0.0
  %329 = vmatpush1.msra.mxu0 %v119
  %330 = vmatprep.subr.mxu0 0.0
  %331 = vmatpush1.msra.mxu0 %v120
  %332 = vmatprep.subr.mxu0 0.0
  %333 = vmatpush1.msra.mxu0 %v121
  %334 = vmatprep.subr.mxu0 0.0
  %335 = vmatpush1.msra.mxu0 %v122
  %336 = vmatprep.subr.mxu0 0.0
  %337 = vmatpush1.msra.mxu0 %v123
  %338 = vmatprep.subr.mxu0 0.0
  %339 = vmatpush1.msra.mxu0 %v124
  %340 = vmatprep.subr.mxu0 0.0
  %341 = vmatpush1.msra.mxu0 %v125
  %342 = vmatprep.subr.mxu0 0.0
  %343 = vmatpush1.msra.mxu0 %v126
  %344 = vmatprep.subr.mxu0 0.0
  %345 = vmatpush1.msra.mxu0 %v127
  %346 = vmatprep.subr.mxu0 0.0
  %347 = vmatpush1.msra.mxu0 %v128
  %348 = vmatprep.subr.mxu0 0.0
  %349 = vmatpush1.msra.mxu0 %v129
  %350 = vmatprep.subr.mxu0 0.0
  %351 = vmatpush1.msra.mxu0 %v130
  %352 = vmatprep.subr.mxu0 0.0
  %353 = vmatpush1.msra.mxu0 %v131
  %354 = vmatprep.subr.mxu0 0.0
  %355 = vmatpush1.msra.mxu0 %v132
  %356 = vmatprep.subr.mxu0 0.0
  %357 = vmatpush1.msra.mxu0 0.0
  %358 = vmatprep.subr.mxu0 0.0
  %359 = vmatpush1.msra.mxu0 0.0
  %360 = vmatprep.subr.mxu0 0.0
  %361 = vmatpush1.msra.mxu0 0.0
  %362 = vmatprep.subr.mxu0 0.0
  %363 = vmatpush1.msra.mxu0 0.0
  %364 = vmatprep.subr.mxu0 0.0
  %365 = vmatpush1.msra.mxu0 0.0
  %366 = vmatprep.subr.mxu0 0.0
  %367 = vmatpush1.msra.mxu0 0.0
  %368 = vmatprep.subr.mxu0 0.0
  %369 = vmatpush1.msra.mxu0 0.0
  %370 = vmatprep.subr.mxu0 0.0
  %371 = vmatpush1.msra.mxu0 0.0
  %372 = vmatprep.subr.mxu0 0.0
  %373 = vmatpush1.msra.mxu0 0.0
  %374 = vmatprep.subr.mxu0 0.0
  %375 = vmatpush1.msra.mxu0 0.0
  %376 = vmatprep.subr.mxu0 0.0
  %377 = vmatpush1.msra.mxu0 0.0
  %378 = vmatprep.subr.mxu0 0.0
  %379 = vmatpush1.msra.mxu0 0.0
  %380 = vmatprep.subr.mxu0 0.0
  %381 = vmatpush1.msra.mxu0 0.0
  %382 = vmatprep.subr.mxu0 0.0
  %383 = vmatpush1.msra.mxu0 0.0
  %384 = vmatprep.subr.mxu0 0.0
  %385 = vmatpush1.msra.mxu0 0.0
  %386 = vmatprep.subr.mxu0 0.0
  %387 = vmatpush1.msra.mxu0 0.0
  %388 = vmatprep.mubr.f32.mxu0 0.0
  %389 = vmatmul.mubr.f32.gmra.mrb[0].mxu0 %v33
  %v390 = vpop.f32.mrb[0].mxu0
  %v391 = vadd.f32 %v322, %v390
  %v392 = vpop.f32.mrb[0].mxu0
  %393 = vmatprep.mubr.f32.mxu0 0.0
  %394 = vmatmul.mubr.f32.gmra.mrb[0].mxu0 %v34
  %v395 = vpop.f32.mrb[0].mxu0
  %v396 = vadd.f32 %v322, %v395
  %v397 = vpop.f32.mrb[0].mxu0
  %398 = vmatprep.mubr.f32.mxu0 0.0
  %399 = vmatmul.mubr.f32.gmra.mrb[0].mxu0 %v35
  %v400 = vpop.f32.mrb[0].mxu0
  %v401 = vadd.f32 %v322, %v400
  %v402 = vpop.f32.mrb[0].mxu0
  %403 = vmatprep.mubr.f32.mxu0 0.0
  %404 = vmatmul.mubr.f32.gmra.mrb[0].mxu0 %v36
  %v405 = vpop.f32.mrb[0].mxu0
  %v406 = vadd.f32 %v322, %v405
  %v407 = vpop.f32.mrb[0].mxu0
  %408 = vdwg.mxu0
  %409 = vmatprep.subr.mxu0 0.0
  %410 = vmatpush1.xpose.msra.mxu0 %v299
  %411 = vmatprep.subr.mxu0 0.0
  %412 = vmatpush1.xpose.msra.mxu0 %v304
  %413 = vmatprep.subr.mxu0 0.0
  %414 = vmatpush1.xpose.msra.mxu0 0.0
  %415 = vmatprep.subr.mxu0 0.0
  %416 = vmatpush1.xpose.msra.mxu0 0.0
  %417 = vmatprep.subr.mxu0 0.0
  %418 = vmatpush1.xpose.msra.mxu0 0.0
  %419 = vmatprep.subr.mxu0 0.0
  %420 = vmatpush1.xpose.msra.mxu0 0.0
  %421 = vmatprep.subr.mxu0 0.0
  %422 = vmatpush1.xpose.msra.mxu0 0.0
  %423 = vmatprep.subr.mxu0 0.0
  %424 = vmatpush1.xpose.msra.mxu0 0.0
  %425 = vmatprep.subr.mxu0 0.0
  %426 = vmatpush1.xpose.msra.mxu0 0.0
  %427 = vmatprep.subr.mxu0 0.0
  %428 = vmatpush1.xpose.msra.mxu0 0.0
  %429 = vmatprep.subr.mxu0 0.0
  %430 = vmatpush1.xpose.msra.mxu0 0.0
  %431 = vmatprep.subr.mxu0 0.0
  %432 = vmatpush1.xpose.msra.mxu0 0.0
  %433 = vmatprep.subr.mxu0 0.0
  %434 = vmatpush1.xpose.msra.mxu0 0.0
  %435 = vmatprep.subr.mxu0 0.0
  %436 = vmatpush1.xpose.msra.mxu0 0.0
  %437 = vmatprep.subr.mxu0 0.0
  %438 = vmatpush1.xpose.msra.mxu0 0.0
  %439 = vmatprep.subr.mxu0 0.0
  %440 = vmatpush1.xpose.msra.mxu0 0.0
  %441 = vmatprep.subr.mxu0 0.0
  %442 = vmatpush1.xpose.msra.mxu0 0.0
  %443 = vmatprep.subr.mxu0 0.0
  %444 = vmatpush1.xpose.msra.mxu0 0.0
  %445 = vmatprep.subr.mxu0 0.0
  %446 = vmatpush1.xpose.msra.mxu0 0.0
  %447 = vmatprep.subr.mxu0 0.0
  %448 = vmatpush1.xpose.msra.mxu0 0.0
  %449 = vmatprep.subr.mxu0 0.0
  %450 = vmatpush1.xpose.msra.mxu0 0.0
  %451 = vmatprep.subr.mxu0 0.0
  %452 = vmatpush1.xpose.msra.mxu0 0.0
  %453 = vmatprep.subr.mxu0 0.0
  %454 = vmatpush1.xpose.msra.mxu0 0.0
  %455 = vmatprep.subr.mxu0 0.0
  %456 = vmatpush1.xpose.msra.mxu0 0.0
  %457 = vmatprep.subr.mxu0 0.0
  %458 = vmatpush1.xpose.msra.mxu0 0.0
  %459 = vmatprep.subr.mxu0 0.0
  %460 = vmatpush1.xpose.msra.mxu0 0.0
  %461 = vmatprep.subr.mxu0 0.0
  %462 = vmatpush1.xpose.msra.mxu0 0.0
  %463 = vmatprep.subr.mxu0 0.0
  %464 = vmatpush1.xpose.msra.mxu0 0.0
  %465 = vmatprep.subr.mxu0 0.0
  %466 = vmatpush1.xpose.msra.mxu0 0.0
  %467 = vmatprep.subr.mxu0 0.0
  %468 = vmatpush1.xpose.msra.mxu0 0.0
  %469 = vmatprep.subr.mxu0 0.0
  %470 = vmatpush1.xpose.msra.mxu0 0.0
  %471 = vmatprep.subr.mxu0 0.0
  %472 = vmatpush1.xpose.msra.mxu0 0.0
  %473 = vmatprep.mubr.f32.mxu0 0.0
  %474 = vmatmul.mubr.f32.gmra.mrb[0].mxu0 %v207
  %v475 = vpop.f32.mrb[0].mxu0
  %v476 = vadd.f32 0.0, %v475
  %v477 = vpop.f32.mrb[0].mxu0
  %478 = vmatprep.mubr.f32.mxu0 0.0
  %479 = vmatmul.mubr.f32.gmra.mrb[0].mxu0 %v212
  %v480 = vpop.f32.mrb[0].mxu0
  %v481 = vadd.f32 0.0, %v480
  %v482 = vpop.f32.mrb[0].mxu0
  %483 = vdwg.mxu0
  %484 = vmatprep.subr.mxu0 0.0
  %485 = vmatpush1.xpose.msra.mxu0 %v309
  %486 = vmatprep.subr.mxu0 0.0
  %487 = vmatpush1.xpose.msra.mxu0 %v314
  %488 = vmatprep.subr.mxu0 0.0
  %489 = vmatpush1.xpose.msra.mxu0 0.0
  %490 = vmatprep.subr.mxu0 0.0
  %491 = vmatpush1.xpose.msra.mxu0 0.0
  %492 = vmatprep.subr.mxu0 0.0
  %493 = vmatpush1.xpose.msra.mxu0 0.0
  %494 = vmatprep.subr.mxu0 0.0
  %495 = vmatpush1.xpose.msra.mxu0 0.0
  %496 = vmatprep.subr.mxu0 0.0
  %497 = vmatpush1.xpose.msra.mxu0 0.0
  %498 = vmatprep.subr.mxu0 0.0
  %499 = vmatpush1.xpose.msra.mxu0 0.0
  %500 = vmatprep.subr.mxu0 0.0
  %501 = vmatpush1.xpose.msra.mxu0 0.0
  %502 = vmatprep.subr.mxu0 0.0
  %503 = vmatpush1.xpose.msra.mxu0 0.0
  %504 = vmatprep.subr.mxu0 0.0
  %505 = vmatpush1.xpose.msra.mxu0 0.0
  %506 = vmatprep.subr.mxu0 0.0
  %507 = vmatpush1.xpose.msra.mxu0 0.0
  %508 = vmatprep.subr.mxu0 0.0
  %509 = vmatpush1.xpose.msra.mxu0 0.0
  %510 = vmatprep.subr.mxu0 0.0
  %511 = vmatpush1.xpose.msra.mxu0 0.0
  %512 = vmatprep.subr.mxu0 0.0
  %513 = vmatpush1.xpose.msra.mxu0 0.0
  %514 = vmatprep.subr.mxu0 0.0
  %515 = vmatpush1.xpose.msra.mxu0 0.0
  %516 = vmatprep.subr.mxu0 0.0
  %517 = vmatpush1.xpose.msra.mxu0 0.0
  %518 = vmatprep.subr.mxu0 0.0
  %519 = vmatpush1.xpose.msra.mxu0 0.0
  %520 = vmatprep.subr.mxu0 0.0
  %521 = vmatpush1.xpose.msra.mxu0 0.0
  %522 = vmatprep.subr.mxu0 0.0
  %523 = vmatpush1.xpose.msra.mxu0 0.0
  %524 = vmatprep.subr.mxu0 0.0
  %525 = vmatpush1.xpose.msra.mxu0 0.0
  %526 = vmatprep.subr.mxu0 0.0
  %527 = vmatpush1.xpose.msra.mxu0 0.0
  %528 = vmatprep.subr.mxu0 0.0
  %529 = vmatpush1.xpose.msra.mxu0 0.0
  %530 = vmatprep.subr.mxu0 0.0
  %531 = vmatpush1.xpose.msra.mxu0 0.0
  %532 = vmatprep.subr.mxu0 0.0
  %533 = vmatpush1.xpose.msra.mxu0 0.0
  %534 = vmatprep.subr.mxu0 0.0
  %535 = vmatpush1.xpose.msra.mxu0 0.0
  %536 = vmatprep.subr.mxu0 0.0
  %537 = vmatpush1.xpose.msra.mxu0 0.0
  %538 = vmatprep.subr.mxu0 0.0
  %539 = vmatpush1.xpose.msra.mxu0 0.0
  %540 = vmatprep.subr.mxu0 0.0
  %541 = vmatpush1.xpose.msra.mxu0 0.0
  %542 = vmatprep.subr.mxu0 0.0
  %543 = vmatpush1.xpose.msra.mxu0 0.0
  %544 = vmatprep.subr.mxu0 0.0
  %545 = vmatpush1.xpose.msra.mxu0 0.0
  %546 = vmatprep.subr.mxu0 0.0
  %547 = vmatpush1.xpose.msra.mxu0 0.0
  %548 = vmatprep.mubr.f32.mxu0 0.0
  %549 = vmatmul.mubr.f32.gmra.mrb[0].mxu0 %v217
  %v550 = vpop.f32.mrb[0].mxu0
  %v551 = vadd.f32 0.0, %v550
  %v552 = vpop.f32.mrb[0].mxu0
  %553 = vmatprep.mubr.f32.mxu0 0.0
  %554 = vmatmul.mubr.f32.gmra.mrb[0].mxu0 %v222
  %v555 = vpop.f32.mrb[0].mxu0
  %v556 = vadd.f32 0.0, %v555
  %v557 = vpop.f32.mrb[0].mxu0
  %558 = vdwg.mxu0
  %vm559 = vcmask 130048
  %v560 = vsel %vm559, %v476, -inf
  %561 = vmax.xlane.f32.xlu0 %v560
  %v562 = vpop.xlane.xlu0 %561
  %v563 = vsel %vm559, %v481, -inf
  %564 = vmax.xlane.f32.xlu0 %v563
  %v565 = vpop.xlane.xlu0 %564
  %v566 = vsel %vm559, %v551, -inf
  %567 = vmax.xlane.f32.xlu0 %v566
  %v568 = vpop.xlane.xlu0 %567
  %v569 = vsel %vm559, %v556, -inf
  %570 = vmax.xlane.f32.xlu0 %v569
  %v571 = vpop.xlane.xlu0 %570
  %v572 = vsub.f32 %v476, %v562
  %v573 = vsub.f32 %v481, %v565
  %v574 = vsub.f32 %v551, %v568
  %v575 = vsub.f32 %v556, %v571
  %v576 = vmul.f32 %v572, 1.442695
  %v577 = vpow.pop %v576
  %v578 = vmul.f32 %v573, 1.442695
  %v579 = vpow.pop %v578
  %v580 = vmul.f32 %v574, 1.442695
  %v581 = vpow.pop %v580
  %v582 = vmul.f32 %v575, 1.442695
  %v583 = vpow.pop %v582
  %v584 = vsel %vm559, %v577, 0.0
  %585 = vadd.xlane.f32.xlu0 %v584
  %v586 = vpop.xlane.xlu0 %585
  %v587 = vsel %vm559, %v579, 0.0
  %588 = vadd.xlane.f32.xlu0 %v587
  %v589 = vpop.xlane.xlu0 %588
  %v590 = vsel %vm559, %v581, 0.0
  %591 = vadd.xlane.f32.xlu0 %v590
  %v592 = vpop.xlane.xlu0 %591
  %v593 = vsel %vm559, %v583, 0.0
  %594 = vadd.xlane.f32.xlu0 %v593
  %v595 = vpop.xlane.xlu0 %594
  %v596 = vrcp.pop %v586
  %v597 = vmul.f32 %v577, %v596
  %v598 = vrcp.pop %v589
  %v599 = vmul.f32 %v579, %v598
  %v600 = vrcp.pop %v592
  %v601 = vmul.f32 %v581, %v600
  %v602 = vrcp.pop %v595
  %v603 = vmul.f32 %v583, %v602
  %v605 = vsel %vm559, %v597, 0
  %v608 = vsel %vm559, %v599, 0
  %610 = vmatprep.subr.mxu0 0.0
  %611 = vmatpush1.msra.mxu0 %v391
  %612 = vmatprep.subr.mxu0 0.0
  %613 = vmatpush1.msra.mxu0 %v396
  %614 = vmatprep.subr.mxu0 0.0
  %615 = vmatpush1.msra.mxu0 0.0
  %616 = vmatprep.subr.mxu0 0.0
  %617 = vmatpush1.msra.mxu0 0.0
  %618 = vmatprep.subr.mxu0 0.0
  %619 = vmatpush1.msra.mxu0 0.0
  %620 = vmatprep.subr.mxu0 0.0
  %621 = vmatpush1.msra.mxu0 0.0
  %622 = vmatprep.subr.mxu0 0.0
  %623 = vmatpush1.msra.mxu0 0.0
  %624 = vmatprep.subr.mxu0 0.0
  %625 = vmatpush1.msra.mxu0 0.0
  %626 = vmatprep.subr.mxu0 0.0
  %627 = vmatpush1.msra.mxu0 0.0
  %628 = vmatprep.subr.mxu0 0.0
  %629 = vmatpush1.msra.mxu0 0.0
  %630 = vmatprep.subr.mxu0 0.0
  %631 = vmatpush1.msra.mxu0 0.0
  %632 = vmatprep.subr.mxu0 0.0
  %633 = vmatpush1.msra.mxu0 0.0
  %634 = vmatprep.subr.mxu0 0.0
  %635 = vmatpush1.msra.mxu0 0.0
  %636 = vmatprep.subr.mxu0 0.0
  %637 = vmatpush1.msra.mxu0 0.0
  %638 = vmatprep.subr.mxu0 0.0
  %639 = vmatpush1.msra.mxu0 0.0
  %640 = vmatprep.subr.mxu0 0.0
  %641 = vmatpush1.msra.mxu0 0.0
  %642 = vmatprep.subr.mxu0 0.0
  %643 = vmatpush1.msra.mxu0 0.0
  %644 = vmatprep.subr.mxu0 0.0
  %645 = vmatpush1.msra.mxu0 0.0
  %646 = vmatprep.subr.mxu0 0.0
  %647 = vmatpush1.msra.mxu0 0.0
  %648 = vmatprep.subr.mxu0 0.0
  %649 = vmatpush1.msra.mxu0 0.0
  %650 = vmatprep.subr.mxu0 0.0
  %651 = vmatpush1.msra.mxu0 0.0
  %652 = vmatprep.subr.mxu0 0.0
  %653 = vmatpush1.msra.mxu0 0.0
  %654 = vmatprep.subr.mxu0 0.0
  %655 = vmatpush1.msra.mxu0 0.0
  %656 = vmatprep.subr.mxu0 0.0
  %657 = vmatpush1.msra.mxu0 0.0
  %658 = vmatprep.subr.mxu0 0.0
  %659 = vmatpush1.msra.mxu0 0.0
  %660 = vmatprep.subr.mxu0 0.0
  %661 = vmatpush1.msra.mxu0 0.0
  %662 = vmatprep.subr.mxu0 0.0
  %663 = vmatpush1.msra.mxu0 0.0
  %664 = vmatprep.subr.mxu0 0.0
  %665 = vmatpush1.msra.mxu0 0.0
  %666 = vmatprep.subr.mxu0 0.0
  %667 = vmatpush1.msra.mxu0 0.0
  %668 = vmatprep.subr.mxu0 0.0
  %669 = vmatpush1.msra.mxu0 0.0
  %670 = vmatprep.subr.mxu0 0.0
  %671 = vmatpush1.msra.mxu0 0.0
  %672 = vmatprep.subr.mxu0 0.0
  %673 = vmatpush1.msra.mxu0 0.0
  %674 = vmatprep.mubr.f32.mxu0 0.0
  %675 = vmatmul.mubr.f32.gmra.mrb[0].mxu0 %v605
  %v676 = vpop.f32.mrb[0].mxu0
  %v677 = vadd.f32 0.0, %v676
  %v678 = vpop.f32.mrb[0].mxu0
  %679 = vmatprep.mubr.f32.mxu0 0.0
  %680 = vmatmul.mubr.f32.gmra.mrb[0].mxu0 %v608
  %v681 = vpop.f32.mrb[0].mxu0
  %v682 = vadd.f32 0.0, %v681
  %v683 = vpop.f32.mrb[0].mxu0
  %684 = vdwg.mxu0
  %v686 = vsel %vm559, %v601, 0
  %v689 = vsel %vm559, %v603, 0
  %691 = vmatprep.subr.mxu0 0.0
  %692 = vmatpush1.msra.mxu0 %v401
  %693 = vmatprep.subr.mxu0 0.0
  %694 = vmatpush1.msra.mxu0 %v406
  %695 = vmatprep.subr.mxu0 0.0
  %696 = vmatpush1.msra.mxu0 0.0
  %697 = vmatprep.subr.mxu0 0.0
  %698 = vmatpush1.msra.mxu0 0.0
  %699 = vmatprep.subr.mxu0 0.0
  %700 = vmatpush1.msra.mxu0 0.0
  %701 = vmatprep.subr.mxu0 0.0
  %702 = vmatpush1.msra.mxu0 0.0
  %703 = vmatprep.subr.mxu0 0.0
  %704 = vmatpush1.msra.mxu0 0.0
  %705 = vmatprep.subr.mxu0 0.0
  %706 = vmatpush1.msra.mxu0 0.0
  %707 = vmatprep.subr.mxu0 0.0
  %708 = vmatpush1.msra.mxu0 0.0
  %709 = vmatprep.subr.mxu0 0.0
  %710 = vmatpush1.msra.mxu0 0.0
  %711 = vmatprep.subr.mxu0 0.0
  %712 = vmatpush1.msra.mxu0 0.0
  %713 = vmatprep.subr.mxu0 0.0
  %714 = vmatpush1.msra.mxu0 0.0
  %715 = vmatprep.subr.mxu0 0.0
  %716 = vmatpush1.msra.mxu0 0.0
  %717 = vmatprep.subr.mxu0 0.0
  %718 = vmatpush1.msra.mxu0 0.0
  %719 = vmatprep.subr.mxu0 0.0
  %720 = vmatpush1.msra.mxu0 0.0
  %721 = vmatprep.subr.mxu0 0.0
  %722 = vmatpush1.msra.mxu0 0.0
  %723 = vmatprep.subr.mxu0 0.0
  %724 = vmatpush1.msra.mxu0 0.0
  %725 = vmatprep.subr.mxu0 0.0
  %726 = vmatpush1.msra.mxu0 0.0
  %727 = vmatprep.subr.mxu0 0.0
  %728 = vmatpush1.msra.mxu0 0.0
  %729 = vmatprep.subr.mxu0 0.0
  %730 = vmatpush1.msra.mxu0 0.0
  %731 = vmatprep.subr.mxu0 0.0
  %732 = vmatpush1.msra.mxu0 0.0
  %733 = vmatprep.subr.mxu0 0.0
  %734 = vmatpush1.msra.mxu0 0.0
  %735 = vmatprep.subr.mxu0 0.0
  %736 = vmatpush1.msra.mxu0 0.0
  %737 = vmatprep.subr.mxu0 0.0
  %738 = vmatpush1.msra.mxu0 0.0
  %739 = vmatprep.subr.mxu0 0.0
  %740 = vmatpush1.msra.mxu0 0.0
  %741 = vmatprep.subr.mxu0 0.0
  %742 = vmatpush1.msra.mxu0 0.0
  %743 = vmatprep.subr.mxu0 0.0
  %744 = vmatpush1.msra.mxu0 0.0
  %745 = vmatprep.subr.mxu0 0.0
  %746 = vmatpush1.msra.mxu0 0.0
  %747 = vmatprep.subr.mxu0 0.0
  %748 = vmatpush1.msra.mxu0 0.0
  %749 = vmatprep.subr.mxu0 0.0
  %750 = vmatpush1.msra.mxu0 0.0
  %751 = vmatprep.subr.mxu0 0.0
  %752 = vmatpush1.msra.mxu0 0.0
  %753 = vmatprep.subr.mxu0 0.0
  %754 = vmatpush1.msra.mxu0 0.0
  %755 = vmatprep.mubr.f32.mxu0 0.0
  %756 = vmatmul.mubr.f32.gmra.mrb[0].mxu0 %v686
  %v757 = vpop.f32.mrb[0].mxu0
  %v758 = vadd.f32 0.0, %v757
  %v759 = vpop.f32.mrb[0].mxu0
  %760 = vmatprep.mubr.f32.mxu0 0.0
  %761 = vmatmul.mubr.f32.gmra.mrb[0].mxu0 %v689
  %v762 = vpop.f32.mrb[0].mxu0
  %v763 = vadd.f32 0.0, %v762
  %v764 = vpop.f32.mrb[0].mxu0
  %765 = vdwg.mxu0
  %v766 = vld [vmem:[%s0] sm:$0x1]
  %v768 = vlaneseq
  %v769 = vshrl.u32 %v768, 7
  %v770 = vsub.s32 0, %v769
  %v771 = vrot.slane %v766, %v770
  %v773 = vmul.f32 %v771, %v677
  %v774 = vmul.f32 %v771, %v682
  %v775 = vmul.f32 %v771, %v758
  %v776 = vmul.f32 %v771, %v763
  %v777 = vadd.f32 %v773, %v33
  %v778 = vadd.f32 %v774, %v34
  %v779 = vadd.f32 %v775, %v35
  %v780 = vadd.f32 %v776, %v36
  %v781 = vpack.c.bf16 %v778, %v777
  %v782 = vpack.c.bf16 %v780, %v779
  %v785 = vunpack.c.l.b16 %v781
  %v786 = vunpack.c.h.b16 %v781
  %v787 = vunpack.c.l.b16 %v782
  %v788 = vunpack.c.h.b16 %v782
  %v789 = vpack.c.b16 %v785, %v785
  %v790 = vpack.c.b16 %v786, %v786
  %v791 = vpack.c.b16 %v787, %v787
  %v792 = vpack.c.b16 %v788, %v788
  %797 = vst [vmem:[%s8] sm:$0xf] %v789
  %798 = vst [vmem:[%s8 + $0x4] sm:$0xf] %v790
  %799 = vst [vmem:[%s8 + $0x8] sm:$0xf] %v791
  %800 = vst [vmem:[%s8 + $0xc] sm:$0xf] %v792
  // Predicated region
  $region34: #{_lambda_.10} parent=0 // pred_check
    _
  $region35: #{_lambda_.10} parent=0 // pred_check_branch
    %802 = sbr.rel (0) target = $region37
  $region36: #{_lambda_.10} parent=0 // pred_region
    _
  $region37: #{_lambda_.10} parent=0 // pred_fallthru
    _
  // Predicated region
  $region38: #{_lambda_.10} parent=0 // pred_check
    _
  $region39: #{_lambda_.10} parent=0 // pred_check_branch
    %804 = sbr.rel (0) target = $region41
  $region40: #{_lambda_.10} parent=0 // pred_region
    _
  $region41: #{_lambda_.10} parent=0 // pred_fallthru
    _

// kernel: _lambda_.11
$region0: #{_lambda_.11}
  #allocation0 [shape = 'u32[]', space=smem, size = 0x4, offset = 0x4, fixed_abs, tag = 'smem constant byte address 0x4 - core index']
  #allocation1 [shape = 'u32[144,128]{1,0:T(1,128)}', space=vmem, size = 0x12000, scoped, tag = 'internal scratch']
  %s0 = inlined_call_operand.vmem [shape: bf16[16,2048], index: 0, kind: input, shape index: {}]
  %s1 = inlined_call_operand.vmem [shape: bf16[2048,128], index: 1, kind: input, shape index: {}]
  %s2 = inlined_call_operand.vmem [shape: f32[16,128], index: 2, kind: output, shape index: {}]
  %s3 = sld [smem:[#allocation0]]
  $region18: #{_lambda_.11} parent=0
    _
  %s5 = ssub.s32 1, %s3
  %s6 = scalar_select 0, %s5, %s3
  // Predicated region
  $region2: #{_lambda_.11} parent=0 // pred_check
    _
  $region3: #{_lambda_.11} parent=0 // pred_check_branch
    %8 = sbr.rel (0) target = $region5
  $region4: #{_lambda_.11} parent=0 // pred_region
    _
  $region5: #{_lambda_.11} parent=0 // pred_fallthru
    _
  // Predicated region
  $region6: #{_lambda_.11} parent=0 // pred_check
    _
  $region7: #{_lambda_.11} parent=0 // pred_check_branch
    %10 = sbr.rel (0) target = $region9
  $region8: #{_lambda_.11} parent=0 // pred_region
    _
  $region9: #{_lambda_.11} parent=0 // pred_fallthru
    _
  %v11 = vld [vmem:[%s0] sm:$0xff]
  %v12 = vld [vmem:[%s0 + $0x8] sm:$0xff]
  %v13 = vld [vmem:[%s0 + $0x10] sm:$0xff]
  %v14 = vld [vmem:[%s0 + $0x18] sm:$0xff]
  %v15 = vld [vmem:[%s0 + $0x20] sm:$0xff]
  %v16 = vld [vmem:[%s0 + $0x28] sm:$0xff]
  %v17 = vld [vmem:[%s0 + $0x30] sm:$0xff]
  %v18 = vld [vmem:[%s0 + $0x38] sm:$0xff]
  %v19 = vld [vmem:[%s0 + $0x40] sm:$0xff]
  %v20 = vld [vmem:[%s0 + $0x48] sm:$0xff]
  %v21 = vld [vmem:[%s0 + $0x50] sm:$0xff]
  %v22 = vld [vmem:[%s0 + $0x58] sm:$0xff]
  %v23 = vld [vmem:[%s0 + $0x60] sm:$0xff]
  %v24 = vld [vmem:[%s0 + $0x68] sm:$0xff]
  %v25 = vld [vmem:[%s0 + $0x70] sm:$0xff]
  %v26 = vld [vmem:[%s0 + $0x78] sm:$0xff]
  %v27 = vunpack.c.l.bf16 %v11
  %v28 = vunpack.c.h.bf16 %v11
  %v29 = vunpack.c.l.bf16 %v12
  %v30 = vunpack.c.h.bf16 %v12
  %v31 = vunpack.c.l.bf16 %v13
  %v32 = vunpack.c.h.bf16 %v13
  %v33 = vunpack.c.l.bf16 %v14
  %v34 = vunpack.c.h.bf16 %v14
  %v35 = vunpack.c.l.bf16 %v15
  %v36 = vunpack.c.h.bf16 %v15
  %v37 = vunpack.c.l.bf16 %v16
  %v38 = vunpack.c.h.bf16 %v16
  %v39 = vunpack.c.l.bf16 %v17
  %v40 = vunpack.c.h.bf16 %v17
  %v41 = vunpack.c.l.bf16 %v18
  %v42 = vunpack.c.h.bf16 %v18
  %v43 = vunpack.c.l.bf16 %v19
  %v44 = vunpack.c.h.bf16 %v19
  %v45 = vunpack.c.l.bf16 %v20
  %v46 = vunpack.c.h.bf16 %v20
  %v47 = vunpack.c.l.bf16 %v21
  %v48 = vunpack.c.h.bf16 %v21
  %v49 = vunpack.c.l.bf16 %v22
  %v50 = vunpack.c.h.bf16 %v22
  %v51 = vunpack.c.l.bf16 %v23
  %v52 = vunpack.c.h.bf16 %v23
  %v53 = vunpack.c.l.bf16 %v24
  %v54 = vunpack.c.h.bf16 %v24
  %v55 = vunpack.c.l.bf16 %v25
  %v56 = vunpack.c.h.bf16 %v25
  %v57 = vunpack.c.l.bf16 %v26
  %v58 = vunpack.c.h.bf16 %v26
  %v59 = vld [vmem:[%s1] sm:$0xf]
  %v60 = vld [vmem:[%s1 + $0x4] sm:$0xf]
  %v61 = vld [vmem:[%s1 + $0x8] sm:$0xf]
  %v62 = vld [vmem:[%s1 + $0xc] sm:$0xf]
  %v63 = vld [vmem:[%s1 + $0x10] sm:$0xf]
  %v64 = vld [vmem:[%s1 + $0x14] sm:$0xf]
  %v65 = vld [vmem:[%s1 + $0x18] sm:$0xf]
  %v66 = vld [vmem:[%s1 + $0x1c] sm:$0xf]
  %v67 = vld [vmem:[%s1 + $0x20] sm:$0xf]
  %v68 = vld [vmem:[%s1 + $0x24] sm:$0xf]
  %v69 = vld [vmem:[%s1 + $0x28] sm:$0xf]
  %v70 = vld [vmem:[%s1 + $0x2c] sm:$0xf]
  %v71 = vld [vmem:[%s1 + $0x30] sm:$0xf]
  %v72 = vld [vmem:[%s1 + $0x34] sm:$0xf]
  %v73 = vld [vmem:[%s1 + $0x38] sm:$0xf]
  %v74 = vld [vmem:[%s1 + $0x3c] sm:$0xf]
  %v75 = vld [vmem:[%s1 + $0x40] sm:$0xf]
  %v76 = vld [vmem:[%s1 + $0x44] sm:$0xf]
  %v77 = vld [vmem:[%s1 + $0x48] sm:$0xf]
  %v78 = vld [vmem:[%s1 + $0x4c] sm:$0xf]
  %v79 = vld [vmem:[%s1 + $0x50] sm:$0xf]
  %v80 = vld [vmem:[%s1 + $0x54] sm:$0xf]
  %v81 = vld [vmem:[%s1 + $0x58] sm:$0xf]
  %v82 = vld [vmem:[%s1 + $0x5c] sm:$0xf]
  %v83 = vld [vmem:[%s1 + $0x60] sm:$0xf]
  %v84 = vld [vmem:[%s1 + $0x64] sm:$0xf]
  %v85 = vld [vmem:[%s1 + $0x68] sm:$0xf]
  %v86 = vld [vmem:[%s1 + $0x6c] sm:$0xf]
  %v87 = vld [vmem:[%s1 + $0x70] sm:$0xf]
  %v88 = vld [vmem:[%s1 + $0x74] sm:$0xf]
  %v89 = vld [vmem:[%s1 + $0x78] sm:$0xf]
  %v90 = vld [vmem:[%s1 + $0x7c] sm:$0xf]
  %v91 = vld [vmem:[%s1 + $0x80] sm:$0xf]
  %v92 = vld [vmem:[%s1 + $0x84] sm:$0xf]
  %v93 = vld [vmem:[%s1 + $0x88] sm:$0xf]
  %v94 = vld [vmem:[%s1 + $0x8c] sm:$0xf]
  %v95 = vld [vmem:[%s1 + $0x90] sm:$0xf]
  %v96 = vld [vmem:[%s1 + $0x94] sm:$0xf]
  %v97 = vld [vmem:[%s1 + $0x98] sm:$0xf]
  %v98 = vld [vmem:[%s1 + $0x9c] sm:$0xf]
  %v99 = vld [vmem:[%s1 + $0xa0] sm:$0xf]
  %v100 = vld [vmem:[%s1 + $0xa4] sm:$0xf]
  %v101 = vld [vmem:[%s1 + $0xa8] sm:$0xf]
  %v102 = vld [vmem:[%s1 + $0xac] sm:$0xf]
  %v103 = vld [vmem:[%s1 + $0xb0] sm:$0xf]
  %v104 = vld [vmem:[%s1 + $0xb4] sm:$0xf]
  %v105 = vld [vmem:[%s1 + $0xb8] sm:$0xf]
  %v106 = vld [vmem:[%s1 + $0xbc] sm:$0xf]
  %v107 = vld [vmem:[%s1 + $0xc0] sm:$0xf]
  %v108 = vld [vmem:[%s1 + $0xc4] sm:$0xf]
  %v109 = vld [vmem:[%s1 + $0xc8] sm:$0xf]
  %v110 = vld [vmem:[%s1 + $0xcc] sm:$0xf]
  %v111 = vld [vmem:[%s1 + $0xd0] sm:$0xf]
  %v112 = vld [vmem:[%s1 + $0xd4] sm:$0xf]
  %v113 = vld [vmem:[%s1 + $0xd8] sm:$0xf]
  %v114 = vld [vmem:[%s1 + $0xdc] sm:$0xf]
  %v115 = vld [vmem:[%s1 + $0xe0] sm:$0xf]
  %v116 = vld [vmem:[%s1 + $0xe4] sm:$0xf]
  %v117 = vld [vmem:[%s1 + $0xe8] sm:$0xf]
  %v118 = vld [vmem:[%s1 + $0xec] sm:$0xf]
  %v119 = vld [vmem:[%s1 + $0xf0] sm:$0xf]
  %v120 = vld [vmem:[%s1 + $0xf4] sm:$0xf]
  %v121 = vld [vmem:[%s1 + $0xf8] sm:$0xf]
  %v122 = vld [vmem:[%s1 + $0xfc] sm:$0xf]
  %v123 = vld [vmem:[%s1 + $0x100] sm:$0xf]
  %v124 = vld [vmem:[%s1 + $0x104] sm:$0xf]
  %v125 = vld [vmem:[%s1 + $0x108] sm:$0xf]
  %v126 = vld [vmem:[%s1 + $0x10c] sm:$0xf]
  %v127 = vld [vmem:[%s1 + $0x110] sm:$0xf]
  %v128 = vld [vmem:[%s1 + $0x114] sm:$0xf]
  %v129 = vld [vmem:[%s1 + $0x118] sm:$0xf]
  %v130 = vld [vmem:[%s1 + $0x11c] sm:$0xf]
  %v131 = vld [vmem:[%s1 + $0x120] sm:$0xf]
  %v132 = vld [vmem:[%s1 + $0x124] sm:$0xf]
  %v133 = vld [vmem:[%s1 + $0x128] sm:$0xf]
  %v134 = vld [vmem:[%s1 + $0x12c] sm:$0xf]
  %v135 = vld [vmem:[%s1 + $0x130] sm:$0xf]
  %v136 = vld [vmem:[%s1 + $0x134] sm:$0xf]
  %v137 = vld [vmem:[%s1 + $0x138] sm:$0xf]
  %v138 = vld [vmem:[%s1 + $0x13c] sm:$0xf]
  %v139 = vld [vmem:[%s1 + $0x140] sm:$0xf]
  %v140 = vld [vmem:[%s1 + $0x144] sm:$0xf]
  %v141 = vld [vmem:[%s1 + $0x148] sm:$0xf]
  %v142 = vld [vmem:[%s1 + $0x14c] sm:$0xf]
  %v143 = vld [vmem:[%s1 + $0x150] sm:$0xf]
  %v144 = vld [vmem:[%s1 + $0x154] sm:$0xf]
  %v145 = vld [vmem:[%s1 + $0x158] sm:$0xf]
  %v146 = vld [vmem:[%s1 + $0x15c] sm:$0xf]
  %v147 = vld [vmem:[%s1 + $0x160] sm:$0xf]
  %v148 = vld [vmem:[%s1 + $0x164] sm:$0xf]
  %v149 = vld [vmem:[%s1 + $0x168] sm:$0xf]
  %v150 = vld [vmem:[%s1 + $0x16c] sm:$0xf]
  %v151 = vld [vmem:[%s1 + $0x170] sm:$0xf]
  %v152 = vld [vmem:[%s1 + $0x174] sm:$0xf]
  %v153 = vld [vmem:[%s1 + $0x178] sm:$0xf]
  %v154 = vld [vmem:[%s1 + $0x17c] sm:$0xf]
  %v155 = vld [vmem:[%s1 + $0x180] sm:$0xf]
  %v156 = vld [vmem:[%s1 + $0x184] sm:$0xf]
  %v157 = vld [vmem:[%s1 + $0x188] sm:$0xf]
  %v158 = vld [vmem:[%s1 + $0x18c] sm:$0xf]
  %v159 = vld [vmem:[%s1 + $0x190] sm:$0xf]
  %v160 = vld [vmem:[%s1 + $0x194] sm:$0xf]
  %v161 = vld [vmem:[%s1 + $0x198] sm:$0xf]
  %v162 = vld [vmem:[%s1 + $0x19c] sm:$0xf]
  %v163 = vld [vmem:[%s1 + $0x1a0] sm:$0xf]
  %v164 = vld [vmem:[%s1 + $0x1a4] sm:$0xf]
  %v165 = vld [vmem:[%s1 + $0x1a8] sm:$0xf]
  %v166 = vld [vmem:[%s1 + $0x1ac] sm:$0xf]
  %v167 = vld [vmem:[%s1 + $0x1b0] sm:$0xf]
  %v168 = vld [vmem:[%s1 + $0x1b4] sm:$0xf]
  %v169 = vld [vmem:[%s1 + $0x1b8] sm:$0xf]
  %v170 = vld [vmem:[%s1 + $0x1bc] sm:$0xf]
  %v171 = vld [vmem:[%s1 + $0x1c0] sm:$0xf]
  %v172 = vld [vmem:[%s1 + $0x1c4] sm:$0xf]
  %v173 = vld [vmem:[%s1 + $0x1c8] sm:$0xf]
  %v174 = vld [vmem:[%s1 + $0x1cc] sm:$0xf]
  %v175 = vld [vmem:[%s1 + $0x1d0] sm:$0xf]
  %v176 = vld [vmem:[%s1 + $0x1d4] sm:$0xf]
  %v177 = vld [vmem:[%s1 + $0x1d8] sm:$0xf]
  %v178 = vld [vmem:[%s1 + $0x1dc] sm:$0xf]
  %v179 = vld [vmem:[%s1 + $0x1e0] sm:$0xf]
  %v180 = vld [vmem:[%s1 + $0x1e4] sm:$0xf]
  %v181 = vld [vmem:[%s1 + $0x1e8] sm:$0xf]
  %v182 = vld [vmem:[%s1 + $0x1ec] sm:$0xf]
  %v183 = vld [vmem:[%s1 + $0x1f0] sm:$0xf]
  %v184 = vld [vmem:[%s1 + $0x1f4] sm:$0xf]
  %v185 = vld [vmem:[%s1 + $0x1f8] sm:$0xf]
  %v186 = vld [vmem:[%s1 + $0x1fc] sm:$0xf]
  %v187 = vld [vmem:[%s1 + $0x200] sm:$0xf]
  %v188 = vld [vmem:[%s1 + $0x204] sm:$0xf]
  %v189 = vld [vmem:[%s1 + $0x208] sm:$0xf]
  %v190 = vld [vmem:[%s1 + $0x20c] sm:$0xf]
  %v191 = vld [vmem:[%s1 + $0x210] sm:$0xf]
  %v192 = vld [vmem:[%s1 + $0x214] sm:$0xf]
  %v193 = vld [vmem:[%s1 + $0x218] sm:$0xf]
  %v194 = vld [vmem:[%s1 + $0x21c] sm:$0xf]
  %v195 = vld [vmem:[%s1 + $0x220] sm:$0xf]
  %v196 = vld [vmem:[%s1 + $0x224] sm:$0xf]
  %v197 = vld [vmem:[%s1 + $0x228] sm:$0xf]
  %v198 = vld [vmem:[%s1 + $0x22c] sm:$0xf]
  %v199 = vld [vmem:[%s1 + $0x230] sm:$0xf]
  %v200 = vld [vmem:[%s1 + $0x234] sm:$0xf]
  %v201 = vld [vmem:[%s1 + $0x238] sm:$0xf]
  %v202 = vld [vmem:[%s1 + $0x23c] sm:$0xf]
  %v203 = vld [vmem:[%s1 + $0x240] sm:$0xf]
  %v204 = vld [vmem:[%s1 + $0x244] sm:$0xf]
  %v205 = vld [vmem:[%s1 + $0x248] sm:$0xf]
  %v206 = vld [vmem:[%s1 + $0x24c] sm:$0xf]
  %v207 = vld [vmem:[%s1 + $0x250] sm:$0xf]
  %v208 = vld [vmem:[%s1 + $0x254] sm:$0xf]
  %v209 = vld [vmem:[%s1 + $0x258] sm:$0xf]
  %v210 = vld [vmem:[%s1 + $0x25c] sm:$0xf]
  %v211 = vld [vmem:[%s1 + $0x260] sm:$0xf]
  %v212 = vld [vmem:[%s1 + $0x264] sm:$0xf]
  %v213 = vld [vmem:[%s1 + $0x268] sm:$0xf]
  %v214 = vld [vmem:[%s1 + $0x26c] sm:$0xf]
  %v215 = vld [vmem:[%s1 + $0x270] sm:$0xf]
  %v216 = vld [vmem:[%s1 + $0x274] sm:$0xf]
  %v217 = vld [vmem:[%s1 + $0x278] sm:$0xf]
  %v218 = vld [vmem:[%s1 + $0x27c] sm:$0xf]
  %v219 = vld [vmem:[%s1 + $0x280] sm:$0xf]
  %v220 = vld [vmem:[%s1 + $0x284] sm:$0xf]
  %v221 = vld [vmem:[%s1 + $0x288] sm:$0xf]
  %v222 = vld [vmem:[%s1 + $0x28c] sm:$0xf]
  %v223 = vld [vmem:[%s1 + $0x290] sm:$0xf]
  %v224 = vld [vmem:[%s1 + $0x294] sm:$0xf]
  %v225 = vld [vmem:[%s1 + $0x298] sm:$0xf]
  %v226 = vld [vmem:[%s1 + $0x29c] sm:$0xf]
  %v227 = vld [vmem:[%s1 + $0x2a0] sm:$0xf]
  %v228 = vld [vmem:[%s1 + $0x2a4] sm:$0xf]
  %v229 = vld [vmem:[%s1 + $0x2a8] sm:$0xf]
  %v230 = vld [vmem:[%s1 + $0x2ac] sm:$0xf]
  %v231 = vld [vmem:[%s1 + $0x2b0] sm:$0xf]
  %v232 = vld [vmem:[%s1 + $0x2b4] sm:$0xf]
  %v233 = vld [vmem:[%s1 + $0x2b8] sm:$0xf]
  %v234 = vld [vmem:[%s1 + $0x2bc] sm:$0xf]
  %v235 = vld [vmem:[%s1 + $0x2c0] sm:$0xf]
  %v236 = vld [vmem:[%s1 + $0x2c4] sm:$0xf]
  %v237 = vld [vmem:[%s1 + $0x2c8] sm:$0xf]
  %v238 = vld [vmem:[%s1 + $0x2cc] sm:$0xf]
  %v239 = vld [vmem:[%s1 + $0x2d0] sm:$0xf]
  %v240 = vld [vmem:[%s1 + $0x2d4] sm:$0xf]
  %v241 = vld [vmem:[%s1 + $0x2d8] sm:$0xf]
  %v242 = vld [vmem:[%s1 + $0x2dc] sm:$0xf]
  %v243 = vld [vmem:[%s1 + $0x2e0] sm:$0xf]
  %v244 = vld [vmem:[%s1 + $0x2e4] sm:$0xf]
  %v245 = vld [vmem:[%s1 + $0x2e8] sm:$0xf]
  %v246 = vld [vmem:[%s1 + $0x2ec] sm:$0xf]
  %v247 = vld [vmem:[%s1 + $0x2f0] sm:$0xf]
  %v248 = vld [vmem:[%s1 + $0x2f4] sm:$0xf]
  %v249 = vld [vmem:[%s1 + $0x2f8] sm:$0xf]
  %v250 = vld [vmem:[%s1 + $0x2fc] sm:$0xf]
  %v251 = vld [vmem:[%s1 + $0x300] sm:$0xf]
  %v252 = vld [vmem:[%s1 + $0x304] sm:$0xf]
  %v253 = vld [vmem:[%s1 + $0x308] sm:$0xf]
  %v254 = vld [vmem:[%s1 + $0x30c] sm:$0xf]
  %v255 = vld [vmem:[%s1 + $0x310] sm:$0xf]
  %v256 = vld [vmem:[%s1 + $0x314] sm:$0xf]
  %v257 = vld [vmem:[%s1 + $0x318] sm:$0xf]
  %v258 = vld [vmem:[%s1 + $0x31c] sm:$0xf]
  %v259 = vld [vmem:[%s1 + $0x320] sm:$0xf]
  %v260 = vld [vmem:[%s1 + $0x324] sm:$0xf]
  %v261 = vld [vmem:[%s1 + $0x328] sm:$0xf]
  %v262 = vld [vmem:[%s1 + $0x32c] sm:$0xf]
  %v263 = vld [vmem:[%s1 + $0x330] sm:$0xf]
  %v264 = vld [vmem:[%s1 + $0x334] sm:$0xf]
  %v265 = vld [vmem:[%s1 + $0x338] sm:$0xf]
  %v266 = vld [vmem:[%s1 + $0x33c] sm:$0xf]
  %v267 = vld [vmem:[%s1 + $0x340] sm:$0xf]
  %v268 = vld [vmem:[%s1 + $0x344] sm:$0xf]
  %v269 = vld [vmem:[%s1 + $0x348] sm:$0xf]
  %v270 = vld [vmem:[%s1 + $0x34c] sm:$0xf]
  %v271 = vld [vmem:[%s1 + $0x350] sm:$0xf]
  %v272 = vld [vmem:[%s1 + $0x354] sm:$0xf]
  %v273 = vld [vmem:[%s1 + $0x358] sm:$0xf]
  %v274 = vld [vmem:[%s1 + $0x35c] sm:$0xf]
  %v275 = vld [vmem:[%s1 + $0x360] sm:$0xf]
  %v276 = vld [vmem:[%s1 + $0x364] sm:$0xf]
  %v277 = vld [vmem:[%s1 + $0x368] sm:$0xf]
  %v278 = vld [vmem:[%s1 + $0x36c] sm:$0xf]
  %v279 = vld [vmem:[%s1 + $0x370] sm:$0xf]
  %v280 = vld [vmem:[%s1 + $0x374] sm:$0xf]
  %v281 = vld [vmem:[%s1 + $0x378] sm:$0xf]
  %v282 = vld [vmem:[%s1 + $0x37c] sm:$0xf]
  %v283 = vld [vmem:[%s1 + $0x380] sm:$0xf]
  %v284 = vld [vmem:[%s1 + $0x384] sm:$0xf]
  %v285 = vld [vmem:[%s1 + $0x388] sm:$0xf]
  %v286 = vld [vmem:[%s1 + $0x38c] sm:$0xf]
  %v287 = vld [vmem:[%s1 + $0x390] sm:$0xf]
  %v288 = vld [vmem:[%s1 + $0x394] sm:$0xf]
  %v289 = vld [vmem:[%s1 + $0x398] sm:$0xf]
  %v290 = vld [vmem:[%s1 + $0x39c] sm:$0xf]
  %v291 = vld [vmem:[%s1 + $0x3a0] sm:$0xf]
  %v292 = vld [vmem:[%s1 + $0x3a4] sm:$0xf]
  %v293 = vld [vmem:[%s1 + $0x3a8] sm:$0xf]
  %v294 = vld [vmem:[%s1 + $0x3ac] sm:$0xf]
  %v295 = vld [vmem:[%s1 + $0x3b0] sm:$0xf]
  %v296 = vld [vmem:[%s1 + $0x3b4] sm:$0xf]
  %v297 = vld [vmem:[%s1 + $0x3b8] sm:$0xf]
  %v298 = vld [vmem:[%s1 + $0x3bc] sm:$0xf]
  %v299 = vld [vmem:[%s1 + $0x3c0] sm:$0xf]
  %v300 = vld [vmem:[%s1 + $0x3c4] sm:$0xf]
  %v301 = vld [vmem:[%s1 + $0x3c8] sm:$0xf]
  %v302 = vld [vmem:[%s1 + $0x3cc] sm:$0xf]
  %v303 = vld [vmem:[%s1 + $0x3d0] sm:$0xf]
  %v304 = vld [vmem:[%s1 + $0x3d4] sm:$0xf]
  %v305 = vld [vmem:[%s1 + $0x3d8] sm:$0xf]
  %v306 = vld [vmem:[%s1 + $0x3dc] sm:$0xf]
  %v307 = vld [vmem:[%s1 + $0x3e0] sm:$0xf]
  %v308 = vld [vmem:[%s1 + $0x3e4] sm:$0xf]
  %v309 = vld [vmem:[%s1 + $0x3e8] sm:$0xf]
  %v310 = vld [vmem:[%s1 + $0x3ec] sm:$0xf]
  %v311 = vld [vmem:[%s1 + $0x3f0] sm:$0xf]
  %v312 = vld [vmem:[%s1 + $0x3f4] sm:$0xf]
  %v313 = vld [vmem:[%s1 + $0x3f8] sm:$0xf]
  %v314 = vld [vmem:[%s1 + $0x3fc] sm:$0xf]
  %v315 = vunpack.c.l.bf16 %v59
  %v316 = vunpack.c.l.bf16 %v60
  %v317 = vunpack.c.l.bf16 %v61
  %v318 = vunpack.c.l.bf16 %v62
  %v319 = vunpack.c.l.bf16 %v63
  %v320 = vunpack.c.l.bf16 %v64
  %v321 = vunpack.c.l.bf16 %v65
  %v322 = vunpack.c.l.bf16 %v66
  %v323 = vunpack.c.l.bf16 %v67
  %v324 = vunpack.c.l.bf16 %v68
  %v325 = vunpack.c.l.bf16 %v69
  %v326 = vunpack.c.l.bf16 %v70
  %v327 = vunpack.c.l.bf16 %v71
  %v328 = vunpack.c.l.bf16 %v72
  %v329 = vunpack.c.l.bf16 %v73
  %v330 = vunpack.c.l.bf16 %v74
  %v331 = vunpack.c.l.bf16 %v75
  %v332 = vunpack.c.l.bf16 %v76
  %v333 = vunpack.c.l.bf16 %v77
  %v334 = vunpack.c.l.bf16 %v78
  %v335 = vunpack.c.l.bf16 %v79
  %v336 = vunpack.c.l.bf16 %v80
  %v337 = vunpack.c.l.bf16 %v81
  %v338 = vunpack.c.l.bf16 %v82
  %v339 = vunpack.c.l.bf16 %v83
  %v340 = vunpack.c.l.bf16 %v84
  %v341 = vunpack.c.l.bf16 %v85
  %v342 = vunpack.c.l.bf16 %v86
  %v343 = vunpack.c.l.bf16 %v87
  %v344 = vunpack.c.l.bf16 %v88
  %v345 = vunpack.c.l.bf16 %v89
  %v346 = vunpack.c.l.bf16 %v90
  %v347 = vunpack.c.l.bf16 %v91
  %v348 = vunpack.c.l.bf16 %v92
  %v349 = vunpack.c.l.bf16 %v93
  %v350 = vunpack.c.l.bf16 %v94
  %v351 = vunpack.c.l.bf16 %v95
  %v352 = vunpack.c.l.bf16 %v96
  %v353 = vunpack.c.l.bf16 %v97
  %v354 = vunpack.c.l.bf16 %v98
  %v355 = vunpack.c.l.bf16 %v99
  %v356 = vunpack.c.l.bf16 %v100
  %v357 = vunpack.c.l.bf16 %v101
  %v358 = vunpack.c.l.bf16 %v102
  %v359 = vunpack.c.l.bf16 %v103
  %v360 = vunpack.c.l.bf16 %v104
  %v361 = vunpack.c.l.bf16 %v105
  %v362 = vunpack.c.l.bf16 %v106
  %v363 = vunpack.c.l.bf16 %v107
  %v364 = vunpack.c.l.bf16 %v108
  %v365 = vunpack.c.l.bf16 %v109
  %v366 = vunpack.c.l.bf16 %v110
  %v367 = vunpack.c.l.bf16 %v111
  %v368 = vunpack.c.l.bf16 %v112
  %v369 = vunpack.c.l.bf16 %v113
  %v370 = vunpack.c.l.bf16 %v114
  %v371 = vunpack.c.l.bf16 %v115
  %v372 = vunpack.c.l.bf16 %v116
  %v373 = vunpack.c.l.bf16 %v117
  %v374 = vunpack.c.l.bf16 %v118
  %v375 = vunpack.c.l.bf16 %v119
  %v376 = vunpack.c.l.bf16 %v120
  %v377 = vunpack.c.l.bf16 %v121
  %v378 = vunpack.c.l.bf16 %v122
  %v379 = vunpack.c.l.bf16 %v123
  %v380 = vunpack.c.l.bf16 %v124
  %v381 = vunpack.c.l.bf16 %v125
  %v382 = vunpack.c.l.bf16 %v126
  %v383 = vunpack.c.l.bf16 %v127
  %v384 = vunpack.c.l.bf16 %v128
  %v385 = vunpack.c.l.bf16 %v129
  %v386 = vunpack.c.l.bf16 %v130
  %v387 = vunpack.c.l.bf16 %v131
  %v388 = vunpack.c.l.bf16 %v132
  %v389 = vunpack.c.l.bf16 %v133
  %v390 = vunpack.c.l.bf16 %v134
  %v391 = vunpack.c.l.bf16 %v135
  %v392 = vunpack.c.l.bf16 %v136
  %v393 = vunpack.c.l.bf16 %v137
  %v394 = vunpack.c.l.bf16 %v138
  %v395 = vunpack.c.l.bf16 %v139
  %v396 = vunpack.c.l.bf16 %v140
  %v397 = vunpack.c.l.bf16 %v141
  %v398 = vunpack.c.l.bf16 %v142
  %v399 = vunpack.c.l.bf16 %v143
  %v400 = vunpack.c.l.bf16 %v144
  %v401 = vunpack.c.l.bf16 %v145
  %v402 = vunpack.c.l.bf16 %v146
  %v403 = vunpack.c.l.bf16 %v147
  %v404 = vunpack.c.l.bf16 %v148
  %v405 = vunpack.c.l.bf16 %v149
  %v406 = vunpack.c.l.bf16 %v150
  %v407 = vunpack.c.l.bf16 %v151
  %v408 = vunpack.c.l.bf16 %v152
  %v409 = vunpack.c.l.bf16 %v153
  %v410 = vunpack.c.l.bf16 %v154
  %v411 = vunpack.c.l.bf16 %v155
  %v412 = vunpack.c.l.bf16 %v156
  %v413 = vunpack.c.l.bf16 %v157
  %v414 = vunpack.c.l.bf16 %v158
  %v415 = vunpack.c.l.bf16 %v159
  %v416 = vunpack.c.l.bf16 %v160
  %v417 = vunpack.c.l.bf16 %v161
  %v418 = vunpack.c.l.bf16 %v162
  %v419 = vunpack.c.l.bf16 %v163
  %v420 = vunpack.c.l.bf16 %v164
  %v421 = vunpack.c.l.bf16 %v165
  %v422 = vunpack.c.l.bf16 %v166
  %v423 = vunpack.c.l.bf16 %v167
  %v424 = vunpack.c.l.bf16 %v168
  %v425 = vunpack.c.l.bf16 %v169
  %v426 = vunpack.c.l.bf16 %v170
  %v427 = vunpack.c.l.bf16 %v171
  %v428 = vunpack.c.l.bf16 %v172
  %v429 = vunpack.c.l.bf16 %v173
  %v430 = vunpack.c.l.bf16 %v174
  %v431 = vunpack.c.l.bf16 %v175
  %v432 = vunpack.c.l.bf16 %v176
  %v433 = vunpack.c.l.bf16 %v177
  %v434 = vunpack.c.l.bf16 %v178
  %v435 = vunpack.c.l.bf16 %v179
  %v436 = vunpack.c.l.bf16 %v180
  %v437 = vunpack.c.l.bf16 %v181
  %v438 = vunpack.c.l.bf16 %v182
  %v439 = vunpack.c.l.bf16 %v183
  %v440 = vunpack.c.l.bf16 %v184
  %v441 = vunpack.c.l.bf16 %v185
  %v442 = vunpack.c.l.bf16 %v186
  %v443 = vunpack.c.l.bf16 %v187
  %v444 = vunpack.c.l.bf16 %v188
  %v445 = vunpack.c.l.bf16 %v189
  %v446 = vunpack.c.l.bf16 %v190
  %v447 = vunpack.c.l.bf16 %v191
  %v448 = vunpack.c.l.bf16 %v192
  %v449 = vunpack.c.l.bf16 %v193
  %v450 = vunpack.c.l.bf16 %v194
  %v451 = vunpack.c.l.bf16 %v195
  %v452 = vunpack.c.l.bf16 %v196
  %v453 = vunpack.c.l.bf16 %v197
  %v454 = vunpack.c.l.bf16 %v198
  %v455 = vunpack.c.l.bf16 %v199
  %v456 = vunpack.c.l.bf16 %v200
  %v457 = vunpack.c.l.bf16 %v201
  %v458 = vunpack.c.l.bf16 %v202
  %v459 = vunpack.c.l.bf16 %v203
  %v460 = vunpack.c.l.bf16 %v204
  %v461 = vunpack.c.l.bf16 %v205
  %v462 = vunpack.c.l.bf16 %v206
  %v463 = vunpack.c.l.bf16 %v207
  %v464 = vunpack.c.l.bf16 %v208
  %v465 = vunpack.c.l.bf16 %v209
  %v466 = vunpack.c.l.bf16 %v210
  %v467 = vunpack.c.l.bf16 %v211
  %v468 = vunpack.c.l.bf16 %v212
  %v469 = vunpack.c.l.bf16 %v213
  %v470 = vunpack.c.l.bf16 %v214
  %v471 = vunpack.c.l.bf16 %v215
  %v472 = vunpack.c.l.bf16 %v216
  %v473 = vunpack.c.l.bf16 %v217
  %v474 = vunpack.c.l.bf16 %v218
  %v475 = vunpack.c.l.bf16 %v219
  %v476 = vunpack.c.l.bf16 %v220
  %v477 = vunpack.c.l.bf16 %v221
  %v478 = vunpack.c.l.bf16 %v222
  %v479 = vunpack.c.l.bf16 %v223
  %v480 = vunpack.c.l.bf16 %v224
  %v481 = vunpack.c.l.bf16 %v225
  %v482 = vunpack.c.l.bf16 %v226
  %v483 = vunpack.c.l.bf16 %v227
  %v484 = vunpack.c.l.bf16 %v228
  %v485 = vunpack.c.l.bf16 %v229
  %v486 = vunpack.c.l.bf16 %v230
  %v487 = vunpack.c.l.bf16 %v231
  %v488 = vunpack.c.l.bf16 %v232
  %v489 = vunpack.c.l.bf16 %v233
  %v490 = vunpack.c.l.bf16 %v234
  %v491 = vunpack.c.l.bf16 %v235
  %v492 = vunpack.c.l.bf16 %v236
  %v493 = vunpack.c.l.bf16 %v237
  %v494 = vunpack.c.l.bf16 %v238
  %v495 = vunpack.c.l.bf16 %v239
  %v496 = vunpack.c.l.bf16 %v240
  %v497 = vunpack.c.l.bf16 %v241
  %v498 = vunpack.c.l.bf16 %v242
  %v499 = vunpack.c.l.bf16 %v243
  %v500 = vunpack.c.l.bf16 %v244
  %v501 = vunpack.c.l.bf16 %v245
  %v502 = vunpack.c.l.bf16 %v246
  %v503 = vunpack.c.l.bf16 %v247
  %v504 = vunpack.c.l.bf16 %v248
  %v505 = vunpack.c.l.bf16 %v249
  %v506 = vunpack.c.l.bf16 %v250
  %v507 = vunpack.c.l.bf16 %v251
  %v508 = vunpack.c.l.bf16 %v252
  %v509 = vunpack.c.l.bf16 %v253
  %v510 = vunpack.c.l.bf16 %v254
  %v511 = vunpack.c.l.bf16 %v255
  %v512 = vunpack.c.l.bf16 %v256
  %v513 = vunpack.c.l.bf16 %v257
  %v514 = vunpack.c.l.bf16 %v258
  %v515 = vunpack.c.l.bf16 %v259
  %v516 = vunpack.c.l.bf16 %v260
  %v517 = vunpack.c.l.bf16 %v261
  %v518 = vunpack.c.l.bf16 %v262
  %v519 = vunpack.c.l.bf16 %v263
  %v520 = vunpack.c.l.bf16 %v264
  %v521 = vunpack.c.l.bf16 %v265
  %v522 = vunpack.c.l.bf16 %v266
  %v523 = vunpack.c.l.bf16 %v267
  %v524 = vunpack.c.l.bf16 %v268
  %v525 = vunpack.c.l.bf16 %v269
  %v526 = vunpack.c.l.bf16 %v270
  %v527 = vunpack.c.l.bf16 %v271
  %v528 = vunpack.c.l.bf16 %v272
  %v529 = vunpack.c.l.bf16 %v273
  %v530 = vunpack.c.l.bf16 %v274
  %v531 = vunpack.c.l.bf16 %v275
  %v532 = vunpack.c.l.bf16 %v276
  %v533 = vunpack.c.l.bf16 %v277
  %v534 = vunpack.c.l.bf16 %v278
  %v535 = vunpack.c.l.bf16 %v279
  %v536 = vunpack.c.l.bf16 %v280
  %v537 = vunpack.c.l.bf16 %v281
  %v538 = vunpack.c.l.bf16 %v282
  %v539 = vunpack.c.l.bf16 %v283
  %v540 = vunpack.c.l.bf16 %v284
  %v541 = vunpack.c.l.bf16 %v285
  %v542 = vunpack.c.l.bf16 %v286
  %v543 = vunpack.c.l.bf16 %v287
  %v544 = vunpack.c.l.bf16 %v288
  %v545 = vunpack.c.l.bf16 %v289
  %v546 = vunpack.c.l.bf16 %v290
  %v547 = vunpack.c.l.bf16 %v291
  %v548 = vunpack.c.l.bf16 %v292
  %v549 = vunpack.c.l.bf16 %v293
  %v550 = vunpack.c.l.bf16 %v294
  %v551 = vunpack.c.l.bf16 %v295
  %v552 = vunpack.c.l.bf16 %v296
  %v553 = vunpack.c.l.bf16 %v297
  %v554 = vunpack.c.l.bf16 %v298
  %v555 = vunpack.c.l.bf16 %v299
  %v556 = vunpack.c.l.bf16 %v300
  %v557 = vunpack.c.l.bf16 %v301
  %v558 = vunpack.c.l.bf16 %v302
  %v559 = vunpack.c.l.bf16 %v303
  %v560 = vunpack.c.l.bf16 %v304
  %v561 = vunpack.c.l.bf16 %v305
  %v562 = vunpack.c.l.bf16 %v306
  %v563 = vunpack.c.l.bf16 %v307
  %v564 = vunpack.c.l.bf16 %v308
  %v565 = vunpack.c.l.bf16 %v309
  %v566 = vunpack.c.l.bf16 %v310
  %v567 = vunpack.c.l.bf16 %v311
  %v568 = vunpack.c.l.bf16 %v312
  %v569 = vunpack.c.l.bf16 %v313
  %v570 = vunpack.c.l.bf16 %v314
  %571 = vmatprep.subr.mxu0 0.0
  %572 = vmatpush1.msra.mxu0 %v315
  %573 = vmatprep.subr.mxu0 0.0
  %574 = vmatpush1.msra.mxu0 %v316
  %575 = vmatprep.subr.mxu0 0.0
  %576 = vmatpush1.msra.mxu0 %v317
  %577 = vmatprep.subr.mxu0 0.0
  %578 = vmatpush1.msra.mxu0 %v318
  %579 = vmatprep.subr.mxu0 0.0
  %580 = vmatpush1.msra.mxu0 %v319
  %581 = vmatprep.subr.mxu0 0.0
  %582 = vmatpush1.msra.mxu0 %v320
  %583 = vmatprep.subr.mxu0 0.0
  %584 = vmatpush1.msra.mxu0 %v321
  %585 = vmatprep.subr.mxu0 0.0
  %586 = vmatpush1.msra.mxu0 %v322
  %587 = vmatprep.subr.mxu0 0.0
  %588 = vmatpush1.msra.mxu0 %v323
  %589 = vmatprep.subr.mxu0 0.0
  %590 = vmatpush1.msra.mxu0 %v324
  %591 = vmatprep.subr.mxu0 0.0
  %592 = vmatpush1.msra.mxu0 %v325
  %593 = vmatprep.subr.mxu0 0.0
  %594 = vmatpush1.msra.mxu0 %v326
  %595 = vmatprep.subr.mxu0 0.0
  %596 = vmatpush1.msra.mxu0 %v327
  %597 = vmatprep.subr.mxu0 0.0
  %598 = vmatpush1.msra.mxu0 %v328
  %599 = vmatprep.subr.mxu0 0.0
  %600 = vmatpush1.msra.mxu0 %v329
  %601 = vmatprep.subr.mxu0 0.0
  %602 = vmatpush1.msra.mxu0 %v330
  %603 = vmatprep.subr.mxu0 0.0
  %604 = vmatpush1.msra.mxu0 %v331
  %605 = vmatprep.subr.mxu0 0.0
  %606 = vmatpush1.msra.mxu0 %v332
  %607 = vmatprep.subr.mxu0 0.0
  %608 = vmatpush1.msra.mxu0 %v333
  %609 = vmatprep.subr.mxu0 0.0
  %610 = vmatpush1.msra.mxu0 %v334
  %611 = vmatprep.subr.mxu0 0.0
  %612 = vmatpush1.msra.mxu0 %v335
  %613 = vmatprep.subr.mxu0 0.0
  %614 = vmatpush1.msra.mxu0 %v336
  %615 = vmatprep.subr.mxu0 0.0
  %616 = vmatpush1.msra.mxu0 %v337
  %617 = vmatprep.subr.mxu0 0.0
  %618 = vmatpush1.msra.mxu0 %v338
  %619 = vmatprep.subr.mxu0 0.0
  %620 = vmatpush1.msra.mxu0 %v339
  %621 = vmatprep.subr.mxu0 0.0
  %622 = vmatpush1.msra.mxu0 %v340
  %623 = vmatprep.subr.mxu0 0.0
  %624 = vmatpush1.msra.mxu0 %v341
  %625 = vmatprep.subr.mxu0 0.0
  %626 = vmatpush1.msra.mxu0 %v342
  %627 = vmatprep.subr.mxu0 0.0
  %628 = vmatpush1.msra.mxu0 %v343
  %629 = vmatprep.subr.mxu0 0.0
  %630 = vmatpush1.msra.mxu0 %v344
  %631 = vmatprep.subr.mxu0 0.0
  %632 = vmatpush1.msra.mxu0 %v345
  %633 = vmatprep.subr.mxu0 0.0
  %634 = vmatpush1.msra.mxu0 %v346
  %635 = vmatprep.mubr.f32.mxu0 %v28
  %636 = vmatmul.mubr.f32.gmra.mrb[0].mxu0 %v27
  %v637 = vpop.f32.mrb[0].mxu0
  %v638 = vadd.f32 0.0, %v637
  %v639 = vpop.f32.mrb[0].mxu0
  %640 = vmatprep.mubr.f32.mxu0 %v44
  %641 = vmatmul.mubr.f32.gmra.mrb[0].mxu0 %v43
  %v642 = vpop.f32.mrb[0].mxu0
  %v643 = vadd.f32 0.0, %v642
  %v644 = vpop.f32.mrb[0].mxu0
  %645 = vdwg.mxu0
  %646 = vmatprep.subr.mxu0 0.0
  %647 = vmatpush1.msra.mxu0 %v347
  %648 = vmatprep.subr.mxu0 0.0
  %649 = vmatpush1.msra.mxu0 %v348
  %650 = vmatprep.subr.mxu0 0.0
  %651 = vmatpush1.msra.mxu0 %v349
  %652 = vmatprep.subr.mxu0 0.0
  %653 = vmatpush1.msra.mxu0 %v350
  %654 = vmatprep.subr.mxu0 0.0
  %655 = vmatpush1.msra.mxu0 %v351
  %656 = vmatprep.subr.mxu0 0.0
  %657 = vmatpush1.msra.mxu0 %v352
  %658 = vmatprep.subr.mxu0 0.0
  %659 = vmatpush1.msra.mxu0 %v353
  %660 = vmatprep.subr.mxu0 0.0
  %661 = vmatpush1.msra.mxu0 %v354
  %662 = vmatprep.subr.mxu0 0.0
  %663 = vmatpush1.msra.mxu0 %v355
  %664 = vmatprep.subr.mxu0 0.0
  %665 = vmatpush1.msra.mxu0 %v356
  %666 = vmatprep.subr.mxu0 0.0
  %667 = vmatpush1.msra.mxu0 %v357
  %668 = vmatprep.subr.mxu0 0.0
  %669 = vmatpush1.msra.mxu0 %v358
  %670 = vmatprep.subr.mxu0 0.0
  %671 = vmatpush1.msra.mxu0 %v359
  %672 = vmatprep.subr.mxu0 0.0
  %673 = vmatpush1.msra.mxu0 %v360
  %674 = vmatprep.subr.mxu0 0.0
  %675 = vmatpush1.msra.mxu0 %v361
  %676 = vmatprep.subr.mxu0 0.0
  %677 = vmatpush1.msra.mxu0 %v362
  %678 = vmatprep.subr.mxu0 0.0
  %679 = vmatpush1.msra.mxu0 %v363
  %680 = vmatprep.subr.mxu0 0.0
  %681 = vmatpush1.msra.mxu0 %v364
  %682 = vmatprep.subr.mxu0 0.0
  %683 = vmatpush1.msra.mxu0 %v365
  %684 = vmatprep.subr.mxu0 0.0
  %685 = vmatpush1.msra.mxu0 %v366
  %686 = vmatprep.subr.mxu0 0.0
  %687 = vmatpush1.msra.mxu0 %v367
  %688 = vmatprep.subr.mxu0 0.0
  %689 = vmatpush1.msra.mxu0 %v368
  %690 = vmatprep.subr.mxu0 0.0
  %691 = vmatpush1.msra.mxu0 %v369
  %692 = vmatprep.subr.mxu0 0.0
  %693 = vmatpush1.msra.mxu0 %v370
  %694 = vmatprep.subr.mxu0 0.0
  %695 = vmatpush1.msra.mxu0 %v371
  %696 = vmatprep.subr.mxu0 0.0
  %697 = vmatpush1.msra.mxu0 %v372
  %698 = vmatprep.subr.mxu0 0.0
  %699 = vmatpush1.msra.mxu0 %v373
  %700 = vmatprep.subr.mxu0 0.0
  %701 = vmatpush1.msra.mxu0 %v374
  %702 = vmatprep.subr.mxu0 0.0
  %703 = vmatpush1.msra.mxu0 %v375
  %704 = vmatprep.subr.mxu0 0.0
  %705 = vmatpush1.msra.mxu0 %v376
  %706 = vmatprep.subr.mxu0 0.0
  %707 = vmatpush1.msra.mxu0 %v377
  %708 = vmatprep.subr.mxu0 0.0
  %709 = vmatpush1.msra.mxu0 %v378
  %710 = vmatprep.mubr.f32.mxu0 %v30
  %711 = vmatmul.mubr.f32.gmra.mrb[0].mxu0 %v29
  %v712 = vpop.f32.mrb[0].mxu0
  %v713 = vadd.f32 %v638, %v712
  %v714 = vpop.f32.mrb[0].mxu0
  %715 = vmatprep.mubr.f32.mxu0 %v46
  %716 = vmatmul.mubr.f32.gmra.mrb[0].mxu0 %v45
  %v717 = vpop.f32.mrb[0].mxu0
  %v718 = vadd.f32 %v643, %v717
  %v719 = vpop.f32.mrb[0].mxu0
  %720 = vdwg.mxu0
  %721 = vmatprep.subr.mxu0 0.0
  %722 = vmatpush1.msra.mxu0 %v379
  %723 = vmatprep.subr.mxu0 0.0
  %724 = vmatpush1.msra.mxu0 %v380
  %725 = vmatprep.subr.mxu0 0.0
  %726 = vmatpush1.msra.mxu0 %v381
  %727 = vmatprep.subr.mxu0 0.0
  %728 = vmatpush1.msra.mxu0 %v382
  %729 = vmatprep.subr.mxu0 0.0
  %730 = vmatpush1.msra.mxu0 %v383
  %731 = vmatprep.subr.mxu0 0.0
  %732 = vmatpush1.msra.mxu0 %v384
  %733 = vmatprep.subr.mxu0 0.0
  %734 = vmatpush1.msra.mxu0 %v385
  %735 = vmatprep.subr.mxu0 0.0
  %736 = vmatpush1.msra.mxu0 %v386
  %737 = vmatprep.subr.mxu0 0.0
  %738 = vmatpush1.msra.mxu0 %v387
  %739 = vmatprep.subr.mxu0 0.0
  %740 = vmatpush1.msra.mxu0 %v388
  %741 = vmatprep.subr.mxu0 0.0
  %742 = vmatpush1.msra.mxu0 %v389
  %743 = vmatprep.subr.mxu0 0.0
  %744 = vmatpush1.msra.mxu0 %v390
  %745 = vmatprep.subr.mxu0 0.0
  %746 = vmatpush1.msra.mxu0 %v391
  %747 = vmatprep.subr.mxu0 0.0
  %748 = vmatpush1.msra.mxu0 %v392
  %749 = vmatprep.subr.mxu0 0.0
  %750 = vmatpush1.msra.mxu0 %v393
  %751 = vmatprep.subr.mxu0 0.0
  %752 = vmatpush1.msra.mxu0 %v394
  %753 = vmatprep.subr.mxu0 0.0
  %754 = vmatpush1.msra.mxu0 %v395
  %755 = vmatprep.subr.mxu0 0.0
  %756 = vmatpush1.msra.mxu0 %v396
  %757 = vmatprep.subr.mxu0 0.0
  %758 = vmatpush1.msra.mxu0 %v397
  %759 = vmatprep.subr.mxu0 0.0
  %760 = vmatpush1.msra.mxu0 %v398
  %761 = vmatprep.subr.mxu0 0.0
  %762 = vmatpush1.msra.mxu0 %v399
  %763 = vmatprep.subr.mxu0 0.0
  %764 = vmatpush1.msra.mxu0 %v400
  %765 = vmatprep.subr.mxu0 0.0
  %766 = vmatpush1.msra.mxu0 %v401
  %767 = vmatprep.subr.mxu0 0.0
  %768 = vmatpush1.msra.mxu0 %v402
  %769 = vmatprep.subr.mxu0 0.0
  %770 = vmatpush1.msra.mxu0 %v403
  %771 = vmatprep.subr.mxu0 0.0
  %772 = vmatpush1.msra.mxu0 %v404
  %773 = vmatprep.subr.mxu0 0.0
  %774 = vmatpush1.msra.mxu0 %v405
  %775 = vmatprep.subr.mxu0 0.0
  %776 = vmatpush1.msra.mxu0 %v406
  %777 = vmatprep.subr.mxu0 0.0
  %778 = vmatpush1.msra.mxu0 %v407
  %779 = vmatprep.subr.mxu0 0.0
  %780 = vmatpush1.msra.mxu0 %v408
  %781 = vmatprep.subr.mxu0 0.0
  %782 = vmatpush1.msra.mxu0 %v409
  %783 = vmatprep.subr.mxu0 0.0
  %784 = vmatpush1.msra.mxu0 %v410
  %785 = vmatprep.mubr.f32.mxu0 %v32
  %786 = vmatmul.mubr.f32.gmra.mrb[0].mxu0 %v31
  %v787 = vpop.f32.mrb[0].mxu0
  %v788 = vadd.f32 %v713, %v787
  %v789 = vpop.f32.mrb[0].mxu0
  %790 = vmatprep.mubr.f32.mxu0 %v48
  %791 = vmatmul.mubr.f32.gmra.mrb[0].mxu0 %v47
  %v792 = vpop.f32.mrb[0].mxu0
  %v793 = vadd.f32 %v718, %v792
  %v794 = vpop.f32.mrb[0].mxu0
  %795 = vdwg.mxu0
  %796 = vmatprep.subr.mxu0 0.0
  %797 = vmatpush1.msra.mxu0 %v411
  %798 = vmatprep.subr.mxu0 0.0
  %799 = vmatpush1.msra.mxu0 %v412
  %800 = vmatprep.subr.mxu0 0.0
  %801 = vmatpush1.msra.mxu0 %v413
  %802 = vmatprep.subr.mxu0 0.0
  %803 = vmatpush1.msra.mxu0 %v414
  %804 = vmatprep.subr.mxu0 0.0
  %805 = vmatpush1.msra.mxu0 %v415
  %806 = vmatprep.subr.mxu0 0.0
  %807 = vmatpush1.msra.mxu0 %v416
  %808 = vmatprep.subr.mxu0 0.0
  %809 = vmatpush1.msra.mxu0 %v417
  %810 = vmatprep.subr.mxu0 0.0
  %811 = vmatpush1.msra.mxu0 %v418
  %812 = vmatprep.subr.mxu0 0.0
  %813 = vmatpush1.msra.mxu0 %v419
  %814 = vmatprep.subr.mxu0 0.0
  %815 = vmatpush1.msra.mxu0 %v420
  %816 = vmatprep.subr.mxu0 0.0
  %817 = vmatpush1.msra.mxu0 %v421
  %818 = vmatprep.subr.mxu0 0.0
  %819 = vmatpush1.msra.mxu0 %v422
  %820 = vmatprep.subr.mxu0 0.0
  %821 = vmatpush1.msra.mxu0 %v423
  %822 = vmatprep.subr.mxu0 0.0
  %823 = vmatpush1.msra.mxu0 %v424
  %824 = vmatprep.subr.mxu0 0.0
  %825 = vmatpush1.msra.mxu0 %v425
  %826 = vmatprep.subr.mxu0 0.0
  %827 = vmatpush1.msra.mxu0 %v426
  %828 = vmatprep.subr.mxu0 0.0
  %829 = vmatpush1.msra.mxu0 %v427
  %830 = vmatprep.subr.mxu0 0.0
  %831 = vmatpush1.msra.mxu0 %v428
  %832 = vmatprep.subr.mxu0 0.0
  %833 = vmatpush1.msra.mxu0 %v429
  %834 = vmatprep.subr.mxu0 0.0
  %835 = vmatpush1.msra.mxu0 %v430
  %836 = vmatprep.subr.mxu0 0.0
  %837 = vmatpush1.msra.mxu0 %v431
  %838 = vmatprep.subr.mxu0 0.0
  %839 = vmatpush1.msra.mxu0 %v432
  %840 = vmatprep.subr.mxu0 0.0
  %841 = vmatpush1.msra.mxu0 %v433
  %842 = vmatprep.subr.mxu0 0.0
  %843 = vmatpush1.msra.mxu0 %v434
  %844 = vmatprep.subr.mxu0 0.0
  %845 = vmatpush1.msra.mxu0 %v435
  %846 = vmatprep.subr.mxu0 0.0
  %847 = vmatpush1.msra.mxu0 %v436
  %848 = vmatprep.subr.mxu0 0.0
  %849 = vmatpush1.msra.mxu0 %v437
  %850 = vmatprep.subr.mxu0 0.0
  %851 = vmatpush1.msra.mxu0 %v438
  %852 = vmatprep.subr.mxu0 0.0
  %853 = vmatpush1.msra.mxu0 %v439
  %854 = vmatprep.subr.mxu0 0.0
  %855 = vmatpush1.msra.mxu0 %v440
  %856 = vmatprep.subr.mxu0 0.0
  %857 = vmatpush1.msra.mxu0 %v441
  %858 = vmatprep.subr.mxu0 0.0
  %859 = vmatpush1.msra.mxu0 %v442
  %860 = vmatprep.mubr.f32.mxu0 %v34
  %861 = vmatmul.mubr.f32.gmra.mrb[0].mxu0 %v33
  %v862 = vpop.f32.mrb[0].mxu0
  %v863 = vadd.f32 %v788, %v862
  %v864 = vpop.f32.mrb[0].mxu0
  %865 = vmatprep.mubr.f32.mxu0 %v50
  %866 = vmatmul.mubr.f32.gmra.mrb[0].mxu0 %v49
  %v867 = vpop.f32.mrb[0].mxu0
  %v868 = vadd.f32 %v793, %v867
  %v869 = vpop.f32.mrb[0].mxu0
  %870 = vdwg.mxu0
  %871 = vmatprep.subr.mxu0 0.0
  %872 = vmatpush1.msra.mxu0 %v443
  %873 = vmatprep.subr.mxu0 0.0
  %874 = vmatpush1.msra.mxu0 %v444
  %875 = vmatprep.subr.mxu0 0.0
  %876 = vmatpush1.msra.mxu0 %v445
  %877 = vmatprep.subr.mxu0 0.0
  %878 = vmatpush1.msra.mxu0 %v446
  %879 = vmatprep.subr.mxu0 0.0
  %880 = vmatpush1.msra.mxu0 %v447
  %881 = vmatprep.subr.mxu0 0.0
  %882 = vmatpush1.msra.mxu0 %v448
  %883 = vmatprep.subr.mxu0 0.0
  %884 = vmatpush1.msra.mxu0 %v449
  %885 = vmatprep.subr.mxu0 0.0
  %886 = vmatpush1.msra.mxu0 %v450
  %887 = vmatprep.subr.mxu0 0.0
  %888 = vmatpush1.msra.mxu0 %v451
  %889 = vmatprep.subr.mxu0 0.0
  %890 = vmatpush1.msra.mxu0 %v452
  %891 = vmatprep.subr.mxu0 0.0
  %892 = vmatpush1.msra.mxu0 %v453
  %893 = vmatprep.subr.mxu0 0.0
  %894 = vmatpush1.msra.mxu0 %v454
  %895 = vmatprep.subr.mxu0 0.0
  %896 = vmatpush1.msra.mxu0 %v455
  %897 = vmatprep.subr.mxu0 0.0
  %898 = vmatpush1.msra.mxu0 %v456
  %899 = vmatprep.subr.mxu0 0.0
  %900 = vmatpush1.msra.mxu0 %v457
  %901 = vmatprep.subr.mxu0 0.0
  %902 = vmatpush1.msra.mxu0 %v458
  %903 = vmatprep.subr.mxu0 0.0
  %904 = vmatpush1.msra.mxu0 %v459
  %905 = vmatprep.subr.mxu0 0.0
  %906 = vmatpush1.msra.mxu0 %v460
  %907 = vmatprep.subr.mxu0 0.0
  %908 = vmatpush1.msra.mxu0 %v461
  %909 = vmatprep.subr.mxu0 0.0
  %910 = vmatpush1.msra.mxu0 %v462
  %911 = vmatprep.subr.mxu0 0.0
  %912 = vmatpush1.msra.mxu0 %v463
  %913 = vmatprep.subr.mxu0 0.0
  %914 = vmatpush1.msra.mxu0 %v464
  %915 = vmatprep.subr.mxu0 0.0
  %916 = vmatpush1.msra.mxu0 %v465
  %917 = vmatprep.subr.mxu0 0.0
  %918 = vmatpush1.msra.mxu0 %v466
  %919 = vmatprep.subr.mxu0 0.0
  %920 = vmatpush1.msra.mxu0 %v467
  %921 = vmatprep.subr.mxu0 0.0
  %922 = vmatpush1.msra.mxu0 %v468
  %923 = vmatprep.subr.mxu0 0.0
  %924 = vmatpush1.msra.mxu0 %v469
  %925 = vmatprep.subr.mxu0 0.0
  %926 = vmatpush1.msra.mxu0 %v470
  %927 = vmatprep.subr.mxu0 0.0
  %928 = vmatpush1.msra.mxu0 %v471
  %929 = vmatprep.subr.mxu0 0.0
  %930 = vmatpush1.msra.mxu0 %v472
  %931 = vmatprep.subr.mxu0 0.0
  %932 = vmatpush1.msra.mxu0 %v473
  %933 = vmatprep.subr.mxu0 0.0
  %934 = vmatpush1.msra.mxu0 %v474
  %935 = vmatprep.mubr.f32.mxu0 %v36
  %936 = vmatmul.mubr.f32.gmra.mrb[0].mxu0 %v35
  %v937 = vpop.f32.mrb[0].mxu0
  %v938 = vadd.f32 %v863, %v937
  %v939 = vpop.f32.mrb[0].mxu0
  %940 = vmatprep.mubr.f32.mxu0 %v52
  %941 = vmatmul.mubr.f32.gmra.mrb[0].mxu0 %v51
  %v942 = vpop.f32.mrb[0].mxu0
  %v943 = vadd.f32 %v868, %v942
  %v944 = vpop.f32.mrb[0].mxu0
  %945 = vdwg.mxu0
  %946 = vmatprep.subr.mxu0 0.0
  %947 = vmatpush1.msra.mxu0 %v475
  %948 = vmatprep.subr.mxu0 0.0
  %949 = vmatpush1.msra.mxu0 %v476
  %950 = vmatprep.subr.mxu0 0.0
  %951 = vmatpush1.msra.mxu0 %v477
  %952 = vmatprep.subr.mxu0 0.0
  %953 = vmatpush1.msra.mxu0 %v478
  %954 = vmatprep.subr.mxu0 0.0
  %955 = vmatpush1.msra.mxu0 %v479
  %956 = vmatprep.subr.mxu0 0.0
  %957 = vmatpush1.msra.mxu0 %v480
  %958 = vmatprep.subr.mxu0 0.0
  %959 = vmatpush1.msra.mxu0 %v481
  %960 = vmatprep.subr.mxu0 0.0
  %961 = vmatpush1.msra.mxu0 %v482
  %962 = vmatprep.subr.mxu0 0.0
  %963 = vmatpush1.msra.mxu0 %v483
  %964 = vmatprep.subr.mxu0 0.0
  %965 = vmatpush1.msra.mxu0 %v484
  %966 = vmatprep.subr.mxu0 0.0
  %967 = vmatpush1.msra.mxu0 %v485
  %968 = vmatprep.subr.mxu0 0.0
  %969 = vmatpush1.msra.mxu0 %v486
  %970 = vmatprep.subr.mxu0 0.0
  %971 = vmatpush1.msra.mxu0 %v487
  %972 = vmatprep.subr.mxu0 0.0
  %973 = vmatpush1.msra.mxu0 %v488
  %974 = vmatprep.subr.mxu0 0.0
  %975 = vmatpush1.msra.mxu0 %v489
  %976 = vmatprep.subr.mxu0 0.0
  %977 = vmatpush1.msra.mxu0 %v490
  %978 = vmatprep.subr.mxu0 0.0
  %979 = vmatpush1.msra.mxu0 %v491
  %980 = vmatprep.subr.mxu0 0.0
  %981 = vmatpush1.msra.mxu0 %v492
  %982 = vmatprep.subr.mxu0 0.0
  %983 = vmatpush1.msra.mxu0 %v493
  %984 = vmatprep.subr.mxu0 0.0
  %985 = vmatpush1.msra.mxu0 %v494
  %986 = vmatprep.subr.mxu0 0.0
  %987 = vmatpush1.msra.mxu0 %v495
  %988 = vmatprep.subr.mxu0 0.0
  %989 = vmatpush1.msra.mxu0 %v496
  %990 = vmatprep.subr.mxu0 0.0
  %991 = vmatpush1.msra.mxu0 %v497
  %992 = vmatprep.subr.mxu0 0.0
  %993 = vmatpush1.msra.mxu0 %v498
  %994 = vmatprep.subr.mxu0 0.0
  %995 = vmatpush1.msra.mxu0 %v499
  %996 = vmatprep.subr.mxu0 0.0
  %997 = vmatpush1.msra.mxu0 %v500
  %998 = vmatprep.subr.mxu0 0.0
  %999 = vmatpush1.msra.mxu0 %v501
  %1000 = vmatprep.subr.mxu0 0.0
  %1001 = vmatpush1.msra.mxu0 %v502
  %1002 = vmatprep.subr.mxu0 0.0
  %1003 = vmatpush1.msra.mxu0 %v503
  %1004 = vmatprep.subr.mxu0 0.0
  %1005 = vmatpush1.msra.mxu0 %v504
  %1006 = vmatprep.subr.mxu0 0.0
  %1007 = vmatpush1.msra.mxu0 %v505
  %1008 = vmatprep.subr.mxu0 0.0
  %1009 = vmatpush1.msra.mxu0 %v506
  %1010 = vmatprep.mubr.f32.mxu0 %v38
  %1011 = vmatmul.mubr.f32.gmra.mrb[0].mxu0 %v37
  %v1012 = vpop.f32.mrb[0].mxu0
  %v1013 = vadd.f32 %v938, %v1012
  %v1014 = vpop.f32.mrb[0].mxu0
  %1015 = vmatprep.mubr.f32.mxu0 %v54
  %1016 = vmatmul.mubr.f32.gmra.mrb[0].mxu0 %v53
  %v1017 = vpop.f32.mrb[0].mxu0
  %v1018 = vadd.f32 %v943, %v1017
  %v1019 = vpop.f32.mrb[0].mxu0
  %1020 = vdwg.mxu0
  %1021 = vmatprep.subr.mxu0 0.0
  %1022 = vmatpush1.msra.mxu0 %v507
  %1023 = vmatprep.subr.mxu0 0.0
  %1024 = vmatpush1.msra.mxu0 %v508
  %1025 = vmatprep.subr.mxu0 0.0
  %1026 = vmatpush1.msra.mxu0 %v509
  %1027 = vmatprep.subr.mxu0 0.0
  %1028 = vmatpush1.msra.mxu0 %v510
  %1029 = vmatprep.subr.mxu0 0.0
  %1030 = vmatpush1.msra.mxu0 %v511
  %1031 = vmatprep.subr.mxu0 0.0
  %1032 = vmatpush1.msra.mxu0 %v512
  %1033 = vmatprep.subr.mxu0 0.0
  %1034 = vmatpush1.msra.mxu0 %v513
  %1035 = vmatprep.subr.mxu0 0.0
  %1036 = vmatpush1.msra.mxu0 %v514
  %1037 = vmatprep.subr.mxu0 0.0
  %1038 = vmatpush1.msra.mxu0 %v515
  %1039 = vmatprep.subr.mxu0 0.0
  %1040 = vmatpush1.msra.mxu0 %v516
  %1041 = vmatprep.subr.mxu0 0.0
  %1042 = vmatpush1.msra.mxu0 %v517
  %1043 = vmatprep.subr.mxu0 0.0
  %1044 = vmatpush1.msra.mxu0 %v518
  %1045 = vmatprep.subr.mxu0 0.0
  %1046 = vmatpush1.msra.mxu0 %v519
  %1047 = vmatprep.subr.mxu0 0.0
  %1048 = vmatpush1.msra.mxu0 %v520
  %1049 = vmatprep.subr.mxu0 0.0
  %1050 = vmatpush1.msra.mxu0 %v521
  %1051 = vmatprep.subr.mxu0 0.0
  %1052 = vmatpush1.msra.mxu0 %v522
  %1053 = vmatprep.subr.mxu0 0.0
  %1054 = vmatpush1.msra.mxu0 %v523
  %1055 = vmatprep.subr.mxu0 0.0
  %1056 = vmatpush1.msra.mxu0 %v524
  %1057 = vmatprep.subr.mxu0 0.0
  %1058 = vmatpush1.msra.mxu0 %v525
  %1059 = vmatprep.subr.mxu0 0.0
  %1060 = vmatpush1.msra.mxu0 %v526
  %1061 = vmatprep.subr.mxu0 0.0
  %1062 = vmatpush1.msra.mxu0 %v527
  %1063 = vmatprep.subr.mxu0 0.0
  %1064 = vmatpush1.msra.mxu0 %v528
  %1065 = vmatprep.subr.mxu0 0.0
  %1066 = vmatpush1.msra.mxu0 %v529
  %1067 = vmatprep.subr.mxu0 0.0
  %1068 = vmatpush1.msra.mxu0 %v530
  %1069 = vmatprep.subr.mxu0 0.0
  %1070 = vmatpush1.msra.mxu0 %v531
  %1071 = vmatprep.subr.mxu0 0.0
  %1072 = vmatpush1.msra.mxu0 %v532
  %1073 = vmatprep.subr.mxu0 0.0
  %1074 = vmatpush1.msra.mxu0 %v533
  %1075 = vmatprep.subr.mxu0 0.0
  %1076 = vmatpush1.msra.mxu0 %v534
  %1077 = vmatprep.subr.mxu0 0.0
  %1078 = vmatpush1.msra.mxu0 %v535
  %1079 = vmatprep.subr.mxu0 0.0
  %1080 = vmatpush1.msra.mxu0 %v536
  %1081 = vmatprep.subr.mxu0 0.0
  %1082 = vmatpush1.msra.mxu0 %v537
  %1083 = vmatprep.subr.mxu0 0.0
  %1084 = vmatpush1.msra.mxu0 %v538
  %1085 = vmatprep.mubr.f32.mxu0 %v40
  %1086 = vmatmul.mubr.f32.gmra.mrb[0].mxu0 %v39
  %v1087 = vpop.f32.mrb[0].mxu0
  %v1088 = vadd.f32 %v1013, %v1087
  %v1089 = vpop.f32.mrb[0].mxu0
  %1090 = vmatprep.mubr.f32.mxu0 %v56
  %1091 = vmatmul.mubr.f32.gmra.mrb[0].mxu0 %v55
  %v1092 = vpop.f32.mrb[0].mxu0
  %v1093 = vadd.f32 %v1018, %v1092
  %v1094 = vpop.f32.mrb[0].mxu0
  %1095 = vdwg.mxu0
  %1096 = vmatprep.subr.mxu0 0.0
  %1097 = vmatpush1.msra.mxu0 %v539
  %1098 = vmatprep.subr.mxu0 0.0
  %1099 = vmatpush1.msra.mxu0 %v540
  %1100 = vmatprep.subr.mxu0 0.0
  %1101 = vmatpush1.msra.mxu0 %v541
  %1102 = vmatprep.subr.mxu0 0.0
  %1103 = vmatpush1.msra.mxu0 %v542
  %1104 = vmatprep.subr.mxu0 0.0
  %1105 = vmatpush1.msra.mxu0 %v543
  %1106 = vmatprep.subr.mxu0 0.0
  %1107 = vmatpush1.msra.mxu0 %v544
  %1108 = vmatprep.subr.mxu0 0.0
  %1109 = vmatpush1.msra.mxu0 %v545
  %1110 = vmatprep.subr.mxu0 0.0
  %1111 = vmatpush1.msra.mxu0 %v546
  %1112 = vmatprep.subr.mxu0 0.0
  %1113 = vmatpush1.msra.mxu0 %v547
  %1114 = vmatprep.subr.mxu0 0.0
  %1115 = vmatpush1.msra.mxu0 %v548
  %1116 = vmatprep.subr.mxu0 0.0
  %1117 = vmatpush1.msra.mxu0 %v549
  %1118 = vmatprep.subr.mxu0 0.0
  %1119 = vmatpush1.msra.mxu0 %v550
  %1120 = vmatprep.subr.mxu0 0.0
  %1121 = vmatpush1.msra.mxu0 %v551
  %1122 = vmatprep.subr.mxu0 0.0
  %1123 = vmatpush1.msra.mxu0 %v552
  %1124 = vmatprep.subr.mxu0 0.0
  %1125 = vmatpush1.msra.mxu0 %v553
  %1126 = vmatprep.subr.mxu0 0.0
  %1127 = vmatpush1.msra.mxu0 %v554
  %1128 = vmatprep.subr.mxu0 0.0
  %1129 = vmatpush1.msra.mxu0 %v555
  %1130 = vmatprep.subr.mxu0 0.0
  %1131 = vmatpush1.msra.mxu0 %v556
  %1132 = vmatprep.subr.mxu0 0.0
  %1133 = vmatpush1.msra.mxu0 %v557
  %1134 = vmatprep.subr.mxu0 0.0
  %1135 = vmatpush1.msra.mxu0 %v558
  %1136 = vmatprep.subr.mxu0 0.0
  %1137 = vmatpush1.msra.mxu0 %v559
  %1138 = vmatprep.subr.mxu0 0.0
  %1139 = vmatpush1.msra.mxu0 %v560
  %1140 = vmatprep.subr.mxu0 0.0
  %1141 = vmatpush1.msra.mxu0 %v561
  %1142 = vmatprep.subr.mxu0 0.0
  %1143 = vmatpush1.msra.mxu0 %v562
  %1144 = vmatprep.subr.mxu0 0.0
  %1145 = vmatpush1.msra.mxu0 %v563
  %1146 = vmatprep.subr.mxu0 0.0
  %1147 = vmatpush1.msra.mxu0 %v564
  %1148 = vmatprep.subr.mxu0 0.0
  %1149 = vmatpush1.msra.mxu0 %v565
  %1150 = vmatprep.subr.mxu0 0.0
  %1151 = vmatpush1.msra.mxu0 %v566
  %1152 = vmatprep.subr.mxu0 0.0
  %1153 = vmatpush1.msra.mxu0 %v567
  %1154 = vmatprep.subr.mxu0 0.0
  %1155 = vmatpush1.msra.mxu0 %v568
  %1156 = vmatprep.subr.mxu0 0.0
  %1157 = vmatpush1.msra.mxu0 %v569
  %1158 = vmatprep.subr.mxu0 0.0
  %1159 = vmatpush1.msra.mxu0 %v570
  %1160 = vmatprep.mubr.f32.mxu0 %v42
  %1161 = vmatmul.mubr.f32.gmra.mrb[0].mxu0 %v41
  %v1162 = vpop.f32.mrb[0].mxu0
  %v1163 = vadd.f32 %v1088, %v1162
  %v1164 = vpop.f32.mrb[0].mxu0
  %1165 = vmatprep.mubr.f32.mxu0 %v58
  %1166 = vmatmul.mubr.f32.gmra.mrb[0].mxu0 %v57
  %v1167 = vpop.f32.mrb[0].mxu0
  %v1168 = vadd.f32 %v1093, %v1167
  %v1169 = vpop.f32.mrb[0].mxu0
  %1170 = vdwg.mxu0
  %v1171 = vxor.u32 %v1163, 2147483648
  %v1172 = vxor.u32 %v1168, 2147483648
  %v1173 = vmul.f32 %v1171, 1.442695
  %v1174 = vpow.pop %v1173
  %v1175 = vmul.f32 %v1172, 1.442695
  %v1176 = vpow.pop %v1175
  %v1177 = vadd.f32 %v1174, 1.0
  %v1178 = vadd.f32 %v1176, 1.0
  %v1179 = vrcp.pop %v1177
  %v1180 = vmul.f32 1.0, %v1179
  %v1181 = vrcp.pop %v1178
  %v1182 = vmul.f32 1.0, %v1181
  %1183 = vst [vmem:[%s2] sm:$0xff] %v1180
  %1184 = vst [vmem:[%s2 + $0x8] sm:$0xff] %v1182
  // Predicated region
  $region10: #{_lambda_.11} parent=0 // pred_check
    _
  $region11: #{_lambda_.11} parent=0 // pred_check_branch
    %1186 = sbr.rel (0) target = $region13
  $region12: #{_lambda_.11} parent=0 // pred_region
    _
  $region13: #{_lambda_.11} parent=0 // pred_fallthru
    _
  // Predicated region
  $region14: #{_lambda_.11} parent=0 // pred_check
    _
  $region15: #{_lambda_.11} parent=0 // pred_check_branch
    %1188 = sbr.rel (0) target = $region17
  $region16: #{_lambda_.11} parent=0 // pred_region
    _
  $region17: #{_lambda_.11} parent=0 // pred_fallthru
    _

</llo_original>
